<compile_context>
chip_gen: v5e
topology: v5e:2x2
jax: 0.10.0
libtpu: 0.0.40
codegen_flags: <defaults>
</compile_context>

<pallas_src>
import functools

import jax
import jax.numpy as jnp
from jax.experimental import pallas as pl
from jax.experimental.pallas import tpu as pltpu

_LANE = 128
_VMEM_LIMIT_FUSED = 40 * 1024 * 1024
_VMEM_LIMIT_STREAM = 48 * 1024 * 1024
_FUSED_VMEM_BUDGET = 24 * 1024 * 1024


def _round_up(x, m):
    return ((x + m - 1) // m) * m


def _pad2(a, rows, cols):
    pr, pc = rows - a.shape[0], cols - a.shape[1]
    if pr == 0 and pc == 0:
        return a
    return jnp.pad(a, ((0, pr), (0, pc)))


def _tile_sizes(np_, cap_m=512, cap_k=2048):
    """Largest 128-multiples that divide np_ (np_ is itself a 128-multiple).

    TM is additionally capped at Np/2 so the row-tile ("parallel") grid axis
    has at least 2 tiles and can shard across both v7x TensorCores.
    """
    divisors = [d for d in range(_LANE, np_ + 1, _LANE) if np_ % d == 0]
    tm_cap = min(cap_m, max(_LANE, np_ // 2))
    tm = max(d for d in divisors if d <= tm_cap)
    tk = max(d for d in divisors if d <= cap_k)
    return tm, tk


def prepare_adj(adj):
    """Pad adj to (Np, Np), Np = round_up(N, 128), and cast to bf16.

    Hoisted out of the forward so the O(N^2) pad/cast happens once, not per
    call / per layer.
    """
    n = adj.shape[0]
    np_ = _round_up(n, _LANE)
    return _pad2(adj, np_, np_).astype(jnp.bfloat16)


# --------------------------------------------------------------------------
# Fused path: adj (and h) resident in VMEM, all layers in one pallas_call.
# adj is read from HBM exactly once.
# --------------------------------------------------------------------------
def _fused_kernel(*refs, n_layers):
    adj_ref, x_ref = refs[0], refs[1]
    w_refs = refs[2:2 + n_layers]
    out_ref = refs[2 + n_layers]

    h = x_ref[...]                                           # bf16 (Np, F0p)
    for li in range(n_layers):
        support = jnp.dot(
            h, w_refs[li][...], preferred_element_type=jnp.float32
        ).astype(jnp.bfloat16)
        h = jnp.dot(adj_ref[...], support, preferred_element_type=jnp.float32)
        if li < n_layers - 1:
            h = jnp.maximum(h, 0.0).astype(jnp.bfloat16)
    out_ref[...] = h.astype(out_ref.dtype)


def _gcn_fused(x_p, adj_p, ws_bf16):
    np_ = adj_p.shape[0]
    hp_last = ws_bf16[-1].shape[1]
    kernel = functools.partial(_fused_kernel, n_layers=len(ws_bf16))
    return pl.pallas_call(
        kernel,
        out_shape=jax.ShapeDtypeStruct((np_, hp_last), jnp.float32),
        compiler_params=pltpu.CompilerParams(
            vmem_limit_bytes=_VMEM_LIMIT_FUSED),
    )(adj_p, x_p, *ws_bf16)


def _fused_fits(np_, dims_p):
    dmax = max(dims_p)
    est = (np_ * np_ * 2            # adj bf16
           + np_ * dims_p[0] * 2    # x bf16
           + 3 * np_ * dmax * 4     # h / support temporaries (f32, generous)
           + np_ * dims_p[-1] * 4)  # output f32
    return est <= _FUSED_VMEM_BUDGET


# --------------------------------------------------------------------------
# Streaming path helpers (large graphs): support = X @ W (small, row-tiled)
# --------------------------------------------------------------------------
def _support_kernel(x_ref, w_ref, out_ref):
    out_ref[...] = jnp.dot(
        x_ref[...], w_ref[...], preferred_element_type=jnp.float32
    ).astype(out_ref.dtype)


def _compute_support(x_p, w_bf16, tm):
    np_, fp = x_p.shape
    hp = w_bf16.shape[1]
    return pl.pallas_call(
        _support_kernel,
        out_shape=jax.ShapeDtypeStruct((np_, hp), jnp.bfloat16),
        grid=(np_ // tm,),
        in_specs=[
            pl.BlockSpec((tm, fp), lambda i: (i, 0)),
            pl.BlockSpec((fp, hp), lambda i: (0, 0)),
        ],
        out_specs=pl.BlockSpec((tm, hp), lambda i: (i, 0)),
        compiler_params=pltpu.CompilerParams(
            dimension_semantics=("parallel",),
            vmem_limit_bytes=_VMEM_LIMIT_STREAM),
    )(x_p, w_bf16)


# --------------------------------------------------------------------------
# Streaming layer kernel: stream adj tiles, accumulate in f32 VMEM scratch.
#   post_w=False : rhs = support (= X @ W), finalize writes relu?(acc)
#   post_w=True  : rhs = X,                finalize writes relu?(acc @ W)
# --------------------------------------------------------------------------
def _adj_stream_kernel(adj_ref, rhs_ref, *rest, apply_relu, post_w, tk):
    if post_w:
        w_ref, out_ref, acc_ref = rest
    else:
        out_ref, acc_ref = rest

    k = pl.program_id(1)

    @pl.when(k == 0)
    def _():
        acc_ref[...] = jnp.zeros_like(acc_ref)

    start = pl.multiple_of(k * tk, tk)
    acc_ref[...] += jnp.dot(
        adj_ref[...],
        rhs_ref[pl.ds(start, tk), :],
        preferred_element_type=jnp.float32,
    )

    @pl.when(k == pl.num_programs(1) - 1)
    def _():
        res = acc_ref[...]
        if post_w:
            # bf16 x bf16 MXU dot with f32 accumulation (avoids f32 emulation).
            res = jnp.dot(res.astype(jnp.bfloat16), w_ref[...],
                          preferred_element_type=jnp.float32)
        if apply_relu:
            res = jnp.maximum(res, 0.0)
        out_ref[...] = res.astype(out_ref.dtype)


def _gcn_layer_streamed(x_p, adj_p, w, *, apply_relu, tm, tk, out_dtype):
    """One GraphConvolution layer (+ optional fused ReLU) on padded operands."""
    np_ = adj_p.shape[0]
    f, hdim = w.shape
    fp, hp = _round_up(f, _LANE), _round_up(hdim, _LANE)
    w_bf16 = _pad2(w, fp, hp).astype(jnp.bfloat16)

    # Association choice on padded dims; ties favour post_w=True (skips the
    # extra support pallas_call and its Np x hp HBM write+read).
    post_w = fp <= hp
    if post_w:
        rhs = x_p                                    # (Np, Fp) bf16
        d_acc = fp
    else:
        rhs = _compute_support(x_p, w_bf16, tm)      # (Np, Hp) bf16
        d_acc = hp

    kernel = functools.partial(
        _adj_stream_kernel, apply_relu=apply_relu, post_w=post_w, tk=tk)

    in_specs = [
        pl.BlockSpec((tm, tk), lambda i, k: (i, k)),       # adj tile (streamed)
        pl.BlockSpec((np_, d_acc), lambda i, k: (0, 0)),   # rhs resident in VMEM
    ]
    operands = [adj_p, rhs]
    if post_w:
        in_specs.append(pl.BlockSpec((fp, hp), lambda i, k: (0, 0)))
        operands.append(w_bf16)

    return pl.pallas_call(
        kernel,
        out_shape=jax.ShapeDtypeStruct((np_, hp), out_dtype),
        grid=(np_ // tm, np_ // tk),
        in_specs=in_specs,
        out_specs=pl.BlockSpec((tm, hp), lambda i, k: (i, 0)),
        scratch_shapes=[pltpu.VMEM((tm, d_acc), jnp.float32)],
        compiler_params=pltpu.CompilerParams(
            dimension_semantics=("parallel", "arbitrary"),
            vmem_limit_bytes=_VMEM_LIMIT_STREAM),
    )(*operands)


# --------------------------------------------------------------------------
# Parameter init (mirrors GCN.__init__, bias=False)
# --------------------------------------------------------------------------
def xavier_uniform(key, fan_in, fan_out, dtype=jnp.float32):
    limit = jnp.sqrt(6.0 / (fan_in + fan_out))
    return jax.random.uniform(key, (fan_in, fan_out), dtype, -limit, limit)


def init_gcn_params(key, n_layers, n_features, hidden_dim, n_classes):
    keys = jax.random.split(key, max(n_layers, 1))
    weights = []
    if n_layers == 1:
        weights.append(xavier_uniform(keys[0], n_features, n_classes))
    else:
        weights.append(xavier_uniform(keys[0], n_features, hidden_dim))
        for i in range(n_layers - 2):
            weights.append(xavier_uniform(keys[1 + i], hidden_dim, hidden_dim))
        weights.append(xavier_uniform(keys[n_layers - 1], hidden_dim, n_classes))
    return weights


# --------------------------------------------------------------------------
# Full forward
# --------------------------------------------------------------------------
@functools.partial(jax.jit, static_argnames=("force_streaming",))
def gcn_forward(x, adj_p, weights, *, force_streaming=False):
    """GCN.forward (relu after every layer except the last).

    x       : (N, F) f32
    adj_p   : output of prepare_adj(adj) — (Np, Np) bf16, Np = round_up(N,128)
    weights : list of unpadded f32 weight matrices
    """
    n = x.shape[0]
    np_ = adj_p.shape[0]
    assert adj_p.shape == (np_, np_) and np_ == _round_up(n, _LANE)
    n_classes = weights[-1].shape[1]
    n_layers = len(weights)

    dims = [weights[0].shape[0]] + [w.shape[1] for w in weights]
    dims_p = [_round_up(d, _LANE) for d in dims]

    x_p = _pad2(x, np_, dims_p[0]).astype(jnp.bfloat16)

    if (not force_streaming) and _fused_fits(np_, dims_p):
        # adj fits in VMEM: one kernel, adj streamed from HBM once for ALL layers.
        ws = [
            _pad2(w, _round_up(w.shape[0], _LANE),
                  _round_up(w.shape[1], _LANE)).astype(jnp.bfloat16)
            for w in weights
        ]
        out = _gcn_fused(x_p, adj_p, ws)
    else:
        tm, tk = _tile_sizes(np_)
        h = x_p
        for li, w in enumerate(weights):
            is_last = li == n_layers - 1
            h = _gcn_layer_streamed(
                h, adj_p, w,
                apply_relu=not is_last,
                tm=tm, tk=tk,
                out_dtype=jnp.float32 if is_last else jnp.bfloat16,
            )
        out = h
    return out[:n, :n_classes]


def gcn_forward_ref(x, adj, weights):
    """Pure-JAX f32 reference for correctness checking."""
    if len(weights) == 1:
        return adj @ (x @ weights[0])
    h = x
    for w in weights[:-1]:
        h = jnp.maximum(adj @ (h @ w), 0.0)
    return adj @ (h @ weights[-1])


if __name__ == "__main__":
    key = jax.random.PRNGKey(0)

    def make_graph(k, n, f):
        k_x, k_adj = jax.random.split(k)
        x = jax.random.normal(k_x, (n, f), dtype=jnp.float32)
        a = (jax.random.uniform(k_adj, (n, n)) > 0.98).astype(jnp.float32)
        a = jnp.maximum(a, a.T) + jnp.eye(n, dtype=jnp.float32)
        d_inv_sqrt = 1.0 / jnp.sqrt(jnp.sum(a, axis=1))
        return x, a * d_inv_sqrt[:, None] * d_inv_sqrt[None, :]

    def check(out, ref, tag):
        rel = jnp.max(jnp.abs(out - ref)) / (jnp.max(jnp.abs(ref)) + 1e-6)
        assert rel < 3e-2, f"{tag}: relative error too large: {rel}"

    k1, k2, kw1, kw2 = jax.random.split(key, 4)

    # Test 1: small graph (N not a multiple of 128) -> fused path, adj resident
    # in VMEM, streamed from HBM once for all 3 layers.
    N1, F1, H1, C1, L1 = 1000, 8, 32, 4, 3
    x1, adj1 = make_graph(k1, N1, F1)
    w1 = init_gcn_params(kw1, L1, F1, H1, C1)
    adj1_p = prepare_adj(adj1)
    out1 = jax.block_until_ready(gcn_forward(x1, adj1_p, w1))
    assert out1.shape == (N1, C1)
    check(out1, gcn_forward_ref(x1, adj1, w1), "fused")

    # Test 2: wider features, forced streaming path -> exercises the adj-tile
    # streaming kernel with large tiles (TM=512, TK=1536 here), both matmul
    # associations, and the support pre-pass.
    N2, F2, H2, C2, L2 = 1500, 300, 32, 4, 3
    x2, adj2 = make_graph(k2, N2, F2)
    w2 = init_gcn_params(kw2, L2, F2, H2, C2)
    adj2_p = prepare_adj(adj2)
    out2 = jax.block_until_ready(gcn_forward(x2, adj2_p, w2, force_streaming=True))
    assert out2.shape == (N2, C2)
    check(out2, gcn_forward_ref(x2, adj2, w2), "streamed")

    print("KERNEL_OK")
</pallas_src>

<mosaic_0001>
module attributes {stable_mosaic.version = 11 : i64} {
  func.func @_fused_kernel(%arg0: memref<1024x1024xbf16, #tpu.memory_space<vmem>>, %arg1: memref<1024x128xbf16, #tpu.memory_space<vmem>>, %arg2: memref<128x128xbf16, #tpu.memory_space<vmem>>, %arg3: memref<128x128xbf16, #tpu.memory_space<vmem>>, %arg4: memref<128x128xbf16, #tpu.memory_space<vmem>>, %arg5: memref<1024x128xf32, #tpu.memory_space<vmem>>) attributes {dimension_semantics = [], scalar_prefetch = 0 : i64, scratch_operands = 0 : i64, tpu.core_type = #tpu.core_type<tc>} {
    %c0 = arith.constant 0 : index
    %c0_0 = arith.constant 0 : index
    %0 = vector.load %arg1[%c0, %c0_0] : memref<1024x128xbf16, #tpu.memory_space<vmem>>, vector<1024x128xbf16>
    %c0_1 = arith.constant 0 : index
    %c0_2 = arith.constant 0 : index
    %1 = vector.load %arg2[%c0_1, %c0_2] : memref<128x128xbf16, #tpu.memory_space<vmem>>, vector<128x128xbf16>
    %cst = arith.constant dense<0.000000e+00> : vector<1024x128xf32>
    %2 = tpu.matmul %0, %1, %cst {dimension_numbers = #tpu.dot_dimension_numbers<[1], [0], [0], [1], [0, 0, 1, 1], [], []>} : vector<1024x128xbf16>, vector<128x128xbf16>, vector<1024x128xf32> -> vector<1024x128xf32>
    %3 = arith.truncf %2 : vector<1024x128xf32> to vector<1024x128xbf16>
    %c0_3 = arith.constant 0 : index
    %c0_4 = arith.constant 0 : index
    %4 = vector.load %arg0[%c0_3, %c0_4] : memref<1024x1024xbf16, #tpu.memory_space<vmem>>, vector<1024x1024xbf16>
    %cst_5 = arith.constant dense<0.000000e+00> : vector<1024x128xf32>
    %5 = tpu.matmul %4, %3, %cst_5 {dimension_numbers = #tpu.dot_dimension_numbers<[1], [0], [0], [1], [0, 0, 1, 1], [], []>} : vector<1024x1024xbf16>, vector<1024x128xbf16>, vector<1024x128xf32> -> vector<1024x128xf32>
    %cst_6 = arith.constant 0.000000e+00 : f32
    %6 = vector.broadcast %cst_6 : f32 to vector<1024x128xf32>
    %7 = arith.maximumf %5, %6 : vector<1024x128xf32>
    %8 = arith.truncf %7 : vector<1024x128xf32> to vector<1024x128xbf16>
    %c0_7 = arith.constant 0 : index
    %c0_8 = arith.constant 0 : index
    %9 = vector.load %arg3[%c0_7, %c0_8] : memref<128x128xbf16, #tpu.memory_space<vmem>>, vector<128x128xbf16>
    %cst_9 = arith.constant dense<0.000000e+00> : vector<1024x128xf32>
    %10 = tpu.matmul %8, %9, %cst_9 {dimension_numbers = #tpu.dot_dimension_numbers<[1], [0], [0], [1], [0, 0, 1, 1], [], []>} : vector<1024x128xbf16>, vector<128x128xbf16>, vector<1024x128xf32> -> vector<1024x128xf32>
    %11 = arith.truncf %10 : vector<1024x128xf32> to vector<1024x128xbf16>
    %c0_10 = arith.constant 0 : index
    %c0_11 = arith.constant 0 : index
    %12 = vector.load %arg0[%c0_10, %c0_11] : memref<1024x1024xbf16, #tpu.memory_space<vmem>>, vector<1024x1024xbf16>
    %cst_12 = arith.constant dense<0.000000e+00> : vector<1024x128xf32>
    %13 = tpu.matmul %12, %11, %cst_12 {dimension_numbers = #tpu.dot_dimension_numbers<[1], [0], [0], [1], [0, 0, 1, 1], [], []>} : vector<1024x1024xbf16>, vector<1024x128xbf16>, vector<1024x128xf32> -> vector<1024x128xf32>
    %cst_13 = arith.constant 0.000000e+00 : f32
    %14 = vector.broadcast %cst_13 : f32 to vector<1024x128xf32>
    %15 = arith.maximumf %13, %14 : vector<1024x128xf32>
    %16 = arith.truncf %15 : vector<1024x128xf32> to vector<1024x128xbf16>
    %c0_14 = arith.constant 0 : index
    %c0_15 = arith.constant 0 : index
    %17 = vector.load %arg4[%c0_14, %c0_15] : memref<128x128xbf16, #tpu.memory_space<vmem>>, vector<128x128xbf16>
    %cst_16 = arith.constant dense<0.000000e+00> : vector<1024x128xf32>
    %18 = tpu.matmul %16, %17, %cst_16 {dimension_numbers = #tpu.dot_dimension_numbers<[1], [0], [0], [1], [0, 0, 1, 1], [], []>} : vector<1024x128xbf16>, vector<128x128xbf16>, vector<1024x128xf32> -> vector<1024x128xf32>
    %19 = arith.truncf %18 : vector<1024x128xf32> to vector<1024x128xbf16>
    %c0_17 = arith.constant 0 : index
    %c0_18 = arith.constant 0 : index
    %20 = vector.load %arg0[%c0_17, %c0_18] : memref<1024x1024xbf16, #tpu.memory_space<vmem>>, vector<1024x1024xbf16>
    %cst_19 = arith.constant dense<0.000000e+00> : vector<1024x128xf32>
    %21 = tpu.matmul %20, %19, %cst_19 {dimension_numbers = #tpu.dot_dimension_numbers<[1], [0], [0], [1], [0, 0, 1, 1], [], []>} : vector<1024x1024xbf16>, vector<1024x128xbf16>, vector<1024x128xf32> -> vector<1024x128xf32>
    %c0_20 = arith.constant 0 : index
    %c0_21 = arith.constant 0 : index
    %22 = vector.load %arg5[%c0_20, %c0_21] : memref<1024x128xf32, #tpu.memory_space<vmem>>, vector<1024x128xf32>
    tpu.vector_store %arg5[%c0_20, %c0_21], %21 {strides = array<i32>} : memref<1024x128xf32, #tpu.memory_space<vmem>>, vector<1024x128xf32>,
    return
  }
}

</mosaic_0001>

<llo_original>
// kernel: gcn_forward.1
$region0: #{gcn_forward.1}
  #allocation0 [shape = 'u32[]', space=smem, size = 0x4, offset = 0x4, fixed_abs, tag = 'smem constant byte address 0x4 - core index']
  #allocation1 [shape = 'u32[72,128]{1,0:T(1,128)}', space=vmem, size = 0x9000, scoped, tag = 'internal scratch']
  %s0 = inlined_call_operand.hbm [shape: bf16[1024,1024], index: 0, kind: input, shape index: {}]
  %s1 = inlined_call_operand.vmem [shape: bf16[1024,128], index: 1, kind: input, shape index: {}]
  %s2 = inlined_call_operand.vmem [shape: bf16[128,128], index: 2, kind: input, shape index: {}]
  %s3 = inlined_call_operand.vmem [shape: bf16[128,128], index: 3, kind: input, shape index: {}]
  %s4 = inlined_call_operand.vmem [shape: bf16[128,128], index: 4, kind: input, shape index: {}]
  %s5 = inlined_call_operand.vmem [shape: f32[1024,128], index: 5, kind: output, shape index: {}]
  %s6 = sld [smem:[#allocation0]]
  $region34: #{gcn_forward.1} parent=0
    _
  %s8 = ssub.s32 1, %s6
  %s9 = scalar_select 0, %s8, %s6
  $region1: #{gcn_forward.1} parent=0
    #allocation2 [shape = 'u8[2097152]{0}', space=vmem, size = 0x200000, scoped, tag = 'input window, operand 0, single buffered']
    #allocation3 [shape = 's32[1]{0}', space=sflag, size = 0x4, scoped, tag = 'scoped memory for gcn_forward.1']
    %10 = vsyncpa [#allocation3], 0
    // Predicated region
    $region2: #{gcn_forward.1} parent=1 // pred_check
      _
    $region3: #{gcn_forward.1} parent=1 // pred_check_branch
      %12 = sbr.rel (0) target = $region5
    $region4: #{gcn_forward.1} parent=1 // pred_region
      %14 = vsyncadd [#allocation3], 0
      %s15 = sshll.u32 %s0, 4
      %s16 = int_to_ptr.hbm [resolvable:$true] %s15
      %s17 = sshll.u32 [#allocation2], 4
      %s18 = int_to_ptr.vmem [resolvable:$true] %s17
      %23 = dma.hbm_to_vmem [thread:$0]  %s16, 65536, %s18, [#allocation3], 512, 512, 32
    $region5: #{gcn_forward.1} parent=1 // pred_fallthru
      _
    // Predicated region
    $region6: #{gcn_forward.1} parent=1 // pred_check
      _
    $region7: #{gcn_forward.1} parent=1 // pred_check_branch
      %25 = sbr.rel (0) target = $region9
    $region8: #{gcn_forward.1} parent=1 // pred_region
      _
    $region9: #{gcn_forward.1} parent=1 // pred_fallthru
      _
    // Predicated region
    $region10: #{gcn_forward.1} parent=1 // pred_check
      _
    $region11: #{gcn_forward.1} parent=1 // pred_check_branch
      %27 = sbr.rel (0) target = $region13
    $region12: #{gcn_forward.1} parent=1 // pred_region
      _
    $region13: #{gcn_forward.1} parent=1 // pred_fallthru
      _
    // Predicated region
    $region14: #{gcn_forward.1} parent=1 // pred_check
      _
    $region15: #{gcn_forward.1} parent=1 // pred_check_branch
      %29 = sbr.rel (0) target = $region17
    $region16: #{gcn_forward.1} parent=1 // pred_region
      _
    $region17: #{gcn_forward.1} parent=1 // pred_fallthru
      _
    // Predicated region
    $region18: #{gcn_forward.1} parent=1 // pred_check
      _
    $region19: #{gcn_forward.1} parent=1 // pred_check_branch
      %31 = sbr.rel (0) target = $region21
    $region20: #{gcn_forward.1} parent=1 // pred_region
      _
    $region21: #{gcn_forward.1} parent=1 // pred_fallthru
      _
    // Predicated region
    $region22: #{gcn_forward.1} parent=1 // pred_check
      _
    $region23: #{gcn_forward.1} parent=1 // pred_check_branch
      %33 = sbr.rel (0) target = $region25
    $region24: #{gcn_forward.1} parent=1 // pred_region
      %35 = dma.done [#allocation3], 65536
    $region25: #{gcn_forward.1} parent=1 // pred_fallthru
      _
    %v36 = vld [vmem:[%s1] sm:$0xf]
    %v37 = vld [vmem:[%s1 + $0x4] sm:$0xf]
    %v38 = vld [vmem:[%s1 + $0x8] sm:$0xf]
    %v39 = vld [vmem:[%s1 + $0xc] sm:$0xf]
    %v40 = vld [vmem:[%s1 + $0x10] sm:$0xf]
    %v41 = vld [vmem:[%s1 + $0x14] sm:$0xf]
    %v42 = vld [vmem:[%s1 + $0x18] sm:$0xf]
    %v43 = vld [vmem:[%s1 + $0x1c] sm:$0xf]
    %v44 = vld [vmem:[%s1 + $0x20] sm:$0xf]
    %v45 = vld [vmem:[%s1 + $0x24] sm:$0xf]
    %v46 = vld [vmem:[%s1 + $0x28] sm:$0xf]
    %v47 = vld [vmem:[%s1 + $0x2c] sm:$0xf]
    %v48 = vld [vmem:[%s1 + $0x30] sm:$0xf]
    %v49 = vld [vmem:[%s1 + $0x34] sm:$0xf]
    %v50 = vld [vmem:[%s1 + $0x38] sm:$0xf]
    %v51 = vld [vmem:[%s1 + $0x3c] sm:$0xf]
    %v52 = vld [vmem:[%s1 + $0x40] sm:$0xf]
    %v53 = vld [vmem:[%s1 + $0x44] sm:$0xf]
    %v54 = vld [vmem:[%s1 + $0x48] sm:$0xf]
    %v55 = vld [vmem:[%s1 + $0x4c] sm:$0xf]
    %v56 = vld [vmem:[%s1 + $0x50] sm:$0xf]
    %v57 = vld [vmem:[%s1 + $0x54] sm:$0xf]
    %v58 = vld [vmem:[%s1 + $0x58] sm:$0xf]
    %v59 = vld [vmem:[%s1 + $0x5c] sm:$0xf]
    %v60 = vld [vmem:[%s1 + $0x60] sm:$0xf]
    %v61 = vld [vmem:[%s1 + $0x64] sm:$0xf]
    %v62 = vld [vmem:[%s1 + $0x68] sm:$0xf]
    %v63 = vld [vmem:[%s1 + $0x6c] sm:$0xf]
    %v64 = vld [vmem:[%s1 + $0x70] sm:$0xf]
    %v65 = vld [vmem:[%s1 + $0x74] sm:$0xf]
    %v66 = vld [vmem:[%s1 + $0x78] sm:$0xf]
    %v67 = vld [vmem:[%s1 + $0x7c] sm:$0xf]
    %v68 = vld [vmem:[%s1 + $0x80] sm:$0xf]
    %v69 = vld [vmem:[%s1 + $0x84] sm:$0xf]
    %v70 = vld [vmem:[%s1 + $0x88] sm:$0xf]
    %v71 = vld [vmem:[%s1 + $0x8c] sm:$0xf]
    %v72 = vld [vmem:[%s1 + $0x90] sm:$0xf]
    %v73 = vld [vmem:[%s1 + $0x94] sm:$0xf]
    %v74 = vld [vmem:[%s1 + $0x98] sm:$0xf]
    %v75 = vld [vmem:[%s1 + $0x9c] sm:$0xf]
    %v76 = vld [vmem:[%s1 + $0xa0] sm:$0xf]
    %v77 = vld [vmem:[%s1 + $0xa4] sm:$0xf]
    %v78 = vld [vmem:[%s1 + $0xa8] sm:$0xf]
    %v79 = vld [vmem:[%s1 + $0xac] sm:$0xf]
    %v80 = vld [vmem:[%s1 + $0xb0] sm:$0xf]
    %v81 = vld [vmem:[%s1 + $0xb4] sm:$0xf]
    %v82 = vld [vmem:[%s1 + $0xb8] sm:$0xf]
    %v83 = vld [vmem:[%s1 + $0xbc] sm:$0xf]
    %v84 = vld [vmem:[%s1 + $0xc0] sm:$0xf]
    %v85 = vld [vmem:[%s1 + $0xc4] sm:$0xf]
    %v86 = vld [vmem:[%s1 + $0xc8] sm:$0xf]
    %v87 = vld [vmem:[%s1 + $0xcc] sm:$0xf]
    %v88 = vld [vmem:[%s1 + $0xd0] sm:$0xf]
    %v89 = vld [vmem:[%s1 + $0xd4] sm:$0xf]
    %v90 = vld [vmem:[%s1 + $0xd8] sm:$0xf]
    %v91 = vld [vmem:[%s1 + $0xdc] sm:$0xf]
    %v92 = vld [vmem:[%s1 + $0xe0] sm:$0xf]
    %v93 = vld [vmem:[%s1 + $0xe4] sm:$0xf]
    %v94 = vld [vmem:[%s1 + $0xe8] sm:$0xf]
    %v95 = vld [vmem:[%s1 + $0xec] sm:$0xf]
    %v96 = vld [vmem:[%s1 + $0xf0] sm:$0xf]
    %v97 = vld [vmem:[%s1 + $0xf4] sm:$0xf]
    %v98 = vld [vmem:[%s1 + $0xf8] sm:$0xf]
    %v99 = vld [vmem:[%s1 + $0xfc] sm:$0xf]
    %v100 = vld [vmem:[%s1 + $0x100] sm:$0xf]
    %v101 = vld [vmem:[%s1 + $0x104] sm:$0xf]
    %v102 = vld [vmem:[%s1 + $0x108] sm:$0xf]
    %v103 = vld [vmem:[%s1 + $0x10c] sm:$0xf]
    %v104 = vld [vmem:[%s1 + $0x110] sm:$0xf]
    %v105 = vld [vmem:[%s1 + $0x114] sm:$0xf]
    %v106 = vld [vmem:[%s1 + $0x118] sm:$0xf]
    %v107 = vld [vmem:[%s1 + $0x11c] sm:$0xf]
    %v108 = vld [vmem:[%s1 + $0x120] sm:$0xf]
    %v109 = vld [vmem:[%s1 + $0x124] sm:$0xf]
    %v110 = vld [vmem:[%s1 + $0x128] sm:$0xf]
    %v111 = vld [vmem:[%s1 + $0x12c] sm:$0xf]
    %v112 = vld [vmem:[%s1 + $0x130] sm:$0xf]
    %v113 = vld [vmem:[%s1 + $0x134] sm:$0xf]
    %v114 = vld [vmem:[%s1 + $0x138] sm:$0xf]
    %v115 = vld [vmem:[%s1 + $0x13c] sm:$0xf]
    %v116 = vld [vmem:[%s1 + $0x140] sm:$0xf]
    %v117 = vld [vmem:[%s1 + $0x144] sm:$0xf]
    %v118 = vld [vmem:[%s1 + $0x148] sm:$0xf]
    %v119 = vld [vmem:[%s1 + $0x14c] sm:$0xf]
    %v120 = vld [vmem:[%s1 + $0x150] sm:$0xf]
    %v121 = vld [vmem:[%s1 + $0x154] sm:$0xf]
    %v122 = vld [vmem:[%s1 + $0x158] sm:$0xf]
    %v123 = vld [vmem:[%s1 + $0x15c] sm:$0xf]
    %v124 = vld [vmem:[%s1 + $0x160] sm:$0xf]
    %v125 = vld [vmem:[%s1 + $0x164] sm:$0xf]
    %v126 = vld [vmem:[%s1 + $0x168] sm:$0xf]
    %v127 = vld [vmem:[%s1 + $0x16c] sm:$0xf]
    %v128 = vld [vmem:[%s1 + $0x170] sm:$0xf]
    %v129 = vld [vmem:[%s1 + $0x174] sm:$0xf]
    %v130 = vld [vmem:[%s1 + $0x178] sm:$0xf]
    %v131 = vld [vmem:[%s1 + $0x17c] sm:$0xf]
    %v132 = vld [vmem:[%s1 + $0x180] sm:$0xf]
    %v133 = vld [vmem:[%s1 + $0x184] sm:$0xf]
    %v134 = vld [vmem:[%s1 + $0x188] sm:$0xf]
    %v135 = vld [vmem:[%s1 + $0x18c] sm:$0xf]
    %v136 = vld [vmem:[%s1 + $0x190] sm:$0xf]
    %v137 = vld [vmem:[%s1 + $0x194] sm:$0xf]
    %v138 = vld [vmem:[%s1 + $0x198] sm:$0xf]
    %v139 = vld [vmem:[%s1 + $0x19c] sm:$0xf]
    %v140 = vld [vmem:[%s1 + $0x1a0] sm:$0xf]
    %v141 = vld [vmem:[%s1 + $0x1a4] sm:$0xf]
    %v142 = vld [vmem:[%s1 + $0x1a8] sm:$0xf]
    %v143 = vld [vmem:[%s1 + $0x1ac] sm:$0xf]
    %v144 = vld [vmem:[%s1 + $0x1b0] sm:$0xf]
    %v145 = vld [vmem:[%s1 + $0x1b4] sm:$0xf]
    %v146 = vld [vmem:[%s1 + $0x1b8] sm:$0xf]
    %v147 = vld [vmem:[%s1 + $0x1bc] sm:$0xf]
    %v148 = vld [vmem:[%s1 + $0x1c0] sm:$0xf]
    %v149 = vld [vmem:[%s1 + $0x1c4] sm:$0xf]
    %v150 = vld [vmem:[%s1 + $0x1c8] sm:$0xf]
    %v151 = vld [vmem:[%s1 + $0x1cc] sm:$0xf]
    %v152 = vld [vmem:[%s1 + $0x1d0] sm:$0xf]
    %v153 = vld [vmem:[%s1 + $0x1d4] sm:$0xf]
    %v154 = vld [vmem:[%s1 + $0x1d8] sm:$0xf]
    %v155 = vld [vmem:[%s1 + $0x1dc] sm:$0xf]
    %v156 = vld [vmem:[%s1 + $0x1e0] sm:$0xf]
    %v157 = vld [vmem:[%s1 + $0x1e4] sm:$0xf]
    %v158 = vld [vmem:[%s1 + $0x1e8] sm:$0xf]
    %v159 = vld [vmem:[%s1 + $0x1ec] sm:$0xf]
    %v160 = vld [vmem:[%s1 + $0x1f0] sm:$0xf]
    %v161 = vld [vmem:[%s1 + $0x1f4] sm:$0xf]
    %v162 = vld [vmem:[%s1 + $0x1f8] sm:$0xf]
    %v163 = vld [vmem:[%s1 + $0x1fc] sm:$0xf]
    %v164 = vld [vmem:[%s2] sm:$0xf]
    %v165 = vld [vmem:[%s2 + $0x4] sm:$0xf]
    %v166 = vld [vmem:[%s2 + $0x8] sm:$0xf]
    %v167 = vld [vmem:[%s2 + $0xc] sm:$0xf]
    %v168 = vld [vmem:[%s2 + $0x10] sm:$0xf]
    %v169 = vld [vmem:[%s2 + $0x14] sm:$0xf]
    %v170 = vld [vmem:[%s2 + $0x18] sm:$0xf]
    %v171 = vld [vmem:[%s2 + $0x1c] sm:$0xf]
    %v172 = vld [vmem:[%s2 + $0x20] sm:$0xf]
    %v173 = vld [vmem:[%s2 + $0x24] sm:$0xf]
    %v174 = vld [vmem:[%s2 + $0x28] sm:$0xf]
    %v175 = vld [vmem:[%s2 + $0x2c] sm:$0xf]
    %v176 = vld [vmem:[%s2 + $0x30] sm:$0xf]
    %v177 = vld [vmem:[%s2 + $0x34] sm:$0xf]
    %v178 = vld [vmem:[%s2 + $0x38] sm:$0xf]
    %v179 = vld [vmem:[%s2 + $0x3c] sm:$0xf]
    %v308 = vunpack.c.l.b16 %v36
    %v309 = vunpack.c.l.b16 %v37
    %v310 = vunpack.c.l.b16 %v38
    %v311 = vunpack.c.l.b16 %v39
    %v312 = vunpack.c.l.b16 %v40
    %v313 = vunpack.c.l.b16 %v41
    %v314 = vunpack.c.l.b16 %v42
    %v315 = vunpack.c.l.b16 %v43
    %v316 = vunpack.c.l.b16 %v44
    %v317 = vunpack.c.l.b16 %v45
    %v318 = vunpack.c.l.b16 %v46
    %v319 = vunpack.c.l.b16 %v47
    %v320 = vunpack.c.l.b16 %v48
    %v321 = vunpack.c.l.b16 %v49
    %v322 = vunpack.c.l.b16 %v50
    %v323 = vunpack.c.l.b16 %v51
    %v324 = vunpack.c.l.b16 %v52
    %v325 = vunpack.c.l.b16 %v53
    %v326 = vunpack.c.l.b16 %v54
    %v327 = vunpack.c.l.b16 %v55
    %v328 = vunpack.c.l.b16 %v56
    %v329 = vunpack.c.l.b16 %v57
    %v330 = vunpack.c.l.b16 %v58
    %v331 = vunpack.c.l.b16 %v59
    %v332 = vunpack.c.l.b16 %v60
    %v333 = vunpack.c.l.b16 %v61
    %v334 = vunpack.c.l.b16 %v62
    %v335 = vunpack.c.l.b16 %v63
    %v336 = vunpack.c.l.b16 %v64
    %v337 = vunpack.c.l.b16 %v65
    %v338 = vunpack.c.l.b16 %v66
    %v339 = vunpack.c.l.b16 %v67
    %v340 = vunpack.c.l.b16 %v68
    %v341 = vunpack.c.l.b16 %v69
    %v342 = vunpack.c.l.b16 %v70
    %v343 = vunpack.c.l.b16 %v71
    %v344 = vunpack.c.l.b16 %v72
    %v345 = vunpack.c.l.b16 %v73
    %v346 = vunpack.c.l.b16 %v74
    %v347 = vunpack.c.l.b16 %v75
    %v348 = vunpack.c.l.b16 %v76
    %v349 = vunpack.c.l.b16 %v77
    %v350 = vunpack.c.l.b16 %v78
    %v351 = vunpack.c.l.b16 %v79
    %v352 = vunpack.c.l.b16 %v80
    %v353 = vunpack.c.l.b16 %v81
    %v354 = vunpack.c.l.b16 %v82
    %v355 = vunpack.c.l.b16 %v83
    %v356 = vunpack.c.l.b16 %v84
    %v357 = vunpack.c.l.b16 %v85
    %v358 = vunpack.c.l.b16 %v86
    %v359 = vunpack.c.l.b16 %v87
    %v360 = vunpack.c.l.b16 %v88
    %v361 = vunpack.c.l.b16 %v89
    %v362 = vunpack.c.l.b16 %v90
    %v363 = vunpack.c.l.b16 %v91
    %v364 = vunpack.c.l.b16 %v92
    %v365 = vunpack.c.l.b16 %v93
    %v366 = vunpack.c.l.b16 %v94
    %v367 = vunpack.c.l.b16 %v95
    %v368 = vunpack.c.l.b16 %v96
    %v369 = vunpack.c.l.b16 %v97
    %v370 = vunpack.c.l.b16 %v98
    %v371 = vunpack.c.l.b16 %v99
    %v372 = vunpack.c.l.b16 %v100
    %v373 = vunpack.c.l.b16 %v101
    %v374 = vunpack.c.l.b16 %v102
    %v375 = vunpack.c.l.b16 %v103
    %v376 = vunpack.c.l.b16 %v104
    %v377 = vunpack.c.l.b16 %v105
    %v378 = vunpack.c.l.b16 %v106
    %v379 = vunpack.c.l.b16 %v107
    %v380 = vunpack.c.l.b16 %v108
    %v381 = vunpack.c.l.b16 %v109
    %v382 = vunpack.c.l.b16 %v110
    %v383 = vunpack.c.l.b16 %v111
    %v384 = vunpack.c.l.b16 %v112
    %v385 = vunpack.c.l.b16 %v113
    %v386 = vunpack.c.l.b16 %v114
    %v387 = vunpack.c.l.b16 %v115
    %v388 = vunpack.c.l.b16 %v116
    %v389 = vunpack.c.l.b16 %v117
    %v390 = vunpack.c.l.b16 %v118
    %v391 = vunpack.c.l.b16 %v119
    %v392 = vunpack.c.l.b16 %v120
    %v393 = vunpack.c.l.b16 %v121
    %v394 = vunpack.c.l.b16 %v122
    %v395 = vunpack.c.l.b16 %v123
    %v396 = vunpack.c.l.b16 %v124
    %v397 = vunpack.c.l.b16 %v125
    %v398 = vunpack.c.l.b16 %v126
    %v399 = vunpack.c.l.b16 %v127
    %v400 = vunpack.c.l.b16 %v128
    %v401 = vunpack.c.l.b16 %v129
    %v402 = vunpack.c.l.b16 %v130
    %v403 = vunpack.c.l.b16 %v131
    %v404 = vunpack.c.l.b16 %v132
    %v405 = vunpack.c.l.b16 %v133
    %v406 = vunpack.c.l.b16 %v134
    %v407 = vunpack.c.l.b16 %v135
    %v408 = vunpack.c.l.b16 %v136
    %v409 = vunpack.c.l.b16 %v137
    %v410 = vunpack.c.l.b16 %v138
    %v411 = vunpack.c.l.b16 %v139
    %v412 = vunpack.c.l.b16 %v140
    %v413 = vunpack.c.l.b16 %v141
    %v414 = vunpack.c.l.b16 %v142
    %v415 = vunpack.c.l.b16 %v143
    %v416 = vunpack.c.l.b16 %v144
    %v417 = vunpack.c.l.b16 %v145
    %v418 = vunpack.c.l.b16 %v146
    %v419 = vunpack.c.l.b16 %v147
    %v420 = vunpack.c.l.b16 %v148
    %v421 = vunpack.c.l.b16 %v149
    %v422 = vunpack.c.l.b16 %v150
    %v423 = vunpack.c.l.b16 %v151
    %v424 = vunpack.c.l.b16 %v152
    %v425 = vunpack.c.l.b16 %v153
    %v426 = vunpack.c.l.b16 %v154
    %v427 = vunpack.c.l.b16 %v155
    %v428 = vunpack.c.l.b16 %v156
    %v429 = vunpack.c.l.b16 %v157
    %v430 = vunpack.c.l.b16 %v158
    %v431 = vunpack.c.l.b16 %v159
    %v432 = vunpack.c.l.b16 %v160
    %v433 = vunpack.c.l.b16 %v161
    %v434 = vunpack.c.l.b16 %v162
    %v435 = vunpack.c.l.b16 %v163
    %v436 = vpack.c.b16 %v309, %v308
    %v437 = vpack.c.b16 %v311, %v310
    %v438 = vpack.c.b16 %v313, %v312
    %v439 = vpack.c.b16 %v315, %v314
    %v440 = vpack.c.b16 %v317, %v316
    %v441 = vpack.c.b16 %v319, %v318
    %v442 = vpack.c.b16 %v321, %v320
    %v443 = vpack.c.b16 %v323, %v322
    %v444 = vpack.c.b16 %v325, %v324
    %v445 = vpack.c.b16 %v327, %v326
    %v446 = vpack.c.b16 %v329, %v328
    %v447 = vpack.c.b16 %v331, %v330
    %v448 = vpack.c.b16 %v333, %v332
    %v449 = vpack.c.b16 %v335, %v334
    %v450 = vpack.c.b16 %v337, %v336
    %v451 = vpack.c.b16 %v339, %v338
    %v452 = vpack.c.b16 %v341, %v340
    %v453 = vpack.c.b16 %v343, %v342
    %v454 = vpack.c.b16 %v345, %v344
    %v455 = vpack.c.b16 %v347, %v346
    %v456 = vpack.c.b16 %v349, %v348
    %v457 = vpack.c.b16 %v351, %v350
    %v458 = vpack.c.b16 %v353, %v352
    %v459 = vpack.c.b16 %v355, %v354
    %v460 = vpack.c.b16 %v357, %v356
    %v461 = vpack.c.b16 %v359, %v358
    %v462 = vpack.c.b16 %v361, %v360
    %v463 = vpack.c.b16 %v363, %v362
    %v464 = vpack.c.b16 %v365, %v364
    %v465 = vpack.c.b16 %v367, %v366
    %v466 = vpack.c.b16 %v369, %v368
    %v467 = vpack.c.b16 %v371, %v370
    %v468 = vpack.c.b16 %v373, %v372
    %v469 = vpack.c.b16 %v375, %v374
    %v470 = vpack.c.b16 %v377, %v376
    %v471 = vpack.c.b16 %v379, %v378
    %v472 = vpack.c.b16 %v381, %v380
    %v473 = vpack.c.b16 %v383, %v382
    %v474 = vpack.c.b16 %v385, %v384
    %v475 = vpack.c.b16 %v387, %v386
    %v476 = vpack.c.b16 %v389, %v388
    %v477 = vpack.c.b16 %v391, %v390
    %v478 = vpack.c.b16 %v393, %v392
    %v479 = vpack.c.b16 %v395, %v394
    %v480 = vpack.c.b16 %v397, %v396
    %v481 = vpack.c.b16 %v399, %v398
    %v482 = vpack.c.b16 %v401, %v400
    %v483 = vpack.c.b16 %v403, %v402
    %v484 = vpack.c.b16 %v405, %v404
    %v485 = vpack.c.b16 %v407, %v406
    %v486 = vpack.c.b16 %v409, %v408
    %v487 = vpack.c.b16 %v411, %v410
    %v488 = vpack.c.b16 %v413, %v412
    %v489 = vpack.c.b16 %v415, %v414
    %v490 = vpack.c.b16 %v417, %v416
    %v491 = vpack.c.b16 %v419, %v418
    %v492 = vpack.c.b16 %v421, %v420
    %v493 = vpack.c.b16 %v423, %v422
    %v494 = vpack.c.b16 %v425, %v424
    %v495 = vpack.c.b16 %v427, %v426
    %v496 = vpack.c.b16 %v429, %v428
    %v497 = vpack.c.b16 %v431, %v430
    %v498 = vpack.c.b16 %v433, %v432
    %v499 = vpack.c.b16 %v435, %v434
    %v580 = vunpack.c.l.b16 %v164
    %v581 = vunpack.c.l.b16 %v165
    %v582 = vunpack.c.l.b16 %v166
    %v583 = vunpack.c.l.b16 %v167
    %v584 = vunpack.c.l.b16 %v168
    %v585 = vunpack.c.l.b16 %v169
    %v586 = vunpack.c.l.b16 %v170
    %v587 = vunpack.c.l.b16 %v171
    %v588 = vunpack.c.l.b16 %v172
    %v589 = vunpack.c.l.b16 %v173
    %v590 = vunpack.c.l.b16 %v174
    %v591 = vunpack.c.l.b16 %v175
    %v592 = vunpack.c.l.b16 %v176
    %v593 = vunpack.c.l.b16 %v177
    %v594 = vunpack.c.l.b16 %v178
    %v595 = vunpack.c.l.b16 %v179
    %v596 = vpack.c.b16 %v581, %v580
    %v597 = vpack.c.b16 %v583, %v582
    %v598 = vpack.c.b16 %v585, %v584
    %v599 = vpack.c.b16 %v587, %v586
    %v600 = vpack.c.b16 %v589, %v588
    %v601 = vpack.c.b16 %v591, %v590
    %v602 = vpack.c.b16 %v593, %v592
    %v603 = vpack.c.b16 %v595, %v594
    %612 = vmatpush.bf16.msra.mxu0 %v603
    %613 = vmatpush.bf16.msra.mxu0 %v602
    %614 = vmatpush.bf16.msra.mxu0 %v601
    %615 = vmatpush.bf16.msra.mxu0 %v600
    %616 = vmatpush.bf16.msra.mxu0 %v599
    %617 = vmatpush.bf16.msra.mxu0 %v598
    %618 = vmatpush.bf16.msra.mxu0 %v597
    %619 = vmatpush.bf16.msra.mxu0 %v596
    %620 = vmatmul.bf16.gmra.mxu0 %v436
    %v621 = vpop.f32.mrf.mxu0
    %v622 = vadd.f32 0.0, %v621
    %v623 = vpop.f32.mrf.mxu0
    %v624 = vadd.f32 0.0, %v623
    %625 = vmatmul.bf16.gmra.mxu0 %v437
    %v626 = vpop.f32.mrf.mxu0
    %v627 = vadd.f32 0.0, %v626
    %v628 = vpop.f32.mrf.mxu0
    %v629 = vadd.f32 0.0, %v628
    %630 = vmatmul.bf16.gmra.mxu0 %v438
    %v631 = vpop.f32.mrf.mxu0
    %v632 = vadd.f32 0.0, %v631
    %v633 = vpop.f32.mrf.mxu0
    %v634 = vadd.f32 0.0, %v633
    %635 = vmatmul.bf16.gmra.mxu0 %v439
    %v636 = vpop.f32.mrf.mxu0
    %v637 = vadd.f32 0.0, %v636
    %v638 = vpop.f32.mrf.mxu0
    %v639 = vadd.f32 0.0, %v638
    %640 = vmatmul.bf16.gmra.mxu0 %v440
    %v641 = vpop.f32.mrf.mxu0
    %v642 = vadd.f32 0.0, %v641
    %v643 = vpop.f32.mrf.mxu0
    %v644 = vadd.f32 0.0, %v643
    %645 = vmatmul.bf16.gmra.mxu0 %v441
    %v646 = vpop.f32.mrf.mxu0
    %v647 = vadd.f32 0.0, %v646
    %v648 = vpop.f32.mrf.mxu0
    %v649 = vadd.f32 0.0, %v648
    %650 = vmatmul.bf16.gmra.mxu0 %v442
    %v651 = vpop.f32.mrf.mxu0
    %v652 = vadd.f32 0.0, %v651
    %v653 = vpop.f32.mrf.mxu0
    %v654 = vadd.f32 0.0, %v653
    %655 = vmatmul.bf16.gmra.mxu0 %v443
    %v656 = vpop.f32.mrf.mxu0
    %v657 = vadd.f32 0.0, %v656
    %v658 = vpop.f32.mrf.mxu0
    %v659 = vadd.f32 0.0, %v658
    %660 = vmatmul.bf16.gmra.mxu0 %v444
    %v661 = vpop.f32.mrf.mxu0
    %v662 = vadd.f32 0.0, %v661
    %v663 = vpop.f32.mrf.mxu0
    %v664 = vadd.f32 0.0, %v663
    %665 = vmatmul.bf16.gmra.mxu0 %v445
    %v666 = vpop.f32.mrf.mxu0
    %v667 = vadd.f32 0.0, %v666
    %v668 = vpop.f32.mrf.mxu0
    %v669 = vadd.f32 0.0, %v668
    %670 = vmatmul.bf16.gmra.mxu0 %v446
    %v671 = vpop.f32.mrf.mxu0
    %v672 = vadd.f32 0.0, %v671
    %v673 = vpop.f32.mrf.mxu0
    %v674 = vadd.f32 0.0, %v673
    %675 = vmatmul.bf16.gmra.mxu0 %v447
    %v676 = vpop.f32.mrf.mxu0
    %v677 = vadd.f32 0.0, %v676
    %v678 = vpop.f32.mrf.mxu0
    %v679 = vadd.f32 0.0, %v678
    %680 = vmatmul.bf16.gmra.mxu0 %v448
    %v681 = vpop.f32.mrf.mxu0
    %v682 = vadd.f32 0.0, %v681
    %v683 = vpop.f32.mrf.mxu0
    %v684 = vadd.f32 0.0, %v683
    %685 = vmatmul.bf16.gmra.mxu0 %v449
    %v686 = vpop.f32.mrf.mxu0
    %v687 = vadd.f32 0.0, %v686
    %v688 = vpop.f32.mrf.mxu0
    %v689 = vadd.f32 0.0, %v688
    %690 = vmatmul.bf16.gmra.mxu0 %v450
    %v691 = vpop.f32.mrf.mxu0
    %v692 = vadd.f32 0.0, %v691
    %v693 = vpop.f32.mrf.mxu0
    %v694 = vadd.f32 0.0, %v693
    %695 = vmatmul.bf16.gmra.mxu0 %v451
    %v696 = vpop.f32.mrf.mxu0
    %v697 = vadd.f32 0.0, %v696
    %v698 = vpop.f32.mrf.mxu0
    %v699 = vadd.f32 0.0, %v698
    %700 = vmatmul.bf16.gmra.mxu0 %v452
    %v701 = vpop.f32.mrf.mxu0
    %v702 = vadd.f32 0.0, %v701
    %v703 = vpop.f32.mrf.mxu0
    %v704 = vadd.f32 0.0, %v703
    %705 = vmatmul.bf16.gmra.mxu0 %v453
    %v706 = vpop.f32.mrf.mxu0
    %v707 = vadd.f32 0.0, %v706
    %v708 = vpop.f32.mrf.mxu0
    %v709 = vadd.f32 0.0, %v708
    %710 = vmatmul.bf16.gmra.mxu0 %v454
    %v711 = vpop.f32.mrf.mxu0
    %v712 = vadd.f32 0.0, %v711
    %v713 = vpop.f32.mrf.mxu0
    %v714 = vadd.f32 0.0, %v713
    %715 = vmatmul.bf16.gmra.mxu0 %v455
    %v716 = vpop.f32.mrf.mxu0
    %v717 = vadd.f32 0.0, %v716
    %v718 = vpop.f32.mrf.mxu0
    %v719 = vadd.f32 0.0, %v718
    %720 = vmatmul.bf16.gmra.mxu0 %v456
    %v721 = vpop.f32.mrf.mxu0
    %v722 = vadd.f32 0.0, %v721
    %v723 = vpop.f32.mrf.mxu0
    %v724 = vadd.f32 0.0, %v723
    %725 = vmatmul.bf16.gmra.mxu0 %v457
    %v726 = vpop.f32.mrf.mxu0
    %v727 = vadd.f32 0.0, %v726
    %v728 = vpop.f32.mrf.mxu0
    %v729 = vadd.f32 0.0, %v728
    %730 = vmatmul.bf16.gmra.mxu0 %v458
    %v731 = vpop.f32.mrf.mxu0
    %v732 = vadd.f32 0.0, %v731
    %v733 = vpop.f32.mrf.mxu0
    %v734 = vadd.f32 0.0, %v733
    %735 = vmatmul.bf16.gmra.mxu0 %v459
    %v736 = vpop.f32.mrf.mxu0
    %v737 = vadd.f32 0.0, %v736
    %v738 = vpop.f32.mrf.mxu0
    %v739 = vadd.f32 0.0, %v738
    %740 = vmatmul.bf16.gmra.mxu0 %v460
    %v741 = vpop.f32.mrf.mxu0
    %v742 = vadd.f32 0.0, %v741
    %v743 = vpop.f32.mrf.mxu0
    %v744 = vadd.f32 0.0, %v743
    %745 = vmatmul.bf16.gmra.mxu0 %v461
    %v746 = vpop.f32.mrf.mxu0
    %v747 = vadd.f32 0.0, %v746
    %v748 = vpop.f32.mrf.mxu0
    %v749 = vadd.f32 0.0, %v748
    %750 = vmatmul.bf16.gmra.mxu0 %v462
    %v751 = vpop.f32.mrf.mxu0
    %v752 = vadd.f32 0.0, %v751
    %v753 = vpop.f32.mrf.mxu0
    %v754 = vadd.f32 0.0, %v753
    %755 = vmatmul.bf16.gmra.mxu0 %v463
    %v756 = vpop.f32.mrf.mxu0
    %v757 = vadd.f32 0.0, %v756
    %v758 = vpop.f32.mrf.mxu0
    %v759 = vadd.f32 0.0, %v758
    %760 = vmatmul.bf16.gmra.mxu0 %v464
    %v761 = vpop.f32.mrf.mxu0
    %v762 = vadd.f32 0.0, %v761
    %v763 = vpop.f32.mrf.mxu0
    %v764 = vadd.f32 0.0, %v763
    %765 = vmatmul.bf16.gmra.mxu0 %v465
    %v766 = vpop.f32.mrf.mxu0
    %v767 = vadd.f32 0.0, %v766
    %v768 = vpop.f32.mrf.mxu0
    %v769 = vadd.f32 0.0, %v768
    %770 = vmatmul.bf16.gmra.mxu0 %v466
    %v771 = vpop.f32.mrf.mxu0
    %v772 = vadd.f32 0.0, %v771
    %v773 = vpop.f32.mrf.mxu0
    %v774 = vadd.f32 0.0, %v773
    %775 = vmatmul.bf16.gmra.mxu0 %v467
    %v776 = vpop.f32.mrf.mxu0
    %v777 = vadd.f32 0.0, %v776
    %v778 = vpop.f32.mrf.mxu0
    %v779 = vadd.f32 0.0, %v778
    %780 = vmatmul.bf16.gmra.mxu0 %v468
    %v781 = vpop.f32.mrf.mxu0
    %v782 = vadd.f32 0.0, %v781
    %v783 = vpop.f32.mrf.mxu0
    %v784 = vadd.f32 0.0, %v783
    %785 = vmatmul.bf16.gmra.mxu0 %v469
    %v786 = vpop.f32.mrf.mxu0
    %v787 = vadd.f32 0.0, %v786
    %v788 = vpop.f32.mrf.mxu0
    %v789 = vadd.f32 0.0, %v788
    %790 = vmatmul.bf16.gmra.mxu0 %v470
    %v791 = vpop.f32.mrf.mxu0
    %v792 = vadd.f32 0.0, %v791
    %v793 = vpop.f32.mrf.mxu0
    %v794 = vadd.f32 0.0, %v793
    %795 = vmatmul.bf16.gmra.mxu0 %v471
    %v796 = vpop.f32.mrf.mxu0
    %v797 = vadd.f32 0.0, %v796
    %v798 = vpop.f32.mrf.mxu0
    %v799 = vadd.f32 0.0, %v798
    %800 = vmatmul.bf16.gmra.mxu0 %v472
    %v801 = vpop.f32.mrf.mxu0
    %v802 = vadd.f32 0.0, %v801
    %v803 = vpop.f32.mrf.mxu0
    %v804 = vadd.f32 0.0, %v803
    %805 = vmatmul.bf16.gmra.mxu0 %v473
    %v806 = vpop.f32.mrf.mxu0
    %v807 = vadd.f32 0.0, %v806
    %v808 = vpop.f32.mrf.mxu0
    %v809 = vadd.f32 0.0, %v808
    %810 = vmatmul.bf16.gmra.mxu0 %v474
    %v811 = vpop.f32.mrf.mxu0
    %v812 = vadd.f32 0.0, %v811
    %v813 = vpop.f32.mrf.mxu0
    %v814 = vadd.f32 0.0, %v813
    %815 = vmatmul.bf16.gmra.mxu0 %v475
    %v816 = vpop.f32.mrf.mxu0
    %v817 = vadd.f32 0.0, %v816
    %v818 = vpop.f32.mrf.mxu0
    %v819 = vadd.f32 0.0, %v818
    %820 = vmatmul.bf16.gmra.mxu0 %v476
    %v821 = vpop.f32.mrf.mxu0
    %v822 = vadd.f32 0.0, %v821
    %v823 = vpop.f32.mrf.mxu0
    %v824 = vadd.f32 0.0, %v823
    %825 = vmatmul.bf16.gmra.mxu0 %v477
    %v826 = vpop.f32.mrf.mxu0
    %v827 = vadd.f32 0.0, %v826
    %v828 = vpop.f32.mrf.mxu0
    %v829 = vadd.f32 0.0, %v828
    %830 = vmatmul.bf16.gmra.mxu0 %v478
    %v831 = vpop.f32.mrf.mxu0
    %v832 = vadd.f32 0.0, %v831
    %v833 = vpop.f32.mrf.mxu0
    %v834 = vadd.f32 0.0, %v833
    %835 = vmatmul.bf16.gmra.mxu0 %v479
    %v836 = vpop.f32.mrf.mxu0
    %v837 = vadd.f32 0.0, %v836
    %v838 = vpop.f32.mrf.mxu0
    %v839 = vadd.f32 0.0, %v838
    %840 = vmatmul.bf16.gmra.mxu0 %v480
    %v841 = vpop.f32.mrf.mxu0
    %v842 = vadd.f32 0.0, %v841
    %v843 = vpop.f32.mrf.mxu0
    %v844 = vadd.f32 0.0, %v843
    %845 = vmatmul.bf16.gmra.mxu0 %v481
    %v846 = vpop.f32.mrf.mxu0
    %v847 = vadd.f32 0.0, %v846
    %v848 = vpop.f32.mrf.mxu0
    %v849 = vadd.f32 0.0, %v848
    %850 = vmatmul.bf16.gmra.mxu0 %v482
    %v851 = vpop.f32.mrf.mxu0
    %v852 = vadd.f32 0.0, %v851
    %v853 = vpop.f32.mrf.mxu0
    %v854 = vadd.f32 0.0, %v853
    %855 = vmatmul.bf16.gmra.mxu0 %v483
    %v856 = vpop.f32.mrf.mxu0
    %v857 = vadd.f32 0.0, %v856
    %v858 = vpop.f32.mrf.mxu0
    %v859 = vadd.f32 0.0, %v858
    %860 = vmatmul.bf16.gmra.mxu0 %v484
    %v861 = vpop.f32.mrf.mxu0
    %v862 = vadd.f32 0.0, %v861
    %v863 = vpop.f32.mrf.mxu0
    %v864 = vadd.f32 0.0, %v863
    %865 = vmatmul.bf16.gmra.mxu0 %v485
    %v866 = vpop.f32.mrf.mxu0
    %v867 = vadd.f32 0.0, %v866
    %v868 = vpop.f32.mrf.mxu0
    %v869 = vadd.f32 0.0, %v868
    %870 = vmatmul.bf16.gmra.mxu0 %v486
    %v871 = vpop.f32.mrf.mxu0
    %v872 = vadd.f32 0.0, %v871
    %v873 = vpop.f32.mrf.mxu0
    %v874 = vadd.f32 0.0, %v873
    %875 = vmatmul.bf16.gmra.mxu0 %v487
    %v876 = vpop.f32.mrf.mxu0
    %v877 = vadd.f32 0.0, %v876
    %v878 = vpop.f32.mrf.mxu0
    %v879 = vadd.f32 0.0, %v878
    %880 = vmatmul.bf16.gmra.mxu0 %v488
    %v881 = vpop.f32.mrf.mxu0
    %v882 = vadd.f32 0.0, %v881
    %v883 = vpop.f32.mrf.mxu0
    %v884 = vadd.f32 0.0, %v883
    %885 = vmatmul.bf16.gmra.mxu0 %v489
    %v886 = vpop.f32.mrf.mxu0
    %v887 = vadd.f32 0.0, %v886
    %v888 = vpop.f32.mrf.mxu0
    %v889 = vadd.f32 0.0, %v888
    %890 = vmatmul.bf16.gmra.mxu0 %v490
    %v891 = vpop.f32.mrf.mxu0
    %v892 = vadd.f32 0.0, %v891
    %v893 = vpop.f32.mrf.mxu0
    %v894 = vadd.f32 0.0, %v893
    %895 = vmatmul.bf16.gmra.mxu0 %v491
    %v896 = vpop.f32.mrf.mxu0
    %v897 = vadd.f32 0.0, %v896
    %v898 = vpop.f32.mrf.mxu0
    %v899 = vadd.f32 0.0, %v898
    %900 = vmatmul.bf16.gmra.mxu0 %v492
    %v901 = vpop.f32.mrf.mxu0
    %v902 = vadd.f32 0.0, %v901
    %v903 = vpop.f32.mrf.mxu0
    %v904 = vadd.f32 0.0, %v903
    %905 = vmatmul.bf16.gmra.mxu0 %v493
    %v906 = vpop.f32.mrf.mxu0
    %v907 = vadd.f32 0.0, %v906
    %v908 = vpop.f32.mrf.mxu0
    %v909 = vadd.f32 0.0, %v908
    %910 = vmatmul.bf16.gmra.mxu0 %v494
    %v911 = vpop.f32.mrf.mxu0
    %v912 = vadd.f32 0.0, %v911
    %v913 = vpop.f32.mrf.mxu0
    %v914 = vadd.f32 0.0, %v913
    %915 = vmatmul.bf16.gmra.mxu0 %v495
    %v916 = vpop.f32.mrf.mxu0
    %v917 = vadd.f32 0.0, %v916
    %v918 = vpop.f32.mrf.mxu0
    %v919 = vadd.f32 0.0, %v918
    %920 = vmatmul.bf16.gmra.mxu0 %v496
    %v921 = vpop.f32.mrf.mxu0
    %v922 = vadd.f32 0.0, %v921
    %v923 = vpop.f32.mrf.mxu0
    %v924 = vadd.f32 0.0, %v923
    %925 = vmatmul.bf16.gmra.mxu0 %v497
    %v926 = vpop.f32.mrf.mxu0
    %v927 = vadd.f32 0.0, %v926
    %v928 = vpop.f32.mrf.mxu0
    %v929 = vadd.f32 0.0, %v928
    %930 = vmatmul.bf16.gmra.mxu0 %v498
    %v931 = vpop.f32.mrf.mxu0
    %v932 = vadd.f32 0.0, %v931
    %v933 = vpop.f32.mrf.mxu0
    %v934 = vadd.f32 0.0, %v933
    %935 = vmatmul.bf16.gmra.mxu0 %v499
    %v936 = vpop.f32.mrf.mxu0
    %v937 = vadd.f32 0.0, %v936
    %v938 = vpop.f32.mrf.mxu0
    %v939 = vadd.f32 0.0, %v938
    %940 = vdwg.mxu0
    %v941 = vpack.c.bf16 %v624, %v622
    %v942 = vpack.c.bf16 %v629, %v627
    %v943 = vpack.c.bf16 %v634, %v632
    %v944 = vpack.c.bf16 %v639, %v637
    %v945 = vpack.c.bf16 %v644, %v642
    %v946 = vpack.c.bf16 %v649, %v647
    %v947 = vpack.c.bf16 %v654, %v652
    %v948 = vpack.c.bf16 %v659, %v657
    %v949 = vpack.c.bf16 %v664, %v662
    %v950 = vpack.c.bf16 %v669, %v667
    %v951 = vpack.c.bf16 %v674, %v672
    %v952 = vpack.c.bf16 %v679, %v677
    %v953 = vpack.c.bf16 %v684, %v682
    %v954 = vpack.c.bf16 %v689, %v687
    %v955 = vpack.c.bf16 %v694, %v692
    %v956 = vpack.c.bf16 %v699, %v697
    %v957 = vpack.c.bf16 %v704, %v702
    %v958 = vpack.c.bf16 %v709, %v707
    %v959 = vpack.c.bf16 %v714, %v712
    %v960 = vpack.c.bf16 %v719, %v717
    %v961 = vpack.c.bf16 %v724, %v722
    %v962 = vpack.c.bf16 %v729, %v727
    %v963 = vpack.c.bf16 %v734, %v732
    %v964 = vpack.c.bf16 %v739, %v737
    %v965 = vpack.c.bf16 %v744, %v742
    %v966 = vpack.c.bf16 %v749, %v747
    %v967 = vpack.c.bf16 %v754, %v752
    %v968 = vpack.c.bf16 %v759, %v757
    %v969 = vpack.c.bf16 %v764, %v762
    %v970 = vpack.c.bf16 %v769, %v767
    %v971 = vpack.c.bf16 %v774, %v772
    %v972 = vpack.c.bf16 %v779, %v777
    %v973 = vpack.c.bf16 %v784, %v782
    %v974 = vpack.c.bf16 %v789, %v787
    %v975 = vpack.c.bf16 %v794, %v792
    %v976 = vpack.c.bf16 %v799, %v797
    %v977 = vpack.c.bf16 %v804, %v802
    %v978 = vpack.c.bf16 %v809, %v807
    %v979 = vpack.c.bf16 %v814, %v812
    %v980 = vpack.c.bf16 %v819, %v817
    %v981 = vpack.c.bf16 %v824, %v822
    %v982 = vpack.c.bf16 %v829, %v827
    %v983 = vpack.c.bf16 %v834, %v832
    %v984 = vpack.c.bf16 %v839, %v837
    %v985 = vpack.c.bf16 %v844, %v842
    %v986 = vpack.c.bf16 %v849, %v847
    %v987 = vpack.c.bf16 %v854, %v852
    %v988 = vpack.c.bf16 %v859, %v857
    %v989 = vpack.c.bf16 %v864, %v862
    %v990 = vpack.c.bf16 %v869, %v867
    %v991 = vpack.c.bf16 %v874, %v872
    %v992 = vpack.c.bf16 %v879, %v877
    %v993 = vpack.c.bf16 %v884, %v882
    %v994 = vpack.c.bf16 %v889, %v887
    %v995 = vpack.c.bf16 %v894, %v892
    %v996 = vpack.c.bf16 %v899, %v897
    %v997 = vpack.c.bf16 %v904, %v902
    %v998 = vpack.c.bf16 %v909, %v907
    %v999 = vpack.c.bf16 %v914, %v912
    %v1000 = vpack.c.bf16 %v919, %v917
    %v1001 = vpack.c.bf16 %v924, %v922
    %v1002 = vpack.c.bf16 %v929, %v927
    %v1003 = vpack.c.bf16 %v934, %v932
    %v1004 = vpack.c.bf16 %v939, %v937
    %v1005 = vld [vmem:[#allocation2] sm:$0xff]
    %v1006 = vld [vmem:[#allocation2 + $0x8] sm:$0xff]
    %v1007 = vld [vmem:[#allocation2 + $0x10] sm:$0xff]
    %v1008 = vld [vmem:[#allocation2 + $0x18] sm:$0xff]
    %v1009 = vld [vmem:[#allocation2 + $0x20] sm:$0xff]
    %v1010 = vld [vmem:[#allocation2 + $0x28] sm:$0xff]
    %v1011 = vld [vmem:[#allocation2 + $0x30] sm:$0xff]
    %v1012 = vld [vmem:[#allocation2 + $0x38] sm:$0xff]
    %v1013 = vld [vmem:[#allocation2 + $0x40] sm:$0xff]
    %v1014 = vld [vmem:[#allocation2 + $0x48] sm:$0xff]
    %v1015 = vld [vmem:[#allocation2 + $0x50] sm:$0xff]
    %v1016 = vld [vmem:[#allocation2 + $0x58] sm:$0xff]
    %v1017 = vld [vmem:[#allocation2 + $0x60] sm:$0xff]
    %v1018 = vld [vmem:[#allocation2 + $0x68] sm:$0xff]
    %v1019 = vld [vmem:[#allocation2 + $0x70] sm:$0xff]
    %v1020 = vld [vmem:[#allocation2 + $0x78] sm:$0xff]
    %v1021 = vld [vmem:[#allocation2 + $0x80] sm:$0xff]
    %v1022 = vld [vmem:[#allocation2 + $0x88] sm:$0xff]
    %v1023 = vld [vmem:[#allocation2 + $0x90] sm:$0xff]
    %v1024 = vld [vmem:[#allocation2 + $0x98] sm:$0xff]
    %v1025 = vld [vmem:[#allocation2 + $0xa0] sm:$0xff]
    %v1026 = vld [vmem:[#allocation2 + $0xa8] sm:$0xff]
    %v1027 = vld [vmem:[#allocation2 + $0xb0] sm:$0xff]
    %v1028 = vld [vmem:[#allocation2 + $0xb8] sm:$0xff]
    %v1029 = vld [vmem:[#allocation2 + $0xc0] sm:$0xff]
    %v1030 = vld [vmem:[#allocation2 + $0xc8] sm:$0xff]
    %v1031 = vld [vmem:[#allocation2 + $0xd0] sm:$0xff]
    %v1032 = vld [vmem:[#allocation2 + $0xd8] sm:$0xff]
    %v1033 = vld [vmem:[#allocation2 + $0xe0] sm:$0xff]
    %v1034 = vld [vmem:[#allocation2 + $0xe8] sm:$0xff]
    %v1035 = vld [vmem:[#allocation2 + $0xf0] sm:$0xff]
    %v1036 = vld [vmem:[#allocation2 + $0xf8] sm:$0xff]
    %v1037 = vld [vmem:[#allocation2 + $0x100] sm:$0xff]
    %v1038 = vld [vmem:[#allocation2 + $0x108] sm:$0xff]
    %v1039 = vld [vmem:[#allocation2 + $0x110] sm:$0xff]
    %v1040 = vld [vmem:[#allocation2 + $0x118] sm:$0xff]
    %v1041 = vld [vmem:[#allocation2 + $0x120] sm:$0xff]
    %v1042 = vld [vmem:[#allocation2 + $0x128] sm:$0xff]
    %v1043 = vld [vmem:[#allocation2 + $0x130] sm:$0xff]
    %v1044 = vld [vmem:[#allocation2 + $0x138] sm:$0xff]
    %v1045 = vld [vmem:[#allocation2 + $0x140] sm:$0xff]
    %v1046 = vld [vmem:[#allocation2 + $0x148] sm:$0xff]
    %v1047 = vld [vmem:[#allocation2 + $0x150] sm:$0xff]
    %v1048 = vld [vmem:[#allocation2 + $0x158] sm:$0xff]
    %v1049 = vld [vmem:[#allocation2 + $0x160] sm:$0xff]
    %v1050 = vld [vmem:[#allocation2 + $0x168] sm:$0xff]
    %v1051 = vld [vmem:[#allocation2 + $0x170] sm:$0xff]
    %v1052 = vld [vmem:[#allocation2 + $0x178] sm:$0xff]
    %v1053 = vld [vmem:[#allocation2 + $0x180] sm:$0xff]
    %v1054 = vld [vmem:[#allocation2 + $0x188] sm:$0xff]
    %v1055 = vld [vmem:[#allocation2 + $0x190] sm:$0xff]
    %v1056 = vld [vmem:[#allocation2 + $0x198] sm:$0xff]
    %v1057 = vld [vmem:[#allocation2 + $0x1a0] sm:$0xff]
    %v1058 = vld [vmem:[#allocation2 + $0x1a8] sm:$0xff]
    %v1059 = vld [vmem:[#allocation2 + $0x1b0] sm:$0xff]
    %v1060 = vld [vmem:[#allocation2 + $0x1b8] sm:$0xff]
    %v1061 = vld [vmem:[#allocation2 + $0x1c0] sm:$0xff]
    %v1062 = vld [vmem:[#allocation2 + $0x1c8] sm:$0xff]
    %v1063 = vld [vmem:[#allocation2 + $0x1d0] sm:$0xff]
    %v1064 = vld [vmem:[#allocation2 + $0x1d8] sm:$0xff]
    %v1065 = vld [vmem:[#allocation2 + $0x1e0] sm:$0xff]
    %v1066 = vld [vmem:[#allocation2 + $0x1e8] sm:$0xff]
    %v1067 = vld [vmem:[#allocation2 + $0x1f0] sm:$0xff]
    %v1068 = vld [vmem:[#allocation2 + $0x1f8] sm:$0xff]
    %v1069 = vld [vmem:[#allocation2 + $0x200] sm:$0xff]
    %v1070 = vld [vmem:[#allocation2 + $0x208] sm:$0xff]
    %v1071 = vld [vmem:[#allocation2 + $0x210] sm:$0xff]
    %v1072 = vld [vmem:[#allocation2 + $0x218] sm:$0xff]
    %v1073 = vld [vmem:[#allocation2 + $0x220] sm:$0xff]
    %v1074 = vld [vmem:[#allocation2 + $0x228] sm:$0xff]
    %v1075 = vld [vmem:[#allocation2 + $0x230] sm:$0xff]
    %v1076 = vld [vmem:[#allocation2 + $0x238] sm:$0xff]
    %v1077 = vld [vmem:[#allocation2 + $0x240] sm:$0xff]
    %v1078 = vld [vmem:[#allocation2 + $0x248] sm:$0xff]
    %v1079 = vld [vmem:[#allocation2 + $0x250] sm:$0xff]
    %v1080 = vld [vmem:[#allocation2 + $0x258] sm:$0xff]
    %v1081 = vld [vmem:[#allocation2 + $0x260] sm:$0xff]
    %v1082 = vld [vmem:[#allocation2 + $0x268] sm:$0xff]
    %v1083 = vld [vmem:[#allocation2 + $0x270] sm:$0xff]
    %v1084 = vld [vmem:[#allocation2 + $0x278] sm:$0xff]
    %v1085 = vld [vmem:[#allocation2 + $0x280] sm:$0xff]
    %v1086 = vld [vmem:[#allocation2 + $0x288] sm:$0xff]
    %v1087 = vld [vmem:[#allocation2 + $0x290] sm:$0xff]
    %v1088 = vld [vmem:[#allocation2 + $0x298] sm:$0xff]
    %v1089 = vld [vmem:[#allocation2 + $0x2a0] sm:$0xff]
    %v1090 = vld [vmem:[#allocation2 + $0x2a8] sm:$0xff]
    %v1091 = vld [vmem:[#allocation2 + $0x2b0] sm:$0xff]
    %v1092 = vld [vmem:[#allocation2 + $0x2b8] sm:$0xff]
    %v1093 = vld [vmem:[#allocation2 + $0x2c0] sm:$0xff]
    %v1094 = vld [vmem:[#allocation2 + $0x2c8] sm:$0xff]
    %v1095 = vld [vmem:[#allocation2 + $0x2d0] sm:$0xff]
    %v1096 = vld [vmem:[#allocation2 + $0x2d8] sm:$0xff]
    %v1097 = vld [vmem:[#allocation2 + $0x2e0] sm:$0xff]
    %v1098 = vld [vmem:[#allocation2 + $0x2e8] sm:$0xff]
    %v1099 = vld [vmem:[#allocation2 + $0x2f0] sm:$0xff]
    %v1100 = vld [vmem:[#allocation2 + $0x2f8] sm:$0xff]
    %v1101 = vld [vmem:[#allocation2 + $0x300] sm:$0xff]
    %v1102 = vld [vmem:[#allocation2 + $0x308] sm:$0xff]
    %v1103 = vld [vmem:[#allocation2 + $0x310] sm:$0xff]
    %v1104 = vld [vmem:[#allocation2 + $0x318] sm:$0xff]
    %v1105 = vld [vmem:[#allocation2 + $0x320] sm:$0xff]
    %v1106 = vld [vmem:[#allocation2 + $0x328] sm:$0xff]
    %v1107 = vld [vmem:[#allocation2 + $0x330] sm:$0xff]
    %v1108 = vld [vmem:[#allocation2 + $0x338] sm:$0xff]
    %v1109 = vld [vmem:[#allocation2 + $0x340] sm:$0xff]
    %v1110 = vld [vmem:[#allocation2 + $0x348] sm:$0xff]
    %v1111 = vld [vmem:[#allocation2 + $0x350] sm:$0xff]
    %v1112 = vld [vmem:[#allocation2 + $0x358] sm:$0xff]
    %v1113 = vld [vmem:[#allocation2 + $0x360] sm:$0xff]
    %v1114 = vld [vmem:[#allocation2 + $0x368] sm:$0xff]
    %v1115 = vld [vmem:[#allocation2 + $0x370] sm:$0xff]
    %v1116 = vld [vmem:[#allocation2 + $0x378] sm:$0xff]
    %v1117 = vld [vmem:[#allocation2 + $0x380] sm:$0xff]
    %v1118 = vld [vmem:[#allocation2 + $0x388] sm:$0xff]
    %v1119 = vld [vmem:[#allocation2 + $0x390] sm:$0xff]
    %v1120 = vld [vmem:[#allocation2 + $0x398] sm:$0xff]
    %v1121 = vld [vmem:[#allocation2 + $0x3a0] sm:$0xff]
    %v1122 = vld [vmem:[#allocation2 + $0x3a8] sm:$0xff]
    %v1123 = vld [vmem:[#allocation2 + $0x3b0] sm:$0xff]
    %v1124 = vld [vmem:[#allocation2 + $0x3b8] sm:$0xff]
    %v1125 = vld [vmem:[#allocation2 + $0x3c0] sm:$0xff]
    %v1126 = vld [vmem:[#allocation2 + $0x3c8] sm:$0xff]
    %v1127 = vld [vmem:[#allocation2 + $0x3d0] sm:$0xff]
    %v1128 = vld [vmem:[#allocation2 + $0x3d8] sm:$0xff]
    %v1129 = vld [vmem:[#allocation2 + $0x3e0] sm:$0xff]
    %v1130 = vld [vmem:[#allocation2 + $0x3e8] sm:$0xff]
    %v1131 = vld [vmem:[#allocation2 + $0x3f0] sm:$0xff]
    %v1132 = vld [vmem:[#allocation2 + $0x3f8] sm:$0xff]
    %v1133 = vld [vmem:[#allocation2 + $0x400] sm:$0xff]
    %v1134 = vld [vmem:[#allocation2 + $0x408] sm:$0xff]
    %v1135 = vld [vmem:[#allocation2 + $0x410] sm:$0xff]
    %v1136 = vld [vmem:[#allocation2 + $0x418] sm:$0xff]
    %v1137 = vld [vmem:[#allocation2 + $0x420] sm:$0xff]
    %v1138 = vld [vmem:[#allocation2 + $0x428] sm:$0xff]
    %v1139 = vld [vmem:[#allocation2 + $0x430] sm:$0xff]
    %v1140 = vld [vmem:[#allocation2 + $0x438] sm:$0xff]
    %v1141 = vld [vmem:[#allocation2 + $0x440] sm:$0xff]
    %v1142 = vld [vmem:[#allocation2 + $0x448] sm:$0xff]
    %v1143 = vld [vmem:[#allocation2 + $0x450] sm:$0xff]
    %v1144 = vld [vmem:[#allocation2 + $0x458] sm:$0xff]
    %v1145 = vld [vmem:[#allocation2 + $0x460] sm:$0xff]
    %v1146 = vld [vmem:[#allocation2 + $0x468] sm:$0xff]
    %v1147 = vld [vmem:[#allocation2 + $0x470] sm:$0xff]
    %v1148 = vld [vmem:[#allocation2 + $0x478] sm:$0xff]
    %v1149 = vld [vmem:[#allocation2 + $0x480] sm:$0xff]
    %v1150 = vld [vmem:[#allocation2 + $0x488] sm:$0xff]
    %v1151 = vld [vmem:[#allocation2 + $0x490] sm:$0xff]
    %v1152 = vld [vmem:[#allocation2 + $0x498] sm:$0xff]
    %v1153 = vld [vmem:[#allocation2 + $0x4a0] sm:$0xff]
    %v1154 = vld [vmem:[#allocation2 + $0x4a8] sm:$0xff]
    %v1155 = vld [vmem:[#allocation2 + $0x4b0] sm:$0xff]
    %v1156 = vld [vmem:[#allocation2 + $0x4b8] sm:$0xff]
    %v1157 = vld [vmem:[#allocation2 + $0x4c0] sm:$0xff]
    %v1158 = vld [vmem:[#allocation2 + $0x4c8] sm:$0xff]
    %v1159 = vld [vmem:[#allocation2 + $0x4d0] sm:$0xff]
    %v1160 = vld [vmem:[#allocation2 + $0x4d8] sm:$0xff]
    %v1161 = vld [vmem:[#allocation2 + $0x4e0] sm:$0xff]
    %v1162 = vld [vmem:[#allocation2 + $0x4e8] sm:$0xff]
    %v1163 = vld [vmem:[#allocation2 + $0x4f0] sm:$0xff]
    %v1164 = vld [vmem:[#allocation2 + $0x4f8] sm:$0xff]
    %v1165 = vld [vmem:[#allocation2 + $0x500] sm:$0xff]
    %v1166 = vld [vmem:[#allocation2 + $0x508] sm:$0xff]
    %v1167 = vld [vmem:[#allocation2 + $0x510] sm:$0xff]
    %v1168 = vld [vmem:[#allocation2 + $0x518] sm:$0xff]
    %v1169 = vld [vmem:[#allocation2 + $0x520] sm:$0xff]
    %v1170 = vld [vmem:[#allocation2 + $0x528] sm:$0xff]
    %v1171 = vld [vmem:[#allocation2 + $0x530] sm:$0xff]
    %v1172 = vld [vmem:[#allocation2 + $0x538] sm:$0xff]
    %v1173 = vld [vmem:[#allocation2 + $0x540] sm:$0xff]
    %v1174 = vld [vmem:[#allocation2 + $0x548] sm:$0xff]
    %v1175 = vld [vmem:[#allocation2 + $0x550] sm:$0xff]
    %v1176 = vld [vmem:[#allocation2 + $0x558] sm:$0xff]
    %v1177 = vld [vmem:[#allocation2 + $0x560] sm:$0xff]
    %v1178 = vld [vmem:[#allocation2 + $0x568] sm:$0xff]
    %v1179 = vld [vmem:[#allocation2 + $0x570] sm:$0xff]
    %v1180 = vld [vmem:[#allocation2 + $0x578] sm:$0xff]
    %v1181 = vld [vmem:[#allocation2 + $0x580] sm:$0xff]
    %v1182 = vld [vmem:[#allocation2 + $0x588] sm:$0xff]
    %v1183 = vld [vmem:[#allocation2 + $0x590] sm:$0xff]
    %v1184 = vld [vmem:[#allocation2 + $0x598] sm:$0xff]
    %v1185 = vld [vmem:[#allocation2 + $0x5a0] sm:$0xff]
    %v1186 = vld [vmem:[#allocation2 + $0x5a8] sm:$0xff]
    %v1187 = vld [vmem:[#allocation2 + $0x5b0] sm:$0xff]
    %v1188 = vld [vmem:[#allocation2 + $0x5b8] sm:$0xff]
    %v1189 = vld [vmem:[#allocation2 + $0x5c0] sm:$0xff]
    %v1190 = vld [vmem:[#allocation2 + $0x5c8] sm:$0xff]
    %v1191 = vld [vmem:[#allocation2 + $0x5d0] sm:$0xff]
    %v1192 = vld [vmem:[#allocation2 + $0x5d8] sm:$0xff]
    %v1193 = vld [vmem:[#allocation2 + $0x5e0] sm:$0xff]
    %v1194 = vld [vmem:[#allocation2 + $0x5e8] sm:$0xff]
    %v1195 = vld [vmem:[#allocation2 + $0x5f0] sm:$0xff]
    %v1196 = vld [vmem:[#allocation2 + $0x5f8] sm:$0xff]
    %v1197 = vld [vmem:[#allocation2 + $0x600] sm:$0xff]
    %v1198 = vld [vmem:[#allocation2 + $0x608] sm:$0xff]
    %v1199 = vld [vmem:[#allocation2 + $0x610] sm:$0xff]
    %v1200 = vld [vmem:[#allocation2 + $0x618] sm:$0xff]
    %v1201 = vld [vmem:[#allocation2 + $0x620] sm:$0xff]
    %v1202 = vld [vmem:[#allocation2 + $0x628] sm:$0xff]
    %v1203 = vld [vmem:[#allocation2 + $0x630] sm:$0xff]
    %v1204 = vld [vmem:[#allocation2 + $0x638] sm:$0xff]
    %v1205 = vld [vmem:[#allocation2 + $0x640] sm:$0xff]
    %v1206 = vld [vmem:[#allocation2 + $0x648] sm:$0xff]
    %v1207 = vld [vmem:[#allocation2 + $0x650] sm:$0xff]
    %v1208 = vld [vmem:[#allocation2 + $0x658] sm:$0xff]
    %v1209 = vld [vmem:[#allocation2 + $0x660] sm:$0xff]
    %v1210 = vld [vmem:[#allocation2 + $0x668] sm:$0xff]
    %v1211 = vld [vmem:[#allocation2 + $0x670] sm:$0xff]
    %v1212 = vld [vmem:[#allocation2 + $0x678] sm:$0xff]
    %v1213 = vld [vmem:[#allocation2 + $0x680] sm:$0xff]
    %v1214 = vld [vmem:[#allocation2 + $0x688] sm:$0xff]
    %v1215 = vld [vmem:[#allocation2 + $0x690] sm:$0xff]
    %v1216 = vld [vmem:[#allocation2 + $0x698] sm:$0xff]
    %v1217 = vld [vmem:[#allocation2 + $0x6a0] sm:$0xff]
    %v1218 = vld [vmem:[#allocation2 + $0x6a8] sm:$0xff]
    %v1219 = vld [vmem:[#allocation2 + $0x6b0] sm:$0xff]
    %v1220 = vld [vmem:[#allocation2 + $0x6b8] sm:$0xff]
    %v1221 = vld [vmem:[#allocation2 + $0x6c0] sm:$0xff]
    %v1222 = vld [vmem:[#allocation2 + $0x6c8] sm:$0xff]
    %v1223 = vld [vmem:[#allocation2 + $0x6d0] sm:$0xff]
    %v1224 = vld [vmem:[#allocation2 + $0x6d8] sm:$0xff]
    %v1225 = vld [vmem:[#allocation2 + $0x6e0] sm:$0xff]
    %v1226 = vld [vmem:[#allocation2 + $0x6e8] sm:$0xff]
    %v1227 = vld [vmem:[#allocation2 + $0x6f0] sm:$0xff]
    %v1228 = vld [vmem:[#allocation2 + $0x6f8] sm:$0xff]
    %v1229 = vld [vmem:[#allocation2 + $0x700] sm:$0xff]
    %v1230 = vld [vmem:[#allocation2 + $0x708] sm:$0xff]
    %v1231 = vld [vmem:[#allocation2 + $0x710] sm:$0xff]
    %v1232 = vld [vmem:[#allocation2 + $0x718] sm:$0xff]
    %v1233 = vld [vmem:[#allocation2 + $0x720] sm:$0xff]
    %v1234 = vld [vmem:[#allocation2 + $0x728] sm:$0xff]
    %v1235 = vld [vmem:[#allocation2 + $0x730] sm:$0xff]
    %v1236 = vld [vmem:[#allocation2 + $0x738] sm:$0xff]
    %v1237 = vld [vmem:[#allocation2 + $0x740] sm:$0xff]
    %v1238 = vld [vmem:[#allocation2 + $0x748] sm:$0xff]
    %v1239 = vld [vmem:[#allocation2 + $0x750] sm:$0xff]
    %v1240 = vld [vmem:[#allocation2 + $0x758] sm:$0xff]
    %v1241 = vld [vmem:[#allocation2 + $0x760] sm:$0xff]
    %v1242 = vld [vmem:[#allocation2 + $0x768] sm:$0xff]
    %v1243 = vld [vmem:[#allocation2 + $0x770] sm:$0xff]
    %v1244 = vld [vmem:[#allocation2 + $0x778] sm:$0xff]
    %v1245 = vld [vmem:[#allocation2 + $0x780] sm:$0xff]
    %v1246 = vld [vmem:[#allocation2 + $0x788] sm:$0xff]
    %v1247 = vld [vmem:[#allocation2 + $0x790] sm:$0xff]
    %v1248 = vld [vmem:[#allocation2 + $0x798] sm:$0xff]
    %v1249 = vld [vmem:[#allocation2 + $0x7a0] sm:$0xff]
    %v1250 = vld [vmem:[#allocation2 + $0x7a8] sm:$0xff]
    %v1251 = vld [vmem:[#allocation2 + $0x7b0] sm:$0xff]
    %v1252 = vld [vmem:[#allocation2 + $0x7b8] sm:$0xff]
    %v1253 = vld [vmem:[#allocation2 + $0x7c0] sm:$0xff]
    %v1254 = vld [vmem:[#allocation2 + $0x7c8] sm:$0xff]
    %v1255 = vld [vmem:[#allocation2 + $0x7d0] sm:$0xff]
    %v1256 = vld [vmem:[#allocation2 + $0x7d8] sm:$0xff]
    %v1257 = vld [vmem:[#allocation2 + $0x7e0] sm:$0xff]
    %v1258 = vld [vmem:[#allocation2 + $0x7e8] sm:$0xff]
    %v1259 = vld [vmem:[#allocation2 + $0x7f0] sm:$0xff]
    %v1260 = vld [vmem:[#allocation2 + $0x7f8] sm:$0xff]
    %v1261 = vld [vmem:[#allocation2 + $0x800] sm:$0xff]
    %v1262 = vld [vmem:[#allocation2 + $0x808] sm:$0xff]
    %v1263 = vld [vmem:[#allocation2 + $0x810] sm:$0xff]
    %v1264 = vld [vmem:[#allocation2 + $0x818] sm:$0xff]
    %v1265 = vld [vmem:[#allocation2 + $0x820] sm:$0xff]
    %v1266 = vld [vmem:[#allocation2 + $0x828] sm:$0xff]
    %v1267 = vld [vmem:[#allocation2 + $0x830] sm:$0xff]
    %v1268 = vld [vmem:[#allocation2 + $0x838] sm:$0xff]
    %v1269 = vld [vmem:[#allocation2 + $0x840] sm:$0xff]
    %v1270 = vld [vmem:[#allocation2 + $0x848] sm:$0xff]
    %v1271 = vld [vmem:[#allocation2 + $0x850] sm:$0xff]
    %v1272 = vld [vmem:[#allocation2 + $0x858] sm:$0xff]
    %v1273 = vld [vmem:[#allocation2 + $0x860] sm:$0xff]
    %v1274 = vld [vmem:[#allocation2 + $0x868] sm:$0xff]
    %v1275 = vld [vmem:[#allocation2 + $0x870] sm:$0xff]
    %v1276 = vld [vmem:[#allocation2 + $0x878] sm:$0xff]
    %v1277 = vld [vmem:[#allocation2 + $0x880] sm:$0xff]
    %v1278 = vld [vmem:[#allocation2 + $0x888] sm:$0xff]
    %v1279 = vld [vmem:[#allocation2 + $0x890] sm:$0xff]
    %v1280 = vld [vmem:[#allocation2 + $0x898] sm:$0xff]
    %v1281 = vld [vmem:[#allocation2 + $0x8a0] sm:$0xff]
    %v1282 = vld [vmem:[#allocation2 + $0x8a8] sm:$0xff]
    %v1283 = vld [vmem:[#allocation2 + $0x8b0] sm:$0xff]
    %v1284 = vld [vmem:[#allocation2 + $0x8b8] sm:$0xff]
    %v1285 = vld [vmem:[#allocation2 + $0x8c0] sm:$0xff]
    %v1286 = vld [vmem:[#allocation2 + $0x8c8] sm:$0xff]
    %v1287 = vld [vmem:[#allocation2 + $0x8d0] sm:$0xff]
    %v1288 = vld [vmem:[#allocation2 + $0x8d8] sm:$0xff]
    %v1289 = vld [vmem:[#allocation2 + $0x8e0] sm:$0xff]
    %v1290 = vld [vmem:[#allocation2 + $0x8e8] sm:$0xff]
    %v1291 = vld [vmem:[#allocation2 + $0x8f0] sm:$0xff]
    %v1292 = vld [vmem:[#allocation2 + $0x8f8] sm:$0xff]
    %v1293 = vld [vmem:[#allocation2 + $0x900] sm:$0xff]
    %v1294 = vld [vmem:[#allocation2 + $0x908] sm:$0xff]
    %v1295 = vld [vmem:[#allocation2 + $0x910] sm:$0xff]
    %v1296 = vld [vmem:[#allocation2 + $0x918] sm:$0xff]
    %v1297 = vld [vmem:[#allocation2 + $0x920] sm:$0xff]
    %v1298 = vld [vmem:[#allocation2 + $0x928] sm:$0xff]
    %v1299 = vld [vmem:[#allocation2 + $0x930] sm:$0xff]
    %v1300 = vld [vmem:[#allocation2 + $0x938] sm:$0xff]
    %v1301 = vld [vmem:[#allocation2 + $0x940] sm:$0xff]
    %v1302 = vld [vmem:[#allocation2 + $0x948] sm:$0xff]
    %v1303 = vld [vmem:[#allocation2 + $0x950] sm:$0xff]
    %v1304 = vld [vmem:[#allocation2 + $0x958] sm:$0xff]
    %v1305 = vld [vmem:[#allocation2 + $0x960] sm:$0xff]
    %v1306 = vld [vmem:[#allocation2 + $0x968] sm:$0xff]
    %v1307 = vld [vmem:[#allocation2 + $0x970] sm:$0xff]
    %v1308 = vld [vmem:[#allocation2 + $0x978] sm:$0xff]
    %v1309 = vld [vmem:[#allocation2 + $0x980] sm:$0xff]
    %v1310 = vld [vmem:[#allocation2 + $0x988] sm:$0xff]
    %v1311 = vld [vmem:[#allocation2 + $0x990] sm:$0xff]
    %v1312 = vld [vmem:[#allocation2 + $0x998] sm:$0xff]
    %v1313 = vld [vmem:[#allocation2 + $0x9a0] sm:$0xff]
    %v1314 = vld [vmem:[#allocation2 + $0x9a8] sm:$0xff]
    %v1315 = vld [vmem:[#allocation2 + $0x9b0] sm:$0xff]
    %v1316 = vld [vmem:[#allocation2 + $0x9b8] sm:$0xff]
    %v1317 = vld [vmem:[#allocation2 + $0x9c0] sm:$0xff]
    %v1318 = vld [vmem:[#allocation2 + $0x9c8] sm:$0xff]
    %v1319 = vld [vmem:[#allocation2 + $0x9d0] sm:$0xff]
    %v1320 = vld [vmem:[#allocation2 + $0x9d8] sm:$0xff]
    %v1321 = vld [vmem:[#allocation2 + $0x9e0] sm:$0xff]
    %v1322 = vld [vmem:[#allocation2 + $0x9e8] sm:$0xff]
    %v1323 = vld [vmem:[#allocation2 + $0x9f0] sm:$0xff]
    %v1324 = vld [vmem:[#allocation2 + $0x9f8] sm:$0xff]
    %v1325 = vld [vmem:[#allocation2 + $0xa00] sm:$0xff]
    %v1326 = vld [vmem:[#allocation2 + $0xa08] sm:$0xff]
    %v1327 = vld [vmem:[#allocation2 + $0xa10] sm:$0xff]
    %v1328 = vld [vmem:[#allocation2 + $0xa18] sm:$0xff]
    %v1329 = vld [vmem:[#allocation2 + $0xa20] sm:$0xff]
    %v1330 = vld [vmem:[#allocation2 + $0xa28] sm:$0xff]
    %v1331 = vld [vmem:[#allocation2 + $0xa30] sm:$0xff]
    %v1332 = vld [vmem:[#allocation2 + $0xa38] sm:$0xff]
    %v1333 = vld [vmem:[#allocation2 + $0xa40] sm:$0xff]
    %v1334 = vld [vmem:[#allocation2 + $0xa48] sm:$0xff]
    %v1335 = vld [vmem:[#allocation2 + $0xa50] sm:$0xff]
    %v1336 = vld [vmem:[#allocation2 + $0xa58] sm:$0xff]
    %v1337 = vld [vmem:[#allocation2 + $0xa60] sm:$0xff]
    %v1338 = vld [vmem:[#allocation2 + $0xa68] sm:$0xff]
    %v1339 = vld [vmem:[#allocation2 + $0xa70] sm:$0xff]
    %v1340 = vld [vmem:[#allocation2 + $0xa78] sm:$0xff]
    %v1341 = vld [vmem:[#allocation2 + $0xa80] sm:$0xff]
    %v1342 = vld [vmem:[#allocation2 + $0xa88] sm:$0xff]
    %v1343 = vld [vmem:[#allocation2 + $0xa90] sm:$0xff]
    %v1344 = vld [vmem:[#allocation2 + $0xa98] sm:$0xff]
    %v1345 = vld [vmem:[#allocation2 + $0xaa0] sm:$0xff]
    %v1346 = vld [vmem:[#allocation2 + $0xaa8] sm:$0xff]
    %v1347 = vld [vmem:[#allocation2 + $0xab0] sm:$0xff]
    %v1348 = vld [vmem:[#allocation2 + $0xab8] sm:$0xff]
    %v1349 = vld [vmem:[#allocation2 + $0xac0] sm:$0xff]
    %v1350 = vld [vmem:[#allocation2 + $0xac8] sm:$0xff]
    %v1351 = vld [vmem:[#allocation2 + $0xad0] sm:$0xff]
    %v1352 = vld [vmem:[#allocation2 + $0xad8] sm:$0xff]
    %v1353 = vld [vmem:[#allocation2 + $0xae0] sm:$0xff]
    %v1354 = vld [vmem:[#allocation2 + $0xae8] sm:$0xff]
    %v1355 = vld [vmem:[#allocation2 + $0xaf0] sm:$0xff]
    %v1356 = vld [vmem:[#allocation2 + $0xaf8] sm:$0xff]
    %v1357 = vld [vmem:[#allocation2 + $0xb00] sm:$0xff]
    %v1358 = vld [vmem:[#allocation2 + $0xb08] sm:$0xff]
    %v1359 = vld [vmem:[#allocation2 + $0xb10] sm:$0xff]
    %v1360 = vld [vmem:[#allocation2 + $0xb18] sm:$0xff]
    %v1361 = vld [vmem:[#allocation2 + $0xb20] sm:$0xff]
    %v1362 = vld [vmem:[#allocation2 + $0xb28] sm:$0xff]
    %v1363 = vld [vmem:[#allocation2 + $0xb30] sm:$0xff]
    %v1364 = vld [vmem:[#allocation2 + $0xb38] sm:$0xff]
    %v1365 = vld [vmem:[#allocation2 + $0xb40] sm:$0xff]
    %v1366 = vld [vmem:[#allocation2 + $0xb48] sm:$0xff]
    %v1367 = vld [vmem:[#allocation2 + $0xb50] sm:$0xff]
    %v1368 = vld [vmem:[#allocation2 + $0xb58] sm:$0xff]
    %v1369 = vld [vmem:[#allocation2 + $0xb60] sm:$0xff]
    %v1370 = vld [vmem:[#allocation2 + $0xb68] sm:$0xff]
    %v1371 = vld [vmem:[#allocation2 + $0xb70] sm:$0xff]
    %v1372 = vld [vmem:[#allocation2 + $0xb78] sm:$0xff]
    %v1373 = vld [vmem:[#allocation2 + $0xb80] sm:$0xff]
    %v1374 = vld [vmem:[#allocation2 + $0xb88] sm:$0xff]
    %v1375 = vld [vmem:[#allocation2 + $0xb90] sm:$0xff]
    %v1376 = vld [vmem:[#allocation2 + $0xb98] sm:$0xff]
    %v1377 = vld [vmem:[#allocation2 + $0xba0] sm:$0xff]
    %v1378 = vld [vmem:[#allocation2 + $0xba8] sm:$0xff]
    %v1379 = vld [vmem:[#allocation2 + $0xbb0] sm:$0xff]
    %v1380 = vld [vmem:[#allocation2 + $0xbb8] sm:$0xff]
    %v1381 = vld [vmem:[#allocation2 + $0xbc0] sm:$0xff]
    %v1382 = vld [vmem:[#allocation2 + $0xbc8] sm:$0xff]
    %v1383 = vld [vmem:[#allocation2 + $0xbd0] sm:$0xff]
    %v1384 = vld [vmem:[#allocation2 + $0xbd8] sm:$0xff]
    %v1385 = vld [vmem:[#allocation2 + $0xbe0] sm:$0xff]
    %v1386 = vld [vmem:[#allocation2 + $0xbe8] sm:$0xff]
    %v1387 = vld [vmem:[#allocation2 + $0xbf0] sm:$0xff]
    %v1388 = vld [vmem:[#allocation2 + $0xbf8] sm:$0xff]
    %v1389 = vld [vmem:[#allocation2 + $0xc00] sm:$0xff]
    %v1390 = vld [vmem:[#allocation2 + $0xc08] sm:$0xff]
    %v1391 = vld [vmem:[#allocation2 + $0xc10] sm:$0xff]
    %v1392 = vld [vmem:[#allocation2 + $0xc18] sm:$0xff]
    %v1393 = vld [vmem:[#allocation2 + $0xc20] sm:$0xff]
    %v1394 = vld [vmem:[#allocation2 + $0xc28] sm:$0xff]
    %v1395 = vld [vmem:[#allocation2 + $0xc30] sm:$0xff]
    %v1396 = vld [vmem:[#allocation2 + $0xc38] sm:$0xff]
    %v1397 = vld [vmem:[#allocation2 + $0xc40] sm:$0xff]
    %v1398 = vld [vmem:[#allocation2 + $0xc48] sm:$0xff]
    %v1399 = vld [vmem:[#allocation2 + $0xc50] sm:$0xff]
    %v1400 = vld [vmem:[#allocation2 + $0xc58] sm:$0xff]
    %v1401 = vld [vmem:[#allocation2 + $0xc60] sm:$0xff]
    %v1402 = vld [vmem:[#allocation2 + $0xc68] sm:$0xff]
    %v1403 = vld [vmem:[#allocation2 + $0xc70] sm:$0xff]
    %v1404 = vld [vmem:[#allocation2 + $0xc78] sm:$0xff]
    %v1405 = vld [vmem:[#allocation2 + $0xc80] sm:$0xff]
    %v1406 = vld [vmem:[#allocation2 + $0xc88] sm:$0xff]
    %v1407 = vld [vmem:[#allocation2 + $0xc90] sm:$0xff]
    %v1408 = vld [vmem:[#allocation2 + $0xc98] sm:$0xff]
    %v1409 = vld [vmem:[#allocation2 + $0xca0] sm:$0xff]
    %v1410 = vld [vmem:[#allocation2 + $0xca8] sm:$0xff]
    %v1411 = vld [vmem:[#allocation2 + $0xcb0] sm:$0xff]
    %v1412 = vld [vmem:[#allocation2 + $0xcb8] sm:$0xff]
    %v1413 = vld [vmem:[#allocation2 + $0xcc0] sm:$0xff]
    %v1414 = vld [vmem:[#allocation2 + $0xcc8] sm:$0xff]
    %v1415 = vld [vmem:[#allocation2 + $0xcd0] sm:$0xff]
    %v1416 = vld [vmem:[#allocation2 + $0xcd8] sm:$0xff]
    %v1417 = vld [vmem:[#allocation2 + $0xce0] sm:$0xff]
    %v1418 = vld [vmem:[#allocation2 + $0xce8] sm:$0xff]
    %v1419 = vld [vmem:[#allocation2 + $0xcf0] sm:$0xff]
    %v1420 = vld [vmem:[#allocation2 + $0xcf8] sm:$0xff]
    %v1421 = vld [vmem:[#allocation2 + $0xd00] sm:$0xff]
    %v1422 = vld [vmem:[#allocation2 + $0xd08] sm:$0xff]
    %v1423 = vld [vmem:[#allocation2 + $0xd10] sm:$0xff]
    %v1424 = vld [vmem:[#allocation2 + $0xd18] sm:$0xff]
    %v1425 = vld [vmem:[#allocation2 + $0xd20] sm:$0xff]
    %v1426 = vld [vmem:[#allocation2 + $0xd28] sm:$0xff]
    %v1427 = vld [vmem:[#allocation2 + $0xd30] sm:$0xff]
    %v1428 = vld [vmem:[#allocation2 + $0xd38] sm:$0xff]
    %v1429 = vld [vmem:[#allocation2 + $0xd40] sm:$0xff]
    %v1430 = vld [vmem:[#allocation2 + $0xd48] sm:$0xff]
    %v1431 = vld [vmem:[#allocation2 + $0xd50] sm:$0xff]
    %v1432 = vld [vmem:[#allocation2 + $0xd58] sm:$0xff]
    %v1433 = vld [vmem:[#allocation2 + $0xd60] sm:$0xff]
    %v1434 = vld [vmem:[#allocation2 + $0xd68] sm:$0xff]
    %v1435 = vld [vmem:[#allocation2 + $0xd70] sm:$0xff]
    %v1436 = vld [vmem:[#allocation2 + $0xd78] sm:$0xff]
    %v1437 = vld [vmem:[#allocation2 + $0xd80] sm:$0xff]
    %v1438 = vld [vmem:[#allocation2 + $0xd88] sm:$0xff]
    %v1439 = vld [vmem:[#allocation2 + $0xd90] sm:$0xff]
    %v1440 = vld [vmem:[#allocation2 + $0xd98] sm:$0xff]
    %v1441 = vld [vmem:[#allocation2 + $0xda0] sm:$0xff]
    %v1442 = vld [vmem:[#allocation2 + $0xda8] sm:$0xff]
    %v1443 = vld [vmem:[#allocation2 + $0xdb0] sm:$0xff]
    %v1444 = vld [vmem:[#allocation2 + $0xdb8] sm:$0xff]
    %v1445 = vld [vmem:[#allocation2 + $0xdc0] sm:$0xff]
    %v1446 = vld [vmem:[#allocation2 + $0xdc8] sm:$0xff]
    %v1447 = vld [vmem:[#allocation2 + $0xdd0] sm:$0xff]
    %v1448 = vld [vmem:[#allocation2 + $0xdd8] sm:$0xff]
    %v1449 = vld [vmem:[#allocation2 + $0xde0] sm:$0xff]
    %v1450 = vld [vmem:[#allocation2 + $0xde8] sm:$0xff]
    %v1451 = vld [vmem:[#allocation2 + $0xdf0] sm:$0xff]
    %v1452 = vld [vmem:[#allocation2 + $0xdf8] sm:$0xff]
    %v1453 = vld [vmem:[#allocation2 + $0xe00] sm:$0xff]
    %v1454 = vld [vmem:[#allocation2 + $0xe08] sm:$0xff]
    %v1455 = vld [vmem:[#allocation2 + $0xe10] sm:$0xff]
    %v1456 = vld [vmem:[#allocation2 + $0xe18] sm:$0xff]
    %v1457 = vld [vmem:[#allocation2 + $0xe20] sm:$0xff]
    %v1458 = vld [vmem:[#allocation2 + $0xe28] sm:$0xff]
    %v1459 = vld [vmem:[#allocation2 + $0xe30] sm:$0xff]
    %v1460 = vld [vmem:[#allocation2 + $0xe38] sm:$0xff]
    %v1461 = vld [vmem:[#allocation2 + $0xe40] sm:$0xff]
    %v1462 = vld [vmem:[#allocation2 + $0xe48] sm:$0xff]
    %v1463 = vld [vmem:[#allocation2 + $0xe50] sm:$0xff]
    %v1464 = vld [vmem:[#allocation2 + $0xe58] sm:$0xff]
    %v1465 = vld [vmem:[#allocation2 + $0xe60] sm:$0xff]
    %v1466 = vld [vmem:[#allocation2 + $0xe68] sm:$0xff]
    %v1467 = vld [vmem:[#allocation2 + $0xe70] sm:$0xff]
    %v1468 = vld [vmem:[#allocation2 + $0xe78] sm:$0xff]
    %v1469 = vld [vmem:[#allocation2 + $0xe80] sm:$0xff]
    %v1470 = vld [vmem:[#allocation2 + $0xe88] sm:$0xff]
    %v1471 = vld [vmem:[#allocation2 + $0xe90] sm:$0xff]
    %v1472 = vld [vmem:[#allocation2 + $0xe98] sm:$0xff]
    %v1473 = vld [vmem:[#allocation2 + $0xea0] sm:$0xff]
    %v1474 = vld [vmem:[#allocation2 + $0xea8] sm:$0xff]
    %v1475 = vld [vmem:[#allocation2 + $0xeb0] sm:$0xff]
    %v1476 = vld [vmem:[#allocation2 + $0xeb8] sm:$0xff]
    %v1477 = vld [vmem:[#allocation2 + $0xec0] sm:$0xff]
    %v1478 = vld [vmem:[#allocation2 + $0xec8] sm:$0xff]
    %v1479 = vld [vmem:[#allocation2 + $0xed0] sm:$0xff]
    %v1480 = vld [vmem:[#allocation2 + $0xed8] sm:$0xff]
    %v1481 = vld [vmem:[#allocation2 + $0xee0] sm:$0xff]
    %v1482 = vld [vmem:[#allocation2 + $0xee8] sm:$0xff]
    %v1483 = vld [vmem:[#allocation2 + $0xef0] sm:$0xff]
    %v1484 = vld [vmem:[#allocation2 + $0xef8] sm:$0xff]
    %v1485 = vld [vmem:[#allocation2 + $0xf00] sm:$0xff]
    %v1486 = vld [vmem:[#allocation2 + $0xf08] sm:$0xff]
    %v1487 = vld [vmem:[#allocation2 + $0xf10] sm:$0xff]
    %v1488 = vld [vmem:[#allocation2 + $0xf18] sm:$0xff]
    %v1489 = vld [vmem:[#allocation2 + $0xf20] sm:$0xff]
    %v1490 = vld [vmem:[#allocation2 + $0xf28] sm:$0xff]
    %v1491 = vld [vmem:[#allocation2 + $0xf30] sm:$0xff]
    %v1492 = vld [vmem:[#allocation2 + $0xf38] sm:$0xff]
    %v1493 = vld [vmem:[#allocation2 + $0xf40] sm:$0xff]
    %v1494 = vld [vmem:[#allocation2 + $0xf48] sm:$0xff]
    %v1495 = vld [vmem:[#allocation2 + $0xf50] sm:$0xff]
    %v1496 = vld [vmem:[#allocation2 + $0xf58] sm:$0xff]
    %v1497 = vld [vmem:[#allocation2 + $0xf60] sm:$0xff]
    %v1498 = vld [vmem:[#allocation2 + $0xf68] sm:$0xff]
    %v1499 = vld [vmem:[#allocation2 + $0xf70] sm:$0xff]
    %v1500 = vld [vmem:[#allocation2 + $0xf78] sm:$0xff]
    %v1501 = vld [vmem:[#allocation2 + $0xf80] sm:$0xff]
    %v1502 = vld [vmem:[#allocation2 + $0xf88] sm:$0xff]
    %v1503 = vld [vmem:[#allocation2 + $0xf90] sm:$0xff]
    %v1504 = vld [vmem:[#allocation2 + $0xf98] sm:$0xff]
    %v1505 = vld [vmem:[#allocation2 + $0xfa0] sm:$0xff]
    %v1506 = vld [vmem:[#allocation2 + $0xfa8] sm:$0xff]
    %v1507 = vld [vmem:[#allocation2 + $0xfb0] sm:$0xff]
    %v1508 = vld [vmem:[#allocation2 + $0xfb8] sm:$0xff]
    %v1509 = vld [vmem:[#allocation2 + $0xfc0] sm:$0xff]
    %v1510 = vld [vmem:[#allocation2 + $0xfc8] sm:$0xff]
    %v1511 = vld [vmem:[#allocation2 + $0xfd0] sm:$0xff]
    %v1512 = vld [vmem:[#allocation2 + $0xfd8] sm:$0xff]
    %v1513 = vld [vmem:[#allocation2 + $0xfe0] sm:$0xff]
    %v1514 = vld [vmem:[#allocation2 + $0xfe8] sm:$0xff]
    %v1515 = vld [vmem:[#allocation2 + $0xff0] sm:$0xff]
    %v1516 = vld [vmem:[#allocation2 + $0xff8] sm:$0xff]
    %v2029 = vunpack.c.l.b16 %v1005
    %v2030 = vunpack.c.h.b16 %v1005
    %v2031 = vunpack.c.l.b16 %v1006
    %v2032 = vunpack.c.h.b16 %v1006
    %v2033 = vunpack.c.l.b16 %v1007
    %v2034 = vunpack.c.h.b16 %v1007
    %v2035 = vunpack.c.l.b16 %v1008
    %v2036 = vunpack.c.h.b16 %v1008
    %v2037 = vunpack.c.l.b16 %v1009
    %v2038 = vunpack.c.h.b16 %v1009
    %v2039 = vunpack.c.l.b16 %v1010
    %v2040 = vunpack.c.h.b16 %v1010
    %v2041 = vunpack.c.l.b16 %v1011
    %v2042 = vunpack.c.h.b16 %v1011
    %v2043 = vunpack.c.l.b16 %v1012
    %v2044 = vunpack.c.h.b16 %v1012
    %v2045 = vunpack.c.l.b16 %v1013
    %v2046 = vunpack.c.h.b16 %v1013
    %v2047 = vunpack.c.l.b16 %v1014
    %v2048 = vunpack.c.h.b16 %v1014
    %v2049 = vunpack.c.l.b16 %v1015
    %v2050 = vunpack.c.h.b16 %v1015
    %v2051 = vunpack.c.l.b16 %v1016
    %v2052 = vunpack.c.h.b16 %v1016
    %v2053 = vunpack.c.l.b16 %v1017
    %v2054 = vunpack.c.h.b16 %v1017
    %v2055 = vunpack.c.l.b16 %v1018
    %v2056 = vunpack.c.h.b16 %v1018
    %v2057 = vunpack.c.l.b16 %v1019
    %v2058 = vunpack.c.h.b16 %v1019
    %v2059 = vunpack.c.l.b16 %v1020
    %v2060 = vunpack.c.h.b16 %v1020
    %v2061 = vunpack.c.l.b16 %v1021
    %v2062 = vunpack.c.h.b16 %v1021
    %v2063 = vunpack.c.l.b16 %v1022
    %v2064 = vunpack.c.h.b16 %v1022
    %v2065 = vunpack.c.l.b16 %v1023
    %v2066 = vunpack.c.h.b16 %v1023
    %v2067 = vunpack.c.l.b16 %v1024
    %v2068 = vunpack.c.h.b16 %v1024
    %v2069 = vunpack.c.l.b16 %v1025
    %v2070 = vunpack.c.h.b16 %v1025
    %v2071 = vunpack.c.l.b16 %v1026
    %v2072 = vunpack.c.h.b16 %v1026
    %v2073 = vunpack.c.l.b16 %v1027
    %v2074 = vunpack.c.h.b16 %v1027
    %v2075 = vunpack.c.l.b16 %v1028
    %v2076 = vunpack.c.h.b16 %v1028
    %v2077 = vunpack.c.l.b16 %v1029
    %v2078 = vunpack.c.h.b16 %v1029
    %v2079 = vunpack.c.l.b16 %v1030
    %v2080 = vunpack.c.h.b16 %v1030
    %v2081 = vunpack.c.l.b16 %v1031
    %v2082 = vunpack.c.h.b16 %v1031
    %v2083 = vunpack.c.l.b16 %v1032
    %v2084 = vunpack.c.h.b16 %v1032
    %v2085 = vunpack.c.l.b16 %v1033
    %v2086 = vunpack.c.h.b16 %v1033
    %v2087 = vunpack.c.l.b16 %v1034
    %v2088 = vunpack.c.h.b16 %v1034
    %v2089 = vunpack.c.l.b16 %v1035
    %v2090 = vunpack.c.h.b16 %v1035
    %v2091 = vunpack.c.l.b16 %v1036
    %v2092 = vunpack.c.h.b16 %v1036
    %v2093 = vunpack.c.l.b16 %v1037
    %v2094 = vunpack.c.h.b16 %v1037
    %v2095 = vunpack.c.l.b16 %v1038
    %v2096 = vunpack.c.h.b16 %v1038
    %v2097 = vunpack.c.l.b16 %v1039
    %v2098 = vunpack.c.h.b16 %v1039
    %v2099 = vunpack.c.l.b16 %v1040
    %v2100 = vunpack.c.h.b16 %v1040
    %v2101 = vunpack.c.l.b16 %v1041
    %v2102 = vunpack.c.h.b16 %v1041
    %v2103 = vunpack.c.l.b16 %v1042
    %v2104 = vunpack.c.h.b16 %v1042
    %v2105 = vunpack.c.l.b16 %v1043
    %v2106 = vunpack.c.h.b16 %v1043
    %v2107 = vunpack.c.l.b16 %v1044
    %v2108 = vunpack.c.h.b16 %v1044
    %v2109 = vunpack.c.l.b16 %v1045
    %v2110 = vunpack.c.h.b16 %v1045
    %v2111 = vunpack.c.l.b16 %v1046
    %v2112 = vunpack.c.h.b16 %v1046
    %v2113 = vunpack.c.l.b16 %v1047
    %v2114 = vunpack.c.h.b16 %v1047
    %v2115 = vunpack.c.l.b16 %v1048
    %v2116 = vunpack.c.h.b16 %v1048
    %v2117 = vunpack.c.l.b16 %v1049
    %v2118 = vunpack.c.h.b16 %v1049
    %v2119 = vunpack.c.l.b16 %v1050
    %v2120 = vunpack.c.h.b16 %v1050
    %v2121 = vunpack.c.l.b16 %v1051
    %v2122 = vunpack.c.h.b16 %v1051
    %v2123 = vunpack.c.l.b16 %v1052
    %v2124 = vunpack.c.h.b16 %v1052
    %v2125 = vunpack.c.l.b16 %v1053
    %v2126 = vunpack.c.h.b16 %v1053
    %v2127 = vunpack.c.l.b16 %v1054
    %v2128 = vunpack.c.h.b16 %v1054
    %v2129 = vunpack.c.l.b16 %v1055
    %v2130 = vunpack.c.h.b16 %v1055
    %v2131 = vunpack.c.l.b16 %v1056
    %v2132 = vunpack.c.h.b16 %v1056
    %v2133 = vunpack.c.l.b16 %v1057
    %v2134 = vunpack.c.h.b16 %v1057
    %v2135 = vunpack.c.l.b16 %v1058
    %v2136 = vunpack.c.h.b16 %v1058
    %v2137 = vunpack.c.l.b16 %v1059
    %v2138 = vunpack.c.h.b16 %v1059
    %v2139 = vunpack.c.l.b16 %v1060
    %v2140 = vunpack.c.h.b16 %v1060
    %v2141 = vunpack.c.l.b16 %v1061
    %v2142 = vunpack.c.h.b16 %v1061
    %v2143 = vunpack.c.l.b16 %v1062
    %v2144 = vunpack.c.h.b16 %v1062
    %v2145 = vunpack.c.l.b16 %v1063
    %v2146 = vunpack.c.h.b16 %v1063
    %v2147 = vunpack.c.l.b16 %v1064
    %v2148 = vunpack.c.h.b16 %v1064
    %v2149 = vunpack.c.l.b16 %v1065
    %v2150 = vunpack.c.h.b16 %v1065
    %v2151 = vunpack.c.l.b16 %v1066
    %v2152 = vunpack.c.h.b16 %v1066
    %v2153 = vunpack.c.l.b16 %v1067
    %v2154 = vunpack.c.h.b16 %v1067
    %v2155 = vunpack.c.l.b16 %v1068
    %v2156 = vunpack.c.h.b16 %v1068
    %v2157 = vunpack.c.l.b16 %v1069
    %v2158 = vunpack.c.h.b16 %v1069
    %v2159 = vunpack.c.l.b16 %v1070
    %v2160 = vunpack.c.h.b16 %v1070
    %v2161 = vunpack.c.l.b16 %v1071
    %v2162 = vunpack.c.h.b16 %v1071
    %v2163 = vunpack.c.l.b16 %v1072
    %v2164 = vunpack.c.h.b16 %v1072
    %v2165 = vunpack.c.l.b16 %v1073
    %v2166 = vunpack.c.h.b16 %v1073
    %v2167 = vunpack.c.l.b16 %v1074
    %v2168 = vunpack.c.h.b16 %v1074
    %v2169 = vunpack.c.l.b16 %v1075
    %v2170 = vunpack.c.h.b16 %v1075
    %v2171 = vunpack.c.l.b16 %v1076
    %v2172 = vunpack.c.h.b16 %v1076
    %v2173 = vunpack.c.l.b16 %v1077
    %v2174 = vunpack.c.h.b16 %v1077
    %v2175 = vunpack.c.l.b16 %v1078
    %v2176 = vunpack.c.h.b16 %v1078
    %v2177 = vunpack.c.l.b16 %v1079
    %v2178 = vunpack.c.h.b16 %v1079
    %v2179 = vunpack.c.l.b16 %v1080
    %v2180 = vunpack.c.h.b16 %v1080
    %v2181 = vunpack.c.l.b16 %v1081
    %v2182 = vunpack.c.h.b16 %v1081
    %v2183 = vunpack.c.l.b16 %v1082
    %v2184 = vunpack.c.h.b16 %v1082
    %v2185 = vunpack.c.l.b16 %v1083
    %v2186 = vunpack.c.h.b16 %v1083
    %v2187 = vunpack.c.l.b16 %v1084
    %v2188 = vunpack.c.h.b16 %v1084
    %v2189 = vunpack.c.l.b16 %v1085
    %v2190 = vunpack.c.h.b16 %v1085
    %v2191 = vunpack.c.l.b16 %v1086
    %v2192 = vunpack.c.h.b16 %v1086
    %v2193 = vunpack.c.l.b16 %v1087
    %v2194 = vunpack.c.h.b16 %v1087
    %v2195 = vunpack.c.l.b16 %v1088
    %v2196 = vunpack.c.h.b16 %v1088
    %v2197 = vunpack.c.l.b16 %v1089
    %v2198 = vunpack.c.h.b16 %v1089
    %v2199 = vunpack.c.l.b16 %v1090
    %v2200 = vunpack.c.h.b16 %v1090
    %v2201 = vunpack.c.l.b16 %v1091
    %v2202 = vunpack.c.h.b16 %v1091
    %v2203 = vunpack.c.l.b16 %v1092
    %v2204 = vunpack.c.h.b16 %v1092
    %v2205 = vunpack.c.l.b16 %v1093
    %v2206 = vunpack.c.h.b16 %v1093
    %v2207 = vunpack.c.l.b16 %v1094
    %v2208 = vunpack.c.h.b16 %v1094
    %v2209 = vunpack.c.l.b16 %v1095
    %v2210 = vunpack.c.h.b16 %v1095
    %v2211 = vunpack.c.l.b16 %v1096
    %v2212 = vunpack.c.h.b16 %v1096
    %v2213 = vunpack.c.l.b16 %v1097
    %v2214 = vunpack.c.h.b16 %v1097
    %v2215 = vunpack.c.l.b16 %v1098
    %v2216 = vunpack.c.h.b16 %v1098
    %v2217 = vunpack.c.l.b16 %v1099
    %v2218 = vunpack.c.h.b16 %v1099
    %v2219 = vunpack.c.l.b16 %v1100
    %v2220 = vunpack.c.h.b16 %v1100
    %v2221 = vunpack.c.l.b16 %v1101
    %v2222 = vunpack.c.h.b16 %v1101
    %v2223 = vunpack.c.l.b16 %v1102
    %v2224 = vunpack.c.h.b16 %v1102
    %v2225 = vunpack.c.l.b16 %v1103
    %v2226 = vunpack.c.h.b16 %v1103
    %v2227 = vunpack.c.l.b16 %v1104
    %v2228 = vunpack.c.h.b16 %v1104
    %v2229 = vunpack.c.l.b16 %v1105
    %v2230 = vunpack.c.h.b16 %v1105
    %v2231 = vunpack.c.l.b16 %v1106
    %v2232 = vunpack.c.h.b16 %v1106
    %v2233 = vunpack.c.l.b16 %v1107
    %v2234 = vunpack.c.h.b16 %v1107
    %v2235 = vunpack.c.l.b16 %v1108
    %v2236 = vunpack.c.h.b16 %v1108
    %v2237 = vunpack.c.l.b16 %v1109
    %v2238 = vunpack.c.h.b16 %v1109
    %v2239 = vunpack.c.l.b16 %v1110
    %v2240 = vunpack.c.h.b16 %v1110
    %v2241 = vunpack.c.l.b16 %v1111
    %v2242 = vunpack.c.h.b16 %v1111
    %v2243 = vunpack.c.l.b16 %v1112
    %v2244 = vunpack.c.h.b16 %v1112
    %v2245 = vunpack.c.l.b16 %v1113
    %v2246 = vunpack.c.h.b16 %v1113
    %v2247 = vunpack.c.l.b16 %v1114
    %v2248 = vunpack.c.h.b16 %v1114
    %v2249 = vunpack.c.l.b16 %v1115
    %v2250 = vunpack.c.h.b16 %v1115
    %v2251 = vunpack.c.l.b16 %v1116
    %v2252 = vunpack.c.h.b16 %v1116
    %v2253 = vunpack.c.l.b16 %v1117
    %v2254 = vunpack.c.h.b16 %v1117
    %v2255 = vunpack.c.l.b16 %v1118
    %v2256 = vunpack.c.h.b16 %v1118
    %v2257 = vunpack.c.l.b16 %v1119
    %v2258 = vunpack.c.h.b16 %v1119
    %v2259 = vunpack.c.l.b16 %v1120
    %v2260 = vunpack.c.h.b16 %v1120
    %v2261 = vunpack.c.l.b16 %v1121
    %v2262 = vunpack.c.h.b16 %v1121
    %v2263 = vunpack.c.l.b16 %v1122
    %v2264 = vunpack.c.h.b16 %v1122
    %v2265 = vunpack.c.l.b16 %v1123
    %v2266 = vunpack.c.h.b16 %v1123
    %v2267 = vunpack.c.l.b16 %v1124
    %v2268 = vunpack.c.h.b16 %v1124
    %v2269 = vunpack.c.l.b16 %v1125
    %v2270 = vunpack.c.h.b16 %v1125
    %v2271 = vunpack.c.l.b16 %v1126
    %v2272 = vunpack.c.h.b16 %v1126
    %v2273 = vunpack.c.l.b16 %v1127
    %v2274 = vunpack.c.h.b16 %v1127
    %v2275 = vunpack.c.l.b16 %v1128
    %v2276 = vunpack.c.h.b16 %v1128
    %v2277 = vunpack.c.l.b16 %v1129
    %v2278 = vunpack.c.h.b16 %v1129
    %v2279 = vunpack.c.l.b16 %v1130
    %v2280 = vunpack.c.h.b16 %v1130
    %v2281 = vunpack.c.l.b16 %v1131
    %v2282 = vunpack.c.h.b16 %v1131
    %v2283 = vunpack.c.l.b16 %v1132
    %v2284 = vunpack.c.h.b16 %v1132
    %v2285 = vunpack.c.l.b16 %v1133
    %v2286 = vunpack.c.h.b16 %v1133
    %v2287 = vunpack.c.l.b16 %v1134
    %v2288 = vunpack.c.h.b16 %v1134
    %v2289 = vunpack.c.l.b16 %v1135
    %v2290 = vunpack.c.h.b16 %v1135
    %v2291 = vunpack.c.l.b16 %v1136
    %v2292 = vunpack.c.h.b16 %v1136
    %v2293 = vunpack.c.l.b16 %v1137
    %v2294 = vunpack.c.h.b16 %v1137
    %v2295 = vunpack.c.l.b16 %v1138
    %v2296 = vunpack.c.h.b16 %v1138
    %v2297 = vunpack.c.l.b16 %v1139
    %v2298 = vunpack.c.h.b16 %v1139
    %v2299 = vunpack.c.l.b16 %v1140
    %v2300 = vunpack.c.h.b16 %v1140
    %v2301 = vunpack.c.l.b16 %v1141
    %v2302 = vunpack.c.h.b16 %v1141
    %v2303 = vunpack.c.l.b16 %v1142
    %v2304 = vunpack.c.h.b16 %v1142
    %v2305 = vunpack.c.l.b16 %v1143
    %v2306 = vunpack.c.h.b16 %v1143
    %v2307 = vunpack.c.l.b16 %v1144
    %v2308 = vunpack.c.h.b16 %v1144
    %v2309 = vunpack.c.l.b16 %v1145
    %v2310 = vunpack.c.h.b16 %v1145
    %v2311 = vunpack.c.l.b16 %v1146
    %v2312 = vunpack.c.h.b16 %v1146
    %v2313 = vunpack.c.l.b16 %v1147
    %v2314 = vunpack.c.h.b16 %v1147
    %v2315 = vunpack.c.l.b16 %v1148
    %v2316 = vunpack.c.h.b16 %v1148
    %v2317 = vunpack.c.l.b16 %v1149
    %v2318 = vunpack.c.h.b16 %v1149
    %v2319 = vunpack.c.l.b16 %v1150
    %v2320 = vunpack.c.h.b16 %v1150
    %v2321 = vunpack.c.l.b16 %v1151
    %v2322 = vunpack.c.h.b16 %v1151
    %v2323 = vunpack.c.l.b16 %v1152
    %v2324 = vunpack.c.h.b16 %v1152
    %v2325 = vunpack.c.l.b16 %v1153
    %v2326 = vunpack.c.h.b16 %v1153
    %v2327 = vunpack.c.l.b16 %v1154
    %v2328 = vunpack.c.h.b16 %v1154
    %v2329 = vunpack.c.l.b16 %v1155
    %v2330 = vunpack.c.h.b16 %v1155
    %v2331 = vunpack.c.l.b16 %v1156
    %v2332 = vunpack.c.h.b16 %v1156
    %v2333 = vunpack.c.l.b16 %v1157
    %v2334 = vunpack.c.h.b16 %v1157
    %v2335 = vunpack.c.l.b16 %v1158
    %v2336 = vunpack.c.h.b16 %v1158
    %v2337 = vunpack.c.l.b16 %v1159
    %v2338 = vunpack.c.h.b16 %v1159
    %v2339 = vunpack.c.l.b16 %v1160
    %v2340 = vunpack.c.h.b16 %v1160
    %v2341 = vunpack.c.l.b16 %v1161
    %v2342 = vunpack.c.h.b16 %v1161
    %v2343 = vunpack.c.l.b16 %v1162
    %v2344 = vunpack.c.h.b16 %v1162
    %v2345 = vunpack.c.l.b16 %v1163
    %v2346 = vunpack.c.h.b16 %v1163
    %v2347 = vunpack.c.l.b16 %v1164
    %v2348 = vunpack.c.h.b16 %v1164
    %v2349 = vunpack.c.l.b16 %v1165
    %v2350 = vunpack.c.h.b16 %v1165
    %v2351 = vunpack.c.l.b16 %v1166
    %v2352 = vunpack.c.h.b16 %v1166
    %v2353 = vunpack.c.l.b16 %v1167
    %v2354 = vunpack.c.h.b16 %v1167
    %v2355 = vunpack.c.l.b16 %v1168
    %v2356 = vunpack.c.h.b16 %v1168
    %v2357 = vunpack.c.l.b16 %v1169
    %v2358 = vunpack.c.h.b16 %v1169
    %v2359 = vunpack.c.l.b16 %v1170
    %v2360 = vunpack.c.h.b16 %v1170
    %v2361 = vunpack.c.l.b16 %v1171
    %v2362 = vunpack.c.h.b16 %v1171
    %v2363 = vunpack.c.l.b16 %v1172
    %v2364 = vunpack.c.h.b16 %v1172
    %v2365 = vunpack.c.l.b16 %v1173
    %v2366 = vunpack.c.h.b16 %v1173
    %v2367 = vunpack.c.l.b16 %v1174
    %v2368 = vunpack.c.h.b16 %v1174
    %v2369 = vunpack.c.l.b16 %v1175
    %v2370 = vunpack.c.h.b16 %v1175
    %v2371 = vunpack.c.l.b16 %v1176
    %v2372 = vunpack.c.h.b16 %v1176
    %v2373 = vunpack.c.l.b16 %v1177
    %v2374 = vunpack.c.h.b16 %v1177
    %v2375 = vunpack.c.l.b16 %v1178
    %v2376 = vunpack.c.h.b16 %v1178
    %v2377 = vunpack.c.l.b16 %v1179
    %v2378 = vunpack.c.h.b16 %v1179
    %v2379 = vunpack.c.l.b16 %v1180
    %v2380 = vunpack.c.h.b16 %v1180
    %v2381 = vunpack.c.l.b16 %v1181
    %v2382 = vunpack.c.h.b16 %v1181
    %v2383 = vunpack.c.l.b16 %v1182
    %v2384 = vunpack.c.h.b16 %v1182
    %v2385 = vunpack.c.l.b16 %v1183
    %v2386 = vunpack.c.h.b16 %v1183
    %v2387 = vunpack.c.l.b16 %v1184
    %v2388 = vunpack.c.h.b16 %v1184
    %v2389 = vunpack.c.l.b16 %v1185
    %v2390 = vunpack.c.h.b16 %v1185
    %v2391 = vunpack.c.l.b16 %v1186
    %v2392 = vunpack.c.h.b16 %v1186
    %v2393 = vunpack.c.l.b16 %v1187
    %v2394 = vunpack.c.h.b16 %v1187
    %v2395 = vunpack.c.l.b16 %v1188
    %v2396 = vunpack.c.h.b16 %v1188
    %v2397 = vunpack.c.l.b16 %v1189
    %v2398 = vunpack.c.h.b16 %v1189
    %v2399 = vunpack.c.l.b16 %v1190
    %v2400 = vunpack.c.h.b16 %v1190
    %v2401 = vunpack.c.l.b16 %v1191
    %v2402 = vunpack.c.h.b16 %v1191
    %v2403 = vunpack.c.l.b16 %v1192
    %v2404 = vunpack.c.h.b16 %v1192
    %v2405 = vunpack.c.l.b16 %v1193
    %v2406 = vunpack.c.h.b16 %v1193
    %v2407 = vunpack.c.l.b16 %v1194
    %v2408 = vunpack.c.h.b16 %v1194
    %v2409 = vunpack.c.l.b16 %v1195
    %v2410 = vunpack.c.h.b16 %v1195
    %v2411 = vunpack.c.l.b16 %v1196
    %v2412 = vunpack.c.h.b16 %v1196
    %v2413 = vunpack.c.l.b16 %v1197
    %v2414 = vunpack.c.h.b16 %v1197
    %v2415 = vunpack.c.l.b16 %v1198
    %v2416 = vunpack.c.h.b16 %v1198
    %v2417 = vunpack.c.l.b16 %v1199
    %v2418 = vunpack.c.h.b16 %v1199
    %v2419 = vunpack.c.l.b16 %v1200
    %v2420 = vunpack.c.h.b16 %v1200
    %v2421 = vunpack.c.l.b16 %v1201
    %v2422 = vunpack.c.h.b16 %v1201
    %v2423 = vunpack.c.l.b16 %v1202
    %v2424 = vunpack.c.h.b16 %v1202
    %v2425 = vunpack.c.l.b16 %v1203
    %v2426 = vunpack.c.h.b16 %v1203
    %v2427 = vunpack.c.l.b16 %v1204
    %v2428 = vunpack.c.h.b16 %v1204
    %v2429 = vunpack.c.l.b16 %v1205
    %v2430 = vunpack.c.h.b16 %v1205
    %v2431 = vunpack.c.l.b16 %v1206
    %v2432 = vunpack.c.h.b16 %v1206
    %v2433 = vunpack.c.l.b16 %v1207
    %v2434 = vunpack.c.h.b16 %v1207
    %v2435 = vunpack.c.l.b16 %v1208
    %v2436 = vunpack.c.h.b16 %v1208
    %v2437 = vunpack.c.l.b16 %v1209
    %v2438 = vunpack.c.h.b16 %v1209
    %v2439 = vunpack.c.l.b16 %v1210
    %v2440 = vunpack.c.h.b16 %v1210
    %v2441 = vunpack.c.l.b16 %v1211
    %v2442 = vunpack.c.h.b16 %v1211
    %v2443 = vunpack.c.l.b16 %v1212
    %v2444 = vunpack.c.h.b16 %v1212
    %v2445 = vunpack.c.l.b16 %v1213
    %v2446 = vunpack.c.h.b16 %v1213
    %v2447 = vunpack.c.l.b16 %v1214
    %v2448 = vunpack.c.h.b16 %v1214
    %v2449 = vunpack.c.l.b16 %v1215
    %v2450 = vunpack.c.h.b16 %v1215
    %v2451 = vunpack.c.l.b16 %v1216
    %v2452 = vunpack.c.h.b16 %v1216
    %v2453 = vunpack.c.l.b16 %v1217
    %v2454 = vunpack.c.h.b16 %v1217
    %v2455 = vunpack.c.l.b16 %v1218
    %v2456 = vunpack.c.h.b16 %v1218
    %v2457 = vunpack.c.l.b16 %v1219
    %v2458 = vunpack.c.h.b16 %v1219
    %v2459 = vunpack.c.l.b16 %v1220
    %v2460 = vunpack.c.h.b16 %v1220
    %v2461 = vunpack.c.l.b16 %v1221
    %v2462 = vunpack.c.h.b16 %v1221
    %v2463 = vunpack.c.l.b16 %v1222
    %v2464 = vunpack.c.h.b16 %v1222
    %v2465 = vunpack.c.l.b16 %v1223
    %v2466 = vunpack.c.h.b16 %v1223
    %v2467 = vunpack.c.l.b16 %v1224
    %v2468 = vunpack.c.h.b16 %v1224
    %v2469 = vunpack.c.l.b16 %v1225
    %v2470 = vunpack.c.h.b16 %v1225
    %v2471 = vunpack.c.l.b16 %v1226
    %v2472 = vunpack.c.h.b16 %v1226
    %v2473 = vunpack.c.l.b16 %v1227
    %v2474 = vunpack.c.h.b16 %v1227
    %v2475 = vunpack.c.l.b16 %v1228
    %v2476 = vunpack.c.h.b16 %v1228
    %v2477 = vunpack.c.l.b16 %v1229
    %v2478 = vunpack.c.h.b16 %v1229
    %v2479 = vunpack.c.l.b16 %v1230
    %v2480 = vunpack.c.h.b16 %v1230
    %v2481 = vunpack.c.l.b16 %v1231
    %v2482 = vunpack.c.h.b16 %v1231
    %v2483 = vunpack.c.l.b16 %v1232
    %v2484 = vunpack.c.h.b16 %v1232
    %v2485 = vunpack.c.l.b16 %v1233
    %v2486 = vunpack.c.h.b16 %v1233
    %v2487 = vunpack.c.l.b16 %v1234
    %v2488 = vunpack.c.h.b16 %v1234
    %v2489 = vunpack.c.l.b16 %v1235
    %v2490 = vunpack.c.h.b16 %v1235
    %v2491 = vunpack.c.l.b16 %v1236
    %v2492 = vunpack.c.h.b16 %v1236
    %v2493 = vunpack.c.l.b16 %v1237
    %v2494 = vunpack.c.h.b16 %v1237
    %v2495 = vunpack.c.l.b16 %v1238
    %v2496 = vunpack.c.h.b16 %v1238
    %v2497 = vunpack.c.l.b16 %v1239
    %v2498 = vunpack.c.h.b16 %v1239
    %v2499 = vunpack.c.l.b16 %v1240
    %v2500 = vunpack.c.h.b16 %v1240
    %v2501 = vunpack.c.l.b16 %v1241
    %v2502 = vunpack.c.h.b16 %v1241
    %v2503 = vunpack.c.l.b16 %v1242
    %v2504 = vunpack.c.h.b16 %v1242
    %v2505 = vunpack.c.l.b16 %v1243
    %v2506 = vunpack.c.h.b16 %v1243
    %v2507 = vunpack.c.l.b16 %v1244
    %v2508 = vunpack.c.h.b16 %v1244
    %v2509 = vunpack.c.l.b16 %v1245
    %v2510 = vunpack.c.h.b16 %v1245
    %v2511 = vunpack.c.l.b16 %v1246
    %v2512 = vunpack.c.h.b16 %v1246
    %v2513 = vunpack.c.l.b16 %v1247
    %v2514 = vunpack.c.h.b16 %v1247
    %v2515 = vunpack.c.l.b16 %v1248
    %v2516 = vunpack.c.h.b16 %v1248
    %v2517 = vunpack.c.l.b16 %v1249
    %v2518 = vunpack.c.h.b16 %v1249
    %v2519 = vunpack.c.l.b16 %v1250
    %v2520 = vunpack.c.h.b16 %v1250
    %v2521 = vunpack.c.l.b16 %v1251
    %v2522 = vunpack.c.h.b16 %v1251
    %v2523 = vunpack.c.l.b16 %v1252
    %v2524 = vunpack.c.h.b16 %v1252
    %v2525 = vunpack.c.l.b16 %v1253
    %v2526 = vunpack.c.h.b16 %v1253
    %v2527 = vunpack.c.l.b16 %v1254
    %v2528 = vunpack.c.h.b16 %v1254
    %v2529 = vunpack.c.l.b16 %v1255
    %v2530 = vunpack.c.h.b16 %v1255
    %v2531 = vunpack.c.l.b16 %v1256
    %v2532 = vunpack.c.h.b16 %v1256
    %v2533 = vunpack.c.l.b16 %v1257
    %v2534 = vunpack.c.h.b16 %v1257
    %v2535 = vunpack.c.l.b16 %v1258
    %v2536 = vunpack.c.h.b16 %v1258
    %v2537 = vunpack.c.l.b16 %v1259
    %v2538 = vunpack.c.h.b16 %v1259
    %v2539 = vunpack.c.l.b16 %v1260
    %v2540 = vunpack.c.h.b16 %v1260
    %v2541 = vunpack.c.l.b16 %v1261
    %v2542 = vunpack.c.h.b16 %v1261
    %v2543 = vunpack.c.l.b16 %v1262
    %v2544 = vunpack.c.h.b16 %v1262
    %v2545 = vunpack.c.l.b16 %v1263
    %v2546 = vunpack.c.h.b16 %v1263
    %v2547 = vunpack.c.l.b16 %v1264
    %v2548 = vunpack.c.h.b16 %v1264
    %v2549 = vunpack.c.l.b16 %v1265
    %v2550 = vunpack.c.h.b16 %v1265
    %v2551 = vunpack.c.l.b16 %v1266
    %v2552 = vunpack.c.h.b16 %v1266
    %v2553 = vunpack.c.l.b16 %v1267
    %v2554 = vunpack.c.h.b16 %v1267
    %v2555 = vunpack.c.l.b16 %v1268
    %v2556 = vunpack.c.h.b16 %v1268
    %v2557 = vunpack.c.l.b16 %v1269
    %v2558 = vunpack.c.h.b16 %v1269
    %v2559 = vunpack.c.l.b16 %v1270
    %v2560 = vunpack.c.h.b16 %v1270
    %v2561 = vunpack.c.l.b16 %v1271
    %v2562 = vunpack.c.h.b16 %v1271
    %v2563 = vunpack.c.l.b16 %v1272
    %v2564 = vunpack.c.h.b16 %v1272
    %v2565 = vunpack.c.l.b16 %v1273
    %v2566 = vunpack.c.h.b16 %v1273
    %v2567 = vunpack.c.l.b16 %v1274
    %v2568 = vunpack.c.h.b16 %v1274
    %v2569 = vunpack.c.l.b16 %v1275
    %v2570 = vunpack.c.h.b16 %v1275
    %v2571 = vunpack.c.l.b16 %v1276
    %v2572 = vunpack.c.h.b16 %v1276
    %v2573 = vunpack.c.l.b16 %v1277
    %v2574 = vunpack.c.h.b16 %v1277
    %v2575 = vunpack.c.l.b16 %v1278
    %v2576 = vunpack.c.h.b16 %v1278
    %v2577 = vunpack.c.l.b16 %v1279
    %v2578 = vunpack.c.h.b16 %v1279
    %v2579 = vunpack.c.l.b16 %v1280
    %v2580 = vunpack.c.h.b16 %v1280
    %v2581 = vunpack.c.l.b16 %v1281
    %v2582 = vunpack.c.h.b16 %v1281
    %v2583 = vunpack.c.l.b16 %v1282
    %v2584 = vunpack.c.h.b16 %v1282
    %v2585 = vunpack.c.l.b16 %v1283
    %v2586 = vunpack.c.h.b16 %v1283
    %v2587 = vunpack.c.l.b16 %v1284
    %v2588 = vunpack.c.h.b16 %v1284
    %v2589 = vunpack.c.l.b16 %v1285
    %v2590 = vunpack.c.h.b16 %v1285
    %v2591 = vunpack.c.l.b16 %v1286
    %v2592 = vunpack.c.h.b16 %v1286
    %v2593 = vunpack.c.l.b16 %v1287
    %v2594 = vunpack.c.h.b16 %v1287
    %v2595 = vunpack.c.l.b16 %v1288
    %v2596 = vunpack.c.h.b16 %v1288
    %v2597 = vunpack.c.l.b16 %v1289
    %v2598 = vunpack.c.h.b16 %v1289
    %v2599 = vunpack.c.l.b16 %v1290
    %v2600 = vunpack.c.h.b16 %v1290
    %v2601 = vunpack.c.l.b16 %v1291
    %v2602 = vunpack.c.h.b16 %v1291
    %v2603 = vunpack.c.l.b16 %v1292
    %v2604 = vunpack.c.h.b16 %v1292
    %v2605 = vunpack.c.l.b16 %v1293
    %v2606 = vunpack.c.h.b16 %v1293
    %v2607 = vunpack.c.l.b16 %v1294
    %v2608 = vunpack.c.h.b16 %v1294
    %v2609 = vunpack.c.l.b16 %v1295
    %v2610 = vunpack.c.h.b16 %v1295
    %v2611 = vunpack.c.l.b16 %v1296
    %v2612 = vunpack.c.h.b16 %v1296
    %v2613 = vunpack.c.l.b16 %v1297
    %v2614 = vunpack.c.h.b16 %v1297
    %v2615 = vunpack.c.l.b16 %v1298
    %v2616 = vunpack.c.h.b16 %v1298
    %v2617 = vunpack.c.l.b16 %v1299
    %v2618 = vunpack.c.h.b16 %v1299
    %v2619 = vunpack.c.l.b16 %v1300
    %v2620 = vunpack.c.h.b16 %v1300
    %v2621 = vunpack.c.l.b16 %v1301
    %v2622 = vunpack.c.h.b16 %v1301
    %v2623 = vunpack.c.l.b16 %v1302
    %v2624 = vunpack.c.h.b16 %v1302
    %v2625 = vunpack.c.l.b16 %v1303
    %v2626 = vunpack.c.h.b16 %v1303
    %v2627 = vunpack.c.l.b16 %v1304
    %v2628 = vunpack.c.h.b16 %v1304
    %v2629 = vunpack.c.l.b16 %v1305
    %v2630 = vunpack.c.h.b16 %v1305
    %v2631 = vunpack.c.l.b16 %v1306
    %v2632 = vunpack.c.h.b16 %v1306
    %v2633 = vunpack.c.l.b16 %v1307
    %v2634 = vunpack.c.h.b16 %v1307
    %v2635 = vunpack.c.l.b16 %v1308
    %v2636 = vunpack.c.h.b16 %v1308
    %v2637 = vunpack.c.l.b16 %v1309
    %v2638 = vunpack.c.h.b16 %v1309
    %v2639 = vunpack.c.l.b16 %v1310
    %v2640 = vunpack.c.h.b16 %v1310
    %v2641 = vunpack.c.l.b16 %v1311
    %v2642 = vunpack.c.h.b16 %v1311
    %v2643 = vunpack.c.l.b16 %v1312
    %v2644 = vunpack.c.h.b16 %v1312
    %v2645 = vunpack.c.l.b16 %v1313
    %v2646 = vunpack.c.h.b16 %v1313
    %v2647 = vunpack.c.l.b16 %v1314
    %v2648 = vunpack.c.h.b16 %v1314
    %v2649 = vunpack.c.l.b16 %v1315
    %v2650 = vunpack.c.h.b16 %v1315
    %v2651 = vunpack.c.l.b16 %v1316
    %v2652 = vunpack.c.h.b16 %v1316
    %v2653 = vunpack.c.l.b16 %v1317
    %v2654 = vunpack.c.h.b16 %v1317
    %v2655 = vunpack.c.l.b16 %v1318
    %v2656 = vunpack.c.h.b16 %v1318
    %v2657 = vunpack.c.l.b16 %v1319
    %v2658 = vunpack.c.h.b16 %v1319
    %v2659 = vunpack.c.l.b16 %v1320
    %v2660 = vunpack.c.h.b16 %v1320
    %v2661 = vunpack.c.l.b16 %v1321
    %v2662 = vunpack.c.h.b16 %v1321
    %v2663 = vunpack.c.l.b16 %v1322
    %v2664 = vunpack.c.h.b16 %v1322
    %v2665 = vunpack.c.l.b16 %v1323
    %v2666 = vunpack.c.h.b16 %v1323
    %v2667 = vunpack.c.l.b16 %v1324
    %v2668 = vunpack.c.h.b16 %v1324
    %v2669 = vunpack.c.l.b16 %v1325
    %v2670 = vunpack.c.h.b16 %v1325
    %v2671 = vunpack.c.l.b16 %v1326
    %v2672 = vunpack.c.h.b16 %v1326
    %v2673 = vunpack.c.l.b16 %v1327
    %v2674 = vunpack.c.h.b16 %v1327
    %v2675 = vunpack.c.l.b16 %v1328
    %v2676 = vunpack.c.h.b16 %v1328
    %v2677 = vunpack.c.l.b16 %v1329
    %v2678 = vunpack.c.h.b16 %v1329
    %v2679 = vunpack.c.l.b16 %v1330
    %v2680 = vunpack.c.h.b16 %v1330
    %v2681 = vunpack.c.l.b16 %v1331
    %v2682 = vunpack.c.h.b16 %v1331
    %v2683 = vunpack.c.l.b16 %v1332
    %v2684 = vunpack.c.h.b16 %v1332
    %v2685 = vunpack.c.l.b16 %v1333
    %v2686 = vunpack.c.h.b16 %v1333
    %v2687 = vunpack.c.l.b16 %v1334
    %v2688 = vunpack.c.h.b16 %v1334
    %v2689 = vunpack.c.l.b16 %v1335
    %v2690 = vunpack.c.h.b16 %v1335
    %v2691 = vunpack.c.l.b16 %v1336
    %v2692 = vunpack.c.h.b16 %v1336
    %v2693 = vunpack.c.l.b16 %v1337
    %v2694 = vunpack.c.h.b16 %v1337
    %v2695 = vunpack.c.l.b16 %v1338
    %v2696 = vunpack.c.h.b16 %v1338
    %v2697 = vunpack.c.l.b16 %v1339
    %v2698 = vunpack.c.h.b16 %v1339
    %v2699 = vunpack.c.l.b16 %v1340
    %v2700 = vunpack.c.h.b16 %v1340
    %v2701 = vunpack.c.l.b16 %v1341
    %v2702 = vunpack.c.h.b16 %v1341
    %v2703 = vunpack.c.l.b16 %v1342
    %v2704 = vunpack.c.h.b16 %v1342
    %v2705 = vunpack.c.l.b16 %v1343
    %v2706 = vunpack.c.h.b16 %v1343
    %v2707 = vunpack.c.l.b16 %v1344
    %v2708 = vunpack.c.h.b16 %v1344
    %v2709 = vunpack.c.l.b16 %v1345
    %v2710 = vunpack.c.h.b16 %v1345
    %v2711 = vunpack.c.l.b16 %v1346
    %v2712 = vunpack.c.h.b16 %v1346
    %v2713 = vunpack.c.l.b16 %v1347
    %v2714 = vunpack.c.h.b16 %v1347
    %v2715 = vunpack.c.l.b16 %v1348
    %v2716 = vunpack.c.h.b16 %v1348
    %v2717 = vunpack.c.l.b16 %v1349
    %v2718 = vunpack.c.h.b16 %v1349
    %v2719 = vunpack.c.l.b16 %v1350
    %v2720 = vunpack.c.h.b16 %v1350
    %v2721 = vunpack.c.l.b16 %v1351
    %v2722 = vunpack.c.h.b16 %v1351
    %v2723 = vunpack.c.l.b16 %v1352
    %v2724 = vunpack.c.h.b16 %v1352
    %v2725 = vunpack.c.l.b16 %v1353
    %v2726 = vunpack.c.h.b16 %v1353
    %v2727 = vunpack.c.l.b16 %v1354
    %v2728 = vunpack.c.h.b16 %v1354
    %v2729 = vunpack.c.l.b16 %v1355
    %v2730 = vunpack.c.h.b16 %v1355
    %v2731 = vunpack.c.l.b16 %v1356
    %v2732 = vunpack.c.h.b16 %v1356
    %v2733 = vunpack.c.l.b16 %v1357
    %v2734 = vunpack.c.h.b16 %v1357
    %v2735 = vunpack.c.l.b16 %v1358
    %v2736 = vunpack.c.h.b16 %v1358
    %v2737 = vunpack.c.l.b16 %v1359
    %v2738 = vunpack.c.h.b16 %v1359
    %v2739 = vunpack.c.l.b16 %v1360
    %v2740 = vunpack.c.h.b16 %v1360
    %v2741 = vunpack.c.l.b16 %v1361
    %v2742 = vunpack.c.h.b16 %v1361
    %v2743 = vunpack.c.l.b16 %v1362
    %v2744 = vunpack.c.h.b16 %v1362
    %v2745 = vunpack.c.l.b16 %v1363
    %v2746 = vunpack.c.h.b16 %v1363
    %v2747 = vunpack.c.l.b16 %v1364
    %v2748 = vunpack.c.h.b16 %v1364
    %v2749 = vunpack.c.l.b16 %v1365
    %v2750 = vunpack.c.h.b16 %v1365
    %v2751 = vunpack.c.l.b16 %v1366
    %v2752 = vunpack.c.h.b16 %v1366
    %v2753 = vunpack.c.l.b16 %v1367
    %v2754 = vunpack.c.h.b16 %v1367
    %v2755 = vunpack.c.l.b16 %v1368
    %v2756 = vunpack.c.h.b16 %v1368
    %v2757 = vunpack.c.l.b16 %v1369
    %v2758 = vunpack.c.h.b16 %v1369
    %v2759 = vunpack.c.l.b16 %v1370
    %v2760 = vunpack.c.h.b16 %v1370
    %v2761 = vunpack.c.l.b16 %v1371
    %v2762 = vunpack.c.h.b16 %v1371
    %v2763 = vunpack.c.l.b16 %v1372
    %v2764 = vunpack.c.h.b16 %v1372
    %v2765 = vunpack.c.l.b16 %v1373
    %v2766 = vunpack.c.h.b16 %v1373
    %v2767 = vunpack.c.l.b16 %v1374
    %v2768 = vunpack.c.h.b16 %v1374
    %v2769 = vunpack.c.l.b16 %v1375
    %v2770 = vunpack.c.h.b16 %v1375
    %v2771 = vunpack.c.l.b16 %v1376
    %v2772 = vunpack.c.h.b16 %v1376
    %v2773 = vunpack.c.l.b16 %v1377
    %v2774 = vunpack.c.h.b16 %v1377
    %v2775 = vunpack.c.l.b16 %v1378
    %v2776 = vunpack.c.h.b16 %v1378
    %v2777 = vunpack.c.l.b16 %v1379
    %v2778 = vunpack.c.h.b16 %v1379
    %v2779 = vunpack.c.l.b16 %v1380
    %v2780 = vunpack.c.h.b16 %v1380
    %v2781 = vunpack.c.l.b16 %v1381
    %v2782 = vunpack.c.h.b16 %v1381
    %v2783 = vunpack.c.l.b16 %v1382
    %v2784 = vunpack.c.h.b16 %v1382
    %v2785 = vunpack.c.l.b16 %v1383
    %v2786 = vunpack.c.h.b16 %v1383
    %v2787 = vunpack.c.l.b16 %v1384
    %v2788 = vunpack.c.h.b16 %v1384
    %v2789 = vunpack.c.l.b16 %v1385
    %v2790 = vunpack.c.h.b16 %v1385
    %v2791 = vunpack.c.l.b16 %v1386
    %v2792 = vunpack.c.h.b16 %v1386
    %v2793 = vunpack.c.l.b16 %v1387
    %v2794 = vunpack.c.h.b16 %v1387
    %v2795 = vunpack.c.l.b16 %v1388
    %v2796 = vunpack.c.h.b16 %v1388
    %v2797 = vunpack.c.l.b16 %v1389
    %v2798 = vunpack.c.h.b16 %v1389
    %v2799 = vunpack.c.l.b16 %v1390
    %v2800 = vunpack.c.h.b16 %v1390
    %v2801 = vunpack.c.l.b16 %v1391
    %v2802 = vunpack.c.h.b16 %v1391
    %v2803 = vunpack.c.l.b16 %v1392
    %v2804 = vunpack.c.h.b16 %v1392
    %v2805 = vunpack.c.l.b16 %v1393
    %v2806 = vunpack.c.h.b16 %v1393
    %v2807 = vunpack.c.l.b16 %v1394
    %v2808 = vunpack.c.h.b16 %v1394
    %v2809 = vunpack.c.l.b16 %v1395
    %v2810 = vunpack.c.h.b16 %v1395
    %v2811 = vunpack.c.l.b16 %v1396
    %v2812 = vunpack.c.h.b16 %v1396
    %v2813 = vunpack.c.l.b16 %v1397
    %v2814 = vunpack.c.h.b16 %v1397
    %v2815 = vunpack.c.l.b16 %v1398
    %v2816 = vunpack.c.h.b16 %v1398
    %v2817 = vunpack.c.l.b16 %v1399
    %v2818 = vunpack.c.h.b16 %v1399
    %v2819 = vunpack.c.l.b16 %v1400
    %v2820 = vunpack.c.h.b16 %v1400
    %v2821 = vunpack.c.l.b16 %v1401
    %v2822 = vunpack.c.h.b16 %v1401
    %v2823 = vunpack.c.l.b16 %v1402
    %v2824 = vunpack.c.h.b16 %v1402
    %v2825 = vunpack.c.l.b16 %v1403
    %v2826 = vunpack.c.h.b16 %v1403
    %v2827 = vunpack.c.l.b16 %v1404
    %v2828 = vunpack.c.h.b16 %v1404
    %v2829 = vunpack.c.l.b16 %v1405
    %v2830 = vunpack.c.h.b16 %v1405
    %v2831 = vunpack.c.l.b16 %v1406
    %v2832 = vunpack.c.h.b16 %v1406
    %v2833 = vunpack.c.l.b16 %v1407
    %v2834 = vunpack.c.h.b16 %v1407
    %v2835 = vunpack.c.l.b16 %v1408
    %v2836 = vunpack.c.h.b16 %v1408
    %v2837 = vunpack.c.l.b16 %v1409
    %v2838 = vunpack.c.h.b16 %v1409
    %v2839 = vunpack.c.l.b16 %v1410
    %v2840 = vunpack.c.h.b16 %v1410
    %v2841 = vunpack.c.l.b16 %v1411
    %v2842 = vunpack.c.h.b16 %v1411
    %v2843 = vunpack.c.l.b16 %v1412
    %v2844 = vunpack.c.h.b16 %v1412
    %v2845 = vunpack.c.l.b16 %v1413
    %v2846 = vunpack.c.h.b16 %v1413
    %v2847 = vunpack.c.l.b16 %v1414
    %v2848 = vunpack.c.h.b16 %v1414
    %v2849 = vunpack.c.l.b16 %v1415
    %v2850 = vunpack.c.h.b16 %v1415
    %v2851 = vunpack.c.l.b16 %v1416
    %v2852 = vunpack.c.h.b16 %v1416
    %v2853 = vunpack.c.l.b16 %v1417
    %v2854 = vunpack.c.h.b16 %v1417
    %v2855 = vunpack.c.l.b16 %v1418
    %v2856 = vunpack.c.h.b16 %v1418
    %v2857 = vunpack.c.l.b16 %v1419
    %v2858 = vunpack.c.h.b16 %v1419
    %v2859 = vunpack.c.l.b16 %v1420
    %v2860 = vunpack.c.h.b16 %v1420
    %v2861 = vunpack.c.l.b16 %v1421
    %v2862 = vunpack.c.h.b16 %v1421
    %v2863 = vunpack.c.l.b16 %v1422
    %v2864 = vunpack.c.h.b16 %v1422
    %v2865 = vunpack.c.l.b16 %v1423
    %v2866 = vunpack.c.h.b16 %v1423
    %v2867 = vunpack.c.l.b16 %v1424
    %v2868 = vunpack.c.h.b16 %v1424
    %v2869 = vunpack.c.l.b16 %v1425
    %v2870 = vunpack.c.h.b16 %v1425
    %v2871 = vunpack.c.l.b16 %v1426
    %v2872 = vunpack.c.h.b16 %v1426
    %v2873 = vunpack.c.l.b16 %v1427
    %v2874 = vunpack.c.h.b16 %v1427
    %v2875 = vunpack.c.l.b16 %v1428
    %v2876 = vunpack.c.h.b16 %v1428
    %v2877 = vunpack.c.l.b16 %v1429
    %v2878 = vunpack.c.h.b16 %v1429
    %v2879 = vunpack.c.l.b16 %v1430
    %v2880 = vunpack.c.h.b16 %v1430
    %v2881 = vunpack.c.l.b16 %v1431
    %v2882 = vunpack.c.h.b16 %v1431
    %v2883 = vunpack.c.l.b16 %v1432
    %v2884 = vunpack.c.h.b16 %v1432
    %v2885 = vunpack.c.l.b16 %v1433
    %v2886 = vunpack.c.h.b16 %v1433
    %v2887 = vunpack.c.l.b16 %v1434
    %v2888 = vunpack.c.h.b16 %v1434
    %v2889 = vunpack.c.l.b16 %v1435
    %v2890 = vunpack.c.h.b16 %v1435
    %v2891 = vunpack.c.l.b16 %v1436
    %v2892 = vunpack.c.h.b16 %v1436
    %v2893 = vunpack.c.l.b16 %v1437
    %v2894 = vunpack.c.h.b16 %v1437
    %v2895 = vunpack.c.l.b16 %v1438
    %v2896 = vunpack.c.h.b16 %v1438
    %v2897 = vunpack.c.l.b16 %v1439
    %v2898 = vunpack.c.h.b16 %v1439
    %v2899 = vunpack.c.l.b16 %v1440
    %v2900 = vunpack.c.h.b16 %v1440
    %v2901 = vunpack.c.l.b16 %v1441
    %v2902 = vunpack.c.h.b16 %v1441
    %v2903 = vunpack.c.l.b16 %v1442
    %v2904 = vunpack.c.h.b16 %v1442
    %v2905 = vunpack.c.l.b16 %v1443
    %v2906 = vunpack.c.h.b16 %v1443
    %v2907 = vunpack.c.l.b16 %v1444
    %v2908 = vunpack.c.h.b16 %v1444
    %v2909 = vunpack.c.l.b16 %v1445
    %v2910 = vunpack.c.h.b16 %v1445
    %v2911 = vunpack.c.l.b16 %v1446
    %v2912 = vunpack.c.h.b16 %v1446
    %v2913 = vunpack.c.l.b16 %v1447
    %v2914 = vunpack.c.h.b16 %v1447
    %v2915 = vunpack.c.l.b16 %v1448
    %v2916 = vunpack.c.h.b16 %v1448
    %v2917 = vunpack.c.l.b16 %v1449
    %v2918 = vunpack.c.h.b16 %v1449
    %v2919 = vunpack.c.l.b16 %v1450
    %v2920 = vunpack.c.h.b16 %v1450
    %v2921 = vunpack.c.l.b16 %v1451
    %v2922 = vunpack.c.h.b16 %v1451
    %v2923 = vunpack.c.l.b16 %v1452
    %v2924 = vunpack.c.h.b16 %v1452
    %v2925 = vunpack.c.l.b16 %v1453
    %v2926 = vunpack.c.h.b16 %v1453
    %v2927 = vunpack.c.l.b16 %v1454
    %v2928 = vunpack.c.h.b16 %v1454
    %v2929 = vunpack.c.l.b16 %v1455
    %v2930 = vunpack.c.h.b16 %v1455
    %v2931 = vunpack.c.l.b16 %v1456
    %v2932 = vunpack.c.h.b16 %v1456
    %v2933 = vunpack.c.l.b16 %v1457
    %v2934 = vunpack.c.h.b16 %v1457
    %v2935 = vunpack.c.l.b16 %v1458
    %v2936 = vunpack.c.h.b16 %v1458
    %v2937 = vunpack.c.l.b16 %v1459
    %v2938 = vunpack.c.h.b16 %v1459
    %v2939 = vunpack.c.l.b16 %v1460
    %v2940 = vunpack.c.h.b16 %v1460
    %v2941 = vunpack.c.l.b16 %v1461
    %v2942 = vunpack.c.h.b16 %v1461
    %v2943 = vunpack.c.l.b16 %v1462
    %v2944 = vunpack.c.h.b16 %v1462
    %v2945 = vunpack.c.l.b16 %v1463
    %v2946 = vunpack.c.h.b16 %v1463
    %v2947 = vunpack.c.l.b16 %v1464
    %v2948 = vunpack.c.h.b16 %v1464
    %v2949 = vunpack.c.l.b16 %v1465
    %v2950 = vunpack.c.h.b16 %v1465
    %v2951 = vunpack.c.l.b16 %v1466
    %v2952 = vunpack.c.h.b16 %v1466
    %v2953 = vunpack.c.l.b16 %v1467
    %v2954 = vunpack.c.h.b16 %v1467
    %v2955 = vunpack.c.l.b16 %v1468
    %v2956 = vunpack.c.h.b16 %v1468
    %v2957 = vunpack.c.l.b16 %v1469
    %v2958 = vunpack.c.h.b16 %v1469
    %v2959 = vunpack.c.l.b16 %v1470
    %v2960 = vunpack.c.h.b16 %v1470
    %v2961 = vunpack.c.l.b16 %v1471
    %v2962 = vunpack.c.h.b16 %v1471
    %v2963 = vunpack.c.l.b16 %v1472
    %v2964 = vunpack.c.h.b16 %v1472
    %v2965 = vunpack.c.l.b16 %v1473
    %v2966 = vunpack.c.h.b16 %v1473
    %v2967 = vunpack.c.l.b16 %v1474
    %v2968 = vunpack.c.h.b16 %v1474
    %v2969 = vunpack.c.l.b16 %v1475
    %v2970 = vunpack.c.h.b16 %v1475
    %v2971 = vunpack.c.l.b16 %v1476
    %v2972 = vunpack.c.h.b16 %v1476
    %v2973 = vunpack.c.l.b16 %v1477
    %v2974 = vunpack.c.h.b16 %v1477
    %v2975 = vunpack.c.l.b16 %v1478
    %v2976 = vunpack.c.h.b16 %v1478
    %v2977 = vunpack.c.l.b16 %v1479
    %v2978 = vunpack.c.h.b16 %v1479
    %v2979 = vunpack.c.l.b16 %v1480
    %v2980 = vunpack.c.h.b16 %v1480
    %v2981 = vunpack.c.l.b16 %v1481
    %v2982 = vunpack.c.h.b16 %v1481
    %v2983 = vunpack.c.l.b16 %v1482
    %v2984 = vunpack.c.h.b16 %v1482
    %v2985 = vunpack.c.l.b16 %v1483
    %v2986 = vunpack.c.h.b16 %v1483
    %v2987 = vunpack.c.l.b16 %v1484
    %v2988 = vunpack.c.h.b16 %v1484
    %v2989 = vunpack.c.l.b16 %v1485
    %v2990 = vunpack.c.h.b16 %v1485
    %v2991 = vunpack.c.l.b16 %v1486
    %v2992 = vunpack.c.h.b16 %v1486
    %v2993 = vunpack.c.l.b16 %v1487
    %v2994 = vunpack.c.h.b16 %v1487
    %v2995 = vunpack.c.l.b16 %v1488
    %v2996 = vunpack.c.h.b16 %v1488
    %v2997 = vunpack.c.l.b16 %v1489
    %v2998 = vunpack.c.h.b16 %v1489
    %v2999 = vunpack.c.l.b16 %v1490
    %v3000 = vunpack.c.h.b16 %v1490
    %v3001 = vunpack.c.l.b16 %v1491
    %v3002 = vunpack.c.h.b16 %v1491
    %v3003 = vunpack.c.l.b16 %v1492
    %v3004 = vunpack.c.h.b16 %v1492
    %v3005 = vunpack.c.l.b16 %v1493
    %v3006 = vunpack.c.h.b16 %v1493
    %v3007 = vunpack.c.l.b16 %v1494
    %v3008 = vunpack.c.h.b16 %v1494
    %v3009 = vunpack.c.l.b16 %v1495
    %v3010 = vunpack.c.h.b16 %v1495
    %v3011 = vunpack.c.l.b16 %v1496
    %v3012 = vunpack.c.h.b16 %v1496
    %v3013 = vunpack.c.l.b16 %v1497
    %v3014 = vunpack.c.h.b16 %v1497
    %v3015 = vunpack.c.l.b16 %v1498
    %v3016 = vunpack.c.h.b16 %v1498
    %v3017 = vunpack.c.l.b16 %v1499
    %v3018 = vunpack.c.h.b16 %v1499
    %v3019 = vunpack.c.l.b16 %v1500
    %v3020 = vunpack.c.h.b16 %v1500
    %v3021 = vunpack.c.l.b16 %v1501
    %v3022 = vunpack.c.h.b16 %v1501
    %v3023 = vunpack.c.l.b16 %v1502
    %v3024 = vunpack.c.h.b16 %v1502
    %v3025 = vunpack.c.l.b16 %v1503
    %v3026 = vunpack.c.h.b16 %v1503
    %v3027 = vunpack.c.l.b16 %v1504
    %v3028 = vunpack.c.h.b16 %v1504
    %v3029 = vunpack.c.l.b16 %v1505
    %v3030 = vunpack.c.h.b16 %v1505
    %v3031 = vunpack.c.l.b16 %v1506
    %v3032 = vunpack.c.h.b16 %v1506
    %v3033 = vunpack.c.l.b16 %v1507
    %v3034 = vunpack.c.h.b16 %v1507
    %v3035 = vunpack.c.l.b16 %v1508
    %v3036 = vunpack.c.h.b16 %v1508
    %v3037 = vunpack.c.l.b16 %v1509
    %v3038 = vunpack.c.h.b16 %v1509
    %v3039 = vunpack.c.l.b16 %v1510
    %v3040 = vunpack.c.h.b16 %v1510
    %v3041 = vunpack.c.l.b16 %v1511
    %v3042 = vunpack.c.h.b16 %v1511
    %v3043 = vunpack.c.l.b16 %v1512
    %v3044 = vunpack.c.h.b16 %v1512
    %v3045 = vunpack.c.l.b16 %v1513
    %v3046 = vunpack.c.h.b16 %v1513
    %v3047 = vunpack.c.l.b16 %v1514
    %v3048 = vunpack.c.h.b16 %v1514
    %v3049 = vunpack.c.l.b16 %v1515
    %v3050 = vunpack.c.h.b16 %v1515
    %v3051 = vunpack.c.l.b16 %v1516
    %v3052 = vunpack.c.h.b16 %v1516
    %v3053 = vpack.c.b16 %v2037, %v2029
    %v3054 = vpack.c.b16 %v2038, %v2030
    %v3055 = vpack.c.b16 %v2039, %v2031
    %v3056 = vpack.c.b16 %v2040, %v2032
    %v3057 = vpack.c.b16 %v2041, %v2033
    %v3058 = vpack.c.b16 %v2042, %v2034
    %v3059 = vpack.c.b16 %v2043, %v2035
    %v3060 = vpack.c.b16 %v2044, %v2036
    %v3061 = vpack.c.b16 %v2053, %v2045
    %v3062 = vpack.c.b16 %v2054, %v2046
    %v3063 = vpack.c.b16 %v2055, %v2047
    %v3064 = vpack.c.b16 %v2056, %v2048
    %v3065 = vpack.c.b16 %v2057, %v2049
    %v3066 = vpack.c.b16 %v2058, %v2050
    %v3067 = vpack.c.b16 %v2059, %v2051
    %v3068 = vpack.c.b16 %v2060, %v2052
    %v3069 = vpack.c.b16 %v2069, %v2061
    %v3070 = vpack.c.b16 %v2070, %v2062
    %v3071 = vpack.c.b16 %v2071, %v2063
    %v3072 = vpack.c.b16 %v2072, %v2064
    %v3073 = vpack.c.b16 %v2073, %v2065
    %v3074 = vpack.c.b16 %v2074, %v2066
    %v3075 = vpack.c.b16 %v2075, %v2067
    %v3076 = vpack.c.b16 %v2076, %v2068
    %v3077 = vpack.c.b16 %v2085, %v2077
    %v3078 = vpack.c.b16 %v2086, %v2078
    %v3079 = vpack.c.b16 %v2087, %v2079
    %v3080 = vpack.c.b16 %v2088, %v2080
    %v3081 = vpack.c.b16 %v2089, %v2081
    %v3082 = vpack.c.b16 %v2090, %v2082
    %v3083 = vpack.c.b16 %v2091, %v2083
    %v3084 = vpack.c.b16 %v2092, %v2084
    %v3085 = vpack.c.b16 %v2101, %v2093
    %v3086 = vpack.c.b16 %v2102, %v2094
    %v3087 = vpack.c.b16 %v2103, %v2095
    %v3088 = vpack.c.b16 %v2104, %v2096
    %v3089 = vpack.c.b16 %v2105, %v2097
    %v3090 = vpack.c.b16 %v2106, %v2098
    %v3091 = vpack.c.b16 %v2107, %v2099
    %v3092 = vpack.c.b16 %v2108, %v2100
    %v3093 = vpack.c.b16 %v2117, %v2109
    %v3094 = vpack.c.b16 %v2118, %v2110
    %v3095 = vpack.c.b16 %v2119, %v2111
    %v3096 = vpack.c.b16 %v2120, %v2112
    %v3097 = vpack.c.b16 %v2121, %v2113
    %v3098 = vpack.c.b16 %v2122, %v2114
    %v3099 = vpack.c.b16 %v2123, %v2115
    %v3100 = vpack.c.b16 %v2124, %v2116
    %v3101 = vpack.c.b16 %v2133, %v2125
    %v3102 = vpack.c.b16 %v2134, %v2126
    %v3103 = vpack.c.b16 %v2135, %v2127
    %v3104 = vpack.c.b16 %v2136, %v2128
    %v3105 = vpack.c.b16 %v2137, %v2129
    %v3106 = vpack.c.b16 %v2138, %v2130
    %v3107 = vpack.c.b16 %v2139, %v2131
    %v3108 = vpack.c.b16 %v2140, %v2132
    %v3109 = vpack.c.b16 %v2149, %v2141
    %v3110 = vpack.c.b16 %v2150, %v2142
    %v3111 = vpack.c.b16 %v2151, %v2143
    %v3112 = vpack.c.b16 %v2152, %v2144
    %v3113 = vpack.c.b16 %v2153, %v2145
    %v3114 = vpack.c.b16 %v2154, %v2146
    %v3115 = vpack.c.b16 %v2155, %v2147
    %v3116 = vpack.c.b16 %v2156, %v2148
    %v3117 = vpack.c.b16 %v2165, %v2157
    %v3118 = vpack.c.b16 %v2166, %v2158
    %v3119 = vpack.c.b16 %v2167, %v2159
    %v3120 = vpack.c.b16 %v2168, %v2160
    %v3121 = vpack.c.b16 %v2169, %v2161
    %v3122 = vpack.c.b16 %v2170, %v2162
    %v3123 = vpack.c.b16 %v2171, %v2163
    %v3124 = vpack.c.b16 %v2172, %v2164
    %v3125 = vpack.c.b16 %v2181, %v2173
    %v3126 = vpack.c.b16 %v2182, %v2174
    %v3127 = vpack.c.b16 %v2183, %v2175
    %v3128 = vpack.c.b16 %v2184, %v2176
    %v3129 = vpack.c.b16 %v2185, %v2177
    %v3130 = vpack.c.b16 %v2186, %v2178
    %v3131 = vpack.c.b16 %v2187, %v2179
    %v3132 = vpack.c.b16 %v2188, %v2180
    %v3133 = vpack.c.b16 %v2197, %v2189
    %v3134 = vpack.c.b16 %v2198, %v2190
    %v3135 = vpack.c.b16 %v2199, %v2191
    %v3136 = vpack.c.b16 %v2200, %v2192
    %v3137 = vpack.c.b16 %v2201, %v2193
    %v3138 = vpack.c.b16 %v2202, %v2194
    %v3139 = vpack.c.b16 %v2203, %v2195
    %v3140 = vpack.c.b16 %v2204, %v2196
    %v3141 = vpack.c.b16 %v2213, %v2205
    %v3142 = vpack.c.b16 %v2214, %v2206
    %v3143 = vpack.c.b16 %v2215, %v2207
    %v3144 = vpack.c.b16 %v2216, %v2208
    %v3145 = vpack.c.b16 %v2217, %v2209
    %v3146 = vpack.c.b16 %v2218, %v2210
    %v3147 = vpack.c.b16 %v2219, %v2211
    %v3148 = vpack.c.b16 %v2220, %v2212
    %v3149 = vpack.c.b16 %v2229, %v2221
    %v3150 = vpack.c.b16 %v2230, %v2222
    %v3151 = vpack.c.b16 %v2231, %v2223
    %v3152 = vpack.c.b16 %v2232, %v2224
    %v3153 = vpack.c.b16 %v2233, %v2225
    %v3154 = vpack.c.b16 %v2234, %v2226
    %v3155 = vpack.c.b16 %v2235, %v2227
    %v3156 = vpack.c.b16 %v2236, %v2228
    %v3157 = vpack.c.b16 %v2245, %v2237
    %v3158 = vpack.c.b16 %v2246, %v2238
    %v3159 = vpack.c.b16 %v2247, %v2239
    %v3160 = vpack.c.b16 %v2248, %v2240
    %v3161 = vpack.c.b16 %v2249, %v2241
    %v3162 = vpack.c.b16 %v2250, %v2242
    %v3163 = vpack.c.b16 %v2251, %v2243
    %v3164 = vpack.c.b16 %v2252, %v2244
    %v3165 = vpack.c.b16 %v2261, %v2253
    %v3166 = vpack.c.b16 %v2262, %v2254
    %v3167 = vpack.c.b16 %v2263, %v2255
    %v3168 = vpack.c.b16 %v2264, %v2256
    %v3169 = vpack.c.b16 %v2265, %v2257
    %v3170 = vpack.c.b16 %v2266, %v2258
    %v3171 = vpack.c.b16 %v2267, %v2259
    %v3172 = vpack.c.b16 %v2268, %v2260
    %v3173 = vpack.c.b16 %v2277, %v2269
    %v3174 = vpack.c.b16 %v2278, %v2270
    %v3175 = vpack.c.b16 %v2279, %v2271
    %v3176 = vpack.c.b16 %v2280, %v2272
    %v3177 = vpack.c.b16 %v2281, %v2273
    %v3178 = vpack.c.b16 %v2282, %v2274
    %v3179 = vpack.c.b16 %v2283, %v2275
    %v3180 = vpack.c.b16 %v2284, %v2276
    %v3181 = vpack.c.b16 %v2293, %v2285
    %v3182 = vpack.c.b16 %v2294, %v2286
    %v3183 = vpack.c.b16 %v2295, %v2287
    %v3184 = vpack.c.b16 %v2296, %v2288
    %v3185 = vpack.c.b16 %v2297, %v2289
    %v3186 = vpack.c.b16 %v2298, %v2290
    %v3187 = vpack.c.b16 %v2299, %v2291
    %v3188 = vpack.c.b16 %v2300, %v2292
    %v3189 = vpack.c.b16 %v2309, %v2301
    %v3190 = vpack.c.b16 %v2310, %v2302
    %v3191 = vpack.c.b16 %v2311, %v2303
    %v3192 = vpack.c.b16 %v2312, %v2304
    %v3193 = vpack.c.b16 %v2313, %v2305
    %v3194 = vpack.c.b16 %v2314, %v2306
    %v3195 = vpack.c.b16 %v2315, %v2307
    %v3196 = vpack.c.b16 %v2316, %v2308
    %v3197 = vpack.c.b16 %v2325, %v2317
    %v3198 = vpack.c.b16 %v2326, %v2318
    %v3199 = vpack.c.b16 %v2327, %v2319
    %v3200 = vpack.c.b16 %v2328, %v2320
    %v3201 = vpack.c.b16 %v2329, %v2321
    %v3202 = vpack.c.b16 %v2330, %v2322
    %v3203 = vpack.c.b16 %v2331, %v2323
    %v3204 = vpack.c.b16 %v2332, %v2324
    %v3205 = vpack.c.b16 %v2341, %v2333
    %v3206 = vpack.c.b16 %v2342, %v2334
    %v3207 = vpack.c.b16 %v2343, %v2335
    %v3208 = vpack.c.b16 %v2344, %v2336
    %v3209 = vpack.c.b16 %v2345, %v2337
    %v3210 = vpack.c.b16 %v2346, %v2338
    %v3211 = vpack.c.b16 %v2347, %v2339
    %v3212 = vpack.c.b16 %v2348, %v2340
    %v3213 = vpack.c.b16 %v2357, %v2349
    %v3214 = vpack.c.b16 %v2358, %v2350
    %v3215 = vpack.c.b16 %v2359, %v2351
    %v3216 = vpack.c.b16 %v2360, %v2352
    %v3217 = vpack.c.b16 %v2361, %v2353
    %v3218 = vpack.c.b16 %v2362, %v2354
    %v3219 = vpack.c.b16 %v2363, %v2355
    %v3220 = vpack.c.b16 %v2364, %v2356
    %v3221 = vpack.c.b16 %v2373, %v2365
    %v3222 = vpack.c.b16 %v2374, %v2366
    %v3223 = vpack.c.b16 %v2375, %v2367
    %v3224 = vpack.c.b16 %v2376, %v2368
    %v3225 = vpack.c.b16 %v2377, %v2369
    %v3226 = vpack.c.b16 %v2378, %v2370
    %v3227 = vpack.c.b16 %v2379, %v2371
    %v3228 = vpack.c.b16 %v2380, %v2372
    %v3229 = vpack.c.b16 %v2389, %v2381
    %v3230 = vpack.c.b16 %v2390, %v2382
    %v3231 = vpack.c.b16 %v2391, %v2383
    %v3232 = vpack.c.b16 %v2392, %v2384
    %v3233 = vpack.c.b16 %v2393, %v2385
    %v3234 = vpack.c.b16 %v2394, %v2386
    %v3235 = vpack.c.b16 %v2395, %v2387
    %v3236 = vpack.c.b16 %v2396, %v2388
    %v3237 = vpack.c.b16 %v2405, %v2397
    %v3238 = vpack.c.b16 %v2406, %v2398
    %v3239 = vpack.c.b16 %v2407, %v2399
    %v3240 = vpack.c.b16 %v2408, %v2400
    %v3241 = vpack.c.b16 %v2409, %v2401
    %v3242 = vpack.c.b16 %v2410, %v2402
    %v3243 = vpack.c.b16 %v2411, %v2403
    %v3244 = vpack.c.b16 %v2412, %v2404
    %v3245 = vpack.c.b16 %v2421, %v2413
    %v3246 = vpack.c.b16 %v2422, %v2414
    %v3247 = vpack.c.b16 %v2423, %v2415
    %v3248 = vpack.c.b16 %v2424, %v2416
    %v3249 = vpack.c.b16 %v2425, %v2417
    %v3250 = vpack.c.b16 %v2426, %v2418
    %v3251 = vpack.c.b16 %v2427, %v2419
    %v3252 = vpack.c.b16 %v2428, %v2420
    %v3253 = vpack.c.b16 %v2437, %v2429
    %v3254 = vpack.c.b16 %v2438, %v2430
    %v3255 = vpack.c.b16 %v2439, %v2431
    %v3256 = vpack.c.b16 %v2440, %v2432
    %v3257 = vpack.c.b16 %v2441, %v2433
    %v3258 = vpack.c.b16 %v2442, %v2434
    %v3259 = vpack.c.b16 %v2443, %v2435
    %v3260 = vpack.c.b16 %v2444, %v2436
    %v3261 = vpack.c.b16 %v2453, %v2445
    %v3262 = vpack.c.b16 %v2454, %v2446
    %v3263 = vpack.c.b16 %v2455, %v2447
    %v3264 = vpack.c.b16 %v2456, %v2448
    %v3265 = vpack.c.b16 %v2457, %v2449
    %v3266 = vpack.c.b16 %v2458, %v2450
    %v3267 = vpack.c.b16 %v2459, %v2451
    %v3268 = vpack.c.b16 %v2460, %v2452
    %v3269 = vpack.c.b16 %v2469, %v2461
    %v3270 = vpack.c.b16 %v2470, %v2462
    %v3271 = vpack.c.b16 %v2471, %v2463
    %v3272 = vpack.c.b16 %v2472, %v2464
    %v3273 = vpack.c.b16 %v2473, %v2465
    %v3274 = vpack.c.b16 %v2474, %v2466
    %v3275 = vpack.c.b16 %v2475, %v2467
    %v3276 = vpack.c.b16 %v2476, %v2468
    %v3277 = vpack.c.b16 %v2485, %v2477
    %v3278 = vpack.c.b16 %v2486, %v2478
    %v3279 = vpack.c.b16 %v2487, %v2479
    %v3280 = vpack.c.b16 %v2488, %v2480
    %v3281 = vpack.c.b16 %v2489, %v2481
    %v3282 = vpack.c.b16 %v2490, %v2482
    %v3283 = vpack.c.b16 %v2491, %v2483
    %v3284 = vpack.c.b16 %v2492, %v2484
    %v3285 = vpack.c.b16 %v2501, %v2493
    %v3286 = vpack.c.b16 %v2502, %v2494
    %v3287 = vpack.c.b16 %v2503, %v2495
    %v3288 = vpack.c.b16 %v2504, %v2496
    %v3289 = vpack.c.b16 %v2505, %v2497
    %v3290 = vpack.c.b16 %v2506, %v2498
    %v3291 = vpack.c.b16 %v2507, %v2499
    %v3292 = vpack.c.b16 %v2508, %v2500
    %v3293 = vpack.c.b16 %v2517, %v2509
    %v3294 = vpack.c.b16 %v2518, %v2510
    %v3295 = vpack.c.b16 %v2519, %v2511
    %v3296 = vpack.c.b16 %v2520, %v2512
    %v3297 = vpack.c.b16 %v2521, %v2513
    %v3298 = vpack.c.b16 %v2522, %v2514
    %v3299 = vpack.c.b16 %v2523, %v2515
    %v3300 = vpack.c.b16 %v2524, %v2516
    %v3301 = vpack.c.b16 %v2533, %v2525
    %v3302 = vpack.c.b16 %v2534, %v2526
    %v3303 = vpack.c.b16 %v2535, %v2527
    %v3304 = vpack.c.b16 %v2536, %v2528
    %v3305 = vpack.c.b16 %v2537, %v2529
    %v3306 = vpack.c.b16 %v2538, %v2530
    %v3307 = vpack.c.b16 %v2539, %v2531
    %v3308 = vpack.c.b16 %v2540, %v2532
    %v3309 = vpack.c.b16 %v2549, %v2541
    %v3310 = vpack.c.b16 %v2550, %v2542
    %v3311 = vpack.c.b16 %v2551, %v2543
    %v3312 = vpack.c.b16 %v2552, %v2544
    %v3313 = vpack.c.b16 %v2553, %v2545
    %v3314 = vpack.c.b16 %v2554, %v2546
    %v3315 = vpack.c.b16 %v2555, %v2547
    %v3316 = vpack.c.b16 %v2556, %v2548
    %v3317 = vpack.c.b16 %v2565, %v2557
    %v3318 = vpack.c.b16 %v2566, %v2558
    %v3319 = vpack.c.b16 %v2567, %v2559
    %v3320 = vpack.c.b16 %v2568, %v2560
    %v3321 = vpack.c.b16 %v2569, %v2561
    %v3322 = vpack.c.b16 %v2570, %v2562
    %v3323 = vpack.c.b16 %v2571, %v2563
    %v3324 = vpack.c.b16 %v2572, %v2564
    %v3325 = vpack.c.b16 %v2581, %v2573
    %v3326 = vpack.c.b16 %v2582, %v2574
    %v3327 = vpack.c.b16 %v2583, %v2575
    %v3328 = vpack.c.b16 %v2584, %v2576
    %v3329 = vpack.c.b16 %v2585, %v2577
    %v3330 = vpack.c.b16 %v2586, %v2578
    %v3331 = vpack.c.b16 %v2587, %v2579
    %v3332 = vpack.c.b16 %v2588, %v2580
    %v3333 = vpack.c.b16 %v2597, %v2589
    %v3334 = vpack.c.b16 %v2598, %v2590
    %v3335 = vpack.c.b16 %v2599, %v2591
    %v3336 = vpack.c.b16 %v2600, %v2592
    %v3337 = vpack.c.b16 %v2601, %v2593
    %v3338 = vpack.c.b16 %v2602, %v2594
    %v3339 = vpack.c.b16 %v2603, %v2595
    %v3340 = vpack.c.b16 %v2604, %v2596
    %v3341 = vpack.c.b16 %v2613, %v2605
    %v3342 = vpack.c.b16 %v2614, %v2606
    %v3343 = vpack.c.b16 %v2615, %v2607
    %v3344 = vpack.c.b16 %v2616, %v2608
    %v3345 = vpack.c.b16 %v2617, %v2609
    %v3346 = vpack.c.b16 %v2618, %v2610
    %v3347 = vpack.c.b16 %v2619, %v2611
    %v3348 = vpack.c.b16 %v2620, %v2612
    %v3349 = vpack.c.b16 %v2629, %v2621
    %v3350 = vpack.c.b16 %v2630, %v2622
    %v3351 = vpack.c.b16 %v2631, %v2623
    %v3352 = vpack.c.b16 %v2632, %v2624
    %v3353 = vpack.c.b16 %v2633, %v2625
    %v3354 = vpack.c.b16 %v2634, %v2626
    %v3355 = vpack.c.b16 %v2635, %v2627
    %v3356 = vpack.c.b16 %v2636, %v2628
    %v3357 = vpack.c.b16 %v2645, %v2637
    %v3358 = vpack.c.b16 %v2646, %v2638
    %v3359 = vpack.c.b16 %v2647, %v2639
    %v3360 = vpack.c.b16 %v2648, %v2640
    %v3361 = vpack.c.b16 %v2649, %v2641
    %v3362 = vpack.c.b16 %v2650, %v2642
    %v3363 = vpack.c.b16 %v2651, %v2643
    %v3364 = vpack.c.b16 %v2652, %v2644
    %v3365 = vpack.c.b16 %v2661, %v2653
    %v3366 = vpack.c.b16 %v2662, %v2654
    %v3367 = vpack.c.b16 %v2663, %v2655
    %v3368 = vpack.c.b16 %v2664, %v2656
    %v3369 = vpack.c.b16 %v2665, %v2657
    %v3370 = vpack.c.b16 %v2666, %v2658
    %v3371 = vpack.c.b16 %v2667, %v2659
    %v3372 = vpack.c.b16 %v2668, %v2660
    %v3373 = vpack.c.b16 %v2677, %v2669
    %v3374 = vpack.c.b16 %v2678, %v2670
    %v3375 = vpack.c.b16 %v2679, %v2671
    %v3376 = vpack.c.b16 %v2680, %v2672
    %v3377 = vpack.c.b16 %v2681, %v2673
    %v3378 = vpack.c.b16 %v2682, %v2674
    %v3379 = vpack.c.b16 %v2683, %v2675
    %v3380 = vpack.c.b16 %v2684, %v2676
    %v3381 = vpack.c.b16 %v2693, %v2685
    %v3382 = vpack.c.b16 %v2694, %v2686
    %v3383 = vpack.c.b16 %v2695, %v2687
    %v3384 = vpack.c.b16 %v2696, %v2688
    %v3385 = vpack.c.b16 %v2697, %v2689
    %v3386 = vpack.c.b16 %v2698, %v2690
    %v3387 = vpack.c.b16 %v2699, %v2691
    %v3388 = vpack.c.b16 %v2700, %v2692
    %v3389 = vpack.c.b16 %v2709, %v2701
    %v3390 = vpack.c.b16 %v2710, %v2702
    %v3391 = vpack.c.b16 %v2711, %v2703
    %v3392 = vpack.c.b16 %v2712, %v2704
    %v3393 = vpack.c.b16 %v2713, %v2705
    %v3394 = vpack.c.b16 %v2714, %v2706
    %v3395 = vpack.c.b16 %v2715, %v2707
    %v3396 = vpack.c.b16 %v2716, %v2708
    %v3397 = vpack.c.b16 %v2725, %v2717
    %v3398 = vpack.c.b16 %v2726, %v2718
    %v3399 = vpack.c.b16 %v2727, %v2719
    %v3400 = vpack.c.b16 %v2728, %v2720
    %v3401 = vpack.c.b16 %v2729, %v2721
    %v3402 = vpack.c.b16 %v2730, %v2722
    %v3403 = vpack.c.b16 %v2731, %v2723
    %v3404 = vpack.c.b16 %v2732, %v2724
    %v3405 = vpack.c.b16 %v2741, %v2733
    %v3406 = vpack.c.b16 %v2742, %v2734
    %v3407 = vpack.c.b16 %v2743, %v2735
    %v3408 = vpack.c.b16 %v2744, %v2736
    %v3409 = vpack.c.b16 %v2745, %v2737
    %v3410 = vpack.c.b16 %v2746, %v2738
    %v3411 = vpack.c.b16 %v2747, %v2739
    %v3412 = vpack.c.b16 %v2748, %v2740
    %v3413 = vpack.c.b16 %v2757, %v2749
    %v3414 = vpack.c.b16 %v2758, %v2750
    %v3415 = vpack.c.b16 %v2759, %v2751
    %v3416 = vpack.c.b16 %v2760, %v2752
    %v3417 = vpack.c.b16 %v2761, %v2753
    %v3418 = vpack.c.b16 %v2762, %v2754
    %v3419 = vpack.c.b16 %v2763, %v2755
    %v3420 = vpack.c.b16 %v2764, %v2756
    %v3421 = vpack.c.b16 %v2773, %v2765
    %v3422 = vpack.c.b16 %v2774, %v2766
    %v3423 = vpack.c.b16 %v2775, %v2767
    %v3424 = vpack.c.b16 %v2776, %v2768
    %v3425 = vpack.c.b16 %v2777, %v2769
    %v3426 = vpack.c.b16 %v2778, %v2770
    %v3427 = vpack.c.b16 %v2779, %v2771
    %v3428 = vpack.c.b16 %v2780, %v2772
    %v3429 = vpack.c.b16 %v2789, %v2781
    %v3430 = vpack.c.b16 %v2790, %v2782
    %v3431 = vpack.c.b16 %v2791, %v2783
    %v3432 = vpack.c.b16 %v2792, %v2784
    %v3433 = vpack.c.b16 %v2793, %v2785
    %v3434 = vpack.c.b16 %v2794, %v2786
    %v3435 = vpack.c.b16 %v2795, %v2787
    %v3436 = vpack.c.b16 %v2796, %v2788
    %v3437 = vpack.c.b16 %v2805, %v2797
    %v3438 = vpack.c.b16 %v2806, %v2798
    %v3439 = vpack.c.b16 %v2807, %v2799
    %v3440 = vpack.c.b16 %v2808, %v2800
    %v3441 = vpack.c.b16 %v2809, %v2801
    %v3442 = vpack.c.b16 %v2810, %v2802
    %v3443 = vpack.c.b16 %v2811, %v2803
    %v3444 = vpack.c.b16 %v2812, %v2804
    %v3445 = vpack.c.b16 %v2821, %v2813
    %v3446 = vpack.c.b16 %v2822, %v2814
    %v3447 = vpack.c.b16 %v2823, %v2815
    %v3448 = vpack.c.b16 %v2824, %v2816
    %v3449 = vpack.c.b16 %v2825, %v2817
    %v3450 = vpack.c.b16 %v2826, %v2818
    %v3451 = vpack.c.b16 %v2827, %v2819
    %v3452 = vpack.c.b16 %v2828, %v2820
    %v3453 = vpack.c.b16 %v2837, %v2829
    %v3454 = vpack.c.b16 %v2838, %v2830
    %v3455 = vpack.c.b16 %v2839, %v2831
    %v3456 = vpack.c.b16 %v2840, %v2832
    %v3457 = vpack.c.b16 %v2841, %v2833
    %v3458 = vpack.c.b16 %v2842, %v2834
    %v3459 = vpack.c.b16 %v2843, %v2835
    %v3460 = vpack.c.b16 %v2844, %v2836
    %v3461 = vpack.c.b16 %v2853, %v2845
    %v3462 = vpack.c.b16 %v2854, %v2846
    %v3463 = vpack.c.b16 %v2855, %v2847
    %v3464 = vpack.c.b16 %v2856, %v2848
    %v3465 = vpack.c.b16 %v2857, %v2849
    %v3466 = vpack.c.b16 %v2858, %v2850
    %v3467 = vpack.c.b16 %v2859, %v2851
    %v3468 = vpack.c.b16 %v2860, %v2852
    %v3469 = vpack.c.b16 %v2869, %v2861
    %v3470 = vpack.c.b16 %v2870, %v2862
    %v3471 = vpack.c.b16 %v2871, %v2863
    %v3472 = vpack.c.b16 %v2872, %v2864
    %v3473 = vpack.c.b16 %v2873, %v2865
    %v3474 = vpack.c.b16 %v2874, %v2866
    %v3475 = vpack.c.b16 %v2875, %v2867
    %v3476 = vpack.c.b16 %v2876, %v2868
    %v3477 = vpack.c.b16 %v2885, %v2877
    %v3478 = vpack.c.b16 %v2886, %v2878
    %v3479 = vpack.c.b16 %v2887, %v2879
    %v3480 = vpack.c.b16 %v2888, %v2880
    %v3481 = vpack.c.b16 %v2889, %v2881
    %v3482 = vpack.c.b16 %v2890, %v2882
    %v3483 = vpack.c.b16 %v2891, %v2883
    %v3484 = vpack.c.b16 %v2892, %v2884
    %v3485 = vpack.c.b16 %v2901, %v2893
    %v3486 = vpack.c.b16 %v2902, %v2894
    %v3487 = vpack.c.b16 %v2903, %v2895
    %v3488 = vpack.c.b16 %v2904, %v2896
    %v3489 = vpack.c.b16 %v2905, %v2897
    %v3490 = vpack.c.b16 %v2906, %v2898
    %v3491 = vpack.c.b16 %v2907, %v2899
    %v3492 = vpack.c.b16 %v2908, %v2900
    %v3493 = vpack.c.b16 %v2917, %v2909
    %v3494 = vpack.c.b16 %v2918, %v2910
    %v3495 = vpack.c.b16 %v2919, %v2911
    %v3496 = vpack.c.b16 %v2920, %v2912
    %v3497 = vpack.c.b16 %v2921, %v2913
    %v3498 = vpack.c.b16 %v2922, %v2914
    %v3499 = vpack.c.b16 %v2923, %v2915
    %v3500 = vpack.c.b16 %v2924, %v2916
    %v3501 = vpack.c.b16 %v2933, %v2925
    %v3502 = vpack.c.b16 %v2934, %v2926
    %v3503 = vpack.c.b16 %v2935, %v2927
    %v3504 = vpack.c.b16 %v2936, %v2928
    %v3505 = vpack.c.b16 %v2937, %v2929
    %v3506 = vpack.c.b16 %v2938, %v2930
    %v3507 = vpack.c.b16 %v2939, %v2931
    %v3508 = vpack.c.b16 %v2940, %v2932
    %v3509 = vpack.c.b16 %v2949, %v2941
    %v3510 = vpack.c.b16 %v2950, %v2942
    %v3511 = vpack.c.b16 %v2951, %v2943
    %v3512 = vpack.c.b16 %v2952, %v2944
    %v3513 = vpack.c.b16 %v2953, %v2945
    %v3514 = vpack.c.b16 %v2954, %v2946
    %v3515 = vpack.c.b16 %v2955, %v2947
    %v3516 = vpack.c.b16 %v2956, %v2948
    %v3517 = vpack.c.b16 %v2965, %v2957
    %v3518 = vpack.c.b16 %v2966, %v2958
    %v3519 = vpack.c.b16 %v2967, %v2959
    %v3520 = vpack.c.b16 %v2968, %v2960
    %v3521 = vpack.c.b16 %v2969, %v2961
    %v3522 = vpack.c.b16 %v2970, %v2962
    %v3523 = vpack.c.b16 %v2971, %v2963
    %v3524 = vpack.c.b16 %v2972, %v2964
    %v3525 = vpack.c.b16 %v2981, %v2973
    %v3526 = vpack.c.b16 %v2982, %v2974
    %v3527 = vpack.c.b16 %v2983, %v2975
    %v3528 = vpack.c.b16 %v2984, %v2976
    %v3529 = vpack.c.b16 %v2985, %v2977
    %v3530 = vpack.c.b16 %v2986, %v2978
    %v3531 = vpack.c.b16 %v2987, %v2979
    %v3532 = vpack.c.b16 %v2988, %v2980
    %v3533 = vpack.c.b16 %v2997, %v2989
    %v3534 = vpack.c.b16 %v2998, %v2990
    %v3535 = vpack.c.b16 %v2999, %v2991
    %v3536 = vpack.c.b16 %v3000, %v2992
    %v3537 = vpack.c.b16 %v3001, %v2993
    %v3538 = vpack.c.b16 %v3002, %v2994
    %v3539 = vpack.c.b16 %v3003, %v2995
    %v3540 = vpack.c.b16 %v3004, %v2996
    %v3541 = vpack.c.b16 %v3013, %v3005
    %v3542 = vpack.c.b16 %v3014, %v3006
    %v3543 = vpack.c.b16 %v3015, %v3007
    %v3544 = vpack.c.b16 %v3016, %v3008
    %v3545 = vpack.c.b16 %v3017, %v3009
    %v3546 = vpack.c.b16 %v3018, %v3010
    %v3547 = vpack.c.b16 %v3019, %v3011
    %v3548 = vpack.c.b16 %v3020, %v3012
    %v3549 = vpack.c.b16 %v3029, %v3021
    %v3550 = vpack.c.b16 %v3030, %v3022
    %v3551 = vpack.c.b16 %v3031, %v3023
    %v3552 = vpack.c.b16 %v3032, %v3024
    %v3553 = vpack.c.b16 %v3033, %v3025
    %v3554 = vpack.c.b16 %v3034, %v3026
    %v3555 = vpack.c.b16 %v3035, %v3027
    %v3556 = vpack.c.b16 %v3036, %v3028
    %v3557 = vpack.c.b16 %v3045, %v3037
    %v3558 = vpack.c.b16 %v3046, %v3038
    %v3559 = vpack.c.b16 %v3047, %v3039
    %v3560 = vpack.c.b16 %v3048, %v3040
    %v3561 = vpack.c.b16 %v3049, %v3041
    %v3562 = vpack.c.b16 %v3050, %v3042
    %v3563 = vpack.c.b16 %v3051, %v3043
    %v3564 = vpack.c.b16 %v3052, %v3044
    %4077 = vmatpush.bf16.msra.mxu0 %v948
    %4078 = vmatpush.bf16.msra.mxu0 %v947
    %4079 = vmatpush.bf16.msra.mxu0 %v946
    %4080 = vmatpush.bf16.msra.mxu0 %v945
    %4081 = vmatpush.bf16.msra.mxu0 %v944
    %4082 = vmatpush.bf16.msra.mxu0 %v943
    %4083 = vmatpush.bf16.msra.mxu0 %v942
    %4084 = vmatpush.bf16.msra.mxu0 %v941
    %4085 = vmatmul.bf16.gmra.mxu0 %v3053
    %v4086 = vpop.f32.mrf.mxu0
    %v4087 = vadd.f32 0.0, %v4086
    %v4088 = vpop.f32.mrf.mxu0
    %v4089 = vadd.f32 0.0, %v4088
    %4090 = vmatmul.bf16.gmra.mxu0 %v3061
    %v4091 = vpop.f32.mrf.mxu0
    %v4092 = vadd.f32 0.0, %v4091
    %v4093 = vpop.f32.mrf.mxu0
    %v4094 = vadd.f32 0.0, %v4093
    %4095 = vmatmul.bf16.gmra.mxu0 %v3069
    %v4096 = vpop.f32.mrf.mxu0
    %v4097 = vadd.f32 0.0, %v4096
    %v4098 = vpop.f32.mrf.mxu0
    %v4099 = vadd.f32 0.0, %v4098
    %4100 = vmatmul.bf16.gmra.mxu0 %v3077
    %v4101 = vpop.f32.mrf.mxu0
    %v4102 = vadd.f32 0.0, %v4101
    %v4103 = vpop.f32.mrf.mxu0
    %v4104 = vadd.f32 0.0, %v4103
    %4105 = vmatmul.bf16.gmra.mxu0 %v3085
    %v4106 = vpop.f32.mrf.mxu0
    %v4107 = vadd.f32 0.0, %v4106
    %v4108 = vpop.f32.mrf.mxu0
    %v4109 = vadd.f32 0.0, %v4108
    %4110 = vmatmul.bf16.gmra.mxu0 %v3093
    %v4111 = vpop.f32.mrf.mxu0
    %v4112 = vadd.f32 0.0, %v4111
    %v4113 = vpop.f32.mrf.mxu0
    %v4114 = vadd.f32 0.0, %v4113
    %4115 = vmatmul.bf16.gmra.mxu0 %v3101
    %v4116 = vpop.f32.mrf.mxu0
    %v4117 = vadd.f32 0.0, %v4116
    %v4118 = vpop.f32.mrf.mxu0
    %v4119 = vadd.f32 0.0, %v4118
    %4120 = vmatmul.bf16.gmra.mxu0 %v3109
    %v4121 = vpop.f32.mrf.mxu0
    %v4122 = vadd.f32 0.0, %v4121
    %v4123 = vpop.f32.mrf.mxu0
    %v4124 = vadd.f32 0.0, %v4123
    %4125 = vmatmul.bf16.gmra.mxu0 %v3117
    %v4126 = vpop.f32.mrf.mxu0
    %v4127 = vadd.f32 0.0, %v4126
    %v4128 = vpop.f32.mrf.mxu0
    %v4129 = vadd.f32 0.0, %v4128
    %4130 = vmatmul.bf16.gmra.mxu0 %v3125
    %v4131 = vpop.f32.mrf.mxu0
    %v4132 = vadd.f32 0.0, %v4131
    %v4133 = vpop.f32.mrf.mxu0
    %v4134 = vadd.f32 0.0, %v4133
    %4135 = vmatmul.bf16.gmra.mxu0 %v3133
    %v4136 = vpop.f32.mrf.mxu0
    %v4137 = vadd.f32 0.0, %v4136
    %v4138 = vpop.f32.mrf.mxu0
    %v4139 = vadd.f32 0.0, %v4138
    %4140 = vmatmul.bf16.gmra.mxu0 %v3141
    %v4141 = vpop.f32.mrf.mxu0
    %v4142 = vadd.f32 0.0, %v4141
    %v4143 = vpop.f32.mrf.mxu0
    %v4144 = vadd.f32 0.0, %v4143
    %4145 = vmatmul.bf16.gmra.mxu0 %v3149
    %v4146 = vpop.f32.mrf.mxu0
    %v4147 = vadd.f32 0.0, %v4146
    %v4148 = vpop.f32.mrf.mxu0
    %v4149 = vadd.f32 0.0, %v4148
    %4150 = vmatmul.bf16.gmra.mxu0 %v3157
    %v4151 = vpop.f32.mrf.mxu0
    %v4152 = vadd.f32 0.0, %v4151
    %v4153 = vpop.f32.mrf.mxu0
    %v4154 = vadd.f32 0.0, %v4153
    %4155 = vmatmul.bf16.gmra.mxu0 %v3165
    %v4156 = vpop.f32.mrf.mxu0
    %v4157 = vadd.f32 0.0, %v4156
    %v4158 = vpop.f32.mrf.mxu0
    %v4159 = vadd.f32 0.0, %v4158
    %4160 = vmatmul.bf16.gmra.mxu0 %v3173
    %v4161 = vpop.f32.mrf.mxu0
    %v4162 = vadd.f32 0.0, %v4161
    %v4163 = vpop.f32.mrf.mxu0
    %v4164 = vadd.f32 0.0, %v4163
    %4165 = vmatmul.bf16.gmra.mxu0 %v3181
    %v4166 = vpop.f32.mrf.mxu0
    %v4167 = vadd.f32 0.0, %v4166
    %v4168 = vpop.f32.mrf.mxu0
    %v4169 = vadd.f32 0.0, %v4168
    %4170 = vmatmul.bf16.gmra.mxu0 %v3189
    %v4171 = vpop.f32.mrf.mxu0
    %v4172 = vadd.f32 0.0, %v4171
    %v4173 = vpop.f32.mrf.mxu0
    %v4174 = vadd.f32 0.0, %v4173
    %4175 = vmatmul.bf16.gmra.mxu0 %v3197
    %v4176 = vpop.f32.mrf.mxu0
    %v4177 = vadd.f32 0.0, %v4176
    %v4178 = vpop.f32.mrf.mxu0
    %v4179 = vadd.f32 0.0, %v4178
    %4180 = vmatmul.bf16.gmra.mxu0 %v3205
    %v4181 = vpop.f32.mrf.mxu0
    %v4182 = vadd.f32 0.0, %v4181
    %v4183 = vpop.f32.mrf.mxu0
    %v4184 = vadd.f32 0.0, %v4183
    %4185 = vmatmul.bf16.gmra.mxu0 %v3213
    %v4186 = vpop.f32.mrf.mxu0
    %v4187 = vadd.f32 0.0, %v4186
    %v4188 = vpop.f32.mrf.mxu0
    %v4189 = vadd.f32 0.0, %v4188
    %4190 = vmatmul.bf16.gmra.mxu0 %v3221
    %v4191 = vpop.f32.mrf.mxu0
    %v4192 = vadd.f32 0.0, %v4191
    %v4193 = vpop.f32.mrf.mxu0
    %v4194 = vadd.f32 0.0, %v4193
    %4195 = vmatmul.bf16.gmra.mxu0 %v3229
    %v4196 = vpop.f32.mrf.mxu0
    %v4197 = vadd.f32 0.0, %v4196
    %v4198 = vpop.f32.mrf.mxu0
    %v4199 = vadd.f32 0.0, %v4198
    %4200 = vmatmul.bf16.gmra.mxu0 %v3237
    %v4201 = vpop.f32.mrf.mxu0
    %v4202 = vadd.f32 0.0, %v4201
    %v4203 = vpop.f32.mrf.mxu0
    %v4204 = vadd.f32 0.0, %v4203
    %4205 = vmatmul.bf16.gmra.mxu0 %v3245
    %v4206 = vpop.f32.mrf.mxu0
    %v4207 = vadd.f32 0.0, %v4206
    %v4208 = vpop.f32.mrf.mxu0
    %v4209 = vadd.f32 0.0, %v4208
    %4210 = vmatmul.bf16.gmra.mxu0 %v3253
    %v4211 = vpop.f32.mrf.mxu0
    %v4212 = vadd.f32 0.0, %v4211
    %v4213 = vpop.f32.mrf.mxu0
    %v4214 = vadd.f32 0.0, %v4213
    %4215 = vmatmul.bf16.gmra.mxu0 %v3261
    %v4216 = vpop.f32.mrf.mxu0
    %v4217 = vadd.f32 0.0, %v4216
    %v4218 = vpop.f32.mrf.mxu0
    %v4219 = vadd.f32 0.0, %v4218
    %4220 = vmatmul.bf16.gmra.mxu0 %v3269
    %v4221 = vpop.f32.mrf.mxu0
    %v4222 = vadd.f32 0.0, %v4221
    %v4223 = vpop.f32.mrf.mxu0
    %v4224 = vadd.f32 0.0, %v4223
    %4225 = vmatmul.bf16.gmra.mxu0 %v3277
    %v4226 = vpop.f32.mrf.mxu0
    %v4227 = vadd.f32 0.0, %v4226
    %v4228 = vpop.f32.mrf.mxu0
    %v4229 = vadd.f32 0.0, %v4228
    %4230 = vmatmul.bf16.gmra.mxu0 %v3285
    %v4231 = vpop.f32.mrf.mxu0
    %v4232 = vadd.f32 0.0, %v4231
    %v4233 = vpop.f32.mrf.mxu0
    %v4234 = vadd.f32 0.0, %v4233
    %4235 = vmatmul.bf16.gmra.mxu0 %v3293
    %v4236 = vpop.f32.mrf.mxu0
    %v4237 = vadd.f32 0.0, %v4236
    %v4238 = vpop.f32.mrf.mxu0
    %v4239 = vadd.f32 0.0, %v4238
    %4240 = vmatmul.bf16.gmra.mxu0 %v3301
    %v4241 = vpop.f32.mrf.mxu0
    %v4242 = vadd.f32 0.0, %v4241
    %v4243 = vpop.f32.mrf.mxu0
    %v4244 = vadd.f32 0.0, %v4243
    %4245 = vmatmul.bf16.gmra.mxu0 %v3309
    %v4246 = vpop.f32.mrf.mxu0
    %v4247 = vadd.f32 0.0, %v4246
    %v4248 = vpop.f32.mrf.mxu0
    %v4249 = vadd.f32 0.0, %v4248
    %4250 = vmatmul.bf16.gmra.mxu0 %v3317
    %v4251 = vpop.f32.mrf.mxu0
    %v4252 = vadd.f32 0.0, %v4251
    %v4253 = vpop.f32.mrf.mxu0
    %v4254 = vadd.f32 0.0, %v4253
    %4255 = vmatmul.bf16.gmra.mxu0 %v3325
    %v4256 = vpop.f32.mrf.mxu0
    %v4257 = vadd.f32 0.0, %v4256
    %v4258 = vpop.f32.mrf.mxu0
    %v4259 = vadd.f32 0.0, %v4258
    %4260 = vmatmul.bf16.gmra.mxu0 %v3333
    %v4261 = vpop.f32.mrf.mxu0
    %v4262 = vadd.f32 0.0, %v4261
    %v4263 = vpop.f32.mrf.mxu0
    %v4264 = vadd.f32 0.0, %v4263
    %4265 = vmatmul.bf16.gmra.mxu0 %v3341
    %v4266 = vpop.f32.mrf.mxu0
    %v4267 = vadd.f32 0.0, %v4266
    %v4268 = vpop.f32.mrf.mxu0
    %v4269 = vadd.f32 0.0, %v4268
    %4270 = vmatmul.bf16.gmra.mxu0 %v3349
    %v4271 = vpop.f32.mrf.mxu0
    %v4272 = vadd.f32 0.0, %v4271
    %v4273 = vpop.f32.mrf.mxu0
    %v4274 = vadd.f32 0.0, %v4273
    %4275 = vmatmul.bf16.gmra.mxu0 %v3357
    %v4276 = vpop.f32.mrf.mxu0
    %v4277 = vadd.f32 0.0, %v4276
    %v4278 = vpop.f32.mrf.mxu0
    %v4279 = vadd.f32 0.0, %v4278
    %4280 = vmatmul.bf16.gmra.mxu0 %v3365
    %v4281 = vpop.f32.mrf.mxu0
    %v4282 = vadd.f32 0.0, %v4281
    %v4283 = vpop.f32.mrf.mxu0
    %v4284 = vadd.f32 0.0, %v4283
    %4285 = vmatmul.bf16.gmra.mxu0 %v3373
    %v4286 = vpop.f32.mrf.mxu0
    %v4287 = vadd.f32 0.0, %v4286
    %v4288 = vpop.f32.mrf.mxu0
    %v4289 = vadd.f32 0.0, %v4288
    %4290 = vmatmul.bf16.gmra.mxu0 %v3381
    %v4291 = vpop.f32.mrf.mxu0
    %v4292 = vadd.f32 0.0, %v4291
    %v4293 = vpop.f32.mrf.mxu0
    %v4294 = vadd.f32 0.0, %v4293
    %4295 = vmatmul.bf16.gmra.mxu0 %v3389
    %v4296 = vpop.f32.mrf.mxu0
    %v4297 = vadd.f32 0.0, %v4296
    %v4298 = vpop.f32.mrf.mxu0
    %v4299 = vadd.f32 0.0, %v4298
    %4300 = vmatmul.bf16.gmra.mxu0 %v3397
    %v4301 = vpop.f32.mrf.mxu0
    %v4302 = vadd.f32 0.0, %v4301
    %v4303 = vpop.f32.mrf.mxu0
    %v4304 = vadd.f32 0.0, %v4303
    %4305 = vmatmul.bf16.gmra.mxu0 %v3405
    %v4306 = vpop.f32.mrf.mxu0
    %v4307 = vadd.f32 0.0, %v4306
    %v4308 = vpop.f32.mrf.mxu0
    %v4309 = vadd.f32 0.0, %v4308
    %4310 = vmatmul.bf16.gmra.mxu0 %v3413
    %v4311 = vpop.f32.mrf.mxu0
    %v4312 = vadd.f32 0.0, %v4311
    %v4313 = vpop.f32.mrf.mxu0
    %v4314 = vadd.f32 0.0, %v4313
    %4315 = vmatmul.bf16.gmra.mxu0 %v3421
    %v4316 = vpop.f32.mrf.mxu0
    %v4317 = vadd.f32 0.0, %v4316
    %v4318 = vpop.f32.mrf.mxu0
    %v4319 = vadd.f32 0.0, %v4318
    %4320 = vmatmul.bf16.gmra.mxu0 %v3429
    %v4321 = vpop.f32.mrf.mxu0
    %v4322 = vadd.f32 0.0, %v4321
    %v4323 = vpop.f32.mrf.mxu0
    %v4324 = vadd.f32 0.0, %v4323
    %4325 = vmatmul.bf16.gmra.mxu0 %v3437
    %v4326 = vpop.f32.mrf.mxu0
    %v4327 = vadd.f32 0.0, %v4326
    %v4328 = vpop.f32.mrf.mxu0
    %v4329 = vadd.f32 0.0, %v4328
    %4330 = vmatmul.bf16.gmra.mxu0 %v3445
    %v4331 = vpop.f32.mrf.mxu0
    %v4332 = vadd.f32 0.0, %v4331
    %v4333 = vpop.f32.mrf.mxu0
    %v4334 = vadd.f32 0.0, %v4333
    %4335 = vmatmul.bf16.gmra.mxu0 %v3453
    %v4336 = vpop.f32.mrf.mxu0
    %v4337 = vadd.f32 0.0, %v4336
    %v4338 = vpop.f32.mrf.mxu0
    %v4339 = vadd.f32 0.0, %v4338
    %4340 = vmatmul.bf16.gmra.mxu0 %v3461
    %v4341 = vpop.f32.mrf.mxu0
    %v4342 = vadd.f32 0.0, %v4341
    %v4343 = vpop.f32.mrf.mxu0
    %v4344 = vadd.f32 0.0, %v4343
    %4345 = vmatmul.bf16.gmra.mxu0 %v3469
    %v4346 = vpop.f32.mrf.mxu0
    %v4347 = vadd.f32 0.0, %v4346
    %v4348 = vpop.f32.mrf.mxu0
    %v4349 = vadd.f32 0.0, %v4348
    %4350 = vmatmul.bf16.gmra.mxu0 %v3477
    %v4351 = vpop.f32.mrf.mxu0
    %v4352 = vadd.f32 0.0, %v4351
    %v4353 = vpop.f32.mrf.mxu0
    %v4354 = vadd.f32 0.0, %v4353
    %4355 = vmatmul.bf16.gmra.mxu0 %v3485
    %v4356 = vpop.f32.mrf.mxu0
    %v4357 = vadd.f32 0.0, %v4356
    %v4358 = vpop.f32.mrf.mxu0
    %v4359 = vadd.f32 0.0, %v4358
    %4360 = vmatmul.bf16.gmra.mxu0 %v3493
    %v4361 = vpop.f32.mrf.mxu0
    %v4362 = vadd.f32 0.0, %v4361
    %v4363 = vpop.f32.mrf.mxu0
    %v4364 = vadd.f32 0.0, %v4363
    %4365 = vmatmul.bf16.gmra.mxu0 %v3501
    %v4366 = vpop.f32.mrf.mxu0
    %v4367 = vadd.f32 0.0, %v4366
    %v4368 = vpop.f32.mrf.mxu0
    %v4369 = vadd.f32 0.0, %v4368
    %4370 = vmatmul.bf16.gmra.mxu0 %v3509
    %v4371 = vpop.f32.mrf.mxu0
    %v4372 = vadd.f32 0.0, %v4371
    %v4373 = vpop.f32.mrf.mxu0
    %v4374 = vadd.f32 0.0, %v4373
    %4375 = vmatmul.bf16.gmra.mxu0 %v3517
    %v4376 = vpop.f32.mrf.mxu0
    %v4377 = vadd.f32 0.0, %v4376
    %v4378 = vpop.f32.mrf.mxu0
    %v4379 = vadd.f32 0.0, %v4378
    %4380 = vmatmul.bf16.gmra.mxu0 %v3525
    %v4381 = vpop.f32.mrf.mxu0
    %v4382 = vadd.f32 0.0, %v4381
    %v4383 = vpop.f32.mrf.mxu0
    %v4384 = vadd.f32 0.0, %v4383
    %4385 = vmatmul.bf16.gmra.mxu0 %v3533
    %v4386 = vpop.f32.mrf.mxu0
    %v4387 = vadd.f32 0.0, %v4386
    %v4388 = vpop.f32.mrf.mxu0
    %v4389 = vadd.f32 0.0, %v4388
    %4390 = vmatmul.bf16.gmra.mxu0 %v3541
    %v4391 = vpop.f32.mrf.mxu0
    %v4392 = vadd.f32 0.0, %v4391
    %v4393 = vpop.f32.mrf.mxu0
    %v4394 = vadd.f32 0.0, %v4393
    %4395 = vmatmul.bf16.gmra.mxu0 %v3549
    %v4396 = vpop.f32.mrf.mxu0
    %v4397 = vadd.f32 0.0, %v4396
    %v4398 = vpop.f32.mrf.mxu0
    %v4399 = vadd.f32 0.0, %v4398
    %4400 = vmatmul.bf16.gmra.mxu0 %v3557
    %v4401 = vpop.f32.mrf.mxu0
    %v4402 = vadd.f32 0.0, %v4401
    %v4403 = vpop.f32.mrf.mxu0
    %v4404 = vadd.f32 0.0, %v4403
    %4405 = vdwg.mxu0
    %4406 = vmatpush.bf16.msra.mxu0 %v956
    %4407 = vmatpush.bf16.msra.mxu0 %v955
    %4408 = vmatpush.bf16.msra.mxu0 %v954
    %4409 = vmatpush.bf16.msra.mxu0 %v953
    %4410 = vmatpush.bf16.msra.mxu0 %v952
    %4411 = vmatpush.bf16.msra.mxu0 %v951
    %4412 = vmatpush.bf16.msra.mxu0 %v950
    %4413 = vmatpush.bf16.msra.mxu0 %v949
    %4414 = vmatmul.bf16.gmra.mxu0 %v3054
    %v4415 = vpop.f32.mrf.mxu0
    %v4416 = vadd.f32 %v4087, %v4415
    %v4417 = vpop.f32.mrf.mxu0
    %v4418 = vadd.f32 %v4089, %v4417
    %4419 = vmatmul.bf16.gmra.mxu0 %v3062
    %v4420 = vpop.f32.mrf.mxu0
    %v4421 = vadd.f32 %v4092, %v4420
    %v4422 = vpop.f32.mrf.mxu0
    %v4423 = vadd.f32 %v4094, %v4422
    %4424 = vmatmul.bf16.gmra.mxu0 %v3070
    %v4425 = vpop.f32.mrf.mxu0
    %v4426 = vadd.f32 %v4097, %v4425
    %v4427 = vpop.f32.mrf.mxu0
    %v4428 = vadd.f32 %v4099, %v4427
    %4429 = vmatmul.bf16.gmra.mxu0 %v3078
    %v4430 = vpop.f32.mrf.mxu0
    %v4431 = vadd.f32 %v4102, %v4430
    %v4432 = vpop.f32.mrf.mxu0
    %v4433 = vadd.f32 %v4104, %v4432
    %4434 = vmatmul.bf16.gmra.mxu0 %v3086
    %v4435 = vpop.f32.mrf.mxu0
    %v4436 = vadd.f32 %v4107, %v4435
    %v4437 = vpop.f32.mrf.mxu0
    %v4438 = vadd.f32 %v4109, %v4437
    %4439 = vmatmul.bf16.gmra.mxu0 %v3094
    %v4440 = vpop.f32.mrf.mxu0
    %v4441 = vadd.f32 %v4112, %v4440
    %v4442 = vpop.f32.mrf.mxu0
    %v4443 = vadd.f32 %v4114, %v4442
    %4444 = vmatmul.bf16.gmra.mxu0 %v3102
    %v4445 = vpop.f32.mrf.mxu0
    %v4446 = vadd.f32 %v4117, %v4445
    %v4447 = vpop.f32.mrf.mxu0
    %v4448 = vadd.f32 %v4119, %v4447
    %4449 = vmatmul.bf16.gmra.mxu0 %v3110
    %v4450 = vpop.f32.mrf.mxu0
    %v4451 = vadd.f32 %v4122, %v4450
    %v4452 = vpop.f32.mrf.mxu0
    %v4453 = vadd.f32 %v4124, %v4452
    %4454 = vmatmul.bf16.gmra.mxu0 %v3118
    %v4455 = vpop.f32.mrf.mxu0
    %v4456 = vadd.f32 %v4127, %v4455
    %v4457 = vpop.f32.mrf.mxu0
    %v4458 = vadd.f32 %v4129, %v4457
    %4459 = vmatmul.bf16.gmra.mxu0 %v3126
    %v4460 = vpop.f32.mrf.mxu0
    %v4461 = vadd.f32 %v4132, %v4460
    %v4462 = vpop.f32.mrf.mxu0
    %v4463 = vadd.f32 %v4134, %v4462
    %4464 = vmatmul.bf16.gmra.mxu0 %v3134
    %v4465 = vpop.f32.mrf.mxu0
    %v4466 = vadd.f32 %v4137, %v4465
    %v4467 = vpop.f32.mrf.mxu0
    %v4468 = vadd.f32 %v4139, %v4467
    %4469 = vmatmul.bf16.gmra.mxu0 %v3142
    %v4470 = vpop.f32.mrf.mxu0
    %v4471 = vadd.f32 %v4142, %v4470
    %v4472 = vpop.f32.mrf.mxu0
    %v4473 = vadd.f32 %v4144, %v4472
    %4474 = vmatmul.bf16.gmra.mxu0 %v3150
    %v4475 = vpop.f32.mrf.mxu0
    %v4476 = vadd.f32 %v4147, %v4475
    %v4477 = vpop.f32.mrf.mxu0
    %v4478 = vadd.f32 %v4149, %v4477
    %4479 = vmatmul.bf16.gmra.mxu0 %v3158
    %v4480 = vpop.f32.mrf.mxu0
    %v4481 = vadd.f32 %v4152, %v4480
    %v4482 = vpop.f32.mrf.mxu0
    %v4483 = vadd.f32 %v4154, %v4482
    %4484 = vmatmul.bf16.gmra.mxu0 %v3166
    %v4485 = vpop.f32.mrf.mxu0
    %v4486 = vadd.f32 %v4157, %v4485
    %v4487 = vpop.f32.mrf.mxu0
    %v4488 = vadd.f32 %v4159, %v4487
    %4489 = vmatmul.bf16.gmra.mxu0 %v3174
    %v4490 = vpop.f32.mrf.mxu0
    %v4491 = vadd.f32 %v4162, %v4490
    %v4492 = vpop.f32.mrf.mxu0
    %v4493 = vadd.f32 %v4164, %v4492
    %4494 = vmatmul.bf16.gmra.mxu0 %v3182
    %v4495 = vpop.f32.mrf.mxu0
    %v4496 = vadd.f32 %v4167, %v4495
    %v4497 = vpop.f32.mrf.mxu0
    %v4498 = vadd.f32 %v4169, %v4497
    %4499 = vmatmul.bf16.gmra.mxu0 %v3190
    %v4500 = vpop.f32.mrf.mxu0
    %v4501 = vadd.f32 %v4172, %v4500
    %v4502 = vpop.f32.mrf.mxu0
    %v4503 = vadd.f32 %v4174, %v4502
    %4504 = vmatmul.bf16.gmra.mxu0 %v3198
    %v4505 = vpop.f32.mrf.mxu0
    %v4506 = vadd.f32 %v4177, %v4505
    %v4507 = vpop.f32.mrf.mxu0
    %v4508 = vadd.f32 %v4179, %v4507
    %4509 = vmatmul.bf16.gmra.mxu0 %v3206
    %v4510 = vpop.f32.mrf.mxu0
    %v4511 = vadd.f32 %v4182, %v4510
    %v4512 = vpop.f32.mrf.mxu0
    %v4513 = vadd.f32 %v4184, %v4512
    %4514 = vmatmul.bf16.gmra.mxu0 %v3214
    %v4515 = vpop.f32.mrf.mxu0
    %v4516 = vadd.f32 %v4187, %v4515
    %v4517 = vpop.f32.mrf.mxu0
    %v4518 = vadd.f32 %v4189, %v4517
    %4519 = vmatmul.bf16.gmra.mxu0 %v3222
    %v4520 = vpop.f32.mrf.mxu0
    %v4521 = vadd.f32 %v4192, %v4520
    %v4522 = vpop.f32.mrf.mxu0
    %v4523 = vadd.f32 %v4194, %v4522
    %4524 = vmatmul.bf16.gmra.mxu0 %v3230
    %v4525 = vpop.f32.mrf.mxu0
    %v4526 = vadd.f32 %v4197, %v4525
    %v4527 = vpop.f32.mrf.mxu0
    %v4528 = vadd.f32 %v4199, %v4527
    %4529 = vmatmul.bf16.gmra.mxu0 %v3238
    %v4530 = vpop.f32.mrf.mxu0
    %v4531 = vadd.f32 %v4202, %v4530
    %v4532 = vpop.f32.mrf.mxu0
    %v4533 = vadd.f32 %v4204, %v4532
    %4534 = vmatmul.bf16.gmra.mxu0 %v3246
    %v4535 = vpop.f32.mrf.mxu0
    %v4536 = vadd.f32 %v4207, %v4535
    %v4537 = vpop.f32.mrf.mxu0
    %v4538 = vadd.f32 %v4209, %v4537
    %4539 = vmatmul.bf16.gmra.mxu0 %v3254
    %v4540 = vpop.f32.mrf.mxu0
    %v4541 = vadd.f32 %v4212, %v4540
    %v4542 = vpop.f32.mrf.mxu0
    %v4543 = vadd.f32 %v4214, %v4542
    %4544 = vmatmul.bf16.gmra.mxu0 %v3262
    %v4545 = vpop.f32.mrf.mxu0
    %v4546 = vadd.f32 %v4217, %v4545
    %v4547 = vpop.f32.mrf.mxu0
    %v4548 = vadd.f32 %v4219, %v4547
    %4549 = vmatmul.bf16.gmra.mxu0 %v3270
    %v4550 = vpop.f32.mrf.mxu0
    %v4551 = vadd.f32 %v4222, %v4550
    %v4552 = vpop.f32.mrf.mxu0
    %v4553 = vadd.f32 %v4224, %v4552
    %4554 = vmatmul.bf16.gmra.mxu0 %v3278
    %v4555 = vpop.f32.mrf.mxu0
    %v4556 = vadd.f32 %v4227, %v4555
    %v4557 = vpop.f32.mrf.mxu0
    %v4558 = vadd.f32 %v4229, %v4557
    %4559 = vmatmul.bf16.gmra.mxu0 %v3286
    %v4560 = vpop.f32.mrf.mxu0
    %v4561 = vadd.f32 %v4232, %v4560
    %v4562 = vpop.f32.mrf.mxu0
    %v4563 = vadd.f32 %v4234, %v4562
    %4564 = vmatmul.bf16.gmra.mxu0 %v3294
    %v4565 = vpop.f32.mrf.mxu0
    %v4566 = vadd.f32 %v4237, %v4565
    %v4567 = vpop.f32.mrf.mxu0
    %v4568 = vadd.f32 %v4239, %v4567
    %4569 = vmatmul.bf16.gmra.mxu0 %v3302
    %v4570 = vpop.f32.mrf.mxu0
    %v4571 = vadd.f32 %v4242, %v4570
    %v4572 = vpop.f32.mrf.mxu0
    %v4573 = vadd.f32 %v4244, %v4572
    %4574 = vmatmul.bf16.gmra.mxu0 %v3310
    %v4575 = vpop.f32.mrf.mxu0
    %v4576 = vadd.f32 %v4247, %v4575
    %v4577 = vpop.f32.mrf.mxu0
    %v4578 = vadd.f32 %v4249, %v4577
    %4579 = vmatmul.bf16.gmra.mxu0 %v3318
    %v4580 = vpop.f32.mrf.mxu0
    %v4581 = vadd.f32 %v4252, %v4580
    %v4582 = vpop.f32.mrf.mxu0
    %v4583 = vadd.f32 %v4254, %v4582
    %4584 = vmatmul.bf16.gmra.mxu0 %v3326
    %v4585 = vpop.f32.mrf.mxu0
    %v4586 = vadd.f32 %v4257, %v4585
    %v4587 = vpop.f32.mrf.mxu0
    %v4588 = vadd.f32 %v4259, %v4587
    %4589 = vmatmul.bf16.gmra.mxu0 %v3334
    %v4590 = vpop.f32.mrf.mxu0
    %v4591 = vadd.f32 %v4262, %v4590
    %v4592 = vpop.f32.mrf.mxu0
    %v4593 = vadd.f32 %v4264, %v4592
    %4594 = vmatmul.bf16.gmra.mxu0 %v3342
    %v4595 = vpop.f32.mrf.mxu0
    %v4596 = vadd.f32 %v4267, %v4595
    %v4597 = vpop.f32.mrf.mxu0
    %v4598 = vadd.f32 %v4269, %v4597
    %4599 = vmatmul.bf16.gmra.mxu0 %v3350
    %v4600 = vpop.f32.mrf.mxu0
    %v4601 = vadd.f32 %v4272, %v4600
    %v4602 = vpop.f32.mrf.mxu0
    %v4603 = vadd.f32 %v4274, %v4602
    %4604 = vmatmul.bf16.gmra.mxu0 %v3358
    %v4605 = vpop.f32.mrf.mxu0
    %v4606 = vadd.f32 %v4277, %v4605
    %v4607 = vpop.f32.mrf.mxu0
    %v4608 = vadd.f32 %v4279, %v4607
    %4609 = vmatmul.bf16.gmra.mxu0 %v3366
    %v4610 = vpop.f32.mrf.mxu0
    %v4611 = vadd.f32 %v4282, %v4610
    %v4612 = vpop.f32.mrf.mxu0
    %v4613 = vadd.f32 %v4284, %v4612
    %4614 = vmatmul.bf16.gmra.mxu0 %v3374
    %v4615 = vpop.f32.mrf.mxu0
    %v4616 = vadd.f32 %v4287, %v4615
    %v4617 = vpop.f32.mrf.mxu0
    %v4618 = vadd.f32 %v4289, %v4617
    %4619 = vmatmul.bf16.gmra.mxu0 %v3382
    %v4620 = vpop.f32.mrf.mxu0
    %v4621 = vadd.f32 %v4292, %v4620
    %v4622 = vpop.f32.mrf.mxu0
    %v4623 = vadd.f32 %v4294, %v4622
    %4624 = vmatmul.bf16.gmra.mxu0 %v3390
    %v4625 = vpop.f32.mrf.mxu0
    %v4626 = vadd.f32 %v4297, %v4625
    %v4627 = vpop.f32.mrf.mxu0
    %v4628 = vadd.f32 %v4299, %v4627
    %4629 = vmatmul.bf16.gmra.mxu0 %v3398
    %v4630 = vpop.f32.mrf.mxu0
    %v4631 = vadd.f32 %v4302, %v4630
    %v4632 = vpop.f32.mrf.mxu0
    %v4633 = vadd.f32 %v4304, %v4632
    %4634 = vmatmul.bf16.gmra.mxu0 %v3406
    %v4635 = vpop.f32.mrf.mxu0
    %v4636 = vadd.f32 %v4307, %v4635
    %v4637 = vpop.f32.mrf.mxu0
    %v4638 = vadd.f32 %v4309, %v4637
    %4639 = vmatmul.bf16.gmra.mxu0 %v3414
    %v4640 = vpop.f32.mrf.mxu0
    %v4641 = vadd.f32 %v4312, %v4640
    %v4642 = vpop.f32.mrf.mxu0
    %v4643 = vadd.f32 %v4314, %v4642
    %4644 = vmatmul.bf16.gmra.mxu0 %v3422
    %v4645 = vpop.f32.mrf.mxu0
    %v4646 = vadd.f32 %v4317, %v4645
    %v4647 = vpop.f32.mrf.mxu0
    %v4648 = vadd.f32 %v4319, %v4647
    %4649 = vmatmul.bf16.gmra.mxu0 %v3430
    %v4650 = vpop.f32.mrf.mxu0
    %v4651 = vadd.f32 %v4322, %v4650
    %v4652 = vpop.f32.mrf.mxu0
    %v4653 = vadd.f32 %v4324, %v4652
    %4654 = vmatmul.bf16.gmra.mxu0 %v3438
    %v4655 = vpop.f32.mrf.mxu0
    %v4656 = vadd.f32 %v4327, %v4655
    %v4657 = vpop.f32.mrf.mxu0
    %v4658 = vadd.f32 %v4329, %v4657
    %4659 = vmatmul.bf16.gmra.mxu0 %v3446
    %v4660 = vpop.f32.mrf.mxu0
    %v4661 = vadd.f32 %v4332, %v4660
    %v4662 = vpop.f32.mrf.mxu0
    %v4663 = vadd.f32 %v4334, %v4662
    %4664 = vmatmul.bf16.gmra.mxu0 %v3454
    %v4665 = vpop.f32.mrf.mxu0
    %v4666 = vadd.f32 %v4337, %v4665
    %v4667 = vpop.f32.mrf.mxu0
    %v4668 = vadd.f32 %v4339, %v4667
    %4669 = vmatmul.bf16.gmra.mxu0 %v3462
    %v4670 = vpop.f32.mrf.mxu0
    %v4671 = vadd.f32 %v4342, %v4670
    %v4672 = vpop.f32.mrf.mxu0
    %v4673 = vadd.f32 %v4344, %v4672
    %4674 = vmatmul.bf16.gmra.mxu0 %v3470
    %v4675 = vpop.f32.mrf.mxu0
    %v4676 = vadd.f32 %v4347, %v4675
    %v4677 = vpop.f32.mrf.mxu0
    %v4678 = vadd.f32 %v4349, %v4677
    %4679 = vmatmul.bf16.gmra.mxu0 %v3478
    %v4680 = vpop.f32.mrf.mxu0
    %v4681 = vadd.f32 %v4352, %v4680
    %v4682 = vpop.f32.mrf.mxu0
    %v4683 = vadd.f32 %v4354, %v4682
    %4684 = vmatmul.bf16.gmra.mxu0 %v3486
    %v4685 = vpop.f32.mrf.mxu0
    %v4686 = vadd.f32 %v4357, %v4685
    %v4687 = vpop.f32.mrf.mxu0
    %v4688 = vadd.f32 %v4359, %v4687
    %4689 = vmatmul.bf16.gmra.mxu0 %v3494
    %v4690 = vpop.f32.mrf.mxu0
    %v4691 = vadd.f32 %v4362, %v4690
    %v4692 = vpop.f32.mrf.mxu0
    %v4693 = vadd.f32 %v4364, %v4692
    %4694 = vmatmul.bf16.gmra.mxu0 %v3502
    %v4695 = vpop.f32.mrf.mxu0
    %v4696 = vadd.f32 %v4367, %v4695
    %v4697 = vpop.f32.mrf.mxu0
    %v4698 = vadd.f32 %v4369, %v4697
    %4699 = vmatmul.bf16.gmra.mxu0 %v3510
    %v4700 = vpop.f32.mrf.mxu0
    %v4701 = vadd.f32 %v4372, %v4700
    %v4702 = vpop.f32.mrf.mxu0
    %v4703 = vadd.f32 %v4374, %v4702
    %4704 = vmatmul.bf16.gmra.mxu0 %v3518
    %v4705 = vpop.f32.mrf.mxu0
    %v4706 = vadd.f32 %v4377, %v4705
    %v4707 = vpop.f32.mrf.mxu0
    %v4708 = vadd.f32 %v4379, %v4707
    %4709 = vmatmul.bf16.gmra.mxu0 %v3526
    %v4710 = vpop.f32.mrf.mxu0
    %v4711 = vadd.f32 %v4382, %v4710
    %v4712 = vpop.f32.mrf.mxu0
    %v4713 = vadd.f32 %v4384, %v4712
    %4714 = vmatmul.bf16.gmra.mxu0 %v3534
    %v4715 = vpop.f32.mrf.mxu0
    %v4716 = vadd.f32 %v4387, %v4715
    %v4717 = vpop.f32.mrf.mxu0
    %v4718 = vadd.f32 %v4389, %v4717
    %4719 = vmatmul.bf16.gmra.mxu0 %v3542
    %v4720 = vpop.f32.mrf.mxu0
    %v4721 = vadd.f32 %v4392, %v4720
    %v4722 = vpop.f32.mrf.mxu0
    %v4723 = vadd.f32 %v4394, %v4722
    %4724 = vmatmul.bf16.gmra.mxu0 %v3550
    %v4725 = vpop.f32.mrf.mxu0
    %v4726 = vadd.f32 %v4397, %v4725
    %v4727 = vpop.f32.mrf.mxu0
    %v4728 = vadd.f32 %v4399, %v4727
    %4729 = vmatmul.bf16.gmra.mxu0 %v3558
    %v4730 = vpop.f32.mrf.mxu0
    %v4731 = vadd.f32 %v4402, %v4730
    %v4732 = vpop.f32.mrf.mxu0
    %v4733 = vadd.f32 %v4404, %v4732
    %4734 = vdwg.mxu0
    %4735 = vmatpush.bf16.msra.mxu0 %v964
    %4736 = vmatpush.bf16.msra.mxu0 %v963
    %4737 = vmatpush.bf16.msra.mxu0 %v962
    %4738 = vmatpush.bf16.msra.mxu0 %v961
    %4739 = vmatpush.bf16.msra.mxu0 %v960
    %4740 = vmatpush.bf16.msra.mxu0 %v959
    %4741 = vmatpush.bf16.msra.mxu0 %v958
    %4742 = vmatpush.bf16.msra.mxu0 %v957
    %4743 = vmatmul.bf16.gmra.mxu0 %v3055
    %v4744 = vpop.f32.mrf.mxu0
    %v4745 = vadd.f32 %v4416, %v4744
    %v4746 = vpop.f32.mrf.mxu0
    %v4747 = vadd.f32 %v4418, %v4746
    %4748 = vmatmul.bf16.gmra.mxu0 %v3063
    %v4749 = vpop.f32.mrf.mxu0
    %v4750 = vadd.f32 %v4421, %v4749
    %v4751 = vpop.f32.mrf.mxu0
    %v4752 = vadd.f32 %v4423, %v4751
    %4753 = vmatmul.bf16.gmra.mxu0 %v3071
    %v4754 = vpop.f32.mrf.mxu0
    %v4755 = vadd.f32 %v4426, %v4754
    %v4756 = vpop.f32.mrf.mxu0
    %v4757 = vadd.f32 %v4428, %v4756
    %4758 = vmatmul.bf16.gmra.mxu0 %v3079
    %v4759 = vpop.f32.mrf.mxu0
    %v4760 = vadd.f32 %v4431, %v4759
    %v4761 = vpop.f32.mrf.mxu0
    %v4762 = vadd.f32 %v4433, %v4761
    %4763 = vmatmul.bf16.gmra.mxu0 %v3087
    %v4764 = vpop.f32.mrf.mxu0
    %v4765 = vadd.f32 %v4436, %v4764
    %v4766 = vpop.f32.mrf.mxu0
    %v4767 = vadd.f32 %v4438, %v4766
    %4768 = vmatmul.bf16.gmra.mxu0 %v3095
    %v4769 = vpop.f32.mrf.mxu0
    %v4770 = vadd.f32 %v4441, %v4769
    %v4771 = vpop.f32.mrf.mxu0
    %v4772 = vadd.f32 %v4443, %v4771
    %4773 = vmatmul.bf16.gmra.mxu0 %v3103
    %v4774 = vpop.f32.mrf.mxu0
    %v4775 = vadd.f32 %v4446, %v4774
    %v4776 = vpop.f32.mrf.mxu0
    %v4777 = vadd.f32 %v4448, %v4776
    %4778 = vmatmul.bf16.gmra.mxu0 %v3111
    %v4779 = vpop.f32.mrf.mxu0
    %v4780 = vadd.f32 %v4451, %v4779
    %v4781 = vpop.f32.mrf.mxu0
    %v4782 = vadd.f32 %v4453, %v4781
    %4783 = vmatmul.bf16.gmra.mxu0 %v3119
    %v4784 = vpop.f32.mrf.mxu0
    %v4785 = vadd.f32 %v4456, %v4784
    %v4786 = vpop.f32.mrf.mxu0
    %v4787 = vadd.f32 %v4458, %v4786
    %4788 = vmatmul.bf16.gmra.mxu0 %v3127
    %v4789 = vpop.f32.mrf.mxu0
    %v4790 = vadd.f32 %v4461, %v4789
    %v4791 = vpop.f32.mrf.mxu0
    %v4792 = vadd.f32 %v4463, %v4791
    %4793 = vmatmul.bf16.gmra.mxu0 %v3135
    %v4794 = vpop.f32.mrf.mxu0
    %v4795 = vadd.f32 %v4466, %v4794
    %v4796 = vpop.f32.mrf.mxu0
    %v4797 = vadd.f32 %v4468, %v4796
    %4798 = vmatmul.bf16.gmra.mxu0 %v3143
    %v4799 = vpop.f32.mrf.mxu0
    %v4800 = vadd.f32 %v4471, %v4799
    %v4801 = vpop.f32.mrf.mxu0
    %v4802 = vadd.f32 %v4473, %v4801
    %4803 = vmatmul.bf16.gmra.mxu0 %v3151
    %v4804 = vpop.f32.mrf.mxu0
    %v4805 = vadd.f32 %v4476, %v4804
    %v4806 = vpop.f32.mrf.mxu0
    %v4807 = vadd.f32 %v4478, %v4806
    %4808 = vmatmul.bf16.gmra.mxu0 %v3159
    %v4809 = vpop.f32.mrf.mxu0
    %v4810 = vadd.f32 %v4481, %v4809
    %v4811 = vpop.f32.mrf.mxu0
    %v4812 = vadd.f32 %v4483, %v4811
    %4813 = vmatmul.bf16.gmra.mxu0 %v3167
    %v4814 = vpop.f32.mrf.mxu0
    %v4815 = vadd.f32 %v4486, %v4814
    %v4816 = vpop.f32.mrf.mxu0
    %v4817 = vadd.f32 %v4488, %v4816
    %4818 = vmatmul.bf16.gmra.mxu0 %v3175
    %v4819 = vpop.f32.mrf.mxu0
    %v4820 = vadd.f32 %v4491, %v4819
    %v4821 = vpop.f32.mrf.mxu0
    %v4822 = vadd.f32 %v4493, %v4821
    %4823 = vmatmul.bf16.gmra.mxu0 %v3183
    %v4824 = vpop.f32.mrf.mxu0
    %v4825 = vadd.f32 %v4496, %v4824
    %v4826 = vpop.f32.mrf.mxu0
    %v4827 = vadd.f32 %v4498, %v4826
    %4828 = vmatmul.bf16.gmra.mxu0 %v3191
    %v4829 = vpop.f32.mrf.mxu0
    %v4830 = vadd.f32 %v4501, %v4829
    %v4831 = vpop.f32.mrf.mxu0
    %v4832 = vadd.f32 %v4503, %v4831
    %4833 = vmatmul.bf16.gmra.mxu0 %v3199
    %v4834 = vpop.f32.mrf.mxu0
    %v4835 = vadd.f32 %v4506, %v4834
    %v4836 = vpop.f32.mrf.mxu0
    %v4837 = vadd.f32 %v4508, %v4836
    %4838 = vmatmul.bf16.gmra.mxu0 %v3207
    %v4839 = vpop.f32.mrf.mxu0
    %v4840 = vadd.f32 %v4511, %v4839
    %v4841 = vpop.f32.mrf.mxu0
    %v4842 = vadd.f32 %v4513, %v4841
    %4843 = vmatmul.bf16.gmra.mxu0 %v3215
    %v4844 = vpop.f32.mrf.mxu0
    %v4845 = vadd.f32 %v4516, %v4844
    %v4846 = vpop.f32.mrf.mxu0
    %v4847 = vadd.f32 %v4518, %v4846
    %4848 = vmatmul.bf16.gmra.mxu0 %v3223
    %v4849 = vpop.f32.mrf.mxu0
    %v4850 = vadd.f32 %v4521, %v4849
    %v4851 = vpop.f32.mrf.mxu0
    %v4852 = vadd.f32 %v4523, %v4851
    %4853 = vmatmul.bf16.gmra.mxu0 %v3231
    %v4854 = vpop.f32.mrf.mxu0
    %v4855 = vadd.f32 %v4526, %v4854
    %v4856 = vpop.f32.mrf.mxu0
    %v4857 = vadd.f32 %v4528, %v4856
    %4858 = vmatmul.bf16.gmra.mxu0 %v3239
    %v4859 = vpop.f32.mrf.mxu0
    %v4860 = vadd.f32 %v4531, %v4859
    %v4861 = vpop.f32.mrf.mxu0
    %v4862 = vadd.f32 %v4533, %v4861
    %4863 = vmatmul.bf16.gmra.mxu0 %v3247
    %v4864 = vpop.f32.mrf.mxu0
    %v4865 = vadd.f32 %v4536, %v4864
    %v4866 = vpop.f32.mrf.mxu0
    %v4867 = vadd.f32 %v4538, %v4866
    %4868 = vmatmul.bf16.gmra.mxu0 %v3255
    %v4869 = vpop.f32.mrf.mxu0
    %v4870 = vadd.f32 %v4541, %v4869
    %v4871 = vpop.f32.mrf.mxu0
    %v4872 = vadd.f32 %v4543, %v4871
    %4873 = vmatmul.bf16.gmra.mxu0 %v3263
    %v4874 = vpop.f32.mrf.mxu0
    %v4875 = vadd.f32 %v4546, %v4874
    %v4876 = vpop.f32.mrf.mxu0
    %v4877 = vadd.f32 %v4548, %v4876
    %4878 = vmatmul.bf16.gmra.mxu0 %v3271
    %v4879 = vpop.f32.mrf.mxu0
    %v4880 = vadd.f32 %v4551, %v4879
    %v4881 = vpop.f32.mrf.mxu0
    %v4882 = vadd.f32 %v4553, %v4881
    %4883 = vmatmul.bf16.gmra.mxu0 %v3279
    %v4884 = vpop.f32.mrf.mxu0
    %v4885 = vadd.f32 %v4556, %v4884
    %v4886 = vpop.f32.mrf.mxu0
    %v4887 = vadd.f32 %v4558, %v4886
    %4888 = vmatmul.bf16.gmra.mxu0 %v3287
    %v4889 = vpop.f32.mrf.mxu0
    %v4890 = vadd.f32 %v4561, %v4889
    %v4891 = vpop.f32.mrf.mxu0
    %v4892 = vadd.f32 %v4563, %v4891
    %4893 = vmatmul.bf16.gmra.mxu0 %v3295
    %v4894 = vpop.f32.mrf.mxu0
    %v4895 = vadd.f32 %v4566, %v4894
    %v4896 = vpop.f32.mrf.mxu0
    %v4897 = vadd.f32 %v4568, %v4896
    %4898 = vmatmul.bf16.gmra.mxu0 %v3303
    %v4899 = vpop.f32.mrf.mxu0
    %v4900 = vadd.f32 %v4571, %v4899
    %v4901 = vpop.f32.mrf.mxu0
    %v4902 = vadd.f32 %v4573, %v4901
    %4903 = vmatmul.bf16.gmra.mxu0 %v3311
    %v4904 = vpop.f32.mrf.mxu0
    %v4905 = vadd.f32 %v4576, %v4904
    %v4906 = vpop.f32.mrf.mxu0
    %v4907 = vadd.f32 %v4578, %v4906
    %4908 = vmatmul.bf16.gmra.mxu0 %v3319
    %v4909 = vpop.f32.mrf.mxu0
    %v4910 = vadd.f32 %v4581, %v4909
    %v4911 = vpop.f32.mrf.mxu0
    %v4912 = vadd.f32 %v4583, %v4911
    %4913 = vmatmul.bf16.gmra.mxu0 %v3327
    %v4914 = vpop.f32.mrf.mxu0
    %v4915 = vadd.f32 %v4586, %v4914
    %v4916 = vpop.f32.mrf.mxu0
    %v4917 = vadd.f32 %v4588, %v4916
    %4918 = vmatmul.bf16.gmra.mxu0 %v3335
    %v4919 = vpop.f32.mrf.mxu0
    %v4920 = vadd.f32 %v4591, %v4919
    %v4921 = vpop.f32.mrf.mxu0
    %v4922 = vadd.f32 %v4593, %v4921
    %4923 = vmatmul.bf16.gmra.mxu0 %v3343
    %v4924 = vpop.f32.mrf.mxu0
    %v4925 = vadd.f32 %v4596, %v4924
    %v4926 = vpop.f32.mrf.mxu0
    %v4927 = vadd.f32 %v4598, %v4926
    %4928 = vmatmul.bf16.gmra.mxu0 %v3351
    %v4929 = vpop.f32.mrf.mxu0
    %v4930 = vadd.f32 %v4601, %v4929
    %v4931 = vpop.f32.mrf.mxu0
    %v4932 = vadd.f32 %v4603, %v4931
    %4933 = vmatmul.bf16.gmra.mxu0 %v3359
    %v4934 = vpop.f32.mrf.mxu0
    %v4935 = vadd.f32 %v4606, %v4934
    %v4936 = vpop.f32.mrf.mxu0
    %v4937 = vadd.f32 %v4608, %v4936
    %4938 = vmatmul.bf16.gmra.mxu0 %v3367
    %v4939 = vpop.f32.mrf.mxu0
    %v4940 = vadd.f32 %v4611, %v4939
    %v4941 = vpop.f32.mrf.mxu0
    %v4942 = vadd.f32 %v4613, %v4941
    %4943 = vmatmul.bf16.gmra.mxu0 %v3375
    %v4944 = vpop.f32.mrf.mxu0
    %v4945 = vadd.f32 %v4616, %v4944
    %v4946 = vpop.f32.mrf.mxu0
    %v4947 = vadd.f32 %v4618, %v4946
    %4948 = vmatmul.bf16.gmra.mxu0 %v3383
    %v4949 = vpop.f32.mrf.mxu0
    %v4950 = vadd.f32 %v4621, %v4949
    %v4951 = vpop.f32.mrf.mxu0
    %v4952 = vadd.f32 %v4623, %v4951
    %4953 = vmatmul.bf16.gmra.mxu0 %v3391
    %v4954 = vpop.f32.mrf.mxu0
    %v4955 = vadd.f32 %v4626, %v4954
    %v4956 = vpop.f32.mrf.mxu0
    %v4957 = vadd.f32 %v4628, %v4956
    %4958 = vmatmul.bf16.gmra.mxu0 %v3399
    %v4959 = vpop.f32.mrf.mxu0
    %v4960 = vadd.f32 %v4631, %v4959
    %v4961 = vpop.f32.mrf.mxu0
    %v4962 = vadd.f32 %v4633, %v4961
    %4963 = vmatmul.bf16.gmra.mxu0 %v3407
    %v4964 = vpop.f32.mrf.mxu0
    %v4965 = vadd.f32 %v4636, %v4964
    %v4966 = vpop.f32.mrf.mxu0
    %v4967 = vadd.f32 %v4638, %v4966
    %4968 = vmatmul.bf16.gmra.mxu0 %v3415
    %v4969 = vpop.f32.mrf.mxu0
    %v4970 = vadd.f32 %v4641, %v4969
    %v4971 = vpop.f32.mrf.mxu0
    %v4972 = vadd.f32 %v4643, %v4971
    %4973 = vmatmul.bf16.gmra.mxu0 %v3423
    %v4974 = vpop.f32.mrf.mxu0
    %v4975 = vadd.f32 %v4646, %v4974
    %v4976 = vpop.f32.mrf.mxu0
    %v4977 = vadd.f32 %v4648, %v4976
    %4978 = vmatmul.bf16.gmra.mxu0 %v3431
    %v4979 = vpop.f32.mrf.mxu0
    %v4980 = vadd.f32 %v4651, %v4979
    %v4981 = vpop.f32.mrf.mxu0
    %v4982 = vadd.f32 %v4653, %v4981
    %4983 = vmatmul.bf16.gmra.mxu0 %v3439
    %v4984 = vpop.f32.mrf.mxu0
    %v4985 = vadd.f32 %v4656, %v4984
    %v4986 = vpop.f32.mrf.mxu0
    %v4987 = vadd.f32 %v4658, %v4986
    %4988 = vmatmul.bf16.gmra.mxu0 %v3447
    %v4989 = vpop.f32.mrf.mxu0
    %v4990 = vadd.f32 %v4661, %v4989
    %v4991 = vpop.f32.mrf.mxu0
    %v4992 = vadd.f32 %v4663, %v4991
    %4993 = vmatmul.bf16.gmra.mxu0 %v3455
    %v4994 = vpop.f32.mrf.mxu0
    %v4995 = vadd.f32 %v4666, %v4994
    %v4996 = vpop.f32.mrf.mxu0
    %v4997 = vadd.f32 %v4668, %v4996
    %4998 = vmatmul.bf16.gmra.mxu0 %v3463
    %v4999 = vpop.f32.mrf.mxu0
    %v5000 = vadd.f32 %v4671, %v4999
    %v5001 = vpop.f32.mrf.mxu0
    %v5002 = vadd.f32 %v4673, %v5001
    %5003 = vmatmul.bf16.gmra.mxu0 %v3471
    %v5004 = vpop.f32.mrf.mxu0
    %v5005 = vadd.f32 %v4676, %v5004
    %v5006 = vpop.f32.mrf.mxu0
    %v5007 = vadd.f32 %v4678, %v5006
    %5008 = vmatmul.bf16.gmra.mxu0 %v3479
    %v5009 = vpop.f32.mrf.mxu0
    %v5010 = vadd.f32 %v4681, %v5009
    %v5011 = vpop.f32.mrf.mxu0
    %v5012 = vadd.f32 %v4683, %v5011
    %5013 = vmatmul.bf16.gmra.mxu0 %v3487
    %v5014 = vpop.f32.mrf.mxu0
    %v5015 = vadd.f32 %v4686, %v5014
    %v5016 = vpop.f32.mrf.mxu0
    %v5017 = vadd.f32 %v4688, %v5016
    %5018 = vmatmul.bf16.gmra.mxu0 %v3495
    %v5019 = vpop.f32.mrf.mxu0
    %v5020 = vadd.f32 %v4691, %v5019
    %v5021 = vpop.f32.mrf.mxu0
    %v5022 = vadd.f32 %v4693, %v5021
    %5023 = vmatmul.bf16.gmra.mxu0 %v3503
    %v5024 = vpop.f32.mrf.mxu0
    %v5025 = vadd.f32 %v4696, %v5024
    %v5026 = vpop.f32.mrf.mxu0
    %v5027 = vadd.f32 %v4698, %v5026
    %5028 = vmatmul.bf16.gmra.mxu0 %v3511
    %v5029 = vpop.f32.mrf.mxu0
    %v5030 = vadd.f32 %v4701, %v5029
    %v5031 = vpop.f32.mrf.mxu0
    %v5032 = vadd.f32 %v4703, %v5031
    %5033 = vmatmul.bf16.gmra.mxu0 %v3519
    %v5034 = vpop.f32.mrf.mxu0
    %v5035 = vadd.f32 %v4706, %v5034
    %v5036 = vpop.f32.mrf.mxu0
    %v5037 = vadd.f32 %v4708, %v5036
    %5038 = vmatmul.bf16.gmra.mxu0 %v3527
    %v5039 = vpop.f32.mrf.mxu0
    %v5040 = vadd.f32 %v4711, %v5039
    %v5041 = vpop.f32.mrf.mxu0
    %v5042 = vadd.f32 %v4713, %v5041
    %5043 = vmatmul.bf16.gmra.mxu0 %v3535
    %v5044 = vpop.f32.mrf.mxu0
    %v5045 = vadd.f32 %v4716, %v5044
    %v5046 = vpop.f32.mrf.mxu0
    %v5047 = vadd.f32 %v4718, %v5046
    %5048 = vmatmul.bf16.gmra.mxu0 %v3543
    %v5049 = vpop.f32.mrf.mxu0
    %v5050 = vadd.f32 %v4721, %v5049
    %v5051 = vpop.f32.mrf.mxu0
    %v5052 = vadd.f32 %v4723, %v5051
    %5053 = vmatmul.bf16.gmra.mxu0 %v3551
    %v5054 = vpop.f32.mrf.mxu0
    %v5055 = vadd.f32 %v4726, %v5054
    %v5056 = vpop.f32.mrf.mxu0
    %v5057 = vadd.f32 %v4728, %v5056
    %5058 = vmatmul.bf16.gmra.mxu0 %v3559
    %v5059 = vpop.f32.mrf.mxu0
    %v5060 = vadd.f32 %v4731, %v5059
    %v5061 = vpop.f32.mrf.mxu0
    %v5062 = vadd.f32 %v4733, %v5061
    %5063 = vdwg.mxu0
    %5064 = vmatpush.bf16.msra.mxu0 %v972
    %5065 = vmatpush.bf16.msra.mxu0 %v971
    %5066 = vmatpush.bf16.msra.mxu0 %v970
    %5067 = vmatpush.bf16.msra.mxu0 %v969
    %5068 = vmatpush.bf16.msra.mxu0 %v968
    %5069 = vmatpush.bf16.msra.mxu0 %v967
    %5070 = vmatpush.bf16.msra.mxu0 %v966
    %5071 = vmatpush.bf16.msra.mxu0 %v965
    %5072 = vmatmul.bf16.gmra.mxu0 %v3056
    %v5073 = vpop.f32.mrf.mxu0
    %v5074 = vadd.f32 %v4745, %v5073
    %v5075 = vpop.f32.mrf.mxu0
    %v5076 = vadd.f32 %v4747, %v5075
    %5077 = vmatmul.bf16.gmra.mxu0 %v3064
    %v5078 = vpop.f32.mrf.mxu0
    %v5079 = vadd.f32 %v4750, %v5078
    %v5080 = vpop.f32.mrf.mxu0
    %v5081 = vadd.f32 %v4752, %v5080
    %5082 = vmatmul.bf16.gmra.mxu0 %v3072
    %v5083 = vpop.f32.mrf.mxu0
    %v5084 = vadd.f32 %v4755, %v5083
    %v5085 = vpop.f32.mrf.mxu0
    %v5086 = vadd.f32 %v4757, %v5085
    %5087 = vmatmul.bf16.gmra.mxu0 %v3080
    %v5088 = vpop.f32.mrf.mxu0
    %v5089 = vadd.f32 %v4760, %v5088
    %v5090 = vpop.f32.mrf.mxu0
    %v5091 = vadd.f32 %v4762, %v5090
    %5092 = vmatmul.bf16.gmra.mxu0 %v3088
    %v5093 = vpop.f32.mrf.mxu0
    %v5094 = vadd.f32 %v4765, %v5093
    %v5095 = vpop.f32.mrf.mxu0
    %v5096 = vadd.f32 %v4767, %v5095
    %5097 = vmatmul.bf16.gmra.mxu0 %v3096
    %v5098 = vpop.f32.mrf.mxu0
    %v5099 = vadd.f32 %v4770, %v5098
    %v5100 = vpop.f32.mrf.mxu0
    %v5101 = vadd.f32 %v4772, %v5100
    %5102 = vmatmul.bf16.gmra.mxu0 %v3104
    %v5103 = vpop.f32.mrf.mxu0
    %v5104 = vadd.f32 %v4775, %v5103
    %v5105 = vpop.f32.mrf.mxu0
    %v5106 = vadd.f32 %v4777, %v5105
    %5107 = vmatmul.bf16.gmra.mxu0 %v3112
    %v5108 = vpop.f32.mrf.mxu0
    %v5109 = vadd.f32 %v4780, %v5108
    %v5110 = vpop.f32.mrf.mxu0
    %v5111 = vadd.f32 %v4782, %v5110
    %5112 = vmatmul.bf16.gmra.mxu0 %v3120
    %v5113 = vpop.f32.mrf.mxu0
    %v5114 = vadd.f32 %v4785, %v5113
    %v5115 = vpop.f32.mrf.mxu0
    %v5116 = vadd.f32 %v4787, %v5115
    %5117 = vmatmul.bf16.gmra.mxu0 %v3128
    %v5118 = vpop.f32.mrf.mxu0
    %v5119 = vadd.f32 %v4790, %v5118
    %v5120 = vpop.f32.mrf.mxu0
    %v5121 = vadd.f32 %v4792, %v5120
    %5122 = vmatmul.bf16.gmra.mxu0 %v3136
    %v5123 = vpop.f32.mrf.mxu0
    %v5124 = vadd.f32 %v4795, %v5123
    %v5125 = vpop.f32.mrf.mxu0
    %v5126 = vadd.f32 %v4797, %v5125
    %5127 = vmatmul.bf16.gmra.mxu0 %v3144
    %v5128 = vpop.f32.mrf.mxu0
    %v5129 = vadd.f32 %v4800, %v5128
    %v5130 = vpop.f32.mrf.mxu0
    %v5131 = vadd.f32 %v4802, %v5130
    %5132 = vmatmul.bf16.gmra.mxu0 %v3152
    %v5133 = vpop.f32.mrf.mxu0
    %v5134 = vadd.f32 %v4805, %v5133
    %v5135 = vpop.f32.mrf.mxu0
    %v5136 = vadd.f32 %v4807, %v5135
    %5137 = vmatmul.bf16.gmra.mxu0 %v3160
    %v5138 = vpop.f32.mrf.mxu0
    %v5139 = vadd.f32 %v4810, %v5138
    %v5140 = vpop.f32.mrf.mxu0
    %v5141 = vadd.f32 %v4812, %v5140
    %5142 = vmatmul.bf16.gmra.mxu0 %v3168
    %v5143 = vpop.f32.mrf.mxu0
    %v5144 = vadd.f32 %v4815, %v5143
    %v5145 = vpop.f32.mrf.mxu0
    %v5146 = vadd.f32 %v4817, %v5145
    %5147 = vmatmul.bf16.gmra.mxu0 %v3176
    %v5148 = vpop.f32.mrf.mxu0
    %v5149 = vadd.f32 %v4820, %v5148
    %v5150 = vpop.f32.mrf.mxu0
    %v5151 = vadd.f32 %v4822, %v5150
    %5152 = vmatmul.bf16.gmra.mxu0 %v3184
    %v5153 = vpop.f32.mrf.mxu0
    %v5154 = vadd.f32 %v4825, %v5153
    %v5155 = vpop.f32.mrf.mxu0
    %v5156 = vadd.f32 %v4827, %v5155
    %5157 = vmatmul.bf16.gmra.mxu0 %v3192
    %v5158 = vpop.f32.mrf.mxu0
    %v5159 = vadd.f32 %v4830, %v5158
    %v5160 = vpop.f32.mrf.mxu0
    %v5161 = vadd.f32 %v4832, %v5160
    %5162 = vmatmul.bf16.gmra.mxu0 %v3200
    %v5163 = vpop.f32.mrf.mxu0
    %v5164 = vadd.f32 %v4835, %v5163
    %v5165 = vpop.f32.mrf.mxu0
    %v5166 = vadd.f32 %v4837, %v5165
    %5167 = vmatmul.bf16.gmra.mxu0 %v3208
    %v5168 = vpop.f32.mrf.mxu0
    %v5169 = vadd.f32 %v4840, %v5168
    %v5170 = vpop.f32.mrf.mxu0
    %v5171 = vadd.f32 %v4842, %v5170
    %5172 = vmatmul.bf16.gmra.mxu0 %v3216
    %v5173 = vpop.f32.mrf.mxu0
    %v5174 = vadd.f32 %v4845, %v5173
    %v5175 = vpop.f32.mrf.mxu0
    %v5176 = vadd.f32 %v4847, %v5175
    %5177 = vmatmul.bf16.gmra.mxu0 %v3224
    %v5178 = vpop.f32.mrf.mxu0
    %v5179 = vadd.f32 %v4850, %v5178
    %v5180 = vpop.f32.mrf.mxu0
    %v5181 = vadd.f32 %v4852, %v5180
    %5182 = vmatmul.bf16.gmra.mxu0 %v3232
    %v5183 = vpop.f32.mrf.mxu0
    %v5184 = vadd.f32 %v4855, %v5183
    %v5185 = vpop.f32.mrf.mxu0
    %v5186 = vadd.f32 %v4857, %v5185
    %5187 = vmatmul.bf16.gmra.mxu0 %v3240
    %v5188 = vpop.f32.mrf.mxu0
    %v5189 = vadd.f32 %v4860, %v5188
    %v5190 = vpop.f32.mrf.mxu0
    %v5191 = vadd.f32 %v4862, %v5190
    %5192 = vmatmul.bf16.gmra.mxu0 %v3248
    %v5193 = vpop.f32.mrf.mxu0
    %v5194 = vadd.f32 %v4865, %v5193
    %v5195 = vpop.f32.mrf.mxu0
    %v5196 = vadd.f32 %v4867, %v5195
    %5197 = vmatmul.bf16.gmra.mxu0 %v3256
    %v5198 = vpop.f32.mrf.mxu0
    %v5199 = vadd.f32 %v4870, %v5198
    %v5200 = vpop.f32.mrf.mxu0
    %v5201 = vadd.f32 %v4872, %v5200
    %5202 = vmatmul.bf16.gmra.mxu0 %v3264
    %v5203 = vpop.f32.mrf.mxu0
    %v5204 = vadd.f32 %v4875, %v5203
    %v5205 = vpop.f32.mrf.mxu0
    %v5206 = vadd.f32 %v4877, %v5205
    %5207 = vmatmul.bf16.gmra.mxu0 %v3272
    %v5208 = vpop.f32.mrf.mxu0
    %v5209 = vadd.f32 %v4880, %v5208
    %v5210 = vpop.f32.mrf.mxu0
    %v5211 = vadd.f32 %v4882, %v5210
    %5212 = vmatmul.bf16.gmra.mxu0 %v3280
    %v5213 = vpop.f32.mrf.mxu0
    %v5214 = vadd.f32 %v4885, %v5213
    %v5215 = vpop.f32.mrf.mxu0
    %v5216 = vadd.f32 %v4887, %v5215
    %5217 = vmatmul.bf16.gmra.mxu0 %v3288
    %v5218 = vpop.f32.mrf.mxu0
    %v5219 = vadd.f32 %v4890, %v5218
    %v5220 = vpop.f32.mrf.mxu0
    %v5221 = vadd.f32 %v4892, %v5220
    %5222 = vmatmul.bf16.gmra.mxu0 %v3296
    %v5223 = vpop.f32.mrf.mxu0
    %v5224 = vadd.f32 %v4895, %v5223
    %v5225 = vpop.f32.mrf.mxu0
    %v5226 = vadd.f32 %v4897, %v5225
    %5227 = vmatmul.bf16.gmra.mxu0 %v3304
    %v5228 = vpop.f32.mrf.mxu0
    %v5229 = vadd.f32 %v4900, %v5228
    %v5230 = vpop.f32.mrf.mxu0
    %v5231 = vadd.f32 %v4902, %v5230
    %5232 = vmatmul.bf16.gmra.mxu0 %v3312
    %v5233 = vpop.f32.mrf.mxu0
    %v5234 = vadd.f32 %v4905, %v5233
    %v5235 = vpop.f32.mrf.mxu0
    %v5236 = vadd.f32 %v4907, %v5235
    %5237 = vmatmul.bf16.gmra.mxu0 %v3320
    %v5238 = vpop.f32.mrf.mxu0
    %v5239 = vadd.f32 %v4910, %v5238
    %v5240 = vpop.f32.mrf.mxu0
    %v5241 = vadd.f32 %v4912, %v5240
    %5242 = vmatmul.bf16.gmra.mxu0 %v3328
    %v5243 = vpop.f32.mrf.mxu0
    %v5244 = vadd.f32 %v4915, %v5243
    %v5245 = vpop.f32.mrf.mxu0
    %v5246 = vadd.f32 %v4917, %v5245
    %5247 = vmatmul.bf16.gmra.mxu0 %v3336
    %v5248 = vpop.f32.mrf.mxu0
    %v5249 = vadd.f32 %v4920, %v5248
    %v5250 = vpop.f32.mrf.mxu0
    %v5251 = vadd.f32 %v4922, %v5250
    %5252 = vmatmul.bf16.gmra.mxu0 %v3344
    %v5253 = vpop.f32.mrf.mxu0
    %v5254 = vadd.f32 %v4925, %v5253
    %v5255 = vpop.f32.mrf.mxu0
    %v5256 = vadd.f32 %v4927, %v5255
    %5257 = vmatmul.bf16.gmra.mxu0 %v3352
    %v5258 = vpop.f32.mrf.mxu0
    %v5259 = vadd.f32 %v4930, %v5258
    %v5260 = vpop.f32.mrf.mxu0
    %v5261 = vadd.f32 %v4932, %v5260
    %5262 = vmatmul.bf16.gmra.mxu0 %v3360
    %v5263 = vpop.f32.mrf.mxu0
    %v5264 = vadd.f32 %v4935, %v5263
    %v5265 = vpop.f32.mrf.mxu0
    %v5266 = vadd.f32 %v4937, %v5265
    %5267 = vmatmul.bf16.gmra.mxu0 %v3368
    %v5268 = vpop.f32.mrf.mxu0
    %v5269 = vadd.f32 %v4940, %v5268
    %v5270 = vpop.f32.mrf.mxu0
    %v5271 = vadd.f32 %v4942, %v5270
    %5272 = vmatmul.bf16.gmra.mxu0 %v3376
    %v5273 = vpop.f32.mrf.mxu0
    %v5274 = vadd.f32 %v4945, %v5273
    %v5275 = vpop.f32.mrf.mxu0
    %v5276 = vadd.f32 %v4947, %v5275
    %5277 = vmatmul.bf16.gmra.mxu0 %v3384
    %v5278 = vpop.f32.mrf.mxu0
    %v5279 = vadd.f32 %v4950, %v5278
    %v5280 = vpop.f32.mrf.mxu0
    %v5281 = vadd.f32 %v4952, %v5280
    %5282 = vmatmul.bf16.gmra.mxu0 %v3392
    %v5283 = vpop.f32.mrf.mxu0
    %v5284 = vadd.f32 %v4955, %v5283
    %v5285 = vpop.f32.mrf.mxu0
    %v5286 = vadd.f32 %v4957, %v5285
    %5287 = vmatmul.bf16.gmra.mxu0 %v3400
    %v5288 = vpop.f32.mrf.mxu0
    %v5289 = vadd.f32 %v4960, %v5288
    %v5290 = vpop.f32.mrf.mxu0
    %v5291 = vadd.f32 %v4962, %v5290
    %5292 = vmatmul.bf16.gmra.mxu0 %v3408
    %v5293 = vpop.f32.mrf.mxu0
    %v5294 = vadd.f32 %v4965, %v5293
    %v5295 = vpop.f32.mrf.mxu0
    %v5296 = vadd.f32 %v4967, %v5295
    %5297 = vmatmul.bf16.gmra.mxu0 %v3416
    %v5298 = vpop.f32.mrf.mxu0
    %v5299 = vadd.f32 %v4970, %v5298
    %v5300 = vpop.f32.mrf.mxu0
    %v5301 = vadd.f32 %v4972, %v5300
    %5302 = vmatmul.bf16.gmra.mxu0 %v3424
    %v5303 = vpop.f32.mrf.mxu0
    %v5304 = vadd.f32 %v4975, %v5303
    %v5305 = vpop.f32.mrf.mxu0
    %v5306 = vadd.f32 %v4977, %v5305
    %5307 = vmatmul.bf16.gmra.mxu0 %v3432
    %v5308 = vpop.f32.mrf.mxu0
    %v5309 = vadd.f32 %v4980, %v5308
    %v5310 = vpop.f32.mrf.mxu0
    %v5311 = vadd.f32 %v4982, %v5310
    %5312 = vmatmul.bf16.gmra.mxu0 %v3440
    %v5313 = vpop.f32.mrf.mxu0
    %v5314 = vadd.f32 %v4985, %v5313
    %v5315 = vpop.f32.mrf.mxu0
    %v5316 = vadd.f32 %v4987, %v5315
    %5317 = vmatmul.bf16.gmra.mxu0 %v3448
    %v5318 = vpop.f32.mrf.mxu0
    %v5319 = vadd.f32 %v4990, %v5318
    %v5320 = vpop.f32.mrf.mxu0
    %v5321 = vadd.f32 %v4992, %v5320
    %5322 = vmatmul.bf16.gmra.mxu0 %v3456
    %v5323 = vpop.f32.mrf.mxu0
    %v5324 = vadd.f32 %v4995, %v5323
    %v5325 = vpop.f32.mrf.mxu0
    %v5326 = vadd.f32 %v4997, %v5325
    %5327 = vmatmul.bf16.gmra.mxu0 %v3464
    %v5328 = vpop.f32.mrf.mxu0
    %v5329 = vadd.f32 %v5000, %v5328
    %v5330 = vpop.f32.mrf.mxu0
    %v5331 = vadd.f32 %v5002, %v5330
    %5332 = vmatmul.bf16.gmra.mxu0 %v3472
    %v5333 = vpop.f32.mrf.mxu0
    %v5334 = vadd.f32 %v5005, %v5333
    %v5335 = vpop.f32.mrf.mxu0
    %v5336 = vadd.f32 %v5007, %v5335
    %5337 = vmatmul.bf16.gmra.mxu0 %v3480
    %v5338 = vpop.f32.mrf.mxu0
    %v5339 = vadd.f32 %v5010, %v5338
    %v5340 = vpop.f32.mrf.mxu0
    %v5341 = vadd.f32 %v5012, %v5340
    %5342 = vmatmul.bf16.gmra.mxu0 %v3488
    %v5343 = vpop.f32.mrf.mxu0
    %v5344 = vadd.f32 %v5015, %v5343
    %v5345 = vpop.f32.mrf.mxu0
    %v5346 = vadd.f32 %v5017, %v5345
    %5347 = vmatmul.bf16.gmra.mxu0 %v3496
    %v5348 = vpop.f32.mrf.mxu0
    %v5349 = vadd.f32 %v5020, %v5348
    %v5350 = vpop.f32.mrf.mxu0
    %v5351 = vadd.f32 %v5022, %v5350
    %5352 = vmatmul.bf16.gmra.mxu0 %v3504
    %v5353 = vpop.f32.mrf.mxu0
    %v5354 = vadd.f32 %v5025, %v5353
    %v5355 = vpop.f32.mrf.mxu0
    %v5356 = vadd.f32 %v5027, %v5355
    %5357 = vmatmul.bf16.gmra.mxu0 %v3512
    %v5358 = vpop.f32.mrf.mxu0
    %v5359 = vadd.f32 %v5030, %v5358
    %v5360 = vpop.f32.mrf.mxu0
    %v5361 = vadd.f32 %v5032, %v5360
    %5362 = vmatmul.bf16.gmra.mxu0 %v3520
    %v5363 = vpop.f32.mrf.mxu0
    %v5364 = vadd.f32 %v5035, %v5363
    %v5365 = vpop.f32.mrf.mxu0
    %v5366 = vadd.f32 %v5037, %v5365
    %5367 = vmatmul.bf16.gmra.mxu0 %v3528
    %v5368 = vpop.f32.mrf.mxu0
    %v5369 = vadd.f32 %v5040, %v5368
    %v5370 = vpop.f32.mrf.mxu0
    %v5371 = vadd.f32 %v5042, %v5370
    %5372 = vmatmul.bf16.gmra.mxu0 %v3536
    %v5373 = vpop.f32.mrf.mxu0
    %v5374 = vadd.f32 %v5045, %v5373
    %v5375 = vpop.f32.mrf.mxu0
    %v5376 = vadd.f32 %v5047, %v5375
    %5377 = vmatmul.bf16.gmra.mxu0 %v3544
    %v5378 = vpop.f32.mrf.mxu0
    %v5379 = vadd.f32 %v5050, %v5378
    %v5380 = vpop.f32.mrf.mxu0
    %v5381 = vadd.f32 %v5052, %v5380
    %5382 = vmatmul.bf16.gmra.mxu0 %v3552
    %v5383 = vpop.f32.mrf.mxu0
    %v5384 = vadd.f32 %v5055, %v5383
    %v5385 = vpop.f32.mrf.mxu0
    %v5386 = vadd.f32 %v5057, %v5385
    %5387 = vmatmul.bf16.gmra.mxu0 %v3560
    %v5388 = vpop.f32.mrf.mxu0
    %v5389 = vadd.f32 %v5060, %v5388
    %v5390 = vpop.f32.mrf.mxu0
    %v5391 = vadd.f32 %v5062, %v5390
    %5392 = vdwg.mxu0
    %5393 = vmatpush.bf16.msra.mxu0 %v980
    %5394 = vmatpush.bf16.msra.mxu0 %v979
    %5395 = vmatpush.bf16.msra.mxu0 %v978
    %5396 = vmatpush.bf16.msra.mxu0 %v977
    %5397 = vmatpush.bf16.msra.mxu0 %v976
    %5398 = vmatpush.bf16.msra.mxu0 %v975
    %5399 = vmatpush.bf16.msra.mxu0 %v974
    %5400 = vmatpush.bf16.msra.mxu0 %v973
    %5401 = vmatmul.bf16.gmra.mxu0 %v3057
    %v5402 = vpop.f32.mrf.mxu0
    %v5403 = vadd.f32 %v5074, %v5402
    %v5404 = vpop.f32.mrf.mxu0
    %v5405 = vadd.f32 %v5076, %v5404
    %5406 = vmatmul.bf16.gmra.mxu0 %v3065
    %v5407 = vpop.f32.mrf.mxu0
    %v5408 = vadd.f32 %v5079, %v5407
    %v5409 = vpop.f32.mrf.mxu0
    %v5410 = vadd.f32 %v5081, %v5409
    %5411 = vmatmul.bf16.gmra.mxu0 %v3073
    %v5412 = vpop.f32.mrf.mxu0
    %v5413 = vadd.f32 %v5084, %v5412
    %v5414 = vpop.f32.mrf.mxu0
    %v5415 = vadd.f32 %v5086, %v5414
    %5416 = vmatmul.bf16.gmra.mxu0 %v3081
    %v5417 = vpop.f32.mrf.mxu0
    %v5418 = vadd.f32 %v5089, %v5417
    %v5419 = vpop.f32.mrf.mxu0
    %v5420 = vadd.f32 %v5091, %v5419
    %5421 = vmatmul.bf16.gmra.mxu0 %v3089
    %v5422 = vpop.f32.mrf.mxu0
    %v5423 = vadd.f32 %v5094, %v5422
    %v5424 = vpop.f32.mrf.mxu0
    %v5425 = vadd.f32 %v5096, %v5424
    %5426 = vmatmul.bf16.gmra.mxu0 %v3097
    %v5427 = vpop.f32.mrf.mxu0
    %v5428 = vadd.f32 %v5099, %v5427
    %v5429 = vpop.f32.mrf.mxu0
    %v5430 = vadd.f32 %v5101, %v5429
    %5431 = vmatmul.bf16.gmra.mxu0 %v3105
    %v5432 = vpop.f32.mrf.mxu0
    %v5433 = vadd.f32 %v5104, %v5432
    %v5434 = vpop.f32.mrf.mxu0
    %v5435 = vadd.f32 %v5106, %v5434
    %5436 = vmatmul.bf16.gmra.mxu0 %v3113
    %v5437 = vpop.f32.mrf.mxu0
    %v5438 = vadd.f32 %v5109, %v5437
    %v5439 = vpop.f32.mrf.mxu0
    %v5440 = vadd.f32 %v5111, %v5439
    %5441 = vmatmul.bf16.gmra.mxu0 %v3121
    %v5442 = vpop.f32.mrf.mxu0
    %v5443 = vadd.f32 %v5114, %v5442
    %v5444 = vpop.f32.mrf.mxu0
    %v5445 = vadd.f32 %v5116, %v5444
    %5446 = vmatmul.bf16.gmra.mxu0 %v3129
    %v5447 = vpop.f32.mrf.mxu0
    %v5448 = vadd.f32 %v5119, %v5447
    %v5449 = vpop.f32.mrf.mxu0
    %v5450 = vadd.f32 %v5121, %v5449
    %5451 = vmatmul.bf16.gmra.mxu0 %v3137
    %v5452 = vpop.f32.mrf.mxu0
    %v5453 = vadd.f32 %v5124, %v5452
    %v5454 = vpop.f32.mrf.mxu0
    %v5455 = vadd.f32 %v5126, %v5454
    %5456 = vmatmul.bf16.gmra.mxu0 %v3145
    %v5457 = vpop.f32.mrf.mxu0
    %v5458 = vadd.f32 %v5129, %v5457
    %v5459 = vpop.f32.mrf.mxu0
    %v5460 = vadd.f32 %v5131, %v5459
    %5461 = vmatmul.bf16.gmra.mxu0 %v3153
    %v5462 = vpop.f32.mrf.mxu0
    %v5463 = vadd.f32 %v5134, %v5462
    %v5464 = vpop.f32.mrf.mxu0
    %v5465 = vadd.f32 %v5136, %v5464
    %5466 = vmatmul.bf16.gmra.mxu0 %v3161
    %v5467 = vpop.f32.mrf.mxu0
    %v5468 = vadd.f32 %v5139, %v5467
    %v5469 = vpop.f32.mrf.mxu0
    %v5470 = vadd.f32 %v5141, %v5469
    %5471 = vmatmul.bf16.gmra.mxu0 %v3169
    %v5472 = vpop.f32.mrf.mxu0
    %v5473 = vadd.f32 %v5144, %v5472
    %v5474 = vpop.f32.mrf.mxu0
    %v5475 = vadd.f32 %v5146, %v5474
    %5476 = vmatmul.bf16.gmra.mxu0 %v3177
    %v5477 = vpop.f32.mrf.mxu0
    %v5478 = vadd.f32 %v5149, %v5477
    %v5479 = vpop.f32.mrf.mxu0
    %v5480 = vadd.f32 %v5151, %v5479
    %5481 = vmatmul.bf16.gmra.mxu0 %v3185
    %v5482 = vpop.f32.mrf.mxu0
    %v5483 = vadd.f32 %v5154, %v5482
    %v5484 = vpop.f32.mrf.mxu0
    %v5485 = vadd.f32 %v5156, %v5484
    %5486 = vmatmul.bf16.gmra.mxu0 %v3193
    %v5487 = vpop.f32.mrf.mxu0
    %v5488 = vadd.f32 %v5159, %v5487
    %v5489 = vpop.f32.mrf.mxu0
    %v5490 = vadd.f32 %v5161, %v5489
    %5491 = vmatmul.bf16.gmra.mxu0 %v3201
    %v5492 = vpop.f32.mrf.mxu0
    %v5493 = vadd.f32 %v5164, %v5492
    %v5494 = vpop.f32.mrf.mxu0
    %v5495 = vadd.f32 %v5166, %v5494
    %5496 = vmatmul.bf16.gmra.mxu0 %v3209
    %v5497 = vpop.f32.mrf.mxu0
    %v5498 = vadd.f32 %v5169, %v5497
    %v5499 = vpop.f32.mrf.mxu0
    %v5500 = vadd.f32 %v5171, %v5499
    %5501 = vmatmul.bf16.gmra.mxu0 %v3217
    %v5502 = vpop.f32.mrf.mxu0
    %v5503 = vadd.f32 %v5174, %v5502
    %v5504 = vpop.f32.mrf.mxu0
    %v5505 = vadd.f32 %v5176, %v5504
    %5506 = vmatmul.bf16.gmra.mxu0 %v3225
    %v5507 = vpop.f32.mrf.mxu0
    %v5508 = vadd.f32 %v5179, %v5507
    %v5509 = vpop.f32.mrf.mxu0
    %v5510 = vadd.f32 %v5181, %v5509
    %5511 = vmatmul.bf16.gmra.mxu0 %v3233
    %v5512 = vpop.f32.mrf.mxu0
    %v5513 = vadd.f32 %v5184, %v5512
    %v5514 = vpop.f32.mrf.mxu0
    %v5515 = vadd.f32 %v5186, %v5514
    %5516 = vmatmul.bf16.gmra.mxu0 %v3241
    %v5517 = vpop.f32.mrf.mxu0
    %v5518 = vadd.f32 %v5189, %v5517
    %v5519 = vpop.f32.mrf.mxu0
    %v5520 = vadd.f32 %v5191, %v5519
    %5521 = vmatmul.bf16.gmra.mxu0 %v3249
    %v5522 = vpop.f32.mrf.mxu0
    %v5523 = vadd.f32 %v5194, %v5522
    %v5524 = vpop.f32.mrf.mxu0
    %v5525 = vadd.f32 %v5196, %v5524
    %5526 = vmatmul.bf16.gmra.mxu0 %v3257
    %v5527 = vpop.f32.mrf.mxu0
    %v5528 = vadd.f32 %v5199, %v5527
    %v5529 = vpop.f32.mrf.mxu0
    %v5530 = vadd.f32 %v5201, %v5529
    %5531 = vmatmul.bf16.gmra.mxu0 %v3265
    %v5532 = vpop.f32.mrf.mxu0
    %v5533 = vadd.f32 %v5204, %v5532
    %v5534 = vpop.f32.mrf.mxu0
    %v5535 = vadd.f32 %v5206, %v5534
    %5536 = vmatmul.bf16.gmra.mxu0 %v3273
    %v5537 = vpop.f32.mrf.mxu0
    %v5538 = vadd.f32 %v5209, %v5537
    %v5539 = vpop.f32.mrf.mxu0
    %v5540 = vadd.f32 %v5211, %v5539
    %5541 = vmatmul.bf16.gmra.mxu0 %v3281
    %v5542 = vpop.f32.mrf.mxu0
    %v5543 = vadd.f32 %v5214, %v5542
    %v5544 = vpop.f32.mrf.mxu0
    %v5545 = vadd.f32 %v5216, %v5544
    %5546 = vmatmul.bf16.gmra.mxu0 %v3289
    %v5547 = vpop.f32.mrf.mxu0
    %v5548 = vadd.f32 %v5219, %v5547
    %v5549 = vpop.f32.mrf.mxu0
    %v5550 = vadd.f32 %v5221, %v5549
    %5551 = vmatmul.bf16.gmra.mxu0 %v3297
    %v5552 = vpop.f32.mrf.mxu0
    %v5553 = vadd.f32 %v5224, %v5552
    %v5554 = vpop.f32.mrf.mxu0
    %v5555 = vadd.f32 %v5226, %v5554
    %5556 = vmatmul.bf16.gmra.mxu0 %v3305
    %v5557 = vpop.f32.mrf.mxu0
    %v5558 = vadd.f32 %v5229, %v5557
    %v5559 = vpop.f32.mrf.mxu0
    %v5560 = vadd.f32 %v5231, %v5559
    %5561 = vmatmul.bf16.gmra.mxu0 %v3313
    %v5562 = vpop.f32.mrf.mxu0
    %v5563 = vadd.f32 %v5234, %v5562
    %v5564 = vpop.f32.mrf.mxu0
    %v5565 = vadd.f32 %v5236, %v5564
    %5566 = vmatmul.bf16.gmra.mxu0 %v3321
    %v5567 = vpop.f32.mrf.mxu0
    %v5568 = vadd.f32 %v5239, %v5567
    %v5569 = vpop.f32.mrf.mxu0
    %v5570 = vadd.f32 %v5241, %v5569
    %5571 = vmatmul.bf16.gmra.mxu0 %v3329
    %v5572 = vpop.f32.mrf.mxu0
    %v5573 = vadd.f32 %v5244, %v5572
    %v5574 = vpop.f32.mrf.mxu0
    %v5575 = vadd.f32 %v5246, %v5574
    %5576 = vmatmul.bf16.gmra.mxu0 %v3337
    %v5577 = vpop.f32.mrf.mxu0
    %v5578 = vadd.f32 %v5249, %v5577
    %v5579 = vpop.f32.mrf.mxu0
    %v5580 = vadd.f32 %v5251, %v5579
    %5581 = vmatmul.bf16.gmra.mxu0 %v3345
    %v5582 = vpop.f32.mrf.mxu0
    %v5583 = vadd.f32 %v5254, %v5582
    %v5584 = vpop.f32.mrf.mxu0
    %v5585 = vadd.f32 %v5256, %v5584
    %5586 = vmatmul.bf16.gmra.mxu0 %v3353
    %v5587 = vpop.f32.mrf.mxu0
    %v5588 = vadd.f32 %v5259, %v5587
    %v5589 = vpop.f32.mrf.mxu0
    %v5590 = vadd.f32 %v5261, %v5589
    %5591 = vmatmul.bf16.gmra.mxu0 %v3361
    %v5592 = vpop.f32.mrf.mxu0
    %v5593 = vadd.f32 %v5264, %v5592
    %v5594 = vpop.f32.mrf.mxu0
    %v5595 = vadd.f32 %v5266, %v5594
    %5596 = vmatmul.bf16.gmra.mxu0 %v3369
    %v5597 = vpop.f32.mrf.mxu0
    %v5598 = vadd.f32 %v5269, %v5597
    %v5599 = vpop.f32.mrf.mxu0
    %v5600 = vadd.f32 %v5271, %v5599
    %5601 = vmatmul.bf16.gmra.mxu0 %v3377
    %v5602 = vpop.f32.mrf.mxu0
    %v5603 = vadd.f32 %v5274, %v5602
    %v5604 = vpop.f32.mrf.mxu0
    %v5605 = vadd.f32 %v5276, %v5604
    %5606 = vmatmul.bf16.gmra.mxu0 %v3385
    %v5607 = vpop.f32.mrf.mxu0
    %v5608 = vadd.f32 %v5279, %v5607
    %v5609 = vpop.f32.mrf.mxu0
    %v5610 = vadd.f32 %v5281, %v5609
    %5611 = vmatmul.bf16.gmra.mxu0 %v3393
    %v5612 = vpop.f32.mrf.mxu0
    %v5613 = vadd.f32 %v5284, %v5612
    %v5614 = vpop.f32.mrf.mxu0
    %v5615 = vadd.f32 %v5286, %v5614
    %5616 = vmatmul.bf16.gmra.mxu0 %v3401
    %v5617 = vpop.f32.mrf.mxu0
    %v5618 = vadd.f32 %v5289, %v5617
    %v5619 = vpop.f32.mrf.mxu0
    %v5620 = vadd.f32 %v5291, %v5619
    %5621 = vmatmul.bf16.gmra.mxu0 %v3409
    %v5622 = vpop.f32.mrf.mxu0
    %v5623 = vadd.f32 %v5294, %v5622
    %v5624 = vpop.f32.mrf.mxu0
    %v5625 = vadd.f32 %v5296, %v5624
    %5626 = vmatmul.bf16.gmra.mxu0 %v3417
    %v5627 = vpop.f32.mrf.mxu0
    %v5628 = vadd.f32 %v5299, %v5627
    %v5629 = vpop.f32.mrf.mxu0
    %v5630 = vadd.f32 %v5301, %v5629
    %5631 = vmatmul.bf16.gmra.mxu0 %v3425
    %v5632 = vpop.f32.mrf.mxu0
    %v5633 = vadd.f32 %v5304, %v5632
    %v5634 = vpop.f32.mrf.mxu0
    %v5635 = vadd.f32 %v5306, %v5634
    %5636 = vmatmul.bf16.gmra.mxu0 %v3433
    %v5637 = vpop.f32.mrf.mxu0
    %v5638 = vadd.f32 %v5309, %v5637
    %v5639 = vpop.f32.mrf.mxu0
    %v5640 = vadd.f32 %v5311, %v5639
    %5641 = vmatmul.bf16.gmra.mxu0 %v3441
    %v5642 = vpop.f32.mrf.mxu0
    %v5643 = vadd.f32 %v5314, %v5642
    %v5644 = vpop.f32.mrf.mxu0
    %v5645 = vadd.f32 %v5316, %v5644
    %5646 = vmatmul.bf16.gmra.mxu0 %v3449
    %v5647 = vpop.f32.mrf.mxu0
    %v5648 = vadd.f32 %v5319, %v5647
    %v5649 = vpop.f32.mrf.mxu0
    %v5650 = vadd.f32 %v5321, %v5649
    %5651 = vmatmul.bf16.gmra.mxu0 %v3457
    %v5652 = vpop.f32.mrf.mxu0
    %v5653 = vadd.f32 %v5324, %v5652
    %v5654 = vpop.f32.mrf.mxu0
    %v5655 = vadd.f32 %v5326, %v5654
    %5656 = vmatmul.bf16.gmra.mxu0 %v3465
    %v5657 = vpop.f32.mrf.mxu0
    %v5658 = vadd.f32 %v5329, %v5657
    %v5659 = vpop.f32.mrf.mxu0
    %v5660 = vadd.f32 %v5331, %v5659
    %5661 = vmatmul.bf16.gmra.mxu0 %v3473
    %v5662 = vpop.f32.mrf.mxu0
    %v5663 = vadd.f32 %v5334, %v5662
    %v5664 = vpop.f32.mrf.mxu0
    %v5665 = vadd.f32 %v5336, %v5664
    %5666 = vmatmul.bf16.gmra.mxu0 %v3481
    %v5667 = vpop.f32.mrf.mxu0
    %v5668 = vadd.f32 %v5339, %v5667
    %v5669 = vpop.f32.mrf.mxu0
    %v5670 = vadd.f32 %v5341, %v5669
    %5671 = vmatmul.bf16.gmra.mxu0 %v3489
    %v5672 = vpop.f32.mrf.mxu0
    %v5673 = vadd.f32 %v5344, %v5672
    %v5674 = vpop.f32.mrf.mxu0
    %v5675 = vadd.f32 %v5346, %v5674
    %5676 = vmatmul.bf16.gmra.mxu0 %v3497
    %v5677 = vpop.f32.mrf.mxu0
    %v5678 = vadd.f32 %v5349, %v5677
    %v5679 = vpop.f32.mrf.mxu0
    %v5680 = vadd.f32 %v5351, %v5679
    %5681 = vmatmul.bf16.gmra.mxu0 %v3505
    %v5682 = vpop.f32.mrf.mxu0
    %v5683 = vadd.f32 %v5354, %v5682
    %v5684 = vpop.f32.mrf.mxu0
    %v5685 = vadd.f32 %v5356, %v5684
    %5686 = vmatmul.bf16.gmra.mxu0 %v3513
    %v5687 = vpop.f32.mrf.mxu0
    %v5688 = vadd.f32 %v5359, %v5687
    %v5689 = vpop.f32.mrf.mxu0
    %v5690 = vadd.f32 %v5361, %v5689
    %5691 = vmatmul.bf16.gmra.mxu0 %v3521
    %v5692 = vpop.f32.mrf.mxu0
    %v5693 = vadd.f32 %v5364, %v5692
    %v5694 = vpop.f32.mrf.mxu0
    %v5695 = vadd.f32 %v5366, %v5694
    %5696 = vmatmul.bf16.gmra.mxu0 %v3529
    %v5697 = vpop.f32.mrf.mxu0
    %v5698 = vadd.f32 %v5369, %v5697
    %v5699 = vpop.f32.mrf.mxu0
    %v5700 = vadd.f32 %v5371, %v5699
    %5701 = vmatmul.bf16.gmra.mxu0 %v3537
    %v5702 = vpop.f32.mrf.mxu0
    %v5703 = vadd.f32 %v5374, %v5702
    %v5704 = vpop.f32.mrf.mxu0
    %v5705 = vadd.f32 %v5376, %v5704
    %5706 = vmatmul.bf16.gmra.mxu0 %v3545
    %v5707 = vpop.f32.mrf.mxu0
    %v5708 = vadd.f32 %v5379, %v5707
    %v5709 = vpop.f32.mrf.mxu0
    %v5710 = vadd.f32 %v5381, %v5709
    %5711 = vmatmul.bf16.gmra.mxu0 %v3553
    %v5712 = vpop.f32.mrf.mxu0
    %v5713 = vadd.f32 %v5384, %v5712
    %v5714 = vpop.f32.mrf.mxu0
    %v5715 = vadd.f32 %v5386, %v5714
    %5716 = vmatmul.bf16.gmra.mxu0 %v3561
    %v5717 = vpop.f32.mrf.mxu0
    %v5718 = vadd.f32 %v5389, %v5717
    %v5719 = vpop.f32.mrf.mxu0
    %v5720 = vadd.f32 %v5391, %v5719
    %5721 = vdwg.mxu0
    %5722 = vmatpush.bf16.msra.mxu0 %v988
    %5723 = vmatpush.bf16.msra.mxu0 %v987
    %5724 = vmatpush.bf16.msra.mxu0 %v986
    %5725 = vmatpush.bf16.msra.mxu0 %v985
    %5726 = vmatpush.bf16.msra.mxu0 %v984
    %5727 = vmatpush.bf16.msra.mxu0 %v983
    %5728 = vmatpush.bf16.msra.mxu0 %v982
    %5729 = vmatpush.bf16.msra.mxu0 %v981
    %5730 = vmatmul.bf16.gmra.mxu0 %v3058
    %v5731 = vpop.f32.mrf.mxu0
    %v5732 = vadd.f32 %v5403, %v5731
    %v5733 = vpop.f32.mrf.mxu0
    %v5734 = vadd.f32 %v5405, %v5733
    %5735 = vmatmul.bf16.gmra.mxu0 %v3066
    %v5736 = vpop.f32.mrf.mxu0
    %v5737 = vadd.f32 %v5408, %v5736
    %v5738 = vpop.f32.mrf.mxu0
    %v5739 = vadd.f32 %v5410, %v5738
    %5740 = vmatmul.bf16.gmra.mxu0 %v3074
    %v5741 = vpop.f32.mrf.mxu0
    %v5742 = vadd.f32 %v5413, %v5741
    %v5743 = vpop.f32.mrf.mxu0
    %v5744 = vadd.f32 %v5415, %v5743
    %5745 = vmatmul.bf16.gmra.mxu0 %v3082
    %v5746 = vpop.f32.mrf.mxu0
    %v5747 = vadd.f32 %v5418, %v5746
    %v5748 = vpop.f32.mrf.mxu0
    %v5749 = vadd.f32 %v5420, %v5748
    %5750 = vmatmul.bf16.gmra.mxu0 %v3090
    %v5751 = vpop.f32.mrf.mxu0
    %v5752 = vadd.f32 %v5423, %v5751
    %v5753 = vpop.f32.mrf.mxu0
    %v5754 = vadd.f32 %v5425, %v5753
    %5755 = vmatmul.bf16.gmra.mxu0 %v3098
    %v5756 = vpop.f32.mrf.mxu0
    %v5757 = vadd.f32 %v5428, %v5756
    %v5758 = vpop.f32.mrf.mxu0
    %v5759 = vadd.f32 %v5430, %v5758
    %5760 = vmatmul.bf16.gmra.mxu0 %v3106
    %v5761 = vpop.f32.mrf.mxu0
    %v5762 = vadd.f32 %v5433, %v5761
    %v5763 = vpop.f32.mrf.mxu0
    %v5764 = vadd.f32 %v5435, %v5763
    %5765 = vmatmul.bf16.gmra.mxu0 %v3114
    %v5766 = vpop.f32.mrf.mxu0
    %v5767 = vadd.f32 %v5438, %v5766
    %v5768 = vpop.f32.mrf.mxu0
    %v5769 = vadd.f32 %v5440, %v5768
    %5770 = vmatmul.bf16.gmra.mxu0 %v3122
    %v5771 = vpop.f32.mrf.mxu0
    %v5772 = vadd.f32 %v5443, %v5771
    %v5773 = vpop.f32.mrf.mxu0
    %v5774 = vadd.f32 %v5445, %v5773
    %5775 = vmatmul.bf16.gmra.mxu0 %v3130
    %v5776 = vpop.f32.mrf.mxu0
    %v5777 = vadd.f32 %v5448, %v5776
    %v5778 = vpop.f32.mrf.mxu0
    %v5779 = vadd.f32 %v5450, %v5778
    %5780 = vmatmul.bf16.gmra.mxu0 %v3138
    %v5781 = vpop.f32.mrf.mxu0
    %v5782 = vadd.f32 %v5453, %v5781
    %v5783 = vpop.f32.mrf.mxu0
    %v5784 = vadd.f32 %v5455, %v5783
    %5785 = vmatmul.bf16.gmra.mxu0 %v3146
    %v5786 = vpop.f32.mrf.mxu0
    %v5787 = vadd.f32 %v5458, %v5786
    %v5788 = vpop.f32.mrf.mxu0
    %v5789 = vadd.f32 %v5460, %v5788
    %5790 = vmatmul.bf16.gmra.mxu0 %v3154
    %v5791 = vpop.f32.mrf.mxu0
    %v5792 = vadd.f32 %v5463, %v5791
    %v5793 = vpop.f32.mrf.mxu0
    %v5794 = vadd.f32 %v5465, %v5793
    %5795 = vmatmul.bf16.gmra.mxu0 %v3162
    %v5796 = vpop.f32.mrf.mxu0
    %v5797 = vadd.f32 %v5468, %v5796
    %v5798 = vpop.f32.mrf.mxu0
    %v5799 = vadd.f32 %v5470, %v5798
    %5800 = vmatmul.bf16.gmra.mxu0 %v3170
    %v5801 = vpop.f32.mrf.mxu0
    %v5802 = vadd.f32 %v5473, %v5801
    %v5803 = vpop.f32.mrf.mxu0
    %v5804 = vadd.f32 %v5475, %v5803
    %5805 = vmatmul.bf16.gmra.mxu0 %v3178
    %v5806 = vpop.f32.mrf.mxu0
    %v5807 = vadd.f32 %v5478, %v5806
    %v5808 = vpop.f32.mrf.mxu0
    %v5809 = vadd.f32 %v5480, %v5808
    %5810 = vmatmul.bf16.gmra.mxu0 %v3186
    %v5811 = vpop.f32.mrf.mxu0
    %v5812 = vadd.f32 %v5483, %v5811
    %v5813 = vpop.f32.mrf.mxu0
    %v5814 = vadd.f32 %v5485, %v5813
    %5815 = vmatmul.bf16.gmra.mxu0 %v3194
    %v5816 = vpop.f32.mrf.mxu0
    %v5817 = vadd.f32 %v5488, %v5816
    %v5818 = vpop.f32.mrf.mxu0
    %v5819 = vadd.f32 %v5490, %v5818
    %5820 = vmatmul.bf16.gmra.mxu0 %v3202
    %v5821 = vpop.f32.mrf.mxu0
    %v5822 = vadd.f32 %v5493, %v5821
    %v5823 = vpop.f32.mrf.mxu0
    %v5824 = vadd.f32 %v5495, %v5823
    %5825 = vmatmul.bf16.gmra.mxu0 %v3210
    %v5826 = vpop.f32.mrf.mxu0
    %v5827 = vadd.f32 %v5498, %v5826
    %v5828 = vpop.f32.mrf.mxu0
    %v5829 = vadd.f32 %v5500, %v5828
    %5830 = vmatmul.bf16.gmra.mxu0 %v3218
    %v5831 = vpop.f32.mrf.mxu0
    %v5832 = vadd.f32 %v5503, %v5831
    %v5833 = vpop.f32.mrf.mxu0
    %v5834 = vadd.f32 %v5505, %v5833
    %5835 = vmatmul.bf16.gmra.mxu0 %v3226
    %v5836 = vpop.f32.mrf.mxu0
    %v5837 = vadd.f32 %v5508, %v5836
    %v5838 = vpop.f32.mrf.mxu0
    %v5839 = vadd.f32 %v5510, %v5838
    %5840 = vmatmul.bf16.gmra.mxu0 %v3234
    %v5841 = vpop.f32.mrf.mxu0
    %v5842 = vadd.f32 %v5513, %v5841
    %v5843 = vpop.f32.mrf.mxu0
    %v5844 = vadd.f32 %v5515, %v5843
    %5845 = vmatmul.bf16.gmra.mxu0 %v3242
    %v5846 = vpop.f32.mrf.mxu0
    %v5847 = vadd.f32 %v5518, %v5846
    %v5848 = vpop.f32.mrf.mxu0
    %v5849 = vadd.f32 %v5520, %v5848
    %5850 = vmatmul.bf16.gmra.mxu0 %v3250
    %v5851 = vpop.f32.mrf.mxu0
    %v5852 = vadd.f32 %v5523, %v5851
    %v5853 = vpop.f32.mrf.mxu0
    %v5854 = vadd.f32 %v5525, %v5853
    %5855 = vmatmul.bf16.gmra.mxu0 %v3258
    %v5856 = vpop.f32.mrf.mxu0
    %v5857 = vadd.f32 %v5528, %v5856
    %v5858 = vpop.f32.mrf.mxu0
    %v5859 = vadd.f32 %v5530, %v5858
    %5860 = vmatmul.bf16.gmra.mxu0 %v3266
    %v5861 = vpop.f32.mrf.mxu0
    %v5862 = vadd.f32 %v5533, %v5861
    %v5863 = vpop.f32.mrf.mxu0
    %v5864 = vadd.f32 %v5535, %v5863
    %5865 = vmatmul.bf16.gmra.mxu0 %v3274
    %v5866 = vpop.f32.mrf.mxu0
    %v5867 = vadd.f32 %v5538, %v5866
    %v5868 = vpop.f32.mrf.mxu0
    %v5869 = vadd.f32 %v5540, %v5868
    %5870 = vmatmul.bf16.gmra.mxu0 %v3282
    %v5871 = vpop.f32.mrf.mxu0
    %v5872 = vadd.f32 %v5543, %v5871
    %v5873 = vpop.f32.mrf.mxu0
    %v5874 = vadd.f32 %v5545, %v5873
    %5875 = vmatmul.bf16.gmra.mxu0 %v3290
    %v5876 = vpop.f32.mrf.mxu0
    %v5877 = vadd.f32 %v5548, %v5876
    %v5878 = vpop.f32.mrf.mxu0
    %v5879 = vadd.f32 %v5550, %v5878
    %5880 = vmatmul.bf16.gmra.mxu0 %v3298
    %v5881 = vpop.f32.mrf.mxu0
    %v5882 = vadd.f32 %v5553, %v5881
    %v5883 = vpop.f32.mrf.mxu0
    %v5884 = vadd.f32 %v5555, %v5883
    %5885 = vmatmul.bf16.gmra.mxu0 %v3306
    %v5886 = vpop.f32.mrf.mxu0
    %v5887 = vadd.f32 %v5558, %v5886
    %v5888 = vpop.f32.mrf.mxu0
    %v5889 = vadd.f32 %v5560, %v5888
    %5890 = vmatmul.bf16.gmra.mxu0 %v3314
    %v5891 = vpop.f32.mrf.mxu0
    %v5892 = vadd.f32 %v5563, %v5891
    %v5893 = vpop.f32.mrf.mxu0
    %v5894 = vadd.f32 %v5565, %v5893
    %5895 = vmatmul.bf16.gmra.mxu0 %v3322
    %v5896 = vpop.f32.mrf.mxu0
    %v5897 = vadd.f32 %v5568, %v5896
    %v5898 = vpop.f32.mrf.mxu0
    %v5899 = vadd.f32 %v5570, %v5898
    %5900 = vmatmul.bf16.gmra.mxu0 %v3330
    %v5901 = vpop.f32.mrf.mxu0
    %v5902 = vadd.f32 %v5573, %v5901
    %v5903 = vpop.f32.mrf.mxu0
    %v5904 = vadd.f32 %v5575, %v5903
    %5905 = vmatmul.bf16.gmra.mxu0 %v3338
    %v5906 = vpop.f32.mrf.mxu0
    %v5907 = vadd.f32 %v5578, %v5906
    %v5908 = vpop.f32.mrf.mxu0
    %v5909 = vadd.f32 %v5580, %v5908
    %5910 = vmatmul.bf16.gmra.mxu0 %v3346
    %v5911 = vpop.f32.mrf.mxu0
    %v5912 = vadd.f32 %v5583, %v5911
    %v5913 = vpop.f32.mrf.mxu0
    %v5914 = vadd.f32 %v5585, %v5913
    %5915 = vmatmul.bf16.gmra.mxu0 %v3354
    %v5916 = vpop.f32.mrf.mxu0
    %v5917 = vadd.f32 %v5588, %v5916
    %v5918 = vpop.f32.mrf.mxu0
    %v5919 = vadd.f32 %v5590, %v5918
    %5920 = vmatmul.bf16.gmra.mxu0 %v3362
    %v5921 = vpop.f32.mrf.mxu0
    %v5922 = vadd.f32 %v5593, %v5921
    %v5923 = vpop.f32.mrf.mxu0
    %v5924 = vadd.f32 %v5595, %v5923
    %5925 = vmatmul.bf16.gmra.mxu0 %v3370
    %v5926 = vpop.f32.mrf.mxu0
    %v5927 = vadd.f32 %v5598, %v5926
    %v5928 = vpop.f32.mrf.mxu0
    %v5929 = vadd.f32 %v5600, %v5928
    %5930 = vmatmul.bf16.gmra.mxu0 %v3378
    %v5931 = vpop.f32.mrf.mxu0
    %v5932 = vadd.f32 %v5603, %v5931
    %v5933 = vpop.f32.mrf.mxu0
    %v5934 = vadd.f32 %v5605, %v5933
    %5935 = vmatmul.bf16.gmra.mxu0 %v3386
    %v5936 = vpop.f32.mrf.mxu0
    %v5937 = vadd.f32 %v5608, %v5936
    %v5938 = vpop.f32.mrf.mxu0
    %v5939 = vadd.f32 %v5610, %v5938
    %5940 = vmatmul.bf16.gmra.mxu0 %v3394
    %v5941 = vpop.f32.mrf.mxu0
    %v5942 = vadd.f32 %v5613, %v5941
    %v5943 = vpop.f32.mrf.mxu0
    %v5944 = vadd.f32 %v5615, %v5943
    %5945 = vmatmul.bf16.gmra.mxu0 %v3402
    %v5946 = vpop.f32.mrf.mxu0
    %v5947 = vadd.f32 %v5618, %v5946
    %v5948 = vpop.f32.mrf.mxu0
    %v5949 = vadd.f32 %v5620, %v5948
    %5950 = vmatmul.bf16.gmra.mxu0 %v3410
    %v5951 = vpop.f32.mrf.mxu0
    %v5952 = vadd.f32 %v5623, %v5951
    %v5953 = vpop.f32.mrf.mxu0
    %v5954 = vadd.f32 %v5625, %v5953
    %5955 = vmatmul.bf16.gmra.mxu0 %v3418
    %v5956 = vpop.f32.mrf.mxu0
    %v5957 = vadd.f32 %v5628, %v5956
    %v5958 = vpop.f32.mrf.mxu0
    %v5959 = vadd.f32 %v5630, %v5958
    %5960 = vmatmul.bf16.gmra.mxu0 %v3426
    %v5961 = vpop.f32.mrf.mxu0
    %v5962 = vadd.f32 %v5633, %v5961
    %v5963 = vpop.f32.mrf.mxu0
    %v5964 = vadd.f32 %v5635, %v5963
    %5965 = vmatmul.bf16.gmra.mxu0 %v3434
    %v5966 = vpop.f32.mrf.mxu0
    %v5967 = vadd.f32 %v5638, %v5966
    %v5968 = vpop.f32.mrf.mxu0
    %v5969 = vadd.f32 %v5640, %v5968
    %5970 = vmatmul.bf16.gmra.mxu0 %v3442
    %v5971 = vpop.f32.mrf.mxu0
    %v5972 = vadd.f32 %v5643, %v5971
    %v5973 = vpop.f32.mrf.mxu0
    %v5974 = vadd.f32 %v5645, %v5973
    %5975 = vmatmul.bf16.gmra.mxu0 %v3450
    %v5976 = vpop.f32.mrf.mxu0
    %v5977 = vadd.f32 %v5648, %v5976
    %v5978 = vpop.f32.mrf.mxu0
    %v5979 = vadd.f32 %v5650, %v5978
    %5980 = vmatmul.bf16.gmra.mxu0 %v3458
    %v5981 = vpop.f32.mrf.mxu0
    %v5982 = vadd.f32 %v5653, %v5981
    %v5983 = vpop.f32.mrf.mxu0
    %v5984 = vadd.f32 %v5655, %v5983
    %5985 = vmatmul.bf16.gmra.mxu0 %v3466
    %v5986 = vpop.f32.mrf.mxu0
    %v5987 = vadd.f32 %v5658, %v5986
    %v5988 = vpop.f32.mrf.mxu0
    %v5989 = vadd.f32 %v5660, %v5988
    %5990 = vmatmul.bf16.gmra.mxu0 %v3474
    %v5991 = vpop.f32.mrf.mxu0
    %v5992 = vadd.f32 %v5663, %v5991
    %v5993 = vpop.f32.mrf.mxu0
    %v5994 = vadd.f32 %v5665, %v5993
    %5995 = vmatmul.bf16.gmra.mxu0 %v3482
    %v5996 = vpop.f32.mrf.mxu0
    %v5997 = vadd.f32 %v5668, %v5996
    %v5998 = vpop.f32.mrf.mxu0
    %v5999 = vadd.f32 %v5670, %v5998
    %6000 = vmatmul.bf16.gmra.mxu0 %v3490
    %v6001 = vpop.f32.mrf.mxu0
    %v6002 = vadd.f32 %v5673, %v6001
    %v6003 = vpop.f32.mrf.mxu0
    %v6004 = vadd.f32 %v5675, %v6003
    %6005 = vmatmul.bf16.gmra.mxu0 %v3498
    %v6006 = vpop.f32.mrf.mxu0
    %v6007 = vadd.f32 %v5678, %v6006
    %v6008 = vpop.f32.mrf.mxu0
    %v6009 = vadd.f32 %v5680, %v6008
    %6010 = vmatmul.bf16.gmra.mxu0 %v3506
    %v6011 = vpop.f32.mrf.mxu0
    %v6012 = vadd.f32 %v5683, %v6011
    %v6013 = vpop.f32.mrf.mxu0
    %v6014 = vadd.f32 %v5685, %v6013
    %6015 = vmatmul.bf16.gmra.mxu0 %v3514
    %v6016 = vpop.f32.mrf.mxu0
    %v6017 = vadd.f32 %v5688, %v6016
    %v6018 = vpop.f32.mrf.mxu0
    %v6019 = vadd.f32 %v5690, %v6018
    %6020 = vmatmul.bf16.gmra.mxu0 %v3522
    %v6021 = vpop.f32.mrf.mxu0
    %v6022 = vadd.f32 %v5693, %v6021
    %v6023 = vpop.f32.mrf.mxu0
    %v6024 = vadd.f32 %v5695, %v6023
    %6025 = vmatmul.bf16.gmra.mxu0 %v3530
    %v6026 = vpop.f32.mrf.mxu0
    %v6027 = vadd.f32 %v5698, %v6026
    %v6028 = vpop.f32.mrf.mxu0
    %v6029 = vadd.f32 %v5700, %v6028
    %6030 = vmatmul.bf16.gmra.mxu0 %v3538
    %v6031 = vpop.f32.mrf.mxu0
    %v6032 = vadd.f32 %v5703, %v6031
    %v6033 = vpop.f32.mrf.mxu0
    %v6034 = vadd.f32 %v5705, %v6033
    %6035 = vmatmul.bf16.gmra.mxu0 %v3546
    %v6036 = vpop.f32.mrf.mxu0
    %v6037 = vadd.f32 %v5708, %v6036
    %v6038 = vpop.f32.mrf.mxu0
    %v6039 = vadd.f32 %v5710, %v6038
    %6040 = vmatmul.bf16.gmra.mxu0 %v3554
    %v6041 = vpop.f32.mrf.mxu0
    %v6042 = vadd.f32 %v5713, %v6041
    %v6043 = vpop.f32.mrf.mxu0
    %v6044 = vadd.f32 %v5715, %v6043
    %6045 = vmatmul.bf16.gmra.mxu0 %v3562
    %v6046 = vpop.f32.mrf.mxu0
    %v6047 = vadd.f32 %v5718, %v6046
    %v6048 = vpop.f32.mrf.mxu0
    %v6049 = vadd.f32 %v5720, %v6048
    %6050 = vdwg.mxu0
    %6051 = vmatpush.bf16.msra.mxu0 %v996
    %6052 = vmatpush.bf16.msra.mxu0 %v995
    %6053 = vmatpush.bf16.msra.mxu0 %v994
    %6054 = vmatpush.bf16.msra.mxu0 %v993
    %6055 = vmatpush.bf16.msra.mxu0 %v992
    %6056 = vmatpush.bf16.msra.mxu0 %v991
    %6057 = vmatpush.bf16.msra.mxu0 %v990
    %6058 = vmatpush.bf16.msra.mxu0 %v989
    %6059 = vmatmul.bf16.gmra.mxu0 %v3059
    %v6060 = vpop.f32.mrf.mxu0
    %v6061 = vadd.f32 %v5732, %v6060
    %v6062 = vpop.f32.mrf.mxu0
    %v6063 = vadd.f32 %v5734, %v6062
    %6064 = vmatmul.bf16.gmra.mxu0 %v3067
    %v6065 = vpop.f32.mrf.mxu0
    %v6066 = vadd.f32 %v5737, %v6065
    %v6067 = vpop.f32.mrf.mxu0
    %v6068 = vadd.f32 %v5739, %v6067
    %6069 = vmatmul.bf16.gmra.mxu0 %v3075
    %v6070 = vpop.f32.mrf.mxu0
    %v6071 = vadd.f32 %v5742, %v6070
    %v6072 = vpop.f32.mrf.mxu0
    %v6073 = vadd.f32 %v5744, %v6072
    %6074 = vmatmul.bf16.gmra.mxu0 %v3083
    %v6075 = vpop.f32.mrf.mxu0
    %v6076 = vadd.f32 %v5747, %v6075
    %v6077 = vpop.f32.mrf.mxu0
    %v6078 = vadd.f32 %v5749, %v6077
    %6079 = vmatmul.bf16.gmra.mxu0 %v3091
    %v6080 = vpop.f32.mrf.mxu0
    %v6081 = vadd.f32 %v5752, %v6080
    %v6082 = vpop.f32.mrf.mxu0
    %v6083 = vadd.f32 %v5754, %v6082
    %6084 = vmatmul.bf16.gmra.mxu0 %v3099
    %v6085 = vpop.f32.mrf.mxu0
    %v6086 = vadd.f32 %v5757, %v6085
    %v6087 = vpop.f32.mrf.mxu0
    %v6088 = vadd.f32 %v5759, %v6087
    %6089 = vmatmul.bf16.gmra.mxu0 %v3107
    %v6090 = vpop.f32.mrf.mxu0
    %v6091 = vadd.f32 %v5762, %v6090
    %v6092 = vpop.f32.mrf.mxu0
    %v6093 = vadd.f32 %v5764, %v6092
    %6094 = vmatmul.bf16.gmra.mxu0 %v3115
    %v6095 = vpop.f32.mrf.mxu0
    %v6096 = vadd.f32 %v5767, %v6095
    %v6097 = vpop.f32.mrf.mxu0
    %v6098 = vadd.f32 %v5769, %v6097
    %6099 = vmatmul.bf16.gmra.mxu0 %v3123
    %v6100 = vpop.f32.mrf.mxu0
    %v6101 = vadd.f32 %v5772, %v6100
    %v6102 = vpop.f32.mrf.mxu0
    %v6103 = vadd.f32 %v5774, %v6102
    %6104 = vmatmul.bf16.gmra.mxu0 %v3131
    %v6105 = vpop.f32.mrf.mxu0
    %v6106 = vadd.f32 %v5777, %v6105
    %v6107 = vpop.f32.mrf.mxu0
    %v6108 = vadd.f32 %v5779, %v6107
    %6109 = vmatmul.bf16.gmra.mxu0 %v3139
    %v6110 = vpop.f32.mrf.mxu0
    %v6111 = vadd.f32 %v5782, %v6110
    %v6112 = vpop.f32.mrf.mxu0
    %v6113 = vadd.f32 %v5784, %v6112
    %6114 = vmatmul.bf16.gmra.mxu0 %v3147
    %v6115 = vpop.f32.mrf.mxu0
    %v6116 = vadd.f32 %v5787, %v6115
    %v6117 = vpop.f32.mrf.mxu0
    %v6118 = vadd.f32 %v5789, %v6117
    %6119 = vmatmul.bf16.gmra.mxu0 %v3155
    %v6120 = vpop.f32.mrf.mxu0
    %v6121 = vadd.f32 %v5792, %v6120
    %v6122 = vpop.f32.mrf.mxu0
    %v6123 = vadd.f32 %v5794, %v6122
    %6124 = vmatmul.bf16.gmra.mxu0 %v3163
    %v6125 = vpop.f32.mrf.mxu0
    %v6126 = vadd.f32 %v5797, %v6125
    %v6127 = vpop.f32.mrf.mxu0
    %v6128 = vadd.f32 %v5799, %v6127
    %6129 = vmatmul.bf16.gmra.mxu0 %v3171
    %v6130 = vpop.f32.mrf.mxu0
    %v6131 = vadd.f32 %v5802, %v6130
    %v6132 = vpop.f32.mrf.mxu0
    %v6133 = vadd.f32 %v5804, %v6132
    %6134 = vmatmul.bf16.gmra.mxu0 %v3179
    %v6135 = vpop.f32.mrf.mxu0
    %v6136 = vadd.f32 %v5807, %v6135
    %v6137 = vpop.f32.mrf.mxu0
    %v6138 = vadd.f32 %v5809, %v6137
    %6139 = vmatmul.bf16.gmra.mxu0 %v3187
    %v6140 = vpop.f32.mrf.mxu0
    %v6141 = vadd.f32 %v5812, %v6140
    %v6142 = vpop.f32.mrf.mxu0
    %v6143 = vadd.f32 %v5814, %v6142
    %6144 = vmatmul.bf16.gmra.mxu0 %v3195
    %v6145 = vpop.f32.mrf.mxu0
    %v6146 = vadd.f32 %v5817, %v6145
    %v6147 = vpop.f32.mrf.mxu0
    %v6148 = vadd.f32 %v5819, %v6147
    %6149 = vmatmul.bf16.gmra.mxu0 %v3203
    %v6150 = vpop.f32.mrf.mxu0
    %v6151 = vadd.f32 %v5822, %v6150
    %v6152 = vpop.f32.mrf.mxu0
    %v6153 = vadd.f32 %v5824, %v6152
    %6154 = vmatmul.bf16.gmra.mxu0 %v3211
    %v6155 = vpop.f32.mrf.mxu0
    %v6156 = vadd.f32 %v5827, %v6155
    %v6157 = vpop.f32.mrf.mxu0
    %v6158 = vadd.f32 %v5829, %v6157
    %6159 = vmatmul.bf16.gmra.mxu0 %v3219
    %v6160 = vpop.f32.mrf.mxu0
    %v6161 = vadd.f32 %v5832, %v6160
    %v6162 = vpop.f32.mrf.mxu0
    %v6163 = vadd.f32 %v5834, %v6162
    %6164 = vmatmul.bf16.gmra.mxu0 %v3227
    %v6165 = vpop.f32.mrf.mxu0
    %v6166 = vadd.f32 %v5837, %v6165
    %v6167 = vpop.f32.mrf.mxu0
    %v6168 = vadd.f32 %v5839, %v6167
    %6169 = vmatmul.bf16.gmra.mxu0 %v3235
    %v6170 = vpop.f32.mrf.mxu0
    %v6171 = vadd.f32 %v5842, %v6170
    %v6172 = vpop.f32.mrf.mxu0
    %v6173 = vadd.f32 %v5844, %v6172
    %6174 = vmatmul.bf16.gmra.mxu0 %v3243
    %v6175 = vpop.f32.mrf.mxu0
    %v6176 = vadd.f32 %v5847, %v6175
    %v6177 = vpop.f32.mrf.mxu0
    %v6178 = vadd.f32 %v5849, %v6177
    %6179 = vmatmul.bf16.gmra.mxu0 %v3251
    %v6180 = vpop.f32.mrf.mxu0
    %v6181 = vadd.f32 %v5852, %v6180
    %v6182 = vpop.f32.mrf.mxu0
    %v6183 = vadd.f32 %v5854, %v6182
    %6184 = vmatmul.bf16.gmra.mxu0 %v3259
    %v6185 = vpop.f32.mrf.mxu0
    %v6186 = vadd.f32 %v5857, %v6185
    %v6187 = vpop.f32.mrf.mxu0
    %v6188 = vadd.f32 %v5859, %v6187
    %6189 = vmatmul.bf16.gmra.mxu0 %v3267
    %v6190 = vpop.f32.mrf.mxu0
    %v6191 = vadd.f32 %v5862, %v6190
    %v6192 = vpop.f32.mrf.mxu0
    %v6193 = vadd.f32 %v5864, %v6192
    %6194 = vmatmul.bf16.gmra.mxu0 %v3275
    %v6195 = vpop.f32.mrf.mxu0
    %v6196 = vadd.f32 %v5867, %v6195
    %v6197 = vpop.f32.mrf.mxu0
    %v6198 = vadd.f32 %v5869, %v6197
    %6199 = vmatmul.bf16.gmra.mxu0 %v3283
    %v6200 = vpop.f32.mrf.mxu0
    %v6201 = vadd.f32 %v5872, %v6200
    %v6202 = vpop.f32.mrf.mxu0
    %v6203 = vadd.f32 %v5874, %v6202
    %6204 = vmatmul.bf16.gmra.mxu0 %v3291
    %v6205 = vpop.f32.mrf.mxu0
    %v6206 = vadd.f32 %v5877, %v6205
    %v6207 = vpop.f32.mrf.mxu0
    %v6208 = vadd.f32 %v5879, %v6207
    %6209 = vmatmul.bf16.gmra.mxu0 %v3299
    %v6210 = vpop.f32.mrf.mxu0
    %v6211 = vadd.f32 %v5882, %v6210
    %v6212 = vpop.f32.mrf.mxu0
    %v6213 = vadd.f32 %v5884, %v6212
    %6214 = vmatmul.bf16.gmra.mxu0 %v3307
    %v6215 = vpop.f32.mrf.mxu0
    %v6216 = vadd.f32 %v5887, %v6215
    %v6217 = vpop.f32.mrf.mxu0
    %v6218 = vadd.f32 %v5889, %v6217
    %6219 = vmatmul.bf16.gmra.mxu0 %v3315
    %v6220 = vpop.f32.mrf.mxu0
    %v6221 = vadd.f32 %v5892, %v6220
    %v6222 = vpop.f32.mrf.mxu0
    %v6223 = vadd.f32 %v5894, %v6222
    %6224 = vmatmul.bf16.gmra.mxu0 %v3323
    %v6225 = vpop.f32.mrf.mxu0
    %v6226 = vadd.f32 %v5897, %v6225
    %v6227 = vpop.f32.mrf.mxu0
    %v6228 = vadd.f32 %v5899, %v6227
    %6229 = vmatmul.bf16.gmra.mxu0 %v3331
    %v6230 = vpop.f32.mrf.mxu0
    %v6231 = vadd.f32 %v5902, %v6230
    %v6232 = vpop.f32.mrf.mxu0
    %v6233 = vadd.f32 %v5904, %v6232
    %6234 = vmatmul.bf16.gmra.mxu0 %v3339
    %v6235 = vpop.f32.mrf.mxu0
    %v6236 = vadd.f32 %v5907, %v6235
    %v6237 = vpop.f32.mrf.mxu0
    %v6238 = vadd.f32 %v5909, %v6237
    %6239 = vmatmul.bf16.gmra.mxu0 %v3347
    %v6240 = vpop.f32.mrf.mxu0
    %v6241 = vadd.f32 %v5912, %v6240
    %v6242 = vpop.f32.mrf.mxu0
    %v6243 = vadd.f32 %v5914, %v6242
    %6244 = vmatmul.bf16.gmra.mxu0 %v3355
    %v6245 = vpop.f32.mrf.mxu0
    %v6246 = vadd.f32 %v5917, %v6245
    %v6247 = vpop.f32.mrf.mxu0
    %v6248 = vadd.f32 %v5919, %v6247
    %6249 = vmatmul.bf16.gmra.mxu0 %v3363
    %v6250 = vpop.f32.mrf.mxu0
    %v6251 = vadd.f32 %v5922, %v6250
    %v6252 = vpop.f32.mrf.mxu0
    %v6253 = vadd.f32 %v5924, %v6252
    %6254 = vmatmul.bf16.gmra.mxu0 %v3371
    %v6255 = vpop.f32.mrf.mxu0
    %v6256 = vadd.f32 %v5927, %v6255
    %v6257 = vpop.f32.mrf.mxu0
    %v6258 = vadd.f32 %v5929, %v6257
    %6259 = vmatmul.bf16.gmra.mxu0 %v3379
    %v6260 = vpop.f32.mrf.mxu0
    %v6261 = vadd.f32 %v5932, %v6260
    %v6262 = vpop.f32.mrf.mxu0
    %v6263 = vadd.f32 %v5934, %v6262
    %6264 = vmatmul.bf16.gmra.mxu0 %v3387
    %v6265 = vpop.f32.mrf.mxu0
    %v6266 = vadd.f32 %v5937, %v6265
    %v6267 = vpop.f32.mrf.mxu0
    %v6268 = vadd.f32 %v5939, %v6267
    %6269 = vmatmul.bf16.gmra.mxu0 %v3395
    %v6270 = vpop.f32.mrf.mxu0
    %v6271 = vadd.f32 %v5942, %v6270
    %v6272 = vpop.f32.mrf.mxu0
    %v6273 = vadd.f32 %v5944, %v6272
    %6274 = vmatmul.bf16.gmra.mxu0 %v3403
    %v6275 = vpop.f32.mrf.mxu0
    %v6276 = vadd.f32 %v5947, %v6275
    %v6277 = vpop.f32.mrf.mxu0
    %v6278 = vadd.f32 %v5949, %v6277
    %6279 = vmatmul.bf16.gmra.mxu0 %v3411
    %v6280 = vpop.f32.mrf.mxu0
    %v6281 = vadd.f32 %v5952, %v6280
    %v6282 = vpop.f32.mrf.mxu0
    %v6283 = vadd.f32 %v5954, %v6282
    %6284 = vmatmul.bf16.gmra.mxu0 %v3419
    %v6285 = vpop.f32.mrf.mxu0
    %v6286 = vadd.f32 %v5957, %v6285
    %v6287 = vpop.f32.mrf.mxu0
    %v6288 = vadd.f32 %v5959, %v6287
    %6289 = vmatmul.bf16.gmra.mxu0 %v3427
    %v6290 = vpop.f32.mrf.mxu0
    %v6291 = vadd.f32 %v5962, %v6290
    %v6292 = vpop.f32.mrf.mxu0
    %v6293 = vadd.f32 %v5964, %v6292
    %6294 = vmatmul.bf16.gmra.mxu0 %v3435
    %v6295 = vpop.f32.mrf.mxu0
    %v6296 = vadd.f32 %v5967, %v6295
    %v6297 = vpop.f32.mrf.mxu0
    %v6298 = vadd.f32 %v5969, %v6297
    %6299 = vmatmul.bf16.gmra.mxu0 %v3443
    %v6300 = vpop.f32.mrf.mxu0
    %v6301 = vadd.f32 %v5972, %v6300
    %v6302 = vpop.f32.mrf.mxu0
    %v6303 = vadd.f32 %v5974, %v6302
    %6304 = vmatmul.bf16.gmra.mxu0 %v3451
    %v6305 = vpop.f32.mrf.mxu0
    %v6306 = vadd.f32 %v5977, %v6305
    %v6307 = vpop.f32.mrf.mxu0
    %v6308 = vadd.f32 %v5979, %v6307
    %6309 = vmatmul.bf16.gmra.mxu0 %v3459
    %v6310 = vpop.f32.mrf.mxu0
    %v6311 = vadd.f32 %v5982, %v6310
    %v6312 = vpop.f32.mrf.mxu0
    %v6313 = vadd.f32 %v5984, %v6312
    %6314 = vmatmul.bf16.gmra.mxu0 %v3467
    %v6315 = vpop.f32.mrf.mxu0
    %v6316 = vadd.f32 %v5987, %v6315
    %v6317 = vpop.f32.mrf.mxu0
    %v6318 = vadd.f32 %v5989, %v6317
    %6319 = vmatmul.bf16.gmra.mxu0 %v3475
    %v6320 = vpop.f32.mrf.mxu0
    %v6321 = vadd.f32 %v5992, %v6320
    %v6322 = vpop.f32.mrf.mxu0
    %v6323 = vadd.f32 %v5994, %v6322
    %6324 = vmatmul.bf16.gmra.mxu0 %v3483
    %v6325 = vpop.f32.mrf.mxu0
    %v6326 = vadd.f32 %v5997, %v6325
    %v6327 = vpop.f32.mrf.mxu0
    %v6328 = vadd.f32 %v5999, %v6327
    %6329 = vmatmul.bf16.gmra.mxu0 %v3491
    %v6330 = vpop.f32.mrf.mxu0
    %v6331 = vadd.f32 %v6002, %v6330
    %v6332 = vpop.f32.mrf.mxu0
    %v6333 = vadd.f32 %v6004, %v6332
    %6334 = vmatmul.bf16.gmra.mxu0 %v3499
    %v6335 = vpop.f32.mrf.mxu0
    %v6336 = vadd.f32 %v6007, %v6335
    %v6337 = vpop.f32.mrf.mxu0
    %v6338 = vadd.f32 %v6009, %v6337
    %6339 = vmatmul.bf16.gmra.mxu0 %v3507
    %v6340 = vpop.f32.mrf.mxu0
    %v6341 = vadd.f32 %v6012, %v6340
    %v6342 = vpop.f32.mrf.mxu0
    %v6343 = vadd.f32 %v6014, %v6342
    %6344 = vmatmul.bf16.gmra.mxu0 %v3515
    %v6345 = vpop.f32.mrf.mxu0
    %v6346 = vadd.f32 %v6017, %v6345
    %v6347 = vpop.f32.mrf.mxu0
    %v6348 = vadd.f32 %v6019, %v6347
    %6349 = vmatmul.bf16.gmra.mxu0 %v3523
    %v6350 = vpop.f32.mrf.mxu0
    %v6351 = vadd.f32 %v6022, %v6350
    %v6352 = vpop.f32.mrf.mxu0
    %v6353 = vadd.f32 %v6024, %v6352
    %6354 = vmatmul.bf16.gmra.mxu0 %v3531
    %v6355 = vpop.f32.mrf.mxu0
    %v6356 = vadd.f32 %v6027, %v6355
    %v6357 = vpop.f32.mrf.mxu0
    %v6358 = vadd.f32 %v6029, %v6357
    %6359 = vmatmul.bf16.gmra.mxu0 %v3539
    %v6360 = vpop.f32.mrf.mxu0
    %v6361 = vadd.f32 %v6032, %v6360
    %v6362 = vpop.f32.mrf.mxu0
    %v6363 = vadd.f32 %v6034, %v6362
    %6364 = vmatmul.bf16.gmra.mxu0 %v3547
    %v6365 = vpop.f32.mrf.mxu0
    %v6366 = vadd.f32 %v6037, %v6365
    %v6367 = vpop.f32.mrf.mxu0
    %v6368 = vadd.f32 %v6039, %v6367
    %6369 = vmatmul.bf16.gmra.mxu0 %v3555
    %v6370 = vpop.f32.mrf.mxu0
    %v6371 = vadd.f32 %v6042, %v6370
    %v6372 = vpop.f32.mrf.mxu0
    %v6373 = vadd.f32 %v6044, %v6372
    %6374 = vmatmul.bf16.gmra.mxu0 %v3563
    %v6375 = vpop.f32.mrf.mxu0
    %v6376 = vadd.f32 %v6047, %v6375
    %v6377 = vpop.f32.mrf.mxu0
    %v6378 = vadd.f32 %v6049, %v6377
    %6379 = vdwg.mxu0
    %6380 = vmatpush.bf16.msra.mxu0 %v1004
    %6381 = vmatpush.bf16.msra.mxu0 %v1003
    %6382 = vmatpush.bf16.msra.mxu0 %v1002
    %6383 = vmatpush.bf16.msra.mxu0 %v1001
    %6384 = vmatpush.bf16.msra.mxu0 %v1000
    %6385 = vmatpush.bf16.msra.mxu0 %v999
    %6386 = vmatpush.bf16.msra.mxu0 %v998
    %6387 = vmatpush.bf16.msra.mxu0 %v997
    %6388 = vmatmul.bf16.gmra.mxu0 %v3060
    %v6389 = vpop.f32.mrf.mxu0
    %v6390 = vadd.f32 %v6061, %v6389
    %v6391 = vpop.f32.mrf.mxu0
    %v6392 = vadd.f32 %v6063, %v6391
    %6393 = vmatmul.bf16.gmra.mxu0 %v3068
    %v6394 = vpop.f32.mrf.mxu0
    %v6395 = vadd.f32 %v6066, %v6394
    %v6396 = vpop.f32.mrf.mxu0
    %v6397 = vadd.f32 %v6068, %v6396
    %6398 = vmatmul.bf16.gmra.mxu0 %v3076
    %v6399 = vpop.f32.mrf.mxu0
    %v6400 = vadd.f32 %v6071, %v6399
    %v6401 = vpop.f32.mrf.mxu0
    %v6402 = vadd.f32 %v6073, %v6401
    %6403 = vmatmul.bf16.gmra.mxu0 %v3084
    %v6404 = vpop.f32.mrf.mxu0
    %v6405 = vadd.f32 %v6076, %v6404
    %v6406 = vpop.f32.mrf.mxu0
    %v6407 = vadd.f32 %v6078, %v6406
    %6408 = vmatmul.bf16.gmra.mxu0 %v3092
    %v6409 = vpop.f32.mrf.mxu0
    %v6410 = vadd.f32 %v6081, %v6409
    %v6411 = vpop.f32.mrf.mxu0
    %v6412 = vadd.f32 %v6083, %v6411
    %6413 = vmatmul.bf16.gmra.mxu0 %v3100
    %v6414 = vpop.f32.mrf.mxu0
    %v6415 = vadd.f32 %v6086, %v6414
    %v6416 = vpop.f32.mrf.mxu0
    %v6417 = vadd.f32 %v6088, %v6416
    %6418 = vmatmul.bf16.gmra.mxu0 %v3108
    %v6419 = vpop.f32.mrf.mxu0
    %v6420 = vadd.f32 %v6091, %v6419
    %v6421 = vpop.f32.mrf.mxu0
    %v6422 = vadd.f32 %v6093, %v6421
    %6423 = vmatmul.bf16.gmra.mxu0 %v3116
    %v6424 = vpop.f32.mrf.mxu0
    %v6425 = vadd.f32 %v6096, %v6424
    %v6426 = vpop.f32.mrf.mxu0
    %v6427 = vadd.f32 %v6098, %v6426
    %6428 = vmatmul.bf16.gmra.mxu0 %v3124
    %v6429 = vpop.f32.mrf.mxu0
    %v6430 = vadd.f32 %v6101, %v6429
    %v6431 = vpop.f32.mrf.mxu0
    %v6432 = vadd.f32 %v6103, %v6431
    %6433 = vmatmul.bf16.gmra.mxu0 %v3132
    %v6434 = vpop.f32.mrf.mxu0
    %v6435 = vadd.f32 %v6106, %v6434
    %v6436 = vpop.f32.mrf.mxu0
    %v6437 = vadd.f32 %v6108, %v6436
    %6438 = vmatmul.bf16.gmra.mxu0 %v3140
    %v6439 = vpop.f32.mrf.mxu0
    %v6440 = vadd.f32 %v6111, %v6439
    %v6441 = vpop.f32.mrf.mxu0
    %v6442 = vadd.f32 %v6113, %v6441
    %6443 = vmatmul.bf16.gmra.mxu0 %v3148
    %v6444 = vpop.f32.mrf.mxu0
    %v6445 = vadd.f32 %v6116, %v6444
    %v6446 = vpop.f32.mrf.mxu0
    %v6447 = vadd.f32 %v6118, %v6446
    %6448 = vmatmul.bf16.gmra.mxu0 %v3156
    %v6449 = vpop.f32.mrf.mxu0
    %v6450 = vadd.f32 %v6121, %v6449
    %v6451 = vpop.f32.mrf.mxu0
    %v6452 = vadd.f32 %v6123, %v6451
    %6453 = vmatmul.bf16.gmra.mxu0 %v3164
    %v6454 = vpop.f32.mrf.mxu0
    %v6455 = vadd.f32 %v6126, %v6454
    %v6456 = vpop.f32.mrf.mxu0
    %v6457 = vadd.f32 %v6128, %v6456
    %6458 = vmatmul.bf16.gmra.mxu0 %v3172
    %v6459 = vpop.f32.mrf.mxu0
    %v6460 = vadd.f32 %v6131, %v6459
    %v6461 = vpop.f32.mrf.mxu0
    %v6462 = vadd.f32 %v6133, %v6461
    %6463 = vmatmul.bf16.gmra.mxu0 %v3180
    %v6464 = vpop.f32.mrf.mxu0
    %v6465 = vadd.f32 %v6136, %v6464
    %v6466 = vpop.f32.mrf.mxu0
    %v6467 = vadd.f32 %v6138, %v6466
    %6468 = vmatmul.bf16.gmra.mxu0 %v3188
    %v6469 = vpop.f32.mrf.mxu0
    %v6470 = vadd.f32 %v6141, %v6469
    %v6471 = vpop.f32.mrf.mxu0
    %v6472 = vadd.f32 %v6143, %v6471
    %6473 = vmatmul.bf16.gmra.mxu0 %v3196
    %v6474 = vpop.f32.mrf.mxu0
    %v6475 = vadd.f32 %v6146, %v6474
    %v6476 = vpop.f32.mrf.mxu0
    %v6477 = vadd.f32 %v6148, %v6476
    %6478 = vmatmul.bf16.gmra.mxu0 %v3204
    %v6479 = vpop.f32.mrf.mxu0
    %v6480 = vadd.f32 %v6151, %v6479
    %v6481 = vpop.f32.mrf.mxu0
    %v6482 = vadd.f32 %v6153, %v6481
    %6483 = vmatmul.bf16.gmra.mxu0 %v3212
    %v6484 = vpop.f32.mrf.mxu0
    %v6485 = vadd.f32 %v6156, %v6484
    %v6486 = vpop.f32.mrf.mxu0
    %v6487 = vadd.f32 %v6158, %v6486
    %6488 = vmatmul.bf16.gmra.mxu0 %v3220
    %v6489 = vpop.f32.mrf.mxu0
    %v6490 = vadd.f32 %v6161, %v6489
    %v6491 = vpop.f32.mrf.mxu0
    %v6492 = vadd.f32 %v6163, %v6491
    %6493 = vmatmul.bf16.gmra.mxu0 %v3228
    %v6494 = vpop.f32.mrf.mxu0
    %v6495 = vadd.f32 %v6166, %v6494
    %v6496 = vpop.f32.mrf.mxu0
    %v6497 = vadd.f32 %v6168, %v6496
    %6498 = vmatmul.bf16.gmra.mxu0 %v3236
    %v6499 = vpop.f32.mrf.mxu0
    %v6500 = vadd.f32 %v6171, %v6499
    %v6501 = vpop.f32.mrf.mxu0
    %v6502 = vadd.f32 %v6173, %v6501
    %6503 = vmatmul.bf16.gmra.mxu0 %v3244
    %v6504 = vpop.f32.mrf.mxu0
    %v6505 = vadd.f32 %v6176, %v6504
    %v6506 = vpop.f32.mrf.mxu0
    %v6507 = vadd.f32 %v6178, %v6506
    %6508 = vmatmul.bf16.gmra.mxu0 %v3252
    %v6509 = vpop.f32.mrf.mxu0
    %v6510 = vadd.f32 %v6181, %v6509
    %v6511 = vpop.f32.mrf.mxu0
    %v6512 = vadd.f32 %v6183, %v6511
    %6513 = vmatmul.bf16.gmra.mxu0 %v3260
    %v6514 = vpop.f32.mrf.mxu0
    %v6515 = vadd.f32 %v6186, %v6514
    %v6516 = vpop.f32.mrf.mxu0
    %v6517 = vadd.f32 %v6188, %v6516
    %6518 = vmatmul.bf16.gmra.mxu0 %v3268
    %v6519 = vpop.f32.mrf.mxu0
    %v6520 = vadd.f32 %v6191, %v6519
    %v6521 = vpop.f32.mrf.mxu0
    %v6522 = vadd.f32 %v6193, %v6521
    %6523 = vmatmul.bf16.gmra.mxu0 %v3276
    %v6524 = vpop.f32.mrf.mxu0
    %v6525 = vadd.f32 %v6196, %v6524
    %v6526 = vpop.f32.mrf.mxu0
    %v6527 = vadd.f32 %v6198, %v6526
    %6528 = vmatmul.bf16.gmra.mxu0 %v3284
    %v6529 = vpop.f32.mrf.mxu0
    %v6530 = vadd.f32 %v6201, %v6529
    %v6531 = vpop.f32.mrf.mxu0
    %v6532 = vadd.f32 %v6203, %v6531
    %6533 = vmatmul.bf16.gmra.mxu0 %v3292
    %v6534 = vpop.f32.mrf.mxu0
    %v6535 = vadd.f32 %v6206, %v6534
    %v6536 = vpop.f32.mrf.mxu0
    %v6537 = vadd.f32 %v6208, %v6536
    %6538 = vmatmul.bf16.gmra.mxu0 %v3300
    %v6539 = vpop.f32.mrf.mxu0
    %v6540 = vadd.f32 %v6211, %v6539
    %v6541 = vpop.f32.mrf.mxu0
    %v6542 = vadd.f32 %v6213, %v6541
    %6543 = vmatmul.bf16.gmra.mxu0 %v3308
    %v6544 = vpop.f32.mrf.mxu0
    %v6545 = vadd.f32 %v6216, %v6544
    %v6546 = vpop.f32.mrf.mxu0
    %v6547 = vadd.f32 %v6218, %v6546
    %6548 = vmatmul.bf16.gmra.mxu0 %v3316
    %v6549 = vpop.f32.mrf.mxu0
    %v6550 = vadd.f32 %v6221, %v6549
    %v6551 = vpop.f32.mrf.mxu0
    %v6552 = vadd.f32 %v6223, %v6551
    %6553 = vmatmul.bf16.gmra.mxu0 %v3324
    %v6554 = vpop.f32.mrf.mxu0
    %v6555 = vadd.f32 %v6226, %v6554
    %v6556 = vpop.f32.mrf.mxu0
    %v6557 = vadd.f32 %v6228, %v6556
    %6558 = vmatmul.bf16.gmra.mxu0 %v3332
    %v6559 = vpop.f32.mrf.mxu0
    %v6560 = vadd.f32 %v6231, %v6559
    %v6561 = vpop.f32.mrf.mxu0
    %v6562 = vadd.f32 %v6233, %v6561
    %6563 = vmatmul.bf16.gmra.mxu0 %v3340
    %v6564 = vpop.f32.mrf.mxu0
    %v6565 = vadd.f32 %v6236, %v6564
    %v6566 = vpop.f32.mrf.mxu0
    %v6567 = vadd.f32 %v6238, %v6566
    %6568 = vmatmul.bf16.gmra.mxu0 %v3348
    %v6569 = vpop.f32.mrf.mxu0
    %v6570 = vadd.f32 %v6241, %v6569
    %v6571 = vpop.f32.mrf.mxu0
    %v6572 = vadd.f32 %v6243, %v6571
    %6573 = vmatmul.bf16.gmra.mxu0 %v3356
    %v6574 = vpop.f32.mrf.mxu0
    %v6575 = vadd.f32 %v6246, %v6574
    %v6576 = vpop.f32.mrf.mxu0
    %v6577 = vadd.f32 %v6248, %v6576
    %6578 = vmatmul.bf16.gmra.mxu0 %v3364
    %v6579 = vpop.f32.mrf.mxu0
    %v6580 = vadd.f32 %v6251, %v6579
    %v6581 = vpop.f32.mrf.mxu0
    %v6582 = vadd.f32 %v6253, %v6581
    %6583 = vmatmul.bf16.gmra.mxu0 %v3372
    %v6584 = vpop.f32.mrf.mxu0
    %v6585 = vadd.f32 %v6256, %v6584
    %v6586 = vpop.f32.mrf.mxu0
    %v6587 = vadd.f32 %v6258, %v6586
    %6588 = vmatmul.bf16.gmra.mxu0 %v3380
    %v6589 = vpop.f32.mrf.mxu0
    %v6590 = vadd.f32 %v6261, %v6589
    %v6591 = vpop.f32.mrf.mxu0
    %v6592 = vadd.f32 %v6263, %v6591
    %6593 = vmatmul.bf16.gmra.mxu0 %v3388
    %v6594 = vpop.f32.mrf.mxu0
    %v6595 = vadd.f32 %v6266, %v6594
    %v6596 = vpop.f32.mrf.mxu0
    %v6597 = vadd.f32 %v6268, %v6596
    %6598 = vmatmul.bf16.gmra.mxu0 %v3396
    %v6599 = vpop.f32.mrf.mxu0
    %v6600 = vadd.f32 %v6271, %v6599
    %v6601 = vpop.f32.mrf.mxu0
    %v6602 = vadd.f32 %v6273, %v6601
    %6603 = vmatmul.bf16.gmra.mxu0 %v3404
    %v6604 = vpop.f32.mrf.mxu0
    %v6605 = vadd.f32 %v6276, %v6604
    %v6606 = vpop.f32.mrf.mxu0
    %v6607 = vadd.f32 %v6278, %v6606
    %6608 = vmatmul.bf16.gmra.mxu0 %v3412
    %v6609 = vpop.f32.mrf.mxu0
    %v6610 = vadd.f32 %v6281, %v6609
    %v6611 = vpop.f32.mrf.mxu0
    %v6612 = vadd.f32 %v6283, %v6611
    %6613 = vmatmul.bf16.gmra.mxu0 %v3420
    %v6614 = vpop.f32.mrf.mxu0
    %v6615 = vadd.f32 %v6286, %v6614
    %v6616 = vpop.f32.mrf.mxu0
    %v6617 = vadd.f32 %v6288, %v6616
    %6618 = vmatmul.bf16.gmra.mxu0 %v3428
    %v6619 = vpop.f32.mrf.mxu0
    %v6620 = vadd.f32 %v6291, %v6619
    %v6621 = vpop.f32.mrf.mxu0
    %v6622 = vadd.f32 %v6293, %v6621
    %6623 = vmatmul.bf16.gmra.mxu0 %v3436
    %v6624 = vpop.f32.mrf.mxu0
    %v6625 = vadd.f32 %v6296, %v6624
    %v6626 = vpop.f32.mrf.mxu0
    %v6627 = vadd.f32 %v6298, %v6626
    %6628 = vmatmul.bf16.gmra.mxu0 %v3444
    %v6629 = vpop.f32.mrf.mxu0
    %v6630 = vadd.f32 %v6301, %v6629
    %v6631 = vpop.f32.mrf.mxu0
    %v6632 = vadd.f32 %v6303, %v6631
    %6633 = vmatmul.bf16.gmra.mxu0 %v3452
    %v6634 = vpop.f32.mrf.mxu0
    %v6635 = vadd.f32 %v6306, %v6634
    %v6636 = vpop.f32.mrf.mxu0
    %v6637 = vadd.f32 %v6308, %v6636
    %6638 = vmatmul.bf16.gmra.mxu0 %v3460
    %v6639 = vpop.f32.mrf.mxu0
    %v6640 = vadd.f32 %v6311, %v6639
    %v6641 = vpop.f32.mrf.mxu0
    %v6642 = vadd.f32 %v6313, %v6641
    %6643 = vmatmul.bf16.gmra.mxu0 %v3468
    %v6644 = vpop.f32.mrf.mxu0
    %v6645 = vadd.f32 %v6316, %v6644
    %v6646 = vpop.f32.mrf.mxu0
    %v6647 = vadd.f32 %v6318, %v6646
    %6648 = vmatmul.bf16.gmra.mxu0 %v3476
    %v6649 = vpop.f32.mrf.mxu0
    %v6650 = vadd.f32 %v6321, %v6649
    %v6651 = vpop.f32.mrf.mxu0
    %v6652 = vadd.f32 %v6323, %v6651
    %6653 = vmatmul.bf16.gmra.mxu0 %v3484
    %v6654 = vpop.f32.mrf.mxu0
    %v6655 = vadd.f32 %v6326, %v6654
    %v6656 = vpop.f32.mrf.mxu0
    %v6657 = vadd.f32 %v6328, %v6656
    %6658 = vmatmul.bf16.gmra.mxu0 %v3492
    %v6659 = vpop.f32.mrf.mxu0
    %v6660 = vadd.f32 %v6331, %v6659
    %v6661 = vpop.f32.mrf.mxu0
    %v6662 = vadd.f32 %v6333, %v6661
    %6663 = vmatmul.bf16.gmra.mxu0 %v3500
    %v6664 = vpop.f32.mrf.mxu0
    %v6665 = vadd.f32 %v6336, %v6664
    %v6666 = vpop.f32.mrf.mxu0
    %v6667 = vadd.f32 %v6338, %v6666
    %6668 = vmatmul.bf16.gmra.mxu0 %v3508
    %v6669 = vpop.f32.mrf.mxu0
    %v6670 = vadd.f32 %v6341, %v6669
    %v6671 = vpop.f32.mrf.mxu0
    %v6672 = vadd.f32 %v6343, %v6671
    %6673 = vmatmul.bf16.gmra.mxu0 %v3516
    %v6674 = vpop.f32.mrf.mxu0
    %v6675 = vadd.f32 %v6346, %v6674
    %v6676 = vpop.f32.mrf.mxu0
    %v6677 = vadd.f32 %v6348, %v6676
    %6678 = vmatmul.bf16.gmra.mxu0 %v3524
    %v6679 = vpop.f32.mrf.mxu0
    %v6680 = vadd.f32 %v6351, %v6679
    %v6681 = vpop.f32.mrf.mxu0
    %v6682 = vadd.f32 %v6353, %v6681
    %6683 = vmatmul.bf16.gmra.mxu0 %v3532
    %v6684 = vpop.f32.mrf.mxu0
    %v6685 = vadd.f32 %v6356, %v6684
    %v6686 = vpop.f32.mrf.mxu0
    %v6687 = vadd.f32 %v6358, %v6686
    %6688 = vmatmul.bf16.gmra.mxu0 %v3540
    %v6689 = vpop.f32.mrf.mxu0
    %v6690 = vadd.f32 %v6361, %v6689
    %v6691 = vpop.f32.mrf.mxu0
    %v6692 = vadd.f32 %v6363, %v6691
    %6693 = vmatmul.bf16.gmra.mxu0 %v3548
    %v6694 = vpop.f32.mrf.mxu0
    %v6695 = vadd.f32 %v6366, %v6694
    %v6696 = vpop.f32.mrf.mxu0
    %v6697 = vadd.f32 %v6368, %v6696
    %6698 = vmatmul.bf16.gmra.mxu0 %v3556
    %v6699 = vpop.f32.mrf.mxu0
    %v6700 = vadd.f32 %v6371, %v6699
    %v6701 = vpop.f32.mrf.mxu0
    %v6702 = vadd.f32 %v6373, %v6701
    %6703 = vmatmul.bf16.gmra.mxu0 %v3564
    %v6704 = vpop.f32.mrf.mxu0
    %v6705 = vadd.f32 %v6376, %v6704
    %v6706 = vpop.f32.mrf.mxu0
    %v6707 = vadd.f32 %v6378, %v6706
    %6708 = vdwg.mxu0
    %v6709 = vmax.f32 %v6390, 0.0
    %v6710 = vmax.f32 %v6392, 0.0
    %v6711 = vmax.f32 %v6395, 0.0
    %v6712 = vmax.f32 %v6397, 0.0
    %v6713 = vmax.f32 %v6400, 0.0
    %v6714 = vmax.f32 %v6402, 0.0
    %v6715 = vmax.f32 %v6405, 0.0
    %v6716 = vmax.f32 %v6407, 0.0
    %v6717 = vmax.f32 %v6410, 0.0
    %v6718 = vmax.f32 %v6412, 0.0
    %v6719 = vmax.f32 %v6415, 0.0
    %v6720 = vmax.f32 %v6417, 0.0
    %v6721 = vmax.f32 %v6420, 0.0
    %v6722 = vmax.f32 %v6422, 0.0
    %v6723 = vmax.f32 %v6425, 0.0
    %v6724 = vmax.f32 %v6427, 0.0
    %v6725 = vmax.f32 %v6430, 0.0
    %v6726 = vmax.f32 %v6432, 0.0
    %v6727 = vmax.f32 %v6435, 0.0
    %v6728 = vmax.f32 %v6437, 0.0
    %v6729 = vmax.f32 %v6440, 0.0
    %v6730 = vmax.f32 %v6442, 0.0
    %v6731 = vmax.f32 %v6445, 0.0
    %v6732 = vmax.f32 %v6447, 0.0
    %v6733 = vmax.f32 %v6450, 0.0
    %v6734 = vmax.f32 %v6452, 0.0
    %v6735 = vmax.f32 %v6455, 0.0
    %v6736 = vmax.f32 %v6457, 0.0
    %v6737 = vmax.f32 %v6460, 0.0
    %v6738 = vmax.f32 %v6462, 0.0
    %v6739 = vmax.f32 %v6465, 0.0
    %v6740 = vmax.f32 %v6467, 0.0
    %v6741 = vmax.f32 %v6470, 0.0
    %v6742 = vmax.f32 %v6472, 0.0
    %v6743 = vmax.f32 %v6475, 0.0
    %v6744 = vmax.f32 %v6477, 0.0
    %v6745 = vmax.f32 %v6480, 0.0
    %v6746 = vmax.f32 %v6482, 0.0
    %v6747 = vmax.f32 %v6485, 0.0
    %v6748 = vmax.f32 %v6487, 0.0
    %v6749 = vmax.f32 %v6490, 0.0
    %v6750 = vmax.f32 %v6492, 0.0
    %v6751 = vmax.f32 %v6495, 0.0
    %v6752 = vmax.f32 %v6497, 0.0
    %v6753 = vmax.f32 %v6500, 0.0
    %v6754 = vmax.f32 %v6502, 0.0
    %v6755 = vmax.f32 %v6505, 0.0
    %v6756 = vmax.f32 %v6507, 0.0
    %v6757 = vmax.f32 %v6510, 0.0
    %v6758 = vmax.f32 %v6512, 0.0
    %v6759 = vmax.f32 %v6515, 0.0
    %v6760 = vmax.f32 %v6517, 0.0
    %v6761 = vmax.f32 %v6520, 0.0
    %v6762 = vmax.f32 %v6522, 0.0
    %v6763 = vmax.f32 %v6525, 0.0
    %v6764 = vmax.f32 %v6527, 0.0
    %v6765 = vmax.f32 %v6530, 0.0
    %v6766 = vmax.f32 %v6532, 0.0
    %v6767 = vmax.f32 %v6535, 0.0
    %v6768 = vmax.f32 %v6537, 0.0
    %v6769 = vmax.f32 %v6540, 0.0
    %v6770 = vmax.f32 %v6542, 0.0
    %v6771 = vmax.f32 %v6545, 0.0
    %v6772 = vmax.f32 %v6547, 0.0
    %v6773 = vmax.f32 %v6550, 0.0
    %v6774 = vmax.f32 %v6552, 0.0
    %v6775 = vmax.f32 %v6555, 0.0
    %v6776 = vmax.f32 %v6557, 0.0
    %v6777 = vmax.f32 %v6560, 0.0
    %v6778 = vmax.f32 %v6562, 0.0
    %v6779 = vmax.f32 %v6565, 0.0
    %v6780 = vmax.f32 %v6567, 0.0
    %v6781 = vmax.f32 %v6570, 0.0
    %v6782 = vmax.f32 %v6572, 0.0
    %v6783 = vmax.f32 %v6575, 0.0
    %v6784 = vmax.f32 %v6577, 0.0
    %v6785 = vmax.f32 %v6580, 0.0
    %v6786 = vmax.f32 %v6582, 0.0
    %v6787 = vmax.f32 %v6585, 0.0
    %v6788 = vmax.f32 %v6587, 0.0
    %v6789 = vmax.f32 %v6590, 0.0
    %v6790 = vmax.f32 %v6592, 0.0
    %v6791 = vmax.f32 %v6595, 0.0
    %v6792 = vmax.f32 %v6597, 0.0
    %v6793 = vmax.f32 %v6600, 0.0
    %v6794 = vmax.f32 %v6602, 0.0
    %v6795 = vmax.f32 %v6605, 0.0
    %v6796 = vmax.f32 %v6607, 0.0
    %v6797 = vmax.f32 %v6610, 0.0
    %v6798 = vmax.f32 %v6612, 0.0
    %v6799 = vmax.f32 %v6615, 0.0
    %v6800 = vmax.f32 %v6617, 0.0
    %v6801 = vmax.f32 %v6620, 0.0
    %v6802 = vmax.f32 %v6622, 0.0
    %v6803 = vmax.f32 %v6625, 0.0
    %v6804 = vmax.f32 %v6627, 0.0
    %v6805 = vmax.f32 %v6630, 0.0
    %v6806 = vmax.f32 %v6632, 0.0
    %v6807 = vmax.f32 %v6635, 0.0
    %v6808 = vmax.f32 %v6637, 0.0
    %v6809 = vmax.f32 %v6640, 0.0
    %v6810 = vmax.f32 %v6642, 0.0
    %v6811 = vmax.f32 %v6645, 0.0
    %v6812 = vmax.f32 %v6647, 0.0
    %v6813 = vmax.f32 %v6650, 0.0
    %v6814 = vmax.f32 %v6652, 0.0
    %v6815 = vmax.f32 %v6655, 0.0
    %v6816 = vmax.f32 %v6657, 0.0
    %v6817 = vmax.f32 %v6660, 0.0
    %v6818 = vmax.f32 %v6662, 0.0
    %v6819 = vmax.f32 %v6665, 0.0
    %v6820 = vmax.f32 %v6667, 0.0
    %v6821 = vmax.f32 %v6670, 0.0
    %v6822 = vmax.f32 %v6672, 0.0
    %v6823 = vmax.f32 %v6675, 0.0
    %v6824 = vmax.f32 %v6677, 0.0
    %v6825 = vmax.f32 %v6680, 0.0
    %v6826 = vmax.f32 %v6682, 0.0
    %v6827 = vmax.f32 %v6685, 0.0
    %v6828 = vmax.f32 %v6687, 0.0
    %v6829 = vmax.f32 %v6690, 0.0
    %v6830 = vmax.f32 %v6692, 0.0
    %v6831 = vmax.f32 %v6695, 0.0
    %v6832 = vmax.f32 %v6697, 0.0
    %v6833 = vmax.f32 %v6700, 0.0
    %v6834 = vmax.f32 %v6702, 0.0
    %v6835 = vmax.f32 %v6705, 0.0
    %v6836 = vmax.f32 %v6707, 0.0
    %v6837 = vpack.c.bf16 %v6710, %v6709
    %v6838 = vpack.c.bf16 %v6712, %v6711
    %v6839 = vpack.c.bf16 %v6714, %v6713
    %v6840 = vpack.c.bf16 %v6716, %v6715
    %v6841 = vpack.c.bf16 %v6718, %v6717
    %v6842 = vpack.c.bf16 %v6720, %v6719
    %v6843 = vpack.c.bf16 %v6722, %v6721
    %v6844 = vpack.c.bf16 %v6724, %v6723
    %v6845 = vpack.c.bf16 %v6726, %v6725
    %v6846 = vpack.c.bf16 %v6728, %v6727
    %v6847 = vpack.c.bf16 %v6730, %v6729
    %v6848 = vpack.c.bf16 %v6732, %v6731
    %v6849 = vpack.c.bf16 %v6734, %v6733
    %v6850 = vpack.c.bf16 %v6736, %v6735
    %v6851 = vpack.c.bf16 %v6738, %v6737
    %v6852 = vpack.c.bf16 %v6740, %v6739
    %v6853 = vpack.c.bf16 %v6742, %v6741
    %v6854 = vpack.c.bf16 %v6744, %v6743
    %v6855 = vpack.c.bf16 %v6746, %v6745
    %v6856 = vpack.c.bf16 %v6748, %v6747
    %v6857 = vpack.c.bf16 %v6750, %v6749
    %v6858 = vpack.c.bf16 %v6752, %v6751
    %v6859 = vpack.c.bf16 %v6754, %v6753
    %v6860 = vpack.c.bf16 %v6756, %v6755
    %v6861 = vpack.c.bf16 %v6758, %v6757
    %v6862 = vpack.c.bf16 %v6760, %v6759
    %v6863 = vpack.c.bf16 %v6762, %v6761
    %v6864 = vpack.c.bf16 %v6764, %v6763
    %v6865 = vpack.c.bf16 %v6766, %v6765
    %v6866 = vpack.c.bf16 %v6768, %v6767
    %v6867 = vpack.c.bf16 %v6770, %v6769
    %v6868 = vpack.c.bf16 %v6772, %v6771
    %v6869 = vpack.c.bf16 %v6774, %v6773
    %v6870 = vpack.c.bf16 %v6776, %v6775
    %v6871 = vpack.c.bf16 %v6778, %v6777
    %v6872 = vpack.c.bf16 %v6780, %v6779
    %v6873 = vpack.c.bf16 %v6782, %v6781
    %v6874 = vpack.c.bf16 %v6784, %v6783
    %v6875 = vpack.c.bf16 %v6786, %v6785
    %v6876 = vpack.c.bf16 %v6788, %v6787
    %v6877 = vpack.c.bf16 %v6790, %v6789
    %v6878 = vpack.c.bf16 %v6792, %v6791
    %v6879 = vpack.c.bf16 %v6794, %v6793
    %v6880 = vpack.c.bf16 %v6796, %v6795
    %v6881 = vpack.c.bf16 %v6798, %v6797
    %v6882 = vpack.c.bf16 %v6800, %v6799
    %v6883 = vpack.c.bf16 %v6802, %v6801
    %v6884 = vpack.c.bf16 %v6804, %v6803
    %v6885 = vpack.c.bf16 %v6806, %v6805
    %v6886 = vpack.c.bf16 %v6808, %v6807
    %v6887 = vpack.c.bf16 %v6810, %v6809
    %v6888 = vpack.c.bf16 %v6812, %v6811
    %v6889 = vpack.c.bf16 %v6814, %v6813
    %v6890 = vpack.c.bf16 %v6816, %v6815
    %v6891 = vpack.c.bf16 %v6818, %v6817
    %v6892 = vpack.c.bf16 %v6820, %v6819
    %v6893 = vpack.c.bf16 %v6822, %v6821
    %v6894 = vpack.c.bf16 %v6824, %v6823
    %v6895 = vpack.c.bf16 %v6826, %v6825
    %v6896 = vpack.c.bf16 %v6828, %v6827
    %v6897 = vpack.c.bf16 %v6830, %v6829
    %v6898 = vpack.c.bf16 %v6832, %v6831
    %v6899 = vpack.c.bf16 %v6834, %v6833
    %v6900 = vpack.c.bf16 %v6836, %v6835
    %v6901 = vld [vmem:[%s3] sm:$0xf]
    %v6902 = vld [vmem:[%s3 + $0x4] sm:$0xf]
    %v6903 = vld [vmem:[%s3 + $0x8] sm:$0xf]
    %v6904 = vld [vmem:[%s3 + $0xc] sm:$0xf]
    %v6905 = vld [vmem:[%s3 + $0x10] sm:$0xf]
    %v6906 = vld [vmem:[%s3 + $0x14] sm:$0xf]
    %v6907 = vld [vmem:[%s3 + $0x18] sm:$0xf]
    %v6908 = vld [vmem:[%s3 + $0x1c] sm:$0xf]
    %v6909 = vld [vmem:[%s3 + $0x20] sm:$0xf]
    %v6910 = vld [vmem:[%s3 + $0x24] sm:$0xf]
    %v6911 = vld [vmem:[%s3 + $0x28] sm:$0xf]
    %v6912 = vld [vmem:[%s3 + $0x2c] sm:$0xf]
    %v6913 = vld [vmem:[%s3 + $0x30] sm:$0xf]
    %v6914 = vld [vmem:[%s3 + $0x34] sm:$0xf]
    %v6915 = vld [vmem:[%s3 + $0x38] sm:$0xf]
    %v6916 = vld [vmem:[%s3 + $0x3c] sm:$0xf]
    %v6933 = vunpack.c.l.b16 %v6901
    %v6934 = vunpack.c.l.b16 %v6902
    %v6935 = vunpack.c.l.b16 %v6903
    %v6936 = vunpack.c.l.b16 %v6904
    %v6937 = vunpack.c.l.b16 %v6905
    %v6938 = vunpack.c.l.b16 %v6906
    %v6939 = vunpack.c.l.b16 %v6907
    %v6940 = vunpack.c.l.b16 %v6908
    %v6941 = vunpack.c.l.b16 %v6909
    %v6942 = vunpack.c.l.b16 %v6910
    %v6943 = vunpack.c.l.b16 %v6911
    %v6944 = vunpack.c.l.b16 %v6912
    %v6945 = vunpack.c.l.b16 %v6913
    %v6946 = vunpack.c.l.b16 %v6914
    %v6947 = vunpack.c.l.b16 %v6915
    %v6948 = vunpack.c.l.b16 %v6916
    %v6949 = vpack.c.b16 %v6934, %v6933
    %v6950 = vpack.c.b16 %v6936, %v6935
    %v6951 = vpack.c.b16 %v6938, %v6937
    %v6952 = vpack.c.b16 %v6940, %v6939
    %v6953 = vpack.c.b16 %v6942, %v6941
    %v6954 = vpack.c.b16 %v6944, %v6943
    %v6955 = vpack.c.b16 %v6946, %v6945
    %v6956 = vpack.c.b16 %v6948, %v6947
    %6965 = vmatpush.bf16.msra.mxu0 %v6956
    %6966 = vmatpush.bf16.msra.mxu0 %v6955
    %6967 = vmatpush.bf16.msra.mxu0 %v6954
    %6968 = vmatpush.bf16.msra.mxu0 %v6953
    %6969 = vmatpush.bf16.msra.mxu0 %v6952
    %6970 = vmatpush.bf16.msra.mxu0 %v6951
    %6971 = vmatpush.bf16.msra.mxu0 %v6950
    %6972 = vmatpush.bf16.msra.mxu0 %v6949
    %6973 = vmatmul.bf16.gmra.mxu0 %v6837
    %v6974 = vpop.f32.mrf.mxu0
    %v6975 = vadd.f32 0.0, %v6974
    %v6976 = vpop.f32.mrf.mxu0
    %v6977 = vadd.f32 0.0, %v6976
    %6978 = vmatmul.bf16.gmra.mxu0 %v6838
    %v6979 = vpop.f32.mrf.mxu0
    %v6980 = vadd.f32 0.0, %v6979
    %v6981 = vpop.f32.mrf.mxu0
    %v6982 = vadd.f32 0.0, %v6981
    %6983 = vmatmul.bf16.gmra.mxu0 %v6839
    %v6984 = vpop.f32.mrf.mxu0
    %v6985 = vadd.f32 0.0, %v6984
    %v6986 = vpop.f32.mrf.mxu0
    %v6987 = vadd.f32 0.0, %v6986
    %6988 = vmatmul.bf16.gmra.mxu0 %v6840
    %v6989 = vpop.f32.mrf.mxu0
    %v6990 = vadd.f32 0.0, %v6989
    %v6991 = vpop.f32.mrf.mxu0
    %v6992 = vadd.f32 0.0, %v6991
    %6993 = vmatmul.bf16.gmra.mxu0 %v6841
    %v6994 = vpop.f32.mrf.mxu0
    %v6995 = vadd.f32 0.0, %v6994
    %v6996 = vpop.f32.mrf.mxu0
    %v6997 = vadd.f32 0.0, %v6996
    %6998 = vmatmul.bf16.gmra.mxu0 %v6842
    %v6999 = vpop.f32.mrf.mxu0
    %v7000 = vadd.f32 0.0, %v6999
    %v7001 = vpop.f32.mrf.mxu0
    %v7002 = vadd.f32 0.0, %v7001
    %7003 = vmatmul.bf16.gmra.mxu0 %v6843
    %v7004 = vpop.f32.mrf.mxu0
    %v7005 = vadd.f32 0.0, %v7004
    %v7006 = vpop.f32.mrf.mxu0
    %v7007 = vadd.f32 0.0, %v7006
    %7008 = vmatmul.bf16.gmra.mxu0 %v6844
    %v7009 = vpop.f32.mrf.mxu0
    %v7010 = vadd.f32 0.0, %v7009
    %v7011 = vpop.f32.mrf.mxu0
    %v7012 = vadd.f32 0.0, %v7011
    %7013 = vmatmul.bf16.gmra.mxu0 %v6845
    %v7014 = vpop.f32.mrf.mxu0
    %v7015 = vadd.f32 0.0, %v7014
    %v7016 = vpop.f32.mrf.mxu0
    %v7017 = vadd.f32 0.0, %v7016
    %7018 = vmatmul.bf16.gmra.mxu0 %v6846
    %v7019 = vpop.f32.mrf.mxu0
    %v7020 = vadd.f32 0.0, %v7019
    %v7021 = vpop.f32.mrf.mxu0
    %v7022 = vadd.f32 0.0, %v7021
    %7023 = vmatmul.bf16.gmra.mxu0 %v6847
    %v7024 = vpop.f32.mrf.mxu0
    %v7025 = vadd.f32 0.0, %v7024
    %v7026 = vpop.f32.mrf.mxu0
    %v7027 = vadd.f32 0.0, %v7026
    %7028 = vmatmul.bf16.gmra.mxu0 %v6848
    %v7029 = vpop.f32.mrf.mxu0
    %v7030 = vadd.f32 0.0, %v7029
    %v7031 = vpop.f32.mrf.mxu0
    %v7032 = vadd.f32 0.0, %v7031
    %7033 = vmatmul.bf16.gmra.mxu0 %v6849
    %v7034 = vpop.f32.mrf.mxu0
    %v7035 = vadd.f32 0.0, %v7034
    %v7036 = vpop.f32.mrf.mxu0
    %v7037 = vadd.f32 0.0, %v7036
    %7038 = vmatmul.bf16.gmra.mxu0 %v6850
    %v7039 = vpop.f32.mrf.mxu0
    %v7040 = vadd.f32 0.0, %v7039
    %v7041 = vpop.f32.mrf.mxu0
    %v7042 = vadd.f32 0.0, %v7041
    %7043 = vmatmul.bf16.gmra.mxu0 %v6851
    %v7044 = vpop.f32.mrf.mxu0
    %v7045 = vadd.f32 0.0, %v7044
    %v7046 = vpop.f32.mrf.mxu0
    %v7047 = vadd.f32 0.0, %v7046
    %7048 = vmatmul.bf16.gmra.mxu0 %v6852
    %v7049 = vpop.f32.mrf.mxu0
    %v7050 = vadd.f32 0.0, %v7049
    %v7051 = vpop.f32.mrf.mxu0
    %v7052 = vadd.f32 0.0, %v7051
    %7053 = vmatmul.bf16.gmra.mxu0 %v6853
    %v7054 = vpop.f32.mrf.mxu0
    %v7055 = vadd.f32 0.0, %v7054
    %v7056 = vpop.f32.mrf.mxu0
    %v7057 = vadd.f32 0.0, %v7056
    %7058 = vmatmul.bf16.gmra.mxu0 %v6854
    %v7059 = vpop.f32.mrf.mxu0
    %v7060 = vadd.f32 0.0, %v7059
    %v7061 = vpop.f32.mrf.mxu0
    %v7062 = vadd.f32 0.0, %v7061
    %7063 = vmatmul.bf16.gmra.mxu0 %v6855
    %v7064 = vpop.f32.mrf.mxu0
    %v7065 = vadd.f32 0.0, %v7064
    %v7066 = vpop.f32.mrf.mxu0
    %v7067 = vadd.f32 0.0, %v7066
    %7068 = vmatmul.bf16.gmra.mxu0 %v6856
    %v7069 = vpop.f32.mrf.mxu0
    %v7070 = vadd.f32 0.0, %v7069
    %v7071 = vpop.f32.mrf.mxu0
    %v7072 = vadd.f32 0.0, %v7071
    %7073 = vmatmul.bf16.gmra.mxu0 %v6857
    %v7074 = vpop.f32.mrf.mxu0
    %v7075 = vadd.f32 0.0, %v7074
    %v7076 = vpop.f32.mrf.mxu0
    %v7077 = vadd.f32 0.0, %v7076
    %7078 = vmatmul.bf16.gmra.mxu0 %v6858
    %v7079 = vpop.f32.mrf.mxu0
    %v7080 = vadd.f32 0.0, %v7079
    %v7081 = vpop.f32.mrf.mxu0
    %v7082 = vadd.f32 0.0, %v7081
    %7083 = vmatmul.bf16.gmra.mxu0 %v6859
    %v7084 = vpop.f32.mrf.mxu0
    %v7085 = vadd.f32 0.0, %v7084
    %v7086 = vpop.f32.mrf.mxu0
    %v7087 = vadd.f32 0.0, %v7086
    %7088 = vmatmul.bf16.gmra.mxu0 %v6860
    %v7089 = vpop.f32.mrf.mxu0
    %v7090 = vadd.f32 0.0, %v7089
    %v7091 = vpop.f32.mrf.mxu0
    %v7092 = vadd.f32 0.0, %v7091
    %7093 = vmatmul.bf16.gmra.mxu0 %v6861
    %v7094 = vpop.f32.mrf.mxu0
    %v7095 = vadd.f32 0.0, %v7094
    %v7096 = vpop.f32.mrf.mxu0
    %v7097 = vadd.f32 0.0, %v7096
    %7098 = vmatmul.bf16.gmra.mxu0 %v6862
    %v7099 = vpop.f32.mrf.mxu0
    %v7100 = vadd.f32 0.0, %v7099
    %v7101 = vpop.f32.mrf.mxu0
    %v7102 = vadd.f32 0.0, %v7101
    %7103 = vmatmul.bf16.gmra.mxu0 %v6863
    %v7104 = vpop.f32.mrf.mxu0
    %v7105 = vadd.f32 0.0, %v7104
    %v7106 = vpop.f32.mrf.mxu0
    %v7107 = vadd.f32 0.0, %v7106
    %7108 = vmatmul.bf16.gmra.mxu0 %v6864
    %v7109 = vpop.f32.mrf.mxu0
    %v7110 = vadd.f32 0.0, %v7109
    %v7111 = vpop.f32.mrf.mxu0
    %v7112 = vadd.f32 0.0, %v7111
    %7113 = vmatmul.bf16.gmra.mxu0 %v6865
    %v7114 = vpop.f32.mrf.mxu0
    %v7115 = vadd.f32 0.0, %v7114
    %v7116 = vpop.f32.mrf.mxu0
    %v7117 = vadd.f32 0.0, %v7116
    %7118 = vmatmul.bf16.gmra.mxu0 %v6866
    %v7119 = vpop.f32.mrf.mxu0
    %v7120 = vadd.f32 0.0, %v7119
    %v7121 = vpop.f32.mrf.mxu0
    %v7122 = vadd.f32 0.0, %v7121
    %7123 = vmatmul.bf16.gmra.mxu0 %v6867
    %v7124 = vpop.f32.mrf.mxu0
    %v7125 = vadd.f32 0.0, %v7124
    %v7126 = vpop.f32.mrf.mxu0
    %v7127 = vadd.f32 0.0, %v7126
    %7128 = vmatmul.bf16.gmra.mxu0 %v6868
    %v7129 = vpop.f32.mrf.mxu0
    %v7130 = vadd.f32 0.0, %v7129
    %v7131 = vpop.f32.mrf.mxu0
    %v7132 = vadd.f32 0.0, %v7131
    %7133 = vmatmul.bf16.gmra.mxu0 %v6869
    %v7134 = vpop.f32.mrf.mxu0
    %v7135 = vadd.f32 0.0, %v7134
    %v7136 = vpop.f32.mrf.mxu0
    %v7137 = vadd.f32 0.0, %v7136
    %7138 = vmatmul.bf16.gmra.mxu0 %v6870
    %v7139 = vpop.f32.mrf.mxu0
    %v7140 = vadd.f32 0.0, %v7139
    %v7141 = vpop.f32.mrf.mxu0
    %v7142 = vadd.f32 0.0, %v7141
    %7143 = vmatmul.bf16.gmra.mxu0 %v6871
    %v7144 = vpop.f32.mrf.mxu0
    %v7145 = vadd.f32 0.0, %v7144
    %v7146 = vpop.f32.mrf.mxu0
    %v7147 = vadd.f32 0.0, %v7146
    %7148 = vmatmul.bf16.gmra.mxu0 %v6872
    %v7149 = vpop.f32.mrf.mxu0
    %v7150 = vadd.f32 0.0, %v7149
    %v7151 = vpop.f32.mrf.mxu0
    %v7152 = vadd.f32 0.0, %v7151
    %7153 = vmatmul.bf16.gmra.mxu0 %v6873
    %v7154 = vpop.f32.mrf.mxu0
    %v7155 = vadd.f32 0.0, %v7154
    %v7156 = vpop.f32.mrf.mxu0
    %v7157 = vadd.f32 0.0, %v7156
    %7158 = vmatmul.bf16.gmra.mxu0 %v6874
    %v7159 = vpop.f32.mrf.mxu0
    %v7160 = vadd.f32 0.0, %v7159
    %v7161 = vpop.f32.mrf.mxu0
    %v7162 = vadd.f32 0.0, %v7161
    %7163 = vmatmul.bf16.gmra.mxu0 %v6875
    %v7164 = vpop.f32.mrf.mxu0
    %v7165 = vadd.f32 0.0, %v7164
    %v7166 = vpop.f32.mrf.mxu0
    %v7167 = vadd.f32 0.0, %v7166
    %7168 = vmatmul.bf16.gmra.mxu0 %v6876
    %v7169 = vpop.f32.mrf.mxu0
    %v7170 = vadd.f32 0.0, %v7169
    %v7171 = vpop.f32.mrf.mxu0
    %v7172 = vadd.f32 0.0, %v7171
    %7173 = vmatmul.bf16.gmra.mxu0 %v6877
    %v7174 = vpop.f32.mrf.mxu0
    %v7175 = vadd.f32 0.0, %v7174
    %v7176 = vpop.f32.mrf.mxu0
    %v7177 = vadd.f32 0.0, %v7176
    %7178 = vmatmul.bf16.gmra.mxu0 %v6878
    %v7179 = vpop.f32.mrf.mxu0
    %v7180 = vadd.f32 0.0, %v7179
    %v7181 = vpop.f32.mrf.mxu0
    %v7182 = vadd.f32 0.0, %v7181
    %7183 = vmatmul.bf16.gmra.mxu0 %v6879
    %v7184 = vpop.f32.mrf.mxu0
    %v7185 = vadd.f32 0.0, %v7184
    %v7186 = vpop.f32.mrf.mxu0
    %v7187 = vadd.f32 0.0, %v7186
    %7188 = vmatmul.bf16.gmra.mxu0 %v6880
    %v7189 = vpop.f32.mrf.mxu0
    %v7190 = vadd.f32 0.0, %v7189
    %v7191 = vpop.f32.mrf.mxu0
    %v7192 = vadd.f32 0.0, %v7191
    %7193 = vmatmul.bf16.gmra.mxu0 %v6881
    %v7194 = vpop.f32.mrf.mxu0
    %v7195 = vadd.f32 0.0, %v7194
    %v7196 = vpop.f32.mrf.mxu0
    %v7197 = vadd.f32 0.0, %v7196
    %7198 = vmatmul.bf16.gmra.mxu0 %v6882
    %v7199 = vpop.f32.mrf.mxu0
    %v7200 = vadd.f32 0.0, %v7199
    %v7201 = vpop.f32.mrf.mxu0
    %v7202 = vadd.f32 0.0, %v7201
    %7203 = vmatmul.bf16.gmra.mxu0 %v6883
    %v7204 = vpop.f32.mrf.mxu0
    %v7205 = vadd.f32 0.0, %v7204
    %v7206 = vpop.f32.mrf.mxu0
    %v7207 = vadd.f32 0.0, %v7206
    %7208 = vmatmul.bf16.gmra.mxu0 %v6884
    %v7209 = vpop.f32.mrf.mxu0
    %v7210 = vadd.f32 0.0, %v7209
    %v7211 = vpop.f32.mrf.mxu0
    %v7212 = vadd.f32 0.0, %v7211
    %7213 = vmatmul.bf16.gmra.mxu0 %v6885
    %v7214 = vpop.f32.mrf.mxu0
    %v7215 = vadd.f32 0.0, %v7214
    %v7216 = vpop.f32.mrf.mxu0
    %v7217 = vadd.f32 0.0, %v7216
    %7218 = vmatmul.bf16.gmra.mxu0 %v6886
    %v7219 = vpop.f32.mrf.mxu0
    %v7220 = vadd.f32 0.0, %v7219
    %v7221 = vpop.f32.mrf.mxu0
    %v7222 = vadd.f32 0.0, %v7221
    %7223 = vmatmul.bf16.gmra.mxu0 %v6887
    %v7224 = vpop.f32.mrf.mxu0
    %v7225 = vadd.f32 0.0, %v7224
    %v7226 = vpop.f32.mrf.mxu0
    %v7227 = vadd.f32 0.0, %v7226
    %7228 = vmatmul.bf16.gmra.mxu0 %v6888
    %v7229 = vpop.f32.mrf.mxu0
    %v7230 = vadd.f32 0.0, %v7229
    %v7231 = vpop.f32.mrf.mxu0
    %v7232 = vadd.f32 0.0, %v7231
    %7233 = vmatmul.bf16.gmra.mxu0 %v6889
    %v7234 = vpop.f32.mrf.mxu0
    %v7235 = vadd.f32 0.0, %v7234
    %v7236 = vpop.f32.mrf.mxu0
    %v7237 = vadd.f32 0.0, %v7236
    %7238 = vmatmul.bf16.gmra.mxu0 %v6890
    %v7239 = vpop.f32.mrf.mxu0
    %v7240 = vadd.f32 0.0, %v7239
    %v7241 = vpop.f32.mrf.mxu0
    %v7242 = vadd.f32 0.0, %v7241
    %7243 = vmatmul.bf16.gmra.mxu0 %v6891
    %v7244 = vpop.f32.mrf.mxu0
    %v7245 = vadd.f32 0.0, %v7244
    %v7246 = vpop.f32.mrf.mxu0
    %v7247 = vadd.f32 0.0, %v7246
    %7248 = vmatmul.bf16.gmra.mxu0 %v6892
    %v7249 = vpop.f32.mrf.mxu0
    %v7250 = vadd.f32 0.0, %v7249
    %v7251 = vpop.f32.mrf.mxu0
    %v7252 = vadd.f32 0.0, %v7251
    %7253 = vmatmul.bf16.gmra.mxu0 %v6893
    %v7254 = vpop.f32.mrf.mxu0
    %v7255 = vadd.f32 0.0, %v7254
    %v7256 = vpop.f32.mrf.mxu0
    %v7257 = vadd.f32 0.0, %v7256
    %7258 = vmatmul.bf16.gmra.mxu0 %v6894
    %v7259 = vpop.f32.mrf.mxu0
    %v7260 = vadd.f32 0.0, %v7259
    %v7261 = vpop.f32.mrf.mxu0
    %v7262 = vadd.f32 0.0, %v7261
    %7263 = vmatmul.bf16.gmra.mxu0 %v6895
    %v7264 = vpop.f32.mrf.mxu0
    %v7265 = vadd.f32 0.0, %v7264
    %v7266 = vpop.f32.mrf.mxu0
    %v7267 = vadd.f32 0.0, %v7266
    %7268 = vmatmul.bf16.gmra.mxu0 %v6896
    %v7269 = vpop.f32.mrf.mxu0
    %v7270 = vadd.f32 0.0, %v7269
    %v7271 = vpop.f32.mrf.mxu0
    %v7272 = vadd.f32 0.0, %v7271
    %7273 = vmatmul.bf16.gmra.mxu0 %v6897
    %v7274 = vpop.f32.mrf.mxu0
    %v7275 = vadd.f32 0.0, %v7274
    %v7276 = vpop.f32.mrf.mxu0
    %v7277 = vadd.f32 0.0, %v7276
    %7278 = vmatmul.bf16.gmra.mxu0 %v6898
    %v7279 = vpop.f32.mrf.mxu0
    %v7280 = vadd.f32 0.0, %v7279
    %v7281 = vpop.f32.mrf.mxu0
    %v7282 = vadd.f32 0.0, %v7281
    %7283 = vmatmul.bf16.gmra.mxu0 %v6899
    %v7284 = vpop.f32.mrf.mxu0
    %v7285 = vadd.f32 0.0, %v7284
    %v7286 = vpop.f32.mrf.mxu0
    %v7287 = vadd.f32 0.0, %v7286
    %7288 = vmatmul.bf16.gmra.mxu0 %v6900
    %v7289 = vpop.f32.mrf.mxu0
    %v7290 = vadd.f32 0.0, %v7289
    %v7291 = vpop.f32.mrf.mxu0
    %v7292 = vadd.f32 0.0, %v7291
    %7293 = vdwg.mxu0
    %v7294 = vpack.c.bf16 %v6977, %v6975
    %v7295 = vpack.c.bf16 %v6982, %v6980
    %v7296 = vpack.c.bf16 %v6987, %v6985
    %v7297 = vpack.c.bf16 %v6992, %v6990
    %v7298 = vpack.c.bf16 %v6997, %v6995
    %v7299 = vpack.c.bf16 %v7002, %v7000
    %v7300 = vpack.c.bf16 %v7007, %v7005
    %v7301 = vpack.c.bf16 %v7012, %v7010
    %v7302 = vpack.c.bf16 %v7017, %v7015
    %v7303 = vpack.c.bf16 %v7022, %v7020
    %v7304 = vpack.c.bf16 %v7027, %v7025
    %v7305 = vpack.c.bf16 %v7032, %v7030
    %v7306 = vpack.c.bf16 %v7037, %v7035
    %v7307 = vpack.c.bf16 %v7042, %v7040
    %v7308 = vpack.c.bf16 %v7047, %v7045
    %v7309 = vpack.c.bf16 %v7052, %v7050
    %v7310 = vpack.c.bf16 %v7057, %v7055
    %v7311 = vpack.c.bf16 %v7062, %v7060
    %v7312 = vpack.c.bf16 %v7067, %v7065
    %v7313 = vpack.c.bf16 %v7072, %v7070
    %v7314 = vpack.c.bf16 %v7077, %v7075
    %v7315 = vpack.c.bf16 %v7082, %v7080
    %v7316 = vpack.c.bf16 %v7087, %v7085
    %v7317 = vpack.c.bf16 %v7092, %v7090
    %v7318 = vpack.c.bf16 %v7097, %v7095
    %v7319 = vpack.c.bf16 %v7102, %v7100
    %v7320 = vpack.c.bf16 %v7107, %v7105
    %v7321 = vpack.c.bf16 %v7112, %v7110
    %v7322 = vpack.c.bf16 %v7117, %v7115
    %v7323 = vpack.c.bf16 %v7122, %v7120
    %v7324 = vpack.c.bf16 %v7127, %v7125
    %v7325 = vpack.c.bf16 %v7132, %v7130
    %v7326 = vpack.c.bf16 %v7137, %v7135
    %v7327 = vpack.c.bf16 %v7142, %v7140
    %v7328 = vpack.c.bf16 %v7147, %v7145
    %v7329 = vpack.c.bf16 %v7152, %v7150
    %v7330 = vpack.c.bf16 %v7157, %v7155
    %v7331 = vpack.c.bf16 %v7162, %v7160
    %v7332 = vpack.c.bf16 %v7167, %v7165
    %v7333 = vpack.c.bf16 %v7172, %v7170
    %v7334 = vpack.c.bf16 %v7177, %v7175
    %v7335 = vpack.c.bf16 %v7182, %v7180
    %v7336 = vpack.c.bf16 %v7187, %v7185
    %v7337 = vpack.c.bf16 %v7192, %v7190
    %v7338 = vpack.c.bf16 %v7197, %v7195
    %v7339 = vpack.c.bf16 %v7202, %v7200
    %v7340 = vpack.c.bf16 %v7207, %v7205
    %v7341 = vpack.c.bf16 %v7212, %v7210
    %v7342 = vpack.c.bf16 %v7217, %v7215
    %v7343 = vpack.c.bf16 %v7222, %v7220
    %v7344 = vpack.c.bf16 %v7227, %v7225
    %v7345 = vpack.c.bf16 %v7232, %v7230
    %v7346 = vpack.c.bf16 %v7237, %v7235
    %v7347 = vpack.c.bf16 %v7242, %v7240
    %v7348 = vpack.c.bf16 %v7247, %v7245
    %v7349 = vpack.c.bf16 %v7252, %v7250
    %v7350 = vpack.c.bf16 %v7257, %v7255
    %v7351 = vpack.c.bf16 %v7262, %v7260
    %v7352 = vpack.c.bf16 %v7267, %v7265
    %v7353 = vpack.c.bf16 %v7272, %v7270
    %v7354 = vpack.c.bf16 %v7277, %v7275
    %v7355 = vpack.c.bf16 %v7282, %v7280
    %v7356 = vpack.c.bf16 %v7287, %v7285
    %v7357 = vpack.c.bf16 %v7292, %v7290
    %7358 = vmatpush.bf16.msra.mxu0 %v7301
    %7359 = vmatpush.bf16.msra.mxu0 %v7300
    %7360 = vmatpush.bf16.msra.mxu0 %v7299
    %7361 = vmatpush.bf16.msra.mxu0 %v7298
    %7362 = vmatpush.bf16.msra.mxu0 %v7297
    %7363 = vmatpush.bf16.msra.mxu0 %v7296
    %7364 = vmatpush.bf16.msra.mxu0 %v7295
    %7365 = vmatpush.bf16.msra.mxu0 %v7294
    %7366 = vmatmul.bf16.gmra.mxu0 %v3053
    %v7367 = vpop.f32.mrf.mxu0
    %v7368 = vadd.f32 0.0, %v7367
    %v7369 = vpop.f32.mrf.mxu0
    %v7370 = vadd.f32 0.0, %v7369
    %7371 = vmatmul.bf16.gmra.mxu0 %v3061
    %v7372 = vpop.f32.mrf.mxu0
    %v7373 = vadd.f32 0.0, %v7372
    %v7374 = vpop.f32.mrf.mxu0
    %v7375 = vadd.f32 0.0, %v7374
    %7376 = vmatmul.bf16.gmra.mxu0 %v3069
    %v7377 = vpop.f32.mrf.mxu0
    %v7378 = vadd.f32 0.0, %v7377
    %v7379 = vpop.f32.mrf.mxu0
    %v7380 = vadd.f32 0.0, %v7379
    %7381 = vmatmul.bf16.gmra.mxu0 %v3077
    %v7382 = vpop.f32.mrf.mxu0
    %v7383 = vadd.f32 0.0, %v7382
    %v7384 = vpop.f32.mrf.mxu0
    %v7385 = vadd.f32 0.0, %v7384
    %7386 = vmatmul.bf16.gmra.mxu0 %v3085
    %v7387 = vpop.f32.mrf.mxu0
    %v7388 = vadd.f32 0.0, %v7387
    %v7389 = vpop.f32.mrf.mxu0
    %v7390 = vadd.f32 0.0, %v7389
    %7391 = vmatmul.bf16.gmra.mxu0 %v3093
    %v7392 = vpop.f32.mrf.mxu0
    %v7393 = vadd.f32 0.0, %v7392
    %v7394 = vpop.f32.mrf.mxu0
    %v7395 = vadd.f32 0.0, %v7394
    %7396 = vmatmul.bf16.gmra.mxu0 %v3101
    %v7397 = vpop.f32.mrf.mxu0
    %v7398 = vadd.f32 0.0, %v7397
    %v7399 = vpop.f32.mrf.mxu0
    %v7400 = vadd.f32 0.0, %v7399
    %7401 = vmatmul.bf16.gmra.mxu0 %v3109
    %v7402 = vpop.f32.mrf.mxu0
    %v7403 = vadd.f32 0.0, %v7402
    %v7404 = vpop.f32.mrf.mxu0
    %v7405 = vadd.f32 0.0, %v7404
    %7406 = vmatmul.bf16.gmra.mxu0 %v3117
    %v7407 = vpop.f32.mrf.mxu0
    %v7408 = vadd.f32 0.0, %v7407
    %v7409 = vpop.f32.mrf.mxu0
    %v7410 = vadd.f32 0.0, %v7409
    %7411 = vmatmul.bf16.gmra.mxu0 %v3125
    %v7412 = vpop.f32.mrf.mxu0
    %v7413 = vadd.f32 0.0, %v7412
    %v7414 = vpop.f32.mrf.mxu0
    %v7415 = vadd.f32 0.0, %v7414
    %7416 = vmatmul.bf16.gmra.mxu0 %v3133
    %v7417 = vpop.f32.mrf.mxu0
    %v7418 = vadd.f32 0.0, %v7417
    %v7419 = vpop.f32.mrf.mxu0
    %v7420 = vadd.f32 0.0, %v7419
    %7421 = vmatmul.bf16.gmra.mxu0 %v3141
    %v7422 = vpop.f32.mrf.mxu0
    %v7423 = vadd.f32 0.0, %v7422
    %v7424 = vpop.f32.mrf.mxu0
    %v7425 = vadd.f32 0.0, %v7424
    %7426 = vmatmul.bf16.gmra.mxu0 %v3149
    %v7427 = vpop.f32.mrf.mxu0
    %v7428 = vadd.f32 0.0, %v7427
    %v7429 = vpop.f32.mrf.mxu0
    %v7430 = vadd.f32 0.0, %v7429
    %7431 = vmatmul.bf16.gmra.mxu0 %v3157
    %v7432 = vpop.f32.mrf.mxu0
    %v7433 = vadd.f32 0.0, %v7432
    %v7434 = vpop.f32.mrf.mxu0
    %v7435 = vadd.f32 0.0, %v7434
    %7436 = vmatmul.bf16.gmra.mxu0 %v3165
    %v7437 = vpop.f32.mrf.mxu0
    %v7438 = vadd.f32 0.0, %v7437
    %v7439 = vpop.f32.mrf.mxu0
    %v7440 = vadd.f32 0.0, %v7439
    %7441 = vmatmul.bf16.gmra.mxu0 %v3173
    %v7442 = vpop.f32.mrf.mxu0
    %v7443 = vadd.f32 0.0, %v7442
    %v7444 = vpop.f32.mrf.mxu0
    %v7445 = vadd.f32 0.0, %v7444
    %7446 = vmatmul.bf16.gmra.mxu0 %v3181
    %v7447 = vpop.f32.mrf.mxu0
    %v7448 = vadd.f32 0.0, %v7447
    %v7449 = vpop.f32.mrf.mxu0
    %v7450 = vadd.f32 0.0, %v7449
    %7451 = vmatmul.bf16.gmra.mxu0 %v3189
    %v7452 = vpop.f32.mrf.mxu0
    %v7453 = vadd.f32 0.0, %v7452
    %v7454 = vpop.f32.mrf.mxu0
    %v7455 = vadd.f32 0.0, %v7454
    %7456 = vmatmul.bf16.gmra.mxu0 %v3197
    %v7457 = vpop.f32.mrf.mxu0
    %v7458 = vadd.f32 0.0, %v7457
    %v7459 = vpop.f32.mrf.mxu0
    %v7460 = vadd.f32 0.0, %v7459
    %7461 = vmatmul.bf16.gmra.mxu0 %v3205
    %v7462 = vpop.f32.mrf.mxu0
    %v7463 = vadd.f32 0.0, %v7462
    %v7464 = vpop.f32.mrf.mxu0
    %v7465 = vadd.f32 0.0, %v7464
    %7466 = vmatmul.bf16.gmra.mxu0 %v3213
    %v7467 = vpop.f32.mrf.mxu0
    %v7468 = vadd.f32 0.0, %v7467
    %v7469 = vpop.f32.mrf.mxu0
    %v7470 = vadd.f32 0.0, %v7469
    %7471 = vmatmul.bf16.gmra.mxu0 %v3221
    %v7472 = vpop.f32.mrf.mxu0
    %v7473 = vadd.f32 0.0, %v7472
    %v7474 = vpop.f32.mrf.mxu0
    %v7475 = vadd.f32 0.0, %v7474
    %7476 = vmatmul.bf16.gmra.mxu0 %v3229
    %v7477 = vpop.f32.mrf.mxu0
    %v7478 = vadd.f32 0.0, %v7477
    %v7479 = vpop.f32.mrf.mxu0
    %v7480 = vadd.f32 0.0, %v7479
    %7481 = vmatmul.bf16.gmra.mxu0 %v3237
    %v7482 = vpop.f32.mrf.mxu0
    %v7483 = vadd.f32 0.0, %v7482
    %v7484 = vpop.f32.mrf.mxu0
    %v7485 = vadd.f32 0.0, %v7484
    %7486 = vmatmul.bf16.gmra.mxu0 %v3245
    %v7487 = vpop.f32.mrf.mxu0
    %v7488 = vadd.f32 0.0, %v7487
    %v7489 = vpop.f32.mrf.mxu0
    %v7490 = vadd.f32 0.0, %v7489
    %7491 = vmatmul.bf16.gmra.mxu0 %v3253
    %v7492 = vpop.f32.mrf.mxu0
    %v7493 = vadd.f32 0.0, %v7492
    %v7494 = vpop.f32.mrf.mxu0
    %v7495 = vadd.f32 0.0, %v7494
    %7496 = vmatmul.bf16.gmra.mxu0 %v3261
    %v7497 = vpop.f32.mrf.mxu0
    %v7498 = vadd.f32 0.0, %v7497
    %v7499 = vpop.f32.mrf.mxu0
    %v7500 = vadd.f32 0.0, %v7499
    %7501 = vmatmul.bf16.gmra.mxu0 %v3269
    %v7502 = vpop.f32.mrf.mxu0
    %v7503 = vadd.f32 0.0, %v7502
    %v7504 = vpop.f32.mrf.mxu0
    %v7505 = vadd.f32 0.0, %v7504
    %7506 = vmatmul.bf16.gmra.mxu0 %v3277
    %v7507 = vpop.f32.mrf.mxu0
    %v7508 = vadd.f32 0.0, %v7507
    %v7509 = vpop.f32.mrf.mxu0
    %v7510 = vadd.f32 0.0, %v7509
    %7511 = vmatmul.bf16.gmra.mxu0 %v3285
    %v7512 = vpop.f32.mrf.mxu0
    %v7513 = vadd.f32 0.0, %v7512
    %v7514 = vpop.f32.mrf.mxu0
    %v7515 = vadd.f32 0.0, %v7514
    %7516 = vmatmul.bf16.gmra.mxu0 %v3293
    %v7517 = vpop.f32.mrf.mxu0
    %v7518 = vadd.f32 0.0, %v7517
    %v7519 = vpop.f32.mrf.mxu0
    %v7520 = vadd.f32 0.0, %v7519
    %7521 = vmatmul.bf16.gmra.mxu0 %v3301
    %v7522 = vpop.f32.mrf.mxu0
    %v7523 = vadd.f32 0.0, %v7522
    %v7524 = vpop.f32.mrf.mxu0
    %v7525 = vadd.f32 0.0, %v7524
    %7526 = vmatmul.bf16.gmra.mxu0 %v3309
    %v7527 = vpop.f32.mrf.mxu0
    %v7528 = vadd.f32 0.0, %v7527
    %v7529 = vpop.f32.mrf.mxu0
    %v7530 = vadd.f32 0.0, %v7529
    %7531 = vmatmul.bf16.gmra.mxu0 %v3317
    %v7532 = vpop.f32.mrf.mxu0
    %v7533 = vadd.f32 0.0, %v7532
    %v7534 = vpop.f32.mrf.mxu0
    %v7535 = vadd.f32 0.0, %v7534
    %7536 = vmatmul.bf16.gmra.mxu0 %v3325
    %v7537 = vpop.f32.mrf.mxu0
    %v7538 = vadd.f32 0.0, %v7537
    %v7539 = vpop.f32.mrf.mxu0
    %v7540 = vadd.f32 0.0, %v7539
    %7541 = vmatmul.bf16.gmra.mxu0 %v3333
    %v7542 = vpop.f32.mrf.mxu0
    %v7543 = vadd.f32 0.0, %v7542
    %v7544 = vpop.f32.mrf.mxu0
    %v7545 = vadd.f32 0.0, %v7544
    %7546 = vmatmul.bf16.gmra.mxu0 %v3341
    %v7547 = vpop.f32.mrf.mxu0
    %v7548 = vadd.f32 0.0, %v7547
    %v7549 = vpop.f32.mrf.mxu0
    %v7550 = vadd.f32 0.0, %v7549
    %7551 = vmatmul.bf16.gmra.mxu0 %v3349
    %v7552 = vpop.f32.mrf.mxu0
    %v7553 = vadd.f32 0.0, %v7552
    %v7554 = vpop.f32.mrf.mxu0
    %v7555 = vadd.f32 0.0, %v7554
    %7556 = vmatmul.bf16.gmra.mxu0 %v3357
    %v7557 = vpop.f32.mrf.mxu0
    %v7558 = vadd.f32 0.0, %v7557
    %v7559 = vpop.f32.mrf.mxu0
    %v7560 = vadd.f32 0.0, %v7559
    %7561 = vmatmul.bf16.gmra.mxu0 %v3365
    %v7562 = vpop.f32.mrf.mxu0
    %v7563 = vadd.f32 0.0, %v7562
    %v7564 = vpop.f32.mrf.mxu0
    %v7565 = vadd.f32 0.0, %v7564
    %7566 = vmatmul.bf16.gmra.mxu0 %v3373
    %v7567 = vpop.f32.mrf.mxu0
    %v7568 = vadd.f32 0.0, %v7567
    %v7569 = vpop.f32.mrf.mxu0
    %v7570 = vadd.f32 0.0, %v7569
    %7571 = vmatmul.bf16.gmra.mxu0 %v3381
    %v7572 = vpop.f32.mrf.mxu0
    %v7573 = vadd.f32 0.0, %v7572
    %v7574 = vpop.f32.mrf.mxu0
    %v7575 = vadd.f32 0.0, %v7574
    %7576 = vmatmul.bf16.gmra.mxu0 %v3389
    %v7577 = vpop.f32.mrf.mxu0
    %v7578 = vadd.f32 0.0, %v7577
    %v7579 = vpop.f32.mrf.mxu0
    %v7580 = vadd.f32 0.0, %v7579
    %7581 = vmatmul.bf16.gmra.mxu0 %v3397
    %v7582 = vpop.f32.mrf.mxu0
    %v7583 = vadd.f32 0.0, %v7582
    %v7584 = vpop.f32.mrf.mxu0
    %v7585 = vadd.f32 0.0, %v7584
    %7586 = vmatmul.bf16.gmra.mxu0 %v3405
    %v7587 = vpop.f32.mrf.mxu0
    %v7588 = vadd.f32 0.0, %v7587
    %v7589 = vpop.f32.mrf.mxu0
    %v7590 = vadd.f32 0.0, %v7589
    %7591 = vmatmul.bf16.gmra.mxu0 %v3413
    %v7592 = vpop.f32.mrf.mxu0
    %v7593 = vadd.f32 0.0, %v7592
    %v7594 = vpop.f32.mrf.mxu0
    %v7595 = vadd.f32 0.0, %v7594
    %7596 = vmatmul.bf16.gmra.mxu0 %v3421
    %v7597 = vpop.f32.mrf.mxu0
    %v7598 = vadd.f32 0.0, %v7597
    %v7599 = vpop.f32.mrf.mxu0
    %v7600 = vadd.f32 0.0, %v7599
    %7601 = vmatmul.bf16.gmra.mxu0 %v3429
    %v7602 = vpop.f32.mrf.mxu0
    %v7603 = vadd.f32 0.0, %v7602
    %v7604 = vpop.f32.mrf.mxu0
    %v7605 = vadd.f32 0.0, %v7604
    %7606 = vmatmul.bf16.gmra.mxu0 %v3437
    %v7607 = vpop.f32.mrf.mxu0
    %v7608 = vadd.f32 0.0, %v7607
    %v7609 = vpop.f32.mrf.mxu0
    %v7610 = vadd.f32 0.0, %v7609
    %7611 = vmatmul.bf16.gmra.mxu0 %v3445
    %v7612 = vpop.f32.mrf.mxu0
    %v7613 = vadd.f32 0.0, %v7612
    %v7614 = vpop.f32.mrf.mxu0
    %v7615 = vadd.f32 0.0, %v7614
    %7616 = vmatmul.bf16.gmra.mxu0 %v3453
    %v7617 = vpop.f32.mrf.mxu0
    %v7618 = vadd.f32 0.0, %v7617
    %v7619 = vpop.f32.mrf.mxu0
    %v7620 = vadd.f32 0.0, %v7619
    %7621 = vmatmul.bf16.gmra.mxu0 %v3461
    %v7622 = vpop.f32.mrf.mxu0
    %v7623 = vadd.f32 0.0, %v7622
    %v7624 = vpop.f32.mrf.mxu0
    %v7625 = vadd.f32 0.0, %v7624
    %7626 = vmatmul.bf16.gmra.mxu0 %v3469
    %v7627 = vpop.f32.mrf.mxu0
    %v7628 = vadd.f32 0.0, %v7627
    %v7629 = vpop.f32.mrf.mxu0
    %v7630 = vadd.f32 0.0, %v7629
    %7631 = vmatmul.bf16.gmra.mxu0 %v3477
    %v7632 = vpop.f32.mrf.mxu0
    %v7633 = vadd.f32 0.0, %v7632
    %v7634 = vpop.f32.mrf.mxu0
    %v7635 = vadd.f32 0.0, %v7634
    %7636 = vmatmul.bf16.gmra.mxu0 %v3485
    %v7637 = vpop.f32.mrf.mxu0
    %v7638 = vadd.f32 0.0, %v7637
    %v7639 = vpop.f32.mrf.mxu0
    %v7640 = vadd.f32 0.0, %v7639
    %7641 = vmatmul.bf16.gmra.mxu0 %v3493
    %v7642 = vpop.f32.mrf.mxu0
    %v7643 = vadd.f32 0.0, %v7642
    %v7644 = vpop.f32.mrf.mxu0
    %v7645 = vadd.f32 0.0, %v7644
    %7646 = vmatmul.bf16.gmra.mxu0 %v3501
    %v7647 = vpop.f32.mrf.mxu0
    %v7648 = vadd.f32 0.0, %v7647
    %v7649 = vpop.f32.mrf.mxu0
    %v7650 = vadd.f32 0.0, %v7649
    %7651 = vmatmul.bf16.gmra.mxu0 %v3509
    %v7652 = vpop.f32.mrf.mxu0
    %v7653 = vadd.f32 0.0, %v7652
    %v7654 = vpop.f32.mrf.mxu0
    %v7655 = vadd.f32 0.0, %v7654
    %7656 = vmatmul.bf16.gmra.mxu0 %v3517
    %v7657 = vpop.f32.mrf.mxu0
    %v7658 = vadd.f32 0.0, %v7657
    %v7659 = vpop.f32.mrf.mxu0
    %v7660 = vadd.f32 0.0, %v7659
    %7661 = vmatmul.bf16.gmra.mxu0 %v3525
    %v7662 = vpop.f32.mrf.mxu0
    %v7663 = vadd.f32 0.0, %v7662
    %v7664 = vpop.f32.mrf.mxu0
    %v7665 = vadd.f32 0.0, %v7664
    %7666 = vmatmul.bf16.gmra.mxu0 %v3533
    %v7667 = vpop.f32.mrf.mxu0
    %v7668 = vadd.f32 0.0, %v7667
    %v7669 = vpop.f32.mrf.mxu0
    %v7670 = vadd.f32 0.0, %v7669
    %7671 = vmatmul.bf16.gmra.mxu0 %v3541
    %v7672 = vpop.f32.mrf.mxu0
    %v7673 = vadd.f32 0.0, %v7672
    %v7674 = vpop.f32.mrf.mxu0
    %v7675 = vadd.f32 0.0, %v7674
    %7676 = vmatmul.bf16.gmra.mxu0 %v3549
    %v7677 = vpop.f32.mrf.mxu0
    %v7678 = vadd.f32 0.0, %v7677
    %v7679 = vpop.f32.mrf.mxu0
    %v7680 = vadd.f32 0.0, %v7679
    %7681 = vmatmul.bf16.gmra.mxu0 %v3557
    %v7682 = vpop.f32.mrf.mxu0
    %v7683 = vadd.f32 0.0, %v7682
    %v7684 = vpop.f32.mrf.mxu0
    %v7685 = vadd.f32 0.0, %v7684
    %7686 = vdwg.mxu0
    %7687 = vmatpush.bf16.msra.mxu0 %v7309
    %7688 = vmatpush.bf16.msra.mxu0 %v7308
    %7689 = vmatpush.bf16.msra.mxu0 %v7307
    %7690 = vmatpush.bf16.msra.mxu0 %v7306
    %7691 = vmatpush.bf16.msra.mxu0 %v7305
    %7692 = vmatpush.bf16.msra.mxu0 %v7304
    %7693 = vmatpush.bf16.msra.mxu0 %v7303
    %7694 = vmatpush.bf16.msra.mxu0 %v7302
    %7695 = vmatmul.bf16.gmra.mxu0 %v3054
    %v7696 = vpop.f32.mrf.mxu0
    %v7697 = vadd.f32 %v7368, %v7696
    %v7698 = vpop.f32.mrf.mxu0
    %v7699 = vadd.f32 %v7370, %v7698
    %7700 = vmatmul.bf16.gmra.mxu0 %v3062
    %v7701 = vpop.f32.mrf.mxu0
    %v7702 = vadd.f32 %v7373, %v7701
    %v7703 = vpop.f32.mrf.mxu0
    %v7704 = vadd.f32 %v7375, %v7703
    %7705 = vmatmul.bf16.gmra.mxu0 %v3070
    %v7706 = vpop.f32.mrf.mxu0
    %v7707 = vadd.f32 %v7378, %v7706
    %v7708 = vpop.f32.mrf.mxu0
    %v7709 = vadd.f32 %v7380, %v7708
    %7710 = vmatmul.bf16.gmra.mxu0 %v3078
    %v7711 = vpop.f32.mrf.mxu0
    %v7712 = vadd.f32 %v7383, %v7711
    %v7713 = vpop.f32.mrf.mxu0
    %v7714 = vadd.f32 %v7385, %v7713
    %7715 = vmatmul.bf16.gmra.mxu0 %v3086
    %v7716 = vpop.f32.mrf.mxu0
    %v7717 = vadd.f32 %v7388, %v7716
    %v7718 = vpop.f32.mrf.mxu0
    %v7719 = vadd.f32 %v7390, %v7718
    %7720 = vmatmul.bf16.gmra.mxu0 %v3094
    %v7721 = vpop.f32.mrf.mxu0
    %v7722 = vadd.f32 %v7393, %v7721
    %v7723 = vpop.f32.mrf.mxu0
    %v7724 = vadd.f32 %v7395, %v7723
    %7725 = vmatmul.bf16.gmra.mxu0 %v3102
    %v7726 = vpop.f32.mrf.mxu0
    %v7727 = vadd.f32 %v7398, %v7726
    %v7728 = vpop.f32.mrf.mxu0
    %v7729 = vadd.f32 %v7400, %v7728
    %7730 = vmatmul.bf16.gmra.mxu0 %v3110
    %v7731 = vpop.f32.mrf.mxu0
    %v7732 = vadd.f32 %v7403, %v7731
    %v7733 = vpop.f32.mrf.mxu0
    %v7734 = vadd.f32 %v7405, %v7733
    %7735 = vmatmul.bf16.gmra.mxu0 %v3118
    %v7736 = vpop.f32.mrf.mxu0
    %v7737 = vadd.f32 %v7408, %v7736
    %v7738 = vpop.f32.mrf.mxu0
    %v7739 = vadd.f32 %v7410, %v7738
    %7740 = vmatmul.bf16.gmra.mxu0 %v3126
    %v7741 = vpop.f32.mrf.mxu0
    %v7742 = vadd.f32 %v7413, %v7741
    %v7743 = vpop.f32.mrf.mxu0
    %v7744 = vadd.f32 %v7415, %v7743
    %7745 = vmatmul.bf16.gmra.mxu0 %v3134
    %v7746 = vpop.f32.mrf.mxu0
    %v7747 = vadd.f32 %v7418, %v7746
    %v7748 = vpop.f32.mrf.mxu0
    %v7749 = vadd.f32 %v7420, %v7748
    %7750 = vmatmul.bf16.gmra.mxu0 %v3142
    %v7751 = vpop.f32.mrf.mxu0
    %v7752 = vadd.f32 %v7423, %v7751
    %v7753 = vpop.f32.mrf.mxu0
    %v7754 = vadd.f32 %v7425, %v7753
    %7755 = vmatmul.bf16.gmra.mxu0 %v3150
    %v7756 = vpop.f32.mrf.mxu0
    %v7757 = vadd.f32 %v7428, %v7756
    %v7758 = vpop.f32.mrf.mxu0
    %v7759 = vadd.f32 %v7430, %v7758
    %7760 = vmatmul.bf16.gmra.mxu0 %v3158
    %v7761 = vpop.f32.mrf.mxu0
    %v7762 = vadd.f32 %v7433, %v7761
    %v7763 = vpop.f32.mrf.mxu0
    %v7764 = vadd.f32 %v7435, %v7763
    %7765 = vmatmul.bf16.gmra.mxu0 %v3166
    %v7766 = vpop.f32.mrf.mxu0
    %v7767 = vadd.f32 %v7438, %v7766
    %v7768 = vpop.f32.mrf.mxu0
    %v7769 = vadd.f32 %v7440, %v7768
    %7770 = vmatmul.bf16.gmra.mxu0 %v3174
    %v7771 = vpop.f32.mrf.mxu0
    %v7772 = vadd.f32 %v7443, %v7771
    %v7773 = vpop.f32.mrf.mxu0
    %v7774 = vadd.f32 %v7445, %v7773
    %7775 = vmatmul.bf16.gmra.mxu0 %v3182
    %v7776 = vpop.f32.mrf.mxu0
    %v7777 = vadd.f32 %v7448, %v7776
    %v7778 = vpop.f32.mrf.mxu0
    %v7779 = vadd.f32 %v7450, %v7778
    %7780 = vmatmul.bf16.gmra.mxu0 %v3190
    %v7781 = vpop.f32.mrf.mxu0
    %v7782 = vadd.f32 %v7453, %v7781
    %v7783 = vpop.f32.mrf.mxu0
    %v7784 = vadd.f32 %v7455, %v7783
    %7785 = vmatmul.bf16.gmra.mxu0 %v3198
    %v7786 = vpop.f32.mrf.mxu0
    %v7787 = vadd.f32 %v7458, %v7786
    %v7788 = vpop.f32.mrf.mxu0
    %v7789 = vadd.f32 %v7460, %v7788
    %7790 = vmatmul.bf16.gmra.mxu0 %v3206
    %v7791 = vpop.f32.mrf.mxu0
    %v7792 = vadd.f32 %v7463, %v7791
    %v7793 = vpop.f32.mrf.mxu0
    %v7794 = vadd.f32 %v7465, %v7793
    %7795 = vmatmul.bf16.gmra.mxu0 %v3214
    %v7796 = vpop.f32.mrf.mxu0
    %v7797 = vadd.f32 %v7468, %v7796
    %v7798 = vpop.f32.mrf.mxu0
    %v7799 = vadd.f32 %v7470, %v7798
    %7800 = vmatmul.bf16.gmra.mxu0 %v3222
    %v7801 = vpop.f32.mrf.mxu0
    %v7802 = vadd.f32 %v7473, %v7801
    %v7803 = vpop.f32.mrf.mxu0
    %v7804 = vadd.f32 %v7475, %v7803
    %7805 = vmatmul.bf16.gmra.mxu0 %v3230
    %v7806 = vpop.f32.mrf.mxu0
    %v7807 = vadd.f32 %v7478, %v7806
    %v7808 = vpop.f32.mrf.mxu0
    %v7809 = vadd.f32 %v7480, %v7808
    %7810 = vmatmul.bf16.gmra.mxu0 %v3238
    %v7811 = vpop.f32.mrf.mxu0
    %v7812 = vadd.f32 %v7483, %v7811
    %v7813 = vpop.f32.mrf.mxu0
    %v7814 = vadd.f32 %v7485, %v7813
    %7815 = vmatmul.bf16.gmra.mxu0 %v3246
    %v7816 = vpop.f32.mrf.mxu0
    %v7817 = vadd.f32 %v7488, %v7816
    %v7818 = vpop.f32.mrf.mxu0
    %v7819 = vadd.f32 %v7490, %v7818
    %7820 = vmatmul.bf16.gmra.mxu0 %v3254
    %v7821 = vpop.f32.mrf.mxu0
    %v7822 = vadd.f32 %v7493, %v7821
    %v7823 = vpop.f32.mrf.mxu0
    %v7824 = vadd.f32 %v7495, %v7823
    %7825 = vmatmul.bf16.gmra.mxu0 %v3262
    %v7826 = vpop.f32.mrf.mxu0
    %v7827 = vadd.f32 %v7498, %v7826
    %v7828 = vpop.f32.mrf.mxu0
    %v7829 = vadd.f32 %v7500, %v7828
    %7830 = vmatmul.bf16.gmra.mxu0 %v3270
    %v7831 = vpop.f32.mrf.mxu0
    %v7832 = vadd.f32 %v7503, %v7831
    %v7833 = vpop.f32.mrf.mxu0
    %v7834 = vadd.f32 %v7505, %v7833
    %7835 = vmatmul.bf16.gmra.mxu0 %v3278
    %v7836 = vpop.f32.mrf.mxu0
    %v7837 = vadd.f32 %v7508, %v7836
    %v7838 = vpop.f32.mrf.mxu0
    %v7839 = vadd.f32 %v7510, %v7838
    %7840 = vmatmul.bf16.gmra.mxu0 %v3286
    %v7841 = vpop.f32.mrf.mxu0
    %v7842 = vadd.f32 %v7513, %v7841
    %v7843 = vpop.f32.mrf.mxu0
    %v7844 = vadd.f32 %v7515, %v7843
    %7845 = vmatmul.bf16.gmra.mxu0 %v3294
    %v7846 = vpop.f32.mrf.mxu0
    %v7847 = vadd.f32 %v7518, %v7846
    %v7848 = vpop.f32.mrf.mxu0
    %v7849 = vadd.f32 %v7520, %v7848
    %7850 = vmatmul.bf16.gmra.mxu0 %v3302
    %v7851 = vpop.f32.mrf.mxu0
    %v7852 = vadd.f32 %v7523, %v7851
    %v7853 = vpop.f32.mrf.mxu0
    %v7854 = vadd.f32 %v7525, %v7853
    %7855 = vmatmul.bf16.gmra.mxu0 %v3310
    %v7856 = vpop.f32.mrf.mxu0
    %v7857 = vadd.f32 %v7528, %v7856
    %v7858 = vpop.f32.mrf.mxu0
    %v7859 = vadd.f32 %v7530, %v7858
    %7860 = vmatmul.bf16.gmra.mxu0 %v3318
    %v7861 = vpop.f32.mrf.mxu0
    %v7862 = vadd.f32 %v7533, %v7861
    %v7863 = vpop.f32.mrf.mxu0
    %v7864 = vadd.f32 %v7535, %v7863
    %7865 = vmatmul.bf16.gmra.mxu0 %v3326
    %v7866 = vpop.f32.mrf.mxu0
    %v7867 = vadd.f32 %v7538, %v7866
    %v7868 = vpop.f32.mrf.mxu0
    %v7869 = vadd.f32 %v7540, %v7868
    %7870 = vmatmul.bf16.gmra.mxu0 %v3334
    %v7871 = vpop.f32.mrf.mxu0
    %v7872 = vadd.f32 %v7543, %v7871
    %v7873 = vpop.f32.mrf.mxu0
    %v7874 = vadd.f32 %v7545, %v7873
    %7875 = vmatmul.bf16.gmra.mxu0 %v3342
    %v7876 = vpop.f32.mrf.mxu0
    %v7877 = vadd.f32 %v7548, %v7876
    %v7878 = vpop.f32.mrf.mxu0
    %v7879 = vadd.f32 %v7550, %v7878
    %7880 = vmatmul.bf16.gmra.mxu0 %v3350
    %v7881 = vpop.f32.mrf.mxu0
    %v7882 = vadd.f32 %v7553, %v7881
    %v7883 = vpop.f32.mrf.mxu0
    %v7884 = vadd.f32 %v7555, %v7883
    %7885 = vmatmul.bf16.gmra.mxu0 %v3358
    %v7886 = vpop.f32.mrf.mxu0
    %v7887 = vadd.f32 %v7558, %v7886
    %v7888 = vpop.f32.mrf.mxu0
    %v7889 = vadd.f32 %v7560, %v7888
    %7890 = vmatmul.bf16.gmra.mxu0 %v3366
    %v7891 = vpop.f32.mrf.mxu0
    %v7892 = vadd.f32 %v7563, %v7891
    %v7893 = vpop.f32.mrf.mxu0
    %v7894 = vadd.f32 %v7565, %v7893
    %7895 = vmatmul.bf16.gmra.mxu0 %v3374
    %v7896 = vpop.f32.mrf.mxu0
    %v7897 = vadd.f32 %v7568, %v7896
    %v7898 = vpop.f32.mrf.mxu0
    %v7899 = vadd.f32 %v7570, %v7898
    %7900 = vmatmul.bf16.gmra.mxu0 %v3382
    %v7901 = vpop.f32.mrf.mxu0
    %v7902 = vadd.f32 %v7573, %v7901
    %v7903 = vpop.f32.mrf.mxu0
    %v7904 = vadd.f32 %v7575, %v7903
    %7905 = vmatmul.bf16.gmra.mxu0 %v3390
    %v7906 = vpop.f32.mrf.mxu0
    %v7907 = vadd.f32 %v7578, %v7906
    %v7908 = vpop.f32.mrf.mxu0
    %v7909 = vadd.f32 %v7580, %v7908
    %7910 = vmatmul.bf16.gmra.mxu0 %v3398
    %v7911 = vpop.f32.mrf.mxu0
    %v7912 = vadd.f32 %v7583, %v7911
    %v7913 = vpop.f32.mrf.mxu0
    %v7914 = vadd.f32 %v7585, %v7913
    %7915 = vmatmul.bf16.gmra.mxu0 %v3406
    %v7916 = vpop.f32.mrf.mxu0
    %v7917 = vadd.f32 %v7588, %v7916
    %v7918 = vpop.f32.mrf.mxu0
    %v7919 = vadd.f32 %v7590, %v7918
    %7920 = vmatmul.bf16.gmra.mxu0 %v3414
    %v7921 = vpop.f32.mrf.mxu0
    %v7922 = vadd.f32 %v7593, %v7921
    %v7923 = vpop.f32.mrf.mxu0
    %v7924 = vadd.f32 %v7595, %v7923
    %7925 = vmatmul.bf16.gmra.mxu0 %v3422
    %v7926 = vpop.f32.mrf.mxu0
    %v7927 = vadd.f32 %v7598, %v7926
    %v7928 = vpop.f32.mrf.mxu0
    %v7929 = vadd.f32 %v7600, %v7928
    %7930 = vmatmul.bf16.gmra.mxu0 %v3430
    %v7931 = vpop.f32.mrf.mxu0
    %v7932 = vadd.f32 %v7603, %v7931
    %v7933 = vpop.f32.mrf.mxu0
    %v7934 = vadd.f32 %v7605, %v7933
    %7935 = vmatmul.bf16.gmra.mxu0 %v3438
    %v7936 = vpop.f32.mrf.mxu0
    %v7937 = vadd.f32 %v7608, %v7936
    %v7938 = vpop.f32.mrf.mxu0
    %v7939 = vadd.f32 %v7610, %v7938
    %7940 = vmatmul.bf16.gmra.mxu0 %v3446
    %v7941 = vpop.f32.mrf.mxu0
    %v7942 = vadd.f32 %v7613, %v7941
    %v7943 = vpop.f32.mrf.mxu0
    %v7944 = vadd.f32 %v7615, %v7943
    %7945 = vmatmul.bf16.gmra.mxu0 %v3454
    %v7946 = vpop.f32.mrf.mxu0
    %v7947 = vadd.f32 %v7618, %v7946
    %v7948 = vpop.f32.mrf.mxu0
    %v7949 = vadd.f32 %v7620, %v7948
    %7950 = vmatmul.bf16.gmra.mxu0 %v3462
    %v7951 = vpop.f32.mrf.mxu0
    %v7952 = vadd.f32 %v7623, %v7951
    %v7953 = vpop.f32.mrf.mxu0
    %v7954 = vadd.f32 %v7625, %v7953
    %7955 = vmatmul.bf16.gmra.mxu0 %v3470
    %v7956 = vpop.f32.mrf.mxu0
    %v7957 = vadd.f32 %v7628, %v7956
    %v7958 = vpop.f32.mrf.mxu0
    %v7959 = vadd.f32 %v7630, %v7958
    %7960 = vmatmul.bf16.gmra.mxu0 %v3478
    %v7961 = vpop.f32.mrf.mxu0
    %v7962 = vadd.f32 %v7633, %v7961
    %v7963 = vpop.f32.mrf.mxu0
    %v7964 = vadd.f32 %v7635, %v7963
    %7965 = vmatmul.bf16.gmra.mxu0 %v3486
    %v7966 = vpop.f32.mrf.mxu0
    %v7967 = vadd.f32 %v7638, %v7966
    %v7968 = vpop.f32.mrf.mxu0
    %v7969 = vadd.f32 %v7640, %v7968
    %7970 = vmatmul.bf16.gmra.mxu0 %v3494
    %v7971 = vpop.f32.mrf.mxu0
    %v7972 = vadd.f32 %v7643, %v7971
    %v7973 = vpop.f32.mrf.mxu0
    %v7974 = vadd.f32 %v7645, %v7973
    %7975 = vmatmul.bf16.gmra.mxu0 %v3502
    %v7976 = vpop.f32.mrf.mxu0
    %v7977 = vadd.f32 %v7648, %v7976
    %v7978 = vpop.f32.mrf.mxu0
    %v7979 = vadd.f32 %v7650, %v7978
    %7980 = vmatmul.bf16.gmra.mxu0 %v3510
    %v7981 = vpop.f32.mrf.mxu0
    %v7982 = vadd.f32 %v7653, %v7981
    %v7983 = vpop.f32.mrf.mxu0
    %v7984 = vadd.f32 %v7655, %v7983
    %7985 = vmatmul.bf16.gmra.mxu0 %v3518
    %v7986 = vpop.f32.mrf.mxu0
    %v7987 = vadd.f32 %v7658, %v7986
    %v7988 = vpop.f32.mrf.mxu0
    %v7989 = vadd.f32 %v7660, %v7988
    %7990 = vmatmul.bf16.gmra.mxu0 %v3526
    %v7991 = vpop.f32.mrf.mxu0
    %v7992 = vadd.f32 %v7663, %v7991
    %v7993 = vpop.f32.mrf.mxu0
    %v7994 = vadd.f32 %v7665, %v7993
    %7995 = vmatmul.bf16.gmra.mxu0 %v3534
    %v7996 = vpop.f32.mrf.mxu0
    %v7997 = vadd.f32 %v7668, %v7996
    %v7998 = vpop.f32.mrf.mxu0
    %v7999 = vadd.f32 %v7670, %v7998
    %8000 = vmatmul.bf16.gmra.mxu0 %v3542
    %v8001 = vpop.f32.mrf.mxu0
    %v8002 = vadd.f32 %v7673, %v8001
    %v8003 = vpop.f32.mrf.mxu0
    %v8004 = vadd.f32 %v7675, %v8003
    %8005 = vmatmul.bf16.gmra.mxu0 %v3550
    %v8006 = vpop.f32.mrf.mxu0
    %v8007 = vadd.f32 %v7678, %v8006
    %v8008 = vpop.f32.mrf.mxu0
    %v8009 = vadd.f32 %v7680, %v8008
    %8010 = vmatmul.bf16.gmra.mxu0 %v3558
    %v8011 = vpop.f32.mrf.mxu0
    %v8012 = vadd.f32 %v7683, %v8011
    %v8013 = vpop.f32.mrf.mxu0
    %v8014 = vadd.f32 %v7685, %v8013
    %8015 = vdwg.mxu0
    %8016 = vmatpush.bf16.msra.mxu0 %v7317
    %8017 = vmatpush.bf16.msra.mxu0 %v7316
    %8018 = vmatpush.bf16.msra.mxu0 %v7315
    %8019 = vmatpush.bf16.msra.mxu0 %v7314
    %8020 = vmatpush.bf16.msra.mxu0 %v7313
    %8021 = vmatpush.bf16.msra.mxu0 %v7312
    %8022 = vmatpush.bf16.msra.mxu0 %v7311
    %8023 = vmatpush.bf16.msra.mxu0 %v7310
    %8024 = vmatmul.bf16.gmra.mxu0 %v3055
    %v8025 = vpop.f32.mrf.mxu0
    %v8026 = vadd.f32 %v7697, %v8025
    %v8027 = vpop.f32.mrf.mxu0
    %v8028 = vadd.f32 %v7699, %v8027
    %8029 = vmatmul.bf16.gmra.mxu0 %v3063
    %v8030 = vpop.f32.mrf.mxu0
    %v8031 = vadd.f32 %v7702, %v8030
    %v8032 = vpop.f32.mrf.mxu0
    %v8033 = vadd.f32 %v7704, %v8032
    %8034 = vmatmul.bf16.gmra.mxu0 %v3071
    %v8035 = vpop.f32.mrf.mxu0
    %v8036 = vadd.f32 %v7707, %v8035
    %v8037 = vpop.f32.mrf.mxu0
    %v8038 = vadd.f32 %v7709, %v8037
    %8039 = vmatmul.bf16.gmra.mxu0 %v3079
    %v8040 = vpop.f32.mrf.mxu0
    %v8041 = vadd.f32 %v7712, %v8040
    %v8042 = vpop.f32.mrf.mxu0
    %v8043 = vadd.f32 %v7714, %v8042
    %8044 = vmatmul.bf16.gmra.mxu0 %v3087
    %v8045 = vpop.f32.mrf.mxu0
    %v8046 = vadd.f32 %v7717, %v8045
    %v8047 = vpop.f32.mrf.mxu0
    %v8048 = vadd.f32 %v7719, %v8047
    %8049 = vmatmul.bf16.gmra.mxu0 %v3095
    %v8050 = vpop.f32.mrf.mxu0
    %v8051 = vadd.f32 %v7722, %v8050
    %v8052 = vpop.f32.mrf.mxu0
    %v8053 = vadd.f32 %v7724, %v8052
    %8054 = vmatmul.bf16.gmra.mxu0 %v3103
    %v8055 = vpop.f32.mrf.mxu0
    %v8056 = vadd.f32 %v7727, %v8055
    %v8057 = vpop.f32.mrf.mxu0
    %v8058 = vadd.f32 %v7729, %v8057
    %8059 = vmatmul.bf16.gmra.mxu0 %v3111
    %v8060 = vpop.f32.mrf.mxu0
    %v8061 = vadd.f32 %v7732, %v8060
    %v8062 = vpop.f32.mrf.mxu0
    %v8063 = vadd.f32 %v7734, %v8062
    %8064 = vmatmul.bf16.gmra.mxu0 %v3119
    %v8065 = vpop.f32.mrf.mxu0
    %v8066 = vadd.f32 %v7737, %v8065
    %v8067 = vpop.f32.mrf.mxu0
    %v8068 = vadd.f32 %v7739, %v8067
    %8069 = vmatmul.bf16.gmra.mxu0 %v3127
    %v8070 = vpop.f32.mrf.mxu0
    %v8071 = vadd.f32 %v7742, %v8070
    %v8072 = vpop.f32.mrf.mxu0
    %v8073 = vadd.f32 %v7744, %v8072
    %8074 = vmatmul.bf16.gmra.mxu0 %v3135
    %v8075 = vpop.f32.mrf.mxu0
    %v8076 = vadd.f32 %v7747, %v8075
    %v8077 = vpop.f32.mrf.mxu0
    %v8078 = vadd.f32 %v7749, %v8077
    %8079 = vmatmul.bf16.gmra.mxu0 %v3143
    %v8080 = vpop.f32.mrf.mxu0
    %v8081 = vadd.f32 %v7752, %v8080
    %v8082 = vpop.f32.mrf.mxu0
    %v8083 = vadd.f32 %v7754, %v8082
    %8084 = vmatmul.bf16.gmra.mxu0 %v3151
    %v8085 = vpop.f32.mrf.mxu0
    %v8086 = vadd.f32 %v7757, %v8085
    %v8087 = vpop.f32.mrf.mxu0
    %v8088 = vadd.f32 %v7759, %v8087
    %8089 = vmatmul.bf16.gmra.mxu0 %v3159
    %v8090 = vpop.f32.mrf.mxu0
    %v8091 = vadd.f32 %v7762, %v8090
    %v8092 = vpop.f32.mrf.mxu0
    %v8093 = vadd.f32 %v7764, %v8092
    %8094 = vmatmul.bf16.gmra.mxu0 %v3167
    %v8095 = vpop.f32.mrf.mxu0
    %v8096 = vadd.f32 %v7767, %v8095
    %v8097 = vpop.f32.mrf.mxu0
    %v8098 = vadd.f32 %v7769, %v8097
    %8099 = vmatmul.bf16.gmra.mxu0 %v3175
    %v8100 = vpop.f32.mrf.mxu0
    %v8101 = vadd.f32 %v7772, %v8100
    %v8102 = vpop.f32.mrf.mxu0
    %v8103 = vadd.f32 %v7774, %v8102
    %8104 = vmatmul.bf16.gmra.mxu0 %v3183
    %v8105 = vpop.f32.mrf.mxu0
    %v8106 = vadd.f32 %v7777, %v8105
    %v8107 = vpop.f32.mrf.mxu0
    %v8108 = vadd.f32 %v7779, %v8107
    %8109 = vmatmul.bf16.gmra.mxu0 %v3191
    %v8110 = vpop.f32.mrf.mxu0
    %v8111 = vadd.f32 %v7782, %v8110
    %v8112 = vpop.f32.mrf.mxu0
    %v8113 = vadd.f32 %v7784, %v8112
    %8114 = vmatmul.bf16.gmra.mxu0 %v3199
    %v8115 = vpop.f32.mrf.mxu0
    %v8116 = vadd.f32 %v7787, %v8115
    %v8117 = vpop.f32.mrf.mxu0
    %v8118 = vadd.f32 %v7789, %v8117
    %8119 = vmatmul.bf16.gmra.mxu0 %v3207
    %v8120 = vpop.f32.mrf.mxu0
    %v8121 = vadd.f32 %v7792, %v8120
    %v8122 = vpop.f32.mrf.mxu0
    %v8123 = vadd.f32 %v7794, %v8122
    %8124 = vmatmul.bf16.gmra.mxu0 %v3215
    %v8125 = vpop.f32.mrf.mxu0
    %v8126 = vadd.f32 %v7797, %v8125
    %v8127 = vpop.f32.mrf.mxu0
    %v8128 = vadd.f32 %v7799, %v8127
    %8129 = vmatmul.bf16.gmra.mxu0 %v3223
    %v8130 = vpop.f32.mrf.mxu0
    %v8131 = vadd.f32 %v7802, %v8130
    %v8132 = vpop.f32.mrf.mxu0
    %v8133 = vadd.f32 %v7804, %v8132
    %8134 = vmatmul.bf16.gmra.mxu0 %v3231
    %v8135 = vpop.f32.mrf.mxu0
    %v8136 = vadd.f32 %v7807, %v8135
    %v8137 = vpop.f32.mrf.mxu0
    %v8138 = vadd.f32 %v7809, %v8137
    %8139 = vmatmul.bf16.gmra.mxu0 %v3239
    %v8140 = vpop.f32.mrf.mxu0
    %v8141 = vadd.f32 %v7812, %v8140
    %v8142 = vpop.f32.mrf.mxu0
    %v8143 = vadd.f32 %v7814, %v8142
    %8144 = vmatmul.bf16.gmra.mxu0 %v3247
    %v8145 = vpop.f32.mrf.mxu0
    %v8146 = vadd.f32 %v7817, %v8145
    %v8147 = vpop.f32.mrf.mxu0
    %v8148 = vadd.f32 %v7819, %v8147
    %8149 = vmatmul.bf16.gmra.mxu0 %v3255
    %v8150 = vpop.f32.mrf.mxu0
    %v8151 = vadd.f32 %v7822, %v8150
    %v8152 = vpop.f32.mrf.mxu0
    %v8153 = vadd.f32 %v7824, %v8152
    %8154 = vmatmul.bf16.gmra.mxu0 %v3263
    %v8155 = vpop.f32.mrf.mxu0
    %v8156 = vadd.f32 %v7827, %v8155
    %v8157 = vpop.f32.mrf.mxu0
    %v8158 = vadd.f32 %v7829, %v8157
    %8159 = vmatmul.bf16.gmra.mxu0 %v3271
    %v8160 = vpop.f32.mrf.mxu0
    %v8161 = vadd.f32 %v7832, %v8160
    %v8162 = vpop.f32.mrf.mxu0
    %v8163 = vadd.f32 %v7834, %v8162
    %8164 = vmatmul.bf16.gmra.mxu0 %v3279
    %v8165 = vpop.f32.mrf.mxu0
    %v8166 = vadd.f32 %v7837, %v8165
    %v8167 = vpop.f32.mrf.mxu0
    %v8168 = vadd.f32 %v7839, %v8167
    %8169 = vmatmul.bf16.gmra.mxu0 %v3287
    %v8170 = vpop.f32.mrf.mxu0
    %v8171 = vadd.f32 %v7842, %v8170
    %v8172 = vpop.f32.mrf.mxu0
    %v8173 = vadd.f32 %v7844, %v8172
    %8174 = vmatmul.bf16.gmra.mxu0 %v3295
    %v8175 = vpop.f32.mrf.mxu0
    %v8176 = vadd.f32 %v7847, %v8175
    %v8177 = vpop.f32.mrf.mxu0
    %v8178 = vadd.f32 %v7849, %v8177
    %8179 = vmatmul.bf16.gmra.mxu0 %v3303
    %v8180 = vpop.f32.mrf.mxu0
    %v8181 = vadd.f32 %v7852, %v8180
    %v8182 = vpop.f32.mrf.mxu0
    %v8183 = vadd.f32 %v7854, %v8182
    %8184 = vmatmul.bf16.gmra.mxu0 %v3311
    %v8185 = vpop.f32.mrf.mxu0
    %v8186 = vadd.f32 %v7857, %v8185
    %v8187 = vpop.f32.mrf.mxu0
    %v8188 = vadd.f32 %v7859, %v8187
    %8189 = vmatmul.bf16.gmra.mxu0 %v3319
    %v8190 = vpop.f32.mrf.mxu0
    %v8191 = vadd.f32 %v7862, %v8190
    %v8192 = vpop.f32.mrf.mxu0
    %v8193 = vadd.f32 %v7864, %v8192
    %8194 = vmatmul.bf16.gmra.mxu0 %v3327
    %v8195 = vpop.f32.mrf.mxu0
    %v8196 = vadd.f32 %v7867, %v8195
    %v8197 = vpop.f32.mrf.mxu0
    %v8198 = vadd.f32 %v7869, %v8197
    %8199 = vmatmul.bf16.gmra.mxu0 %v3335
    %v8200 = vpop.f32.mrf.mxu0
    %v8201 = vadd.f32 %v7872, %v8200
    %v8202 = vpop.f32.mrf.mxu0
    %v8203 = vadd.f32 %v7874, %v8202
    %8204 = vmatmul.bf16.gmra.mxu0 %v3343
    %v8205 = vpop.f32.mrf.mxu0
    %v8206 = vadd.f32 %v7877, %v8205
    %v8207 = vpop.f32.mrf.mxu0
    %v8208 = vadd.f32 %v7879, %v8207
    %8209 = vmatmul.bf16.gmra.mxu0 %v3351
    %v8210 = vpop.f32.mrf.mxu0
    %v8211 = vadd.f32 %v7882, %v8210
    %v8212 = vpop.f32.mrf.mxu0
    %v8213 = vadd.f32 %v7884, %v8212
    %8214 = vmatmul.bf16.gmra.mxu0 %v3359
    %v8215 = vpop.f32.mrf.mxu0
    %v8216 = vadd.f32 %v7887, %v8215
    %v8217 = vpop.f32.mrf.mxu0
    %v8218 = vadd.f32 %v7889, %v8217
    %8219 = vmatmul.bf16.gmra.mxu0 %v3367
    %v8220 = vpop.f32.mrf.mxu0
    %v8221 = vadd.f32 %v7892, %v8220
    %v8222 = vpop.f32.mrf.mxu0
    %v8223 = vadd.f32 %v7894, %v8222
    %8224 = vmatmul.bf16.gmra.mxu0 %v3375
    %v8225 = vpop.f32.mrf.mxu0
    %v8226 = vadd.f32 %v7897, %v8225
    %v8227 = vpop.f32.mrf.mxu0
    %v8228 = vadd.f32 %v7899, %v8227
    %8229 = vmatmul.bf16.gmra.mxu0 %v3383
    %v8230 = vpop.f32.mrf.mxu0
    %v8231 = vadd.f32 %v7902, %v8230
    %v8232 = vpop.f32.mrf.mxu0
    %v8233 = vadd.f32 %v7904, %v8232
    %8234 = vmatmul.bf16.gmra.mxu0 %v3391
    %v8235 = vpop.f32.mrf.mxu0
    %v8236 = vadd.f32 %v7907, %v8235
    %v8237 = vpop.f32.mrf.mxu0
    %v8238 = vadd.f32 %v7909, %v8237
    %8239 = vmatmul.bf16.gmra.mxu0 %v3399
    %v8240 = vpop.f32.mrf.mxu0
    %v8241 = vadd.f32 %v7912, %v8240
    %v8242 = vpop.f32.mrf.mxu0
    %v8243 = vadd.f32 %v7914, %v8242
    %8244 = vmatmul.bf16.gmra.mxu0 %v3407
    %v8245 = vpop.f32.mrf.mxu0
    %v8246 = vadd.f32 %v7917, %v8245
    %v8247 = vpop.f32.mrf.mxu0
    %v8248 = vadd.f32 %v7919, %v8247
    %8249 = vmatmul.bf16.gmra.mxu0 %v3415
    %v8250 = vpop.f32.mrf.mxu0
    %v8251 = vadd.f32 %v7922, %v8250
    %v8252 = vpop.f32.mrf.mxu0
    %v8253 = vadd.f32 %v7924, %v8252
    %8254 = vmatmul.bf16.gmra.mxu0 %v3423
    %v8255 = vpop.f32.mrf.mxu0
    %v8256 = vadd.f32 %v7927, %v8255
    %v8257 = vpop.f32.mrf.mxu0
    %v8258 = vadd.f32 %v7929, %v8257
    %8259 = vmatmul.bf16.gmra.mxu0 %v3431
    %v8260 = vpop.f32.mrf.mxu0
    %v8261 = vadd.f32 %v7932, %v8260
    %v8262 = vpop.f32.mrf.mxu0
    %v8263 = vadd.f32 %v7934, %v8262
    %8264 = vmatmul.bf16.gmra.mxu0 %v3439
    %v8265 = vpop.f32.mrf.mxu0
    %v8266 = vadd.f32 %v7937, %v8265
    %v8267 = vpop.f32.mrf.mxu0
    %v8268 = vadd.f32 %v7939, %v8267
    %8269 = vmatmul.bf16.gmra.mxu0 %v3447
    %v8270 = vpop.f32.mrf.mxu0
    %v8271 = vadd.f32 %v7942, %v8270
    %v8272 = vpop.f32.mrf.mxu0
    %v8273 = vadd.f32 %v7944, %v8272
    %8274 = vmatmul.bf16.gmra.mxu0 %v3455
    %v8275 = vpop.f32.mrf.mxu0
    %v8276 = vadd.f32 %v7947, %v8275
    %v8277 = vpop.f32.mrf.mxu0
    %v8278 = vadd.f32 %v7949, %v8277
    %8279 = vmatmul.bf16.gmra.mxu0 %v3463
    %v8280 = vpop.f32.mrf.mxu0
    %v8281 = vadd.f32 %v7952, %v8280
    %v8282 = vpop.f32.mrf.mxu0
    %v8283 = vadd.f32 %v7954, %v8282
    %8284 = vmatmul.bf16.gmra.mxu0 %v3471
    %v8285 = vpop.f32.mrf.mxu0
    %v8286 = vadd.f32 %v7957, %v8285
    %v8287 = vpop.f32.mrf.mxu0
    %v8288 = vadd.f32 %v7959, %v8287
    %8289 = vmatmul.bf16.gmra.mxu0 %v3479
    %v8290 = vpop.f32.mrf.mxu0
    %v8291 = vadd.f32 %v7962, %v8290
    %v8292 = vpop.f32.mrf.mxu0
    %v8293 = vadd.f32 %v7964, %v8292
    %8294 = vmatmul.bf16.gmra.mxu0 %v3487
    %v8295 = vpop.f32.mrf.mxu0
    %v8296 = vadd.f32 %v7967, %v8295
    %v8297 = vpop.f32.mrf.mxu0
    %v8298 = vadd.f32 %v7969, %v8297
    %8299 = vmatmul.bf16.gmra.mxu0 %v3495
    %v8300 = vpop.f32.mrf.mxu0
    %v8301 = vadd.f32 %v7972, %v8300
    %v8302 = vpop.f32.mrf.mxu0
    %v8303 = vadd.f32 %v7974, %v8302
    %8304 = vmatmul.bf16.gmra.mxu0 %v3503
    %v8305 = vpop.f32.mrf.mxu0
    %v8306 = vadd.f32 %v7977, %v8305
    %v8307 = vpop.f32.mrf.mxu0
    %v8308 = vadd.f32 %v7979, %v8307
    %8309 = vmatmul.bf16.gmra.mxu0 %v3511
    %v8310 = vpop.f32.mrf.mxu0
    %v8311 = vadd.f32 %v7982, %v8310
    %v8312 = vpop.f32.mrf.mxu0
    %v8313 = vadd.f32 %v7984, %v8312
    %8314 = vmatmul.bf16.gmra.mxu0 %v3519
    %v8315 = vpop.f32.mrf.mxu0
    %v8316 = vadd.f32 %v7987, %v8315
    %v8317 = vpop.f32.mrf.mxu0
    %v8318 = vadd.f32 %v7989, %v8317
    %8319 = vmatmul.bf16.gmra.mxu0 %v3527
    %v8320 = vpop.f32.mrf.mxu0
    %v8321 = vadd.f32 %v7992, %v8320
    %v8322 = vpop.f32.mrf.mxu0
    %v8323 = vadd.f32 %v7994, %v8322
    %8324 = vmatmul.bf16.gmra.mxu0 %v3535
    %v8325 = vpop.f32.mrf.mxu0
    %v8326 = vadd.f32 %v7997, %v8325
    %v8327 = vpop.f32.mrf.mxu0
    %v8328 = vadd.f32 %v7999, %v8327
    %8329 = vmatmul.bf16.gmra.mxu0 %v3543
    %v8330 = vpop.f32.mrf.mxu0
    %v8331 = vadd.f32 %v8002, %v8330
    %v8332 = vpop.f32.mrf.mxu0
    %v8333 = vadd.f32 %v8004, %v8332
    %8334 = vmatmul.bf16.gmra.mxu0 %v3551
    %v8335 = vpop.f32.mrf.mxu0
    %v8336 = vadd.f32 %v8007, %v8335
    %v8337 = vpop.f32.mrf.mxu0
    %v8338 = vadd.f32 %v8009, %v8337
    %8339 = vmatmul.bf16.gmra.mxu0 %v3559
    %v8340 = vpop.f32.mrf.mxu0
    %v8341 = vadd.f32 %v8012, %v8340
    %v8342 = vpop.f32.mrf.mxu0
    %v8343 = vadd.f32 %v8014, %v8342
    %8344 = vdwg.mxu0
    %8345 = vmatpush.bf16.msra.mxu0 %v7325
    %8346 = vmatpush.bf16.msra.mxu0 %v7324
    %8347 = vmatpush.bf16.msra.mxu0 %v7323
    %8348 = vmatpush.bf16.msra.mxu0 %v7322
    %8349 = vmatpush.bf16.msra.mxu0 %v7321
    %8350 = vmatpush.bf16.msra.mxu0 %v7320
    %8351 = vmatpush.bf16.msra.mxu0 %v7319
    %8352 = vmatpush.bf16.msra.mxu0 %v7318
    %8353 = vmatmul.bf16.gmra.mxu0 %v3056
    %v8354 = vpop.f32.mrf.mxu0
    %v8355 = vadd.f32 %v8026, %v8354
    %v8356 = vpop.f32.mrf.mxu0
    %v8357 = vadd.f32 %v8028, %v8356
    %8358 = vmatmul.bf16.gmra.mxu0 %v3064
    %v8359 = vpop.f32.mrf.mxu0
    %v8360 = vadd.f32 %v8031, %v8359
    %v8361 = vpop.f32.mrf.mxu0
    %v8362 = vadd.f32 %v8033, %v8361
    %8363 = vmatmul.bf16.gmra.mxu0 %v3072
    %v8364 = vpop.f32.mrf.mxu0
    %v8365 = vadd.f32 %v8036, %v8364
    %v8366 = vpop.f32.mrf.mxu0
    %v8367 = vadd.f32 %v8038, %v8366
    %8368 = vmatmul.bf16.gmra.mxu0 %v3080
    %v8369 = vpop.f32.mrf.mxu0
    %v8370 = vadd.f32 %v8041, %v8369
    %v8371 = vpop.f32.mrf.mxu0
    %v8372 = vadd.f32 %v8043, %v8371
    %8373 = vmatmul.bf16.gmra.mxu0 %v3088
    %v8374 = vpop.f32.mrf.mxu0
    %v8375 = vadd.f32 %v8046, %v8374
    %v8376 = vpop.f32.mrf.mxu0
    %v8377 = vadd.f32 %v8048, %v8376
    %8378 = vmatmul.bf16.gmra.mxu0 %v3096
    %v8379 = vpop.f32.mrf.mxu0
    %v8380 = vadd.f32 %v8051, %v8379
    %v8381 = vpop.f32.mrf.mxu0
    %v8382 = vadd.f32 %v8053, %v8381
    %8383 = vmatmul.bf16.gmra.mxu0 %v3104
    %v8384 = vpop.f32.mrf.mxu0
    %v8385 = vadd.f32 %v8056, %v8384
    %v8386 = vpop.f32.mrf.mxu0
    %v8387 = vadd.f32 %v8058, %v8386
    %8388 = vmatmul.bf16.gmra.mxu0 %v3112
    %v8389 = vpop.f32.mrf.mxu0
    %v8390 = vadd.f32 %v8061, %v8389
    %v8391 = vpop.f32.mrf.mxu0
    %v8392 = vadd.f32 %v8063, %v8391
    %8393 = vmatmul.bf16.gmra.mxu0 %v3120
    %v8394 = vpop.f32.mrf.mxu0
    %v8395 = vadd.f32 %v8066, %v8394
    %v8396 = vpop.f32.mrf.mxu0
    %v8397 = vadd.f32 %v8068, %v8396
    %8398 = vmatmul.bf16.gmra.mxu0 %v3128
    %v8399 = vpop.f32.mrf.mxu0
    %v8400 = vadd.f32 %v8071, %v8399
    %v8401 = vpop.f32.mrf.mxu0
    %v8402 = vadd.f32 %v8073, %v8401
    %8403 = vmatmul.bf16.gmra.mxu0 %v3136
    %v8404 = vpop.f32.mrf.mxu0
    %v8405 = vadd.f32 %v8076, %v8404
    %v8406 = vpop.f32.mrf.mxu0
    %v8407 = vadd.f32 %v8078, %v8406
    %8408 = vmatmul.bf16.gmra.mxu0 %v3144
    %v8409 = vpop.f32.mrf.mxu0
    %v8410 = vadd.f32 %v8081, %v8409
    %v8411 = vpop.f32.mrf.mxu0
    %v8412 = vadd.f32 %v8083, %v8411
    %8413 = vmatmul.bf16.gmra.mxu0 %v3152
    %v8414 = vpop.f32.mrf.mxu0
    %v8415 = vadd.f32 %v8086, %v8414
    %v8416 = vpop.f32.mrf.mxu0
    %v8417 = vadd.f32 %v8088, %v8416
    %8418 = vmatmul.bf16.gmra.mxu0 %v3160
    %v8419 = vpop.f32.mrf.mxu0
    %v8420 = vadd.f32 %v8091, %v8419
    %v8421 = vpop.f32.mrf.mxu0
    %v8422 = vadd.f32 %v8093, %v8421
    %8423 = vmatmul.bf16.gmra.mxu0 %v3168
    %v8424 = vpop.f32.mrf.mxu0
    %v8425 = vadd.f32 %v8096, %v8424
    %v8426 = vpop.f32.mrf.mxu0
    %v8427 = vadd.f32 %v8098, %v8426
    %8428 = vmatmul.bf16.gmra.mxu0 %v3176
    %v8429 = vpop.f32.mrf.mxu0
    %v8430 = vadd.f32 %v8101, %v8429
    %v8431 = vpop.f32.mrf.mxu0
    %v8432 = vadd.f32 %v8103, %v8431
    %8433 = vmatmul.bf16.gmra.mxu0 %v3184
    %v8434 = vpop.f32.mrf.mxu0
    %v8435 = vadd.f32 %v8106, %v8434
    %v8436 = vpop.f32.mrf.mxu0
    %v8437 = vadd.f32 %v8108, %v8436
    %8438 = vmatmul.bf16.gmra.mxu0 %v3192
    %v8439 = vpop.f32.mrf.mxu0
    %v8440 = vadd.f32 %v8111, %v8439
    %v8441 = vpop.f32.mrf.mxu0
    %v8442 = vadd.f32 %v8113, %v8441
    %8443 = vmatmul.bf16.gmra.mxu0 %v3200
    %v8444 = vpop.f32.mrf.mxu0
    %v8445 = vadd.f32 %v8116, %v8444
    %v8446 = vpop.f32.mrf.mxu0
    %v8447 = vadd.f32 %v8118, %v8446
    %8448 = vmatmul.bf16.gmra.mxu0 %v3208
    %v8449 = vpop.f32.mrf.mxu0
    %v8450 = vadd.f32 %v8121, %v8449
    %v8451 = vpop.f32.mrf.mxu0
    %v8452 = vadd.f32 %v8123, %v8451
    %8453 = vmatmul.bf16.gmra.mxu0 %v3216
    %v8454 = vpop.f32.mrf.mxu0
    %v8455 = vadd.f32 %v8126, %v8454
    %v8456 = vpop.f32.mrf.mxu0
    %v8457 = vadd.f32 %v8128, %v8456
    %8458 = vmatmul.bf16.gmra.mxu0 %v3224
    %v8459 = vpop.f32.mrf.mxu0
    %v8460 = vadd.f32 %v8131, %v8459
    %v8461 = vpop.f32.mrf.mxu0
    %v8462 = vadd.f32 %v8133, %v8461
    %8463 = vmatmul.bf16.gmra.mxu0 %v3232
    %v8464 = vpop.f32.mrf.mxu0
    %v8465 = vadd.f32 %v8136, %v8464
    %v8466 = vpop.f32.mrf.mxu0
    %v8467 = vadd.f32 %v8138, %v8466
    %8468 = vmatmul.bf16.gmra.mxu0 %v3240
    %v8469 = vpop.f32.mrf.mxu0
    %v8470 = vadd.f32 %v8141, %v8469
    %v8471 = vpop.f32.mrf.mxu0
    %v8472 = vadd.f32 %v8143, %v8471
    %8473 = vmatmul.bf16.gmra.mxu0 %v3248
    %v8474 = vpop.f32.mrf.mxu0
    %v8475 = vadd.f32 %v8146, %v8474
    %v8476 = vpop.f32.mrf.mxu0
    %v8477 = vadd.f32 %v8148, %v8476
    %8478 = vmatmul.bf16.gmra.mxu0 %v3256
    %v8479 = vpop.f32.mrf.mxu0
    %v8480 = vadd.f32 %v8151, %v8479
    %v8481 = vpop.f32.mrf.mxu0
    %v8482 = vadd.f32 %v8153, %v8481
    %8483 = vmatmul.bf16.gmra.mxu0 %v3264
    %v8484 = vpop.f32.mrf.mxu0
    %v8485 = vadd.f32 %v8156, %v8484
    %v8486 = vpop.f32.mrf.mxu0
    %v8487 = vadd.f32 %v8158, %v8486
    %8488 = vmatmul.bf16.gmra.mxu0 %v3272
    %v8489 = vpop.f32.mrf.mxu0
    %v8490 = vadd.f32 %v8161, %v8489
    %v8491 = vpop.f32.mrf.mxu0
    %v8492 = vadd.f32 %v8163, %v8491
    %8493 = vmatmul.bf16.gmra.mxu0 %v3280
    %v8494 = vpop.f32.mrf.mxu0
    %v8495 = vadd.f32 %v8166, %v8494
    %v8496 = vpop.f32.mrf.mxu0
    %v8497 = vadd.f32 %v8168, %v8496
    %8498 = vmatmul.bf16.gmra.mxu0 %v3288
    %v8499 = vpop.f32.mrf.mxu0
    %v8500 = vadd.f32 %v8171, %v8499
    %v8501 = vpop.f32.mrf.mxu0
    %v8502 = vadd.f32 %v8173, %v8501
    %8503 = vmatmul.bf16.gmra.mxu0 %v3296
    %v8504 = vpop.f32.mrf.mxu0
    %v8505 = vadd.f32 %v8176, %v8504
    %v8506 = vpop.f32.mrf.mxu0
    %v8507 = vadd.f32 %v8178, %v8506
    %8508 = vmatmul.bf16.gmra.mxu0 %v3304
    %v8509 = vpop.f32.mrf.mxu0
    %v8510 = vadd.f32 %v8181, %v8509
    %v8511 = vpop.f32.mrf.mxu0
    %v8512 = vadd.f32 %v8183, %v8511
    %8513 = vmatmul.bf16.gmra.mxu0 %v3312
    %v8514 = vpop.f32.mrf.mxu0
    %v8515 = vadd.f32 %v8186, %v8514
    %v8516 = vpop.f32.mrf.mxu0
    %v8517 = vadd.f32 %v8188, %v8516
    %8518 = vmatmul.bf16.gmra.mxu0 %v3320
    %v8519 = vpop.f32.mrf.mxu0
    %v8520 = vadd.f32 %v8191, %v8519
    %v8521 = vpop.f32.mrf.mxu0
    %v8522 = vadd.f32 %v8193, %v8521
    %8523 = vmatmul.bf16.gmra.mxu0 %v3328
    %v8524 = vpop.f32.mrf.mxu0
    %v8525 = vadd.f32 %v8196, %v8524
    %v8526 = vpop.f32.mrf.mxu0
    %v8527 = vadd.f32 %v8198, %v8526
    %8528 = vmatmul.bf16.gmra.mxu0 %v3336
    %v8529 = vpop.f32.mrf.mxu0
    %v8530 = vadd.f32 %v8201, %v8529
    %v8531 = vpop.f32.mrf.mxu0
    %v8532 = vadd.f32 %v8203, %v8531
    %8533 = vmatmul.bf16.gmra.mxu0 %v3344
    %v8534 = vpop.f32.mrf.mxu0
    %v8535 = vadd.f32 %v8206, %v8534
    %v8536 = vpop.f32.mrf.mxu0
    %v8537 = vadd.f32 %v8208, %v8536
    %8538 = vmatmul.bf16.gmra.mxu0 %v3352
    %v8539 = vpop.f32.mrf.mxu0
    %v8540 = vadd.f32 %v8211, %v8539
    %v8541 = vpop.f32.mrf.mxu0
    %v8542 = vadd.f32 %v8213, %v8541
    %8543 = vmatmul.bf16.gmra.mxu0 %v3360
    %v8544 = vpop.f32.mrf.mxu0
    %v8545 = vadd.f32 %v8216, %v8544
    %v8546 = vpop.f32.mrf.mxu0
    %v8547 = vadd.f32 %v8218, %v8546
    %8548 = vmatmul.bf16.gmra.mxu0 %v3368
    %v8549 = vpop.f32.mrf.mxu0
    %v8550 = vadd.f32 %v8221, %v8549
    %v8551 = vpop.f32.mrf.mxu0
    %v8552 = vadd.f32 %v8223, %v8551
    %8553 = vmatmul.bf16.gmra.mxu0 %v3376
    %v8554 = vpop.f32.mrf.mxu0
    %v8555 = vadd.f32 %v8226, %v8554
    %v8556 = vpop.f32.mrf.mxu0
    %v8557 = vadd.f32 %v8228, %v8556
    %8558 = vmatmul.bf16.gmra.mxu0 %v3384
    %v8559 = vpop.f32.mrf.mxu0
    %v8560 = vadd.f32 %v8231, %v8559
    %v8561 = vpop.f32.mrf.mxu0
    %v8562 = vadd.f32 %v8233, %v8561
    %8563 = vmatmul.bf16.gmra.mxu0 %v3392
    %v8564 = vpop.f32.mrf.mxu0
    %v8565 = vadd.f32 %v8236, %v8564
    %v8566 = vpop.f32.mrf.mxu0
    %v8567 = vadd.f32 %v8238, %v8566
    %8568 = vmatmul.bf16.gmra.mxu0 %v3400
    %v8569 = vpop.f32.mrf.mxu0
    %v8570 = vadd.f32 %v8241, %v8569
    %v8571 = vpop.f32.mrf.mxu0
    %v8572 = vadd.f32 %v8243, %v8571
    %8573 = vmatmul.bf16.gmra.mxu0 %v3408
    %v8574 = vpop.f32.mrf.mxu0
    %v8575 = vadd.f32 %v8246, %v8574
    %v8576 = vpop.f32.mrf.mxu0
    %v8577 = vadd.f32 %v8248, %v8576
    %8578 = vmatmul.bf16.gmra.mxu0 %v3416
    %v8579 = vpop.f32.mrf.mxu0
    %v8580 = vadd.f32 %v8251, %v8579
    %v8581 = vpop.f32.mrf.mxu0
    %v8582 = vadd.f32 %v8253, %v8581
    %8583 = vmatmul.bf16.gmra.mxu0 %v3424
    %v8584 = vpop.f32.mrf.mxu0
    %v8585 = vadd.f32 %v8256, %v8584
    %v8586 = vpop.f32.mrf.mxu0
    %v8587 = vadd.f32 %v8258, %v8586
    %8588 = vmatmul.bf16.gmra.mxu0 %v3432
    %v8589 = vpop.f32.mrf.mxu0
    %v8590 = vadd.f32 %v8261, %v8589
    %v8591 = vpop.f32.mrf.mxu0
    %v8592 = vadd.f32 %v8263, %v8591
    %8593 = vmatmul.bf16.gmra.mxu0 %v3440
    %v8594 = vpop.f32.mrf.mxu0
    %v8595 = vadd.f32 %v8266, %v8594
    %v8596 = vpop.f32.mrf.mxu0
    %v8597 = vadd.f32 %v8268, %v8596
    %8598 = vmatmul.bf16.gmra.mxu0 %v3448
    %v8599 = vpop.f32.mrf.mxu0
    %v8600 = vadd.f32 %v8271, %v8599
    %v8601 = vpop.f32.mrf.mxu0
    %v8602 = vadd.f32 %v8273, %v8601
    %8603 = vmatmul.bf16.gmra.mxu0 %v3456
    %v8604 = vpop.f32.mrf.mxu0
    %v8605 = vadd.f32 %v8276, %v8604
    %v8606 = vpop.f32.mrf.mxu0
    %v8607 = vadd.f32 %v8278, %v8606
    %8608 = vmatmul.bf16.gmra.mxu0 %v3464
    %v8609 = vpop.f32.mrf.mxu0
    %v8610 = vadd.f32 %v8281, %v8609
    %v8611 = vpop.f32.mrf.mxu0
    %v8612 = vadd.f32 %v8283, %v8611
    %8613 = vmatmul.bf16.gmra.mxu0 %v3472
    %v8614 = vpop.f32.mrf.mxu0
    %v8615 = vadd.f32 %v8286, %v8614
    %v8616 = vpop.f32.mrf.mxu0
    %v8617 = vadd.f32 %v8288, %v8616
    %8618 = vmatmul.bf16.gmra.mxu0 %v3480
    %v8619 = vpop.f32.mrf.mxu0
    %v8620 = vadd.f32 %v8291, %v8619
    %v8621 = vpop.f32.mrf.mxu0
    %v8622 = vadd.f32 %v8293, %v8621
    %8623 = vmatmul.bf16.gmra.mxu0 %v3488
    %v8624 = vpop.f32.mrf.mxu0
    %v8625 = vadd.f32 %v8296, %v8624
    %v8626 = vpop.f32.mrf.mxu0
    %v8627 = vadd.f32 %v8298, %v8626
    %8628 = vmatmul.bf16.gmra.mxu0 %v3496
    %v8629 = vpop.f32.mrf.mxu0
    %v8630 = vadd.f32 %v8301, %v8629
    %v8631 = vpop.f32.mrf.mxu0
    %v8632 = vadd.f32 %v8303, %v8631
    %8633 = vmatmul.bf16.gmra.mxu0 %v3504
    %v8634 = vpop.f32.mrf.mxu0
    %v8635 = vadd.f32 %v8306, %v8634
    %v8636 = vpop.f32.mrf.mxu0
    %v8637 = vadd.f32 %v8308, %v8636
    %8638 = vmatmul.bf16.gmra.mxu0 %v3512
    %v8639 = vpop.f32.mrf.mxu0
    %v8640 = vadd.f32 %v8311, %v8639
    %v8641 = vpop.f32.mrf.mxu0
    %v8642 = vadd.f32 %v8313, %v8641
    %8643 = vmatmul.bf16.gmra.mxu0 %v3520
    %v8644 = vpop.f32.mrf.mxu0
    %v8645 = vadd.f32 %v8316, %v8644
    %v8646 = vpop.f32.mrf.mxu0
    %v8647 = vadd.f32 %v8318, %v8646
    %8648 = vmatmul.bf16.gmra.mxu0 %v3528
    %v8649 = vpop.f32.mrf.mxu0
    %v8650 = vadd.f32 %v8321, %v8649
    %v8651 = vpop.f32.mrf.mxu0
    %v8652 = vadd.f32 %v8323, %v8651
    %8653 = vmatmul.bf16.gmra.mxu0 %v3536
    %v8654 = vpop.f32.mrf.mxu0
    %v8655 = vadd.f32 %v8326, %v8654
    %v8656 = vpop.f32.mrf.mxu0
    %v8657 = vadd.f32 %v8328, %v8656
    %8658 = vmatmul.bf16.gmra.mxu0 %v3544
    %v8659 = vpop.f32.mrf.mxu0
    %v8660 = vadd.f32 %v8331, %v8659
    %v8661 = vpop.f32.mrf.mxu0
    %v8662 = vadd.f32 %v8333, %v8661
    %8663 = vmatmul.bf16.gmra.mxu0 %v3552
    %v8664 = vpop.f32.mrf.mxu0
    %v8665 = vadd.f32 %v8336, %v8664
    %v8666 = vpop.f32.mrf.mxu0
    %v8667 = vadd.f32 %v8338, %v8666
    %8668 = vmatmul.bf16.gmra.mxu0 %v3560
    %v8669 = vpop.f32.mrf.mxu0
    %v8670 = vadd.f32 %v8341, %v8669
    %v8671 = vpop.f32.mrf.mxu0
    %v8672 = vadd.f32 %v8343, %v8671
    %8673 = vdwg.mxu0
    %8674 = vmatpush.bf16.msra.mxu0 %v7333
    %8675 = vmatpush.bf16.msra.mxu0 %v7332
    %8676 = vmatpush.bf16.msra.mxu0 %v7331
    %8677 = vmatpush.bf16.msra.mxu0 %v7330
    %8678 = vmatpush.bf16.msra.mxu0 %v7329
    %8679 = vmatpush.bf16.msra.mxu0 %v7328
    %8680 = vmatpush.bf16.msra.mxu0 %v7327
    %8681 = vmatpush.bf16.msra.mxu0 %v7326
    %8682 = vmatmul.bf16.gmra.mxu0 %v3057
    %v8683 = vpop.f32.mrf.mxu0
    %v8684 = vadd.f32 %v8355, %v8683
    %v8685 = vpop.f32.mrf.mxu0
    %v8686 = vadd.f32 %v8357, %v8685
    %8687 = vmatmul.bf16.gmra.mxu0 %v3065
    %v8688 = vpop.f32.mrf.mxu0
    %v8689 = vadd.f32 %v8360, %v8688
    %v8690 = vpop.f32.mrf.mxu0
    %v8691 = vadd.f32 %v8362, %v8690
    %8692 = vmatmul.bf16.gmra.mxu0 %v3073
    %v8693 = vpop.f32.mrf.mxu0
    %v8694 = vadd.f32 %v8365, %v8693
    %v8695 = vpop.f32.mrf.mxu0
    %v8696 = vadd.f32 %v8367, %v8695
    %8697 = vmatmul.bf16.gmra.mxu0 %v3081
    %v8698 = vpop.f32.mrf.mxu0
    %v8699 = vadd.f32 %v8370, %v8698
    %v8700 = vpop.f32.mrf.mxu0
    %v8701 = vadd.f32 %v8372, %v8700
    %8702 = vmatmul.bf16.gmra.mxu0 %v3089
    %v8703 = vpop.f32.mrf.mxu0
    %v8704 = vadd.f32 %v8375, %v8703
    %v8705 = vpop.f32.mrf.mxu0
    %v8706 = vadd.f32 %v8377, %v8705
    %8707 = vmatmul.bf16.gmra.mxu0 %v3097
    %v8708 = vpop.f32.mrf.mxu0
    %v8709 = vadd.f32 %v8380, %v8708
    %v8710 = vpop.f32.mrf.mxu0
    %v8711 = vadd.f32 %v8382, %v8710
    %8712 = vmatmul.bf16.gmra.mxu0 %v3105
    %v8713 = vpop.f32.mrf.mxu0
    %v8714 = vadd.f32 %v8385, %v8713
    %v8715 = vpop.f32.mrf.mxu0
    %v8716 = vadd.f32 %v8387, %v8715
    %8717 = vmatmul.bf16.gmra.mxu0 %v3113
    %v8718 = vpop.f32.mrf.mxu0
    %v8719 = vadd.f32 %v8390, %v8718
    %v8720 = vpop.f32.mrf.mxu0
    %v8721 = vadd.f32 %v8392, %v8720
    %8722 = vmatmul.bf16.gmra.mxu0 %v3121
    %v8723 = vpop.f32.mrf.mxu0
    %v8724 = vadd.f32 %v8395, %v8723
    %v8725 = vpop.f32.mrf.mxu0
    %v8726 = vadd.f32 %v8397, %v8725
    %8727 = vmatmul.bf16.gmra.mxu0 %v3129
    %v8728 = vpop.f32.mrf.mxu0
    %v8729 = vadd.f32 %v8400, %v8728
    %v8730 = vpop.f32.mrf.mxu0
    %v8731 = vadd.f32 %v8402, %v8730
    %8732 = vmatmul.bf16.gmra.mxu0 %v3137
    %v8733 = vpop.f32.mrf.mxu0
    %v8734 = vadd.f32 %v8405, %v8733
    %v8735 = vpop.f32.mrf.mxu0
    %v8736 = vadd.f32 %v8407, %v8735
    %8737 = vmatmul.bf16.gmra.mxu0 %v3145
    %v8738 = vpop.f32.mrf.mxu0
    %v8739 = vadd.f32 %v8410, %v8738
    %v8740 = vpop.f32.mrf.mxu0
    %v8741 = vadd.f32 %v8412, %v8740
    %8742 = vmatmul.bf16.gmra.mxu0 %v3153
    %v8743 = vpop.f32.mrf.mxu0
    %v8744 = vadd.f32 %v8415, %v8743
    %v8745 = vpop.f32.mrf.mxu0
    %v8746 = vadd.f32 %v8417, %v8745
    %8747 = vmatmul.bf16.gmra.mxu0 %v3161
    %v8748 = vpop.f32.mrf.mxu0
    %v8749 = vadd.f32 %v8420, %v8748
    %v8750 = vpop.f32.mrf.mxu0
    %v8751 = vadd.f32 %v8422, %v8750
    %8752 = vmatmul.bf16.gmra.mxu0 %v3169
    %v8753 = vpop.f32.mrf.mxu0
    %v8754 = vadd.f32 %v8425, %v8753
    %v8755 = vpop.f32.mrf.mxu0
    %v8756 = vadd.f32 %v8427, %v8755
    %8757 = vmatmul.bf16.gmra.mxu0 %v3177
    %v8758 = vpop.f32.mrf.mxu0
    %v8759 = vadd.f32 %v8430, %v8758
    %v8760 = vpop.f32.mrf.mxu0
    %v8761 = vadd.f32 %v8432, %v8760
    %8762 = vmatmul.bf16.gmra.mxu0 %v3185
    %v8763 = vpop.f32.mrf.mxu0
    %v8764 = vadd.f32 %v8435, %v8763
    %v8765 = vpop.f32.mrf.mxu0
    %v8766 = vadd.f32 %v8437, %v8765
    %8767 = vmatmul.bf16.gmra.mxu0 %v3193
    %v8768 = vpop.f32.mrf.mxu0
    %v8769 = vadd.f32 %v8440, %v8768
    %v8770 = vpop.f32.mrf.mxu0
    %v8771 = vadd.f32 %v8442, %v8770
    %8772 = vmatmul.bf16.gmra.mxu0 %v3201
    %v8773 = vpop.f32.mrf.mxu0
    %v8774 = vadd.f32 %v8445, %v8773
    %v8775 = vpop.f32.mrf.mxu0
    %v8776 = vadd.f32 %v8447, %v8775
    %8777 = vmatmul.bf16.gmra.mxu0 %v3209
    %v8778 = vpop.f32.mrf.mxu0
    %v8779 = vadd.f32 %v8450, %v8778
    %v8780 = vpop.f32.mrf.mxu0
    %v8781 = vadd.f32 %v8452, %v8780
    %8782 = vmatmul.bf16.gmra.mxu0 %v3217
    %v8783 = vpop.f32.mrf.mxu0
    %v8784 = vadd.f32 %v8455, %v8783
    %v8785 = vpop.f32.mrf.mxu0
    %v8786 = vadd.f32 %v8457, %v8785
    %8787 = vmatmul.bf16.gmra.mxu0 %v3225
    %v8788 = vpop.f32.mrf.mxu0
    %v8789 = vadd.f32 %v8460, %v8788
    %v8790 = vpop.f32.mrf.mxu0
    %v8791 = vadd.f32 %v8462, %v8790
    %8792 = vmatmul.bf16.gmra.mxu0 %v3233
    %v8793 = vpop.f32.mrf.mxu0
    %v8794 = vadd.f32 %v8465, %v8793
    %v8795 = vpop.f32.mrf.mxu0
    %v8796 = vadd.f32 %v8467, %v8795
    %8797 = vmatmul.bf16.gmra.mxu0 %v3241
    %v8798 = vpop.f32.mrf.mxu0
    %v8799 = vadd.f32 %v8470, %v8798
    %v8800 = vpop.f32.mrf.mxu0
    %v8801 = vadd.f32 %v8472, %v8800
    %8802 = vmatmul.bf16.gmra.mxu0 %v3249
    %v8803 = vpop.f32.mrf.mxu0
    %v8804 = vadd.f32 %v8475, %v8803
    %v8805 = vpop.f32.mrf.mxu0
    %v8806 = vadd.f32 %v8477, %v8805
    %8807 = vmatmul.bf16.gmra.mxu0 %v3257
    %v8808 = vpop.f32.mrf.mxu0
    %v8809 = vadd.f32 %v8480, %v8808
    %v8810 = vpop.f32.mrf.mxu0
    %v8811 = vadd.f32 %v8482, %v8810
    %8812 = vmatmul.bf16.gmra.mxu0 %v3265
    %v8813 = vpop.f32.mrf.mxu0
    %v8814 = vadd.f32 %v8485, %v8813
    %v8815 = vpop.f32.mrf.mxu0
    %v8816 = vadd.f32 %v8487, %v8815
    %8817 = vmatmul.bf16.gmra.mxu0 %v3273
    %v8818 = vpop.f32.mrf.mxu0
    %v8819 = vadd.f32 %v8490, %v8818
    %v8820 = vpop.f32.mrf.mxu0
    %v8821 = vadd.f32 %v8492, %v8820
    %8822 = vmatmul.bf16.gmra.mxu0 %v3281
    %v8823 = vpop.f32.mrf.mxu0
    %v8824 = vadd.f32 %v8495, %v8823
    %v8825 = vpop.f32.mrf.mxu0
    %v8826 = vadd.f32 %v8497, %v8825
    %8827 = vmatmul.bf16.gmra.mxu0 %v3289
    %v8828 = vpop.f32.mrf.mxu0
    %v8829 = vadd.f32 %v8500, %v8828
    %v8830 = vpop.f32.mrf.mxu0
    %v8831 = vadd.f32 %v8502, %v8830
    %8832 = vmatmul.bf16.gmra.mxu0 %v3297
    %v8833 = vpop.f32.mrf.mxu0
    %v8834 = vadd.f32 %v8505, %v8833
    %v8835 = vpop.f32.mrf.mxu0
    %v8836 = vadd.f32 %v8507, %v8835
    %8837 = vmatmul.bf16.gmra.mxu0 %v3305
    %v8838 = vpop.f32.mrf.mxu0
    %v8839 = vadd.f32 %v8510, %v8838
    %v8840 = vpop.f32.mrf.mxu0
    %v8841 = vadd.f32 %v8512, %v8840
    %8842 = vmatmul.bf16.gmra.mxu0 %v3313
    %v8843 = vpop.f32.mrf.mxu0
    %v8844 = vadd.f32 %v8515, %v8843
    %v8845 = vpop.f32.mrf.mxu0
    %v8846 = vadd.f32 %v8517, %v8845
    %8847 = vmatmul.bf16.gmra.mxu0 %v3321
    %v8848 = vpop.f32.mrf.mxu0
    %v8849 = vadd.f32 %v8520, %v8848
    %v8850 = vpop.f32.mrf.mxu0
    %v8851 = vadd.f32 %v8522, %v8850
    %8852 = vmatmul.bf16.gmra.mxu0 %v3329
    %v8853 = vpop.f32.mrf.mxu0
    %v8854 = vadd.f32 %v8525, %v8853
    %v8855 = vpop.f32.mrf.mxu0
    %v8856 = vadd.f32 %v8527, %v8855
    %8857 = vmatmul.bf16.gmra.mxu0 %v3337
    %v8858 = vpop.f32.mrf.mxu0
    %v8859 = vadd.f32 %v8530, %v8858
    %v8860 = vpop.f32.mrf.mxu0
    %v8861 = vadd.f32 %v8532, %v8860
    %8862 = vmatmul.bf16.gmra.mxu0 %v3345
    %v8863 = vpop.f32.mrf.mxu0
    %v8864 = vadd.f32 %v8535, %v8863
    %v8865 = vpop.f32.mrf.mxu0
    %v8866 = vadd.f32 %v8537, %v8865
    %8867 = vmatmul.bf16.gmra.mxu0 %v3353
    %v8868 = vpop.f32.mrf.mxu0
    %v8869 = vadd.f32 %v8540, %v8868
    %v8870 = vpop.f32.mrf.mxu0
    %v8871 = vadd.f32 %v8542, %v8870
    %8872 = vmatmul.bf16.gmra.mxu0 %v3361
    %v8873 = vpop.f32.mrf.mxu0
    %v8874 = vadd.f32 %v8545, %v8873
    %v8875 = vpop.f32.mrf.mxu0
    %v8876 = vadd.f32 %v8547, %v8875
    %8877 = vmatmul.bf16.gmra.mxu0 %v3369
    %v8878 = vpop.f32.mrf.mxu0
    %v8879 = vadd.f32 %v8550, %v8878
    %v8880 = vpop.f32.mrf.mxu0
    %v8881 = vadd.f32 %v8552, %v8880
    %8882 = vmatmul.bf16.gmra.mxu0 %v3377
    %v8883 = vpop.f32.mrf.mxu0
    %v8884 = vadd.f32 %v8555, %v8883
    %v8885 = vpop.f32.mrf.mxu0
    %v8886 = vadd.f32 %v8557, %v8885
    %8887 = vmatmul.bf16.gmra.mxu0 %v3385
    %v8888 = vpop.f32.mrf.mxu0
    %v8889 = vadd.f32 %v8560, %v8888
    %v8890 = vpop.f32.mrf.mxu0
    %v8891 = vadd.f32 %v8562, %v8890
    %8892 = vmatmul.bf16.gmra.mxu0 %v3393
    %v8893 = vpop.f32.mrf.mxu0
    %v8894 = vadd.f32 %v8565, %v8893
    %v8895 = vpop.f32.mrf.mxu0
    %v8896 = vadd.f32 %v8567, %v8895
    %8897 = vmatmul.bf16.gmra.mxu0 %v3401
    %v8898 = vpop.f32.mrf.mxu0
    %v8899 = vadd.f32 %v8570, %v8898
    %v8900 = vpop.f32.mrf.mxu0
    %v8901 = vadd.f32 %v8572, %v8900
    %8902 = vmatmul.bf16.gmra.mxu0 %v3409
    %v8903 = vpop.f32.mrf.mxu0
    %v8904 = vadd.f32 %v8575, %v8903
    %v8905 = vpop.f32.mrf.mxu0
    %v8906 = vadd.f32 %v8577, %v8905
    %8907 = vmatmul.bf16.gmra.mxu0 %v3417
    %v8908 = vpop.f32.mrf.mxu0
    %v8909 = vadd.f32 %v8580, %v8908
    %v8910 = vpop.f32.mrf.mxu0
    %v8911 = vadd.f32 %v8582, %v8910
    %8912 = vmatmul.bf16.gmra.mxu0 %v3425
    %v8913 = vpop.f32.mrf.mxu0
    %v8914 = vadd.f32 %v8585, %v8913
    %v8915 = vpop.f32.mrf.mxu0
    %v8916 = vadd.f32 %v8587, %v8915
    %8917 = vmatmul.bf16.gmra.mxu0 %v3433
    %v8918 = vpop.f32.mrf.mxu0
    %v8919 = vadd.f32 %v8590, %v8918
    %v8920 = vpop.f32.mrf.mxu0
    %v8921 = vadd.f32 %v8592, %v8920
    %8922 = vmatmul.bf16.gmra.mxu0 %v3441
    %v8923 = vpop.f32.mrf.mxu0
    %v8924 = vadd.f32 %v8595, %v8923
    %v8925 = vpop.f32.mrf.mxu0
    %v8926 = vadd.f32 %v8597, %v8925
    %8927 = vmatmul.bf16.gmra.mxu0 %v3449
    %v8928 = vpop.f32.mrf.mxu0
    %v8929 = vadd.f32 %v8600, %v8928
    %v8930 = vpop.f32.mrf.mxu0
    %v8931 = vadd.f32 %v8602, %v8930
    %8932 = vmatmul.bf16.gmra.mxu0 %v3457
    %v8933 = vpop.f32.mrf.mxu0
    %v8934 = vadd.f32 %v8605, %v8933
    %v8935 = vpop.f32.mrf.mxu0
    %v8936 = vadd.f32 %v8607, %v8935
    %8937 = vmatmul.bf16.gmra.mxu0 %v3465
    %v8938 = vpop.f32.mrf.mxu0
    %v8939 = vadd.f32 %v8610, %v8938
    %v8940 = vpop.f32.mrf.mxu0
    %v8941 = vadd.f32 %v8612, %v8940
    %8942 = vmatmul.bf16.gmra.mxu0 %v3473
    %v8943 = vpop.f32.mrf.mxu0
    %v8944 = vadd.f32 %v8615, %v8943
    %v8945 = vpop.f32.mrf.mxu0
    %v8946 = vadd.f32 %v8617, %v8945
    %8947 = vmatmul.bf16.gmra.mxu0 %v3481
    %v8948 = vpop.f32.mrf.mxu0
    %v8949 = vadd.f32 %v8620, %v8948
    %v8950 = vpop.f32.mrf.mxu0
    %v8951 = vadd.f32 %v8622, %v8950
    %8952 = vmatmul.bf16.gmra.mxu0 %v3489
    %v8953 = vpop.f32.mrf.mxu0
    %v8954 = vadd.f32 %v8625, %v8953
    %v8955 = vpop.f32.mrf.mxu0
    %v8956 = vadd.f32 %v8627, %v8955
    %8957 = vmatmul.bf16.gmra.mxu0 %v3497
    %v8958 = vpop.f32.mrf.mxu0
    %v8959 = vadd.f32 %v8630, %v8958
    %v8960 = vpop.f32.mrf.mxu0
    %v8961 = vadd.f32 %v8632, %v8960
    %8962 = vmatmul.bf16.gmra.mxu0 %v3505
    %v8963 = vpop.f32.mrf.mxu0
    %v8964 = vadd.f32 %v8635, %v8963
    %v8965 = vpop.f32.mrf.mxu0
    %v8966 = vadd.f32 %v8637, %v8965
    %8967 = vmatmul.bf16.gmra.mxu0 %v3513
    %v8968 = vpop.f32.mrf.mxu0
    %v8969 = vadd.f32 %v8640, %v8968
    %v8970 = vpop.f32.mrf.mxu0
    %v8971 = vadd.f32 %v8642, %v8970
    %8972 = vmatmul.bf16.gmra.mxu0 %v3521
    %v8973 = vpop.f32.mrf.mxu0
    %v8974 = vadd.f32 %v8645, %v8973
    %v8975 = vpop.f32.mrf.mxu0
    %v8976 = vadd.f32 %v8647, %v8975
    %8977 = vmatmul.bf16.gmra.mxu0 %v3529
    %v8978 = vpop.f32.mrf.mxu0
    %v8979 = vadd.f32 %v8650, %v8978
    %v8980 = vpop.f32.mrf.mxu0
    %v8981 = vadd.f32 %v8652, %v8980
    %8982 = vmatmul.bf16.gmra.mxu0 %v3537
    %v8983 = vpop.f32.mrf.mxu0
    %v8984 = vadd.f32 %v8655, %v8983
    %v8985 = vpop.f32.mrf.mxu0
    %v8986 = vadd.f32 %v8657, %v8985
    %8987 = vmatmul.bf16.gmra.mxu0 %v3545
    %v8988 = vpop.f32.mrf.mxu0
    %v8989 = vadd.f32 %v8660, %v8988
    %v8990 = vpop.f32.mrf.mxu0
    %v8991 = vadd.f32 %v8662, %v8990
    %8992 = vmatmul.bf16.gmra.mxu0 %v3553
    %v8993 = vpop.f32.mrf.mxu0
    %v8994 = vadd.f32 %v8665, %v8993
    %v8995 = vpop.f32.mrf.mxu0
    %v8996 = vadd.f32 %v8667, %v8995
    %8997 = vmatmul.bf16.gmra.mxu0 %v3561
    %v8998 = vpop.f32.mrf.mxu0
    %v8999 = vadd.f32 %v8670, %v8998
    %v9000 = vpop.f32.mrf.mxu0
    %v9001 = vadd.f32 %v8672, %v9000
    %9002 = vdwg.mxu0
    %9003 = vmatpush.bf16.msra.mxu0 %v7341
    %9004 = vmatpush.bf16.msra.mxu0 %v7340
    %9005 = vmatpush.bf16.msra.mxu0 %v7339
    %9006 = vmatpush.bf16.msra.mxu0 %v7338
    %9007 = vmatpush.bf16.msra.mxu0 %v7337
    %9008 = vmatpush.bf16.msra.mxu0 %v7336
    %9009 = vmatpush.bf16.msra.mxu0 %v7335
    %9010 = vmatpush.bf16.msra.mxu0 %v7334
    %9011 = vmatmul.bf16.gmra.mxu0 %v3058
    %v9012 = vpop.f32.mrf.mxu0
    %v9013 = vadd.f32 %v8684, %v9012
    %v9014 = vpop.f32.mrf.mxu0
    %v9015 = vadd.f32 %v8686, %v9014
    %9016 = vmatmul.bf16.gmra.mxu0 %v3066
    %v9017 = vpop.f32.mrf.mxu0
    %v9018 = vadd.f32 %v8689, %v9017
    %v9019 = vpop.f32.mrf.mxu0
    %v9020 = vadd.f32 %v8691, %v9019
    %9021 = vmatmul.bf16.gmra.mxu0 %v3074
    %v9022 = vpop.f32.mrf.mxu0
    %v9023 = vadd.f32 %v8694, %v9022
    %v9024 = vpop.f32.mrf.mxu0
    %v9025 = vadd.f32 %v8696, %v9024
    %9026 = vmatmul.bf16.gmra.mxu0 %v3082
    %v9027 = vpop.f32.mrf.mxu0
    %v9028 = vadd.f32 %v8699, %v9027
    %v9029 = vpop.f32.mrf.mxu0
    %v9030 = vadd.f32 %v8701, %v9029
    %9031 = vmatmul.bf16.gmra.mxu0 %v3090
    %v9032 = vpop.f32.mrf.mxu0
    %v9033 = vadd.f32 %v8704, %v9032
    %v9034 = vpop.f32.mrf.mxu0
    %v9035 = vadd.f32 %v8706, %v9034
    %9036 = vmatmul.bf16.gmra.mxu0 %v3098
    %v9037 = vpop.f32.mrf.mxu0
    %v9038 = vadd.f32 %v8709, %v9037
    %v9039 = vpop.f32.mrf.mxu0
    %v9040 = vadd.f32 %v8711, %v9039
    %9041 = vmatmul.bf16.gmra.mxu0 %v3106
    %v9042 = vpop.f32.mrf.mxu0
    %v9043 = vadd.f32 %v8714, %v9042
    %v9044 = vpop.f32.mrf.mxu0
    %v9045 = vadd.f32 %v8716, %v9044
    %9046 = vmatmul.bf16.gmra.mxu0 %v3114
    %v9047 = vpop.f32.mrf.mxu0
    %v9048 = vadd.f32 %v8719, %v9047
    %v9049 = vpop.f32.mrf.mxu0
    %v9050 = vadd.f32 %v8721, %v9049
    %9051 = vmatmul.bf16.gmra.mxu0 %v3122
    %v9052 = vpop.f32.mrf.mxu0
    %v9053 = vadd.f32 %v8724, %v9052
    %v9054 = vpop.f32.mrf.mxu0
    %v9055 = vadd.f32 %v8726, %v9054
    %9056 = vmatmul.bf16.gmra.mxu0 %v3130
    %v9057 = vpop.f32.mrf.mxu0
    %v9058 = vadd.f32 %v8729, %v9057
    %v9059 = vpop.f32.mrf.mxu0
    %v9060 = vadd.f32 %v8731, %v9059
    %9061 = vmatmul.bf16.gmra.mxu0 %v3138
    %v9062 = vpop.f32.mrf.mxu0
    %v9063 = vadd.f32 %v8734, %v9062
    %v9064 = vpop.f32.mrf.mxu0
    %v9065 = vadd.f32 %v8736, %v9064
    %9066 = vmatmul.bf16.gmra.mxu0 %v3146
    %v9067 = vpop.f32.mrf.mxu0
    %v9068 = vadd.f32 %v8739, %v9067
    %v9069 = vpop.f32.mrf.mxu0
    %v9070 = vadd.f32 %v8741, %v9069
    %9071 = vmatmul.bf16.gmra.mxu0 %v3154
    %v9072 = vpop.f32.mrf.mxu0
    %v9073 = vadd.f32 %v8744, %v9072
    %v9074 = vpop.f32.mrf.mxu0
    %v9075 = vadd.f32 %v8746, %v9074
    %9076 = vmatmul.bf16.gmra.mxu0 %v3162
    %v9077 = vpop.f32.mrf.mxu0
    %v9078 = vadd.f32 %v8749, %v9077
    %v9079 = vpop.f32.mrf.mxu0
    %v9080 = vadd.f32 %v8751, %v9079
    %9081 = vmatmul.bf16.gmra.mxu0 %v3170
    %v9082 = vpop.f32.mrf.mxu0
    %v9083 = vadd.f32 %v8754, %v9082
    %v9084 = vpop.f32.mrf.mxu0
    %v9085 = vadd.f32 %v8756, %v9084
    %9086 = vmatmul.bf16.gmra.mxu0 %v3178
    %v9087 = vpop.f32.mrf.mxu0
    %v9088 = vadd.f32 %v8759, %v9087
    %v9089 = vpop.f32.mrf.mxu0
    %v9090 = vadd.f32 %v8761, %v9089
    %9091 = vmatmul.bf16.gmra.mxu0 %v3186
    %v9092 = vpop.f32.mrf.mxu0
    %v9093 = vadd.f32 %v8764, %v9092
    %v9094 = vpop.f32.mrf.mxu0
    %v9095 = vadd.f32 %v8766, %v9094
    %9096 = vmatmul.bf16.gmra.mxu0 %v3194
    %v9097 = vpop.f32.mrf.mxu0
    %v9098 = vadd.f32 %v8769, %v9097
    %v9099 = vpop.f32.mrf.mxu0
    %v9100 = vadd.f32 %v8771, %v9099
    %9101 = vmatmul.bf16.gmra.mxu0 %v3202
    %v9102 = vpop.f32.mrf.mxu0
    %v9103 = vadd.f32 %v8774, %v9102
    %v9104 = vpop.f32.mrf.mxu0
    %v9105 = vadd.f32 %v8776, %v9104
    %9106 = vmatmul.bf16.gmra.mxu0 %v3210
    %v9107 = vpop.f32.mrf.mxu0
    %v9108 = vadd.f32 %v8779, %v9107
    %v9109 = vpop.f32.mrf.mxu0
    %v9110 = vadd.f32 %v8781, %v9109
    %9111 = vmatmul.bf16.gmra.mxu0 %v3218
    %v9112 = vpop.f32.mrf.mxu0
    %v9113 = vadd.f32 %v8784, %v9112
    %v9114 = vpop.f32.mrf.mxu0
    %v9115 = vadd.f32 %v8786, %v9114
    %9116 = vmatmul.bf16.gmra.mxu0 %v3226
    %v9117 = vpop.f32.mrf.mxu0
    %v9118 = vadd.f32 %v8789, %v9117
    %v9119 = vpop.f32.mrf.mxu0
    %v9120 = vadd.f32 %v8791, %v9119
    %9121 = vmatmul.bf16.gmra.mxu0 %v3234
    %v9122 = vpop.f32.mrf.mxu0
    %v9123 = vadd.f32 %v8794, %v9122
    %v9124 = vpop.f32.mrf.mxu0
    %v9125 = vadd.f32 %v8796, %v9124
    %9126 = vmatmul.bf16.gmra.mxu0 %v3242
    %v9127 = vpop.f32.mrf.mxu0
    %v9128 = vadd.f32 %v8799, %v9127
    %v9129 = vpop.f32.mrf.mxu0
    %v9130 = vadd.f32 %v8801, %v9129
    %9131 = vmatmul.bf16.gmra.mxu0 %v3250
    %v9132 = vpop.f32.mrf.mxu0
    %v9133 = vadd.f32 %v8804, %v9132
    %v9134 = vpop.f32.mrf.mxu0
    %v9135 = vadd.f32 %v8806, %v9134
    %9136 = vmatmul.bf16.gmra.mxu0 %v3258
    %v9137 = vpop.f32.mrf.mxu0
    %v9138 = vadd.f32 %v8809, %v9137
    %v9139 = vpop.f32.mrf.mxu0
    %v9140 = vadd.f32 %v8811, %v9139
    %9141 = vmatmul.bf16.gmra.mxu0 %v3266
    %v9142 = vpop.f32.mrf.mxu0
    %v9143 = vadd.f32 %v8814, %v9142
    %v9144 = vpop.f32.mrf.mxu0
    %v9145 = vadd.f32 %v8816, %v9144
    %9146 = vmatmul.bf16.gmra.mxu0 %v3274
    %v9147 = vpop.f32.mrf.mxu0
    %v9148 = vadd.f32 %v8819, %v9147
    %v9149 = vpop.f32.mrf.mxu0
    %v9150 = vadd.f32 %v8821, %v9149
    %9151 = vmatmul.bf16.gmra.mxu0 %v3282
    %v9152 = vpop.f32.mrf.mxu0
    %v9153 = vadd.f32 %v8824, %v9152
    %v9154 = vpop.f32.mrf.mxu0
    %v9155 = vadd.f32 %v8826, %v9154
    %9156 = vmatmul.bf16.gmra.mxu0 %v3290
    %v9157 = vpop.f32.mrf.mxu0
    %v9158 = vadd.f32 %v8829, %v9157
    %v9159 = vpop.f32.mrf.mxu0
    %v9160 = vadd.f32 %v8831, %v9159
    %9161 = vmatmul.bf16.gmra.mxu0 %v3298
    %v9162 = vpop.f32.mrf.mxu0
    %v9163 = vadd.f32 %v8834, %v9162
    %v9164 = vpop.f32.mrf.mxu0
    %v9165 = vadd.f32 %v8836, %v9164
    %9166 = vmatmul.bf16.gmra.mxu0 %v3306
    %v9167 = vpop.f32.mrf.mxu0
    %v9168 = vadd.f32 %v8839, %v9167
    %v9169 = vpop.f32.mrf.mxu0
    %v9170 = vadd.f32 %v8841, %v9169
    %9171 = vmatmul.bf16.gmra.mxu0 %v3314
    %v9172 = vpop.f32.mrf.mxu0
    %v9173 = vadd.f32 %v8844, %v9172
    %v9174 = vpop.f32.mrf.mxu0
    %v9175 = vadd.f32 %v8846, %v9174
    %9176 = vmatmul.bf16.gmra.mxu0 %v3322
    %v9177 = vpop.f32.mrf.mxu0
    %v9178 = vadd.f32 %v8849, %v9177
    %v9179 = vpop.f32.mrf.mxu0
    %v9180 = vadd.f32 %v8851, %v9179
    %9181 = vmatmul.bf16.gmra.mxu0 %v3330
    %v9182 = vpop.f32.mrf.mxu0
    %v9183 = vadd.f32 %v8854, %v9182
    %v9184 = vpop.f32.mrf.mxu0
    %v9185 = vadd.f32 %v8856, %v9184
    %9186 = vmatmul.bf16.gmra.mxu0 %v3338
    %v9187 = vpop.f32.mrf.mxu0
    %v9188 = vadd.f32 %v8859, %v9187
    %v9189 = vpop.f32.mrf.mxu0
    %v9190 = vadd.f32 %v8861, %v9189
    %9191 = vmatmul.bf16.gmra.mxu0 %v3346
    %v9192 = vpop.f32.mrf.mxu0
    %v9193 = vadd.f32 %v8864, %v9192
    %v9194 = vpop.f32.mrf.mxu0
    %v9195 = vadd.f32 %v8866, %v9194
    %9196 = vmatmul.bf16.gmra.mxu0 %v3354
    %v9197 = vpop.f32.mrf.mxu0
    %v9198 = vadd.f32 %v8869, %v9197
    %v9199 = vpop.f32.mrf.mxu0
    %v9200 = vadd.f32 %v8871, %v9199
    %9201 = vmatmul.bf16.gmra.mxu0 %v3362
    %v9202 = vpop.f32.mrf.mxu0
    %v9203 = vadd.f32 %v8874, %v9202
    %v9204 = vpop.f32.mrf.mxu0
    %v9205 = vadd.f32 %v8876, %v9204
    %9206 = vmatmul.bf16.gmra.mxu0 %v3370
    %v9207 = vpop.f32.mrf.mxu0
    %v9208 = vadd.f32 %v8879, %v9207
    %v9209 = vpop.f32.mrf.mxu0
    %v9210 = vadd.f32 %v8881, %v9209
    %9211 = vmatmul.bf16.gmra.mxu0 %v3378
    %v9212 = vpop.f32.mrf.mxu0
    %v9213 = vadd.f32 %v8884, %v9212
    %v9214 = vpop.f32.mrf.mxu0
    %v9215 = vadd.f32 %v8886, %v9214
    %9216 = vmatmul.bf16.gmra.mxu0 %v3386
    %v9217 = vpop.f32.mrf.mxu0
    %v9218 = vadd.f32 %v8889, %v9217
    %v9219 = vpop.f32.mrf.mxu0
    %v9220 = vadd.f32 %v8891, %v9219
    %9221 = vmatmul.bf16.gmra.mxu0 %v3394
    %v9222 = vpop.f32.mrf.mxu0
    %v9223 = vadd.f32 %v8894, %v9222
    %v9224 = vpop.f32.mrf.mxu0
    %v9225 = vadd.f32 %v8896, %v9224
    %9226 = vmatmul.bf16.gmra.mxu0 %v3402
    %v9227 = vpop.f32.mrf.mxu0
    %v9228 = vadd.f32 %v8899, %v9227
    %v9229 = vpop.f32.mrf.mxu0
    %v9230 = vadd.f32 %v8901, %v9229
    %9231 = vmatmul.bf16.gmra.mxu0 %v3410
    %v9232 = vpop.f32.mrf.mxu0
    %v9233 = vadd.f32 %v8904, %v9232
    %v9234 = vpop.f32.mrf.mxu0
    %v9235 = vadd.f32 %v8906, %v9234
    %9236 = vmatmul.bf16.gmra.mxu0 %v3418
    %v9237 = vpop.f32.mrf.mxu0
    %v9238 = vadd.f32 %v8909, %v9237
    %v9239 = vpop.f32.mrf.mxu0
    %v9240 = vadd.f32 %v8911, %v9239
    %9241 = vmatmul.bf16.gmra.mxu0 %v3426
    %v9242 = vpop.f32.mrf.mxu0
    %v9243 = vadd.f32 %v8914, %v9242
    %v9244 = vpop.f32.mrf.mxu0
    %v9245 = vadd.f32 %v8916, %v9244
    %9246 = vmatmul.bf16.gmra.mxu0 %v3434
    %v9247 = vpop.f32.mrf.mxu0
    %v9248 = vadd.f32 %v8919, %v9247
    %v9249 = vpop.f32.mrf.mxu0
    %v9250 = vadd.f32 %v8921, %v9249
    %9251 = vmatmul.bf16.gmra.mxu0 %v3442
    %v9252 = vpop.f32.mrf.mxu0
    %v9253 = vadd.f32 %v8924, %v9252
    %v9254 = vpop.f32.mrf.mxu0
    %v9255 = vadd.f32 %v8926, %v9254
    %9256 = vmatmul.bf16.gmra.mxu0 %v3450
    %v9257 = vpop.f32.mrf.mxu0
    %v9258 = vadd.f32 %v8929, %v9257
    %v9259 = vpop.f32.mrf.mxu0
    %v9260 = vadd.f32 %v8931, %v9259
    %9261 = vmatmul.bf16.gmra.mxu0 %v3458
    %v9262 = vpop.f32.mrf.mxu0
    %v9263 = vadd.f32 %v8934, %v9262
    %v9264 = vpop.f32.mrf.mxu0
    %v9265 = vadd.f32 %v8936, %v9264
    %9266 = vmatmul.bf16.gmra.mxu0 %v3466
    %v9267 = vpop.f32.mrf.mxu0
    %v9268 = vadd.f32 %v8939, %v9267
    %v9269 = vpop.f32.mrf.mxu0
    %v9270 = vadd.f32 %v8941, %v9269
    %9271 = vmatmul.bf16.gmra.mxu0 %v3474
    %v9272 = vpop.f32.mrf.mxu0
    %v9273 = vadd.f32 %v8944, %v9272
    %v9274 = vpop.f32.mrf.mxu0
    %v9275 = vadd.f32 %v8946, %v9274
    %9276 = vmatmul.bf16.gmra.mxu0 %v3482
    %v9277 = vpop.f32.mrf.mxu0
    %v9278 = vadd.f32 %v8949, %v9277
    %v9279 = vpop.f32.mrf.mxu0
    %v9280 = vadd.f32 %v8951, %v9279
    %9281 = vmatmul.bf16.gmra.mxu0 %v3490
    %v9282 = vpop.f32.mrf.mxu0
    %v9283 = vadd.f32 %v8954, %v9282
    %v9284 = vpop.f32.mrf.mxu0
    %v9285 = vadd.f32 %v8956, %v9284
    %9286 = vmatmul.bf16.gmra.mxu0 %v3498
    %v9287 = vpop.f32.mrf.mxu0
    %v9288 = vadd.f32 %v8959, %v9287
    %v9289 = vpop.f32.mrf.mxu0
    %v9290 = vadd.f32 %v8961, %v9289
    %9291 = vmatmul.bf16.gmra.mxu0 %v3506
    %v9292 = vpop.f32.mrf.mxu0
    %v9293 = vadd.f32 %v8964, %v9292
    %v9294 = vpop.f32.mrf.mxu0
    %v9295 = vadd.f32 %v8966, %v9294
    %9296 = vmatmul.bf16.gmra.mxu0 %v3514
    %v9297 = vpop.f32.mrf.mxu0
    %v9298 = vadd.f32 %v8969, %v9297
    %v9299 = vpop.f32.mrf.mxu0
    %v9300 = vadd.f32 %v8971, %v9299
    %9301 = vmatmul.bf16.gmra.mxu0 %v3522
    %v9302 = vpop.f32.mrf.mxu0
    %v9303 = vadd.f32 %v8974, %v9302
    %v9304 = vpop.f32.mrf.mxu0
    %v9305 = vadd.f32 %v8976, %v9304
    %9306 = vmatmul.bf16.gmra.mxu0 %v3530
    %v9307 = vpop.f32.mrf.mxu0
    %v9308 = vadd.f32 %v8979, %v9307
    %v9309 = vpop.f32.mrf.mxu0
    %v9310 = vadd.f32 %v8981, %v9309
    %9311 = vmatmul.bf16.gmra.mxu0 %v3538
    %v9312 = vpop.f32.mrf.mxu0
    %v9313 = vadd.f32 %v8984, %v9312
    %v9314 = vpop.f32.mrf.mxu0
    %v9315 = vadd.f32 %v8986, %v9314
    %9316 = vmatmul.bf16.gmra.mxu0 %v3546
    %v9317 = vpop.f32.mrf.mxu0
    %v9318 = vadd.f32 %v8989, %v9317
    %v9319 = vpop.f32.mrf.mxu0
    %v9320 = vadd.f32 %v8991, %v9319
    %9321 = vmatmul.bf16.gmra.mxu0 %v3554
    %v9322 = vpop.f32.mrf.mxu0
    %v9323 = vadd.f32 %v8994, %v9322
    %v9324 = vpop.f32.mrf.mxu0
    %v9325 = vadd.f32 %v8996, %v9324
    %9326 = vmatmul.bf16.gmra.mxu0 %v3562
    %v9327 = vpop.f32.mrf.mxu0
    %v9328 = vadd.f32 %v8999, %v9327
    %v9329 = vpop.f32.mrf.mxu0
    %v9330 = vadd.f32 %v9001, %v9329
    %9331 = vdwg.mxu0
    %9332 = vmatpush.bf16.msra.mxu0 %v7349
    %9333 = vmatpush.bf16.msra.mxu0 %v7348
    %9334 = vmatpush.bf16.msra.mxu0 %v7347
    %9335 = vmatpush.bf16.msra.mxu0 %v7346
    %9336 = vmatpush.bf16.msra.mxu0 %v7345
    %9337 = vmatpush.bf16.msra.mxu0 %v7344
    %9338 = vmatpush.bf16.msra.mxu0 %v7343
    %9339 = vmatpush.bf16.msra.mxu0 %v7342
    %9340 = vmatmul.bf16.gmra.mxu0 %v3059
    %v9341 = vpop.f32.mrf.mxu0
    %v9342 = vadd.f32 %v9013, %v9341
    %v9343 = vpop.f32.mrf.mxu0
    %v9344 = vadd.f32 %v9015, %v9343
    %9345 = vmatmul.bf16.gmra.mxu0 %v3067
    %v9346 = vpop.f32.mrf.mxu0
    %v9347 = vadd.f32 %v9018, %v9346
    %v9348 = vpop.f32.mrf.mxu0
    %v9349 = vadd.f32 %v9020, %v9348
    %9350 = vmatmul.bf16.gmra.mxu0 %v3075
    %v9351 = vpop.f32.mrf.mxu0
    %v9352 = vadd.f32 %v9023, %v9351
    %v9353 = vpop.f32.mrf.mxu0
    %v9354 = vadd.f32 %v9025, %v9353
    %9355 = vmatmul.bf16.gmra.mxu0 %v3083
    %v9356 = vpop.f32.mrf.mxu0
    %v9357 = vadd.f32 %v9028, %v9356
    %v9358 = vpop.f32.mrf.mxu0
    %v9359 = vadd.f32 %v9030, %v9358
    %9360 = vmatmul.bf16.gmra.mxu0 %v3091
    %v9361 = vpop.f32.mrf.mxu0
    %v9362 = vadd.f32 %v9033, %v9361
    %v9363 = vpop.f32.mrf.mxu0
    %v9364 = vadd.f32 %v9035, %v9363
    %9365 = vmatmul.bf16.gmra.mxu0 %v3099
    %v9366 = vpop.f32.mrf.mxu0
    %v9367 = vadd.f32 %v9038, %v9366
    %v9368 = vpop.f32.mrf.mxu0
    %v9369 = vadd.f32 %v9040, %v9368
    %9370 = vmatmul.bf16.gmra.mxu0 %v3107
    %v9371 = vpop.f32.mrf.mxu0
    %v9372 = vadd.f32 %v9043, %v9371
    %v9373 = vpop.f32.mrf.mxu0
    %v9374 = vadd.f32 %v9045, %v9373
    %9375 = vmatmul.bf16.gmra.mxu0 %v3115
    %v9376 = vpop.f32.mrf.mxu0
    %v9377 = vadd.f32 %v9048, %v9376
    %v9378 = vpop.f32.mrf.mxu0
    %v9379 = vadd.f32 %v9050, %v9378
    %9380 = vmatmul.bf16.gmra.mxu0 %v3123
    %v9381 = vpop.f32.mrf.mxu0
    %v9382 = vadd.f32 %v9053, %v9381
    %v9383 = vpop.f32.mrf.mxu0
    %v9384 = vadd.f32 %v9055, %v9383
    %9385 = vmatmul.bf16.gmra.mxu0 %v3131
    %v9386 = vpop.f32.mrf.mxu0
    %v9387 = vadd.f32 %v9058, %v9386
    %v9388 = vpop.f32.mrf.mxu0
    %v9389 = vadd.f32 %v9060, %v9388
    %9390 = vmatmul.bf16.gmra.mxu0 %v3139
    %v9391 = vpop.f32.mrf.mxu0
    %v9392 = vadd.f32 %v9063, %v9391
    %v9393 = vpop.f32.mrf.mxu0
    %v9394 = vadd.f32 %v9065, %v9393
    %9395 = vmatmul.bf16.gmra.mxu0 %v3147
    %v9396 = vpop.f32.mrf.mxu0
    %v9397 = vadd.f32 %v9068, %v9396
    %v9398 = vpop.f32.mrf.mxu0
    %v9399 = vadd.f32 %v9070, %v9398
    %9400 = vmatmul.bf16.gmra.mxu0 %v3155
    %v9401 = vpop.f32.mrf.mxu0
    %v9402 = vadd.f32 %v9073, %v9401
    %v9403 = vpop.f32.mrf.mxu0
    %v9404 = vadd.f32 %v9075, %v9403
    %9405 = vmatmul.bf16.gmra.mxu0 %v3163
    %v9406 = vpop.f32.mrf.mxu0
    %v9407 = vadd.f32 %v9078, %v9406
    %v9408 = vpop.f32.mrf.mxu0
    %v9409 = vadd.f32 %v9080, %v9408
    %9410 = vmatmul.bf16.gmra.mxu0 %v3171
    %v9411 = vpop.f32.mrf.mxu0
    %v9412 = vadd.f32 %v9083, %v9411
    %v9413 = vpop.f32.mrf.mxu0
    %v9414 = vadd.f32 %v9085, %v9413
    %9415 = vmatmul.bf16.gmra.mxu0 %v3179
    %v9416 = vpop.f32.mrf.mxu0
    %v9417 = vadd.f32 %v9088, %v9416
    %v9418 = vpop.f32.mrf.mxu0
    %v9419 = vadd.f32 %v9090, %v9418
    %9420 = vmatmul.bf16.gmra.mxu0 %v3187
    %v9421 = vpop.f32.mrf.mxu0
    %v9422 = vadd.f32 %v9093, %v9421
    %v9423 = vpop.f32.mrf.mxu0
    %v9424 = vadd.f32 %v9095, %v9423
    %9425 = vmatmul.bf16.gmra.mxu0 %v3195
    %v9426 = vpop.f32.mrf.mxu0
    %v9427 = vadd.f32 %v9098, %v9426
    %v9428 = vpop.f32.mrf.mxu0
    %v9429 = vadd.f32 %v9100, %v9428
    %9430 = vmatmul.bf16.gmra.mxu0 %v3203
    %v9431 = vpop.f32.mrf.mxu0
    %v9432 = vadd.f32 %v9103, %v9431
    %v9433 = vpop.f32.mrf.mxu0
    %v9434 = vadd.f32 %v9105, %v9433
    %9435 = vmatmul.bf16.gmra.mxu0 %v3211
    %v9436 = vpop.f32.mrf.mxu0
    %v9437 = vadd.f32 %v9108, %v9436
    %v9438 = vpop.f32.mrf.mxu0
    %v9439 = vadd.f32 %v9110, %v9438
    %9440 = vmatmul.bf16.gmra.mxu0 %v3219
    %v9441 = vpop.f32.mrf.mxu0
    %v9442 = vadd.f32 %v9113, %v9441
    %v9443 = vpop.f32.mrf.mxu0
    %v9444 = vadd.f32 %v9115, %v9443
    %9445 = vmatmul.bf16.gmra.mxu0 %v3227
    %v9446 = vpop.f32.mrf.mxu0
    %v9447 = vadd.f32 %v9118, %v9446
    %v9448 = vpop.f32.mrf.mxu0
    %v9449 = vadd.f32 %v9120, %v9448
    %9450 = vmatmul.bf16.gmra.mxu0 %v3235
    %v9451 = vpop.f32.mrf.mxu0
    %v9452 = vadd.f32 %v9123, %v9451
    %v9453 = vpop.f32.mrf.mxu0
    %v9454 = vadd.f32 %v9125, %v9453
    %9455 = vmatmul.bf16.gmra.mxu0 %v3243
    %v9456 = vpop.f32.mrf.mxu0
    %v9457 = vadd.f32 %v9128, %v9456
    %v9458 = vpop.f32.mrf.mxu0
    %v9459 = vadd.f32 %v9130, %v9458
    %9460 = vmatmul.bf16.gmra.mxu0 %v3251
    %v9461 = vpop.f32.mrf.mxu0
    %v9462 = vadd.f32 %v9133, %v9461
    %v9463 = vpop.f32.mrf.mxu0
    %v9464 = vadd.f32 %v9135, %v9463
    %9465 = vmatmul.bf16.gmra.mxu0 %v3259
    %v9466 = vpop.f32.mrf.mxu0
    %v9467 = vadd.f32 %v9138, %v9466
    %v9468 = vpop.f32.mrf.mxu0
    %v9469 = vadd.f32 %v9140, %v9468
    %9470 = vmatmul.bf16.gmra.mxu0 %v3267
    %v9471 = vpop.f32.mrf.mxu0
    %v9472 = vadd.f32 %v9143, %v9471
    %v9473 = vpop.f32.mrf.mxu0
    %v9474 = vadd.f32 %v9145, %v9473
    %9475 = vmatmul.bf16.gmra.mxu0 %v3275
    %v9476 = vpop.f32.mrf.mxu0
    %v9477 = vadd.f32 %v9148, %v9476
    %v9478 = vpop.f32.mrf.mxu0
    %v9479 = vadd.f32 %v9150, %v9478
    %9480 = vmatmul.bf16.gmra.mxu0 %v3283
    %v9481 = vpop.f32.mrf.mxu0
    %v9482 = vadd.f32 %v9153, %v9481
    %v9483 = vpop.f32.mrf.mxu0
    %v9484 = vadd.f32 %v9155, %v9483
    %9485 = vmatmul.bf16.gmra.mxu0 %v3291
    %v9486 = vpop.f32.mrf.mxu0
    %v9487 = vadd.f32 %v9158, %v9486
    %v9488 = vpop.f32.mrf.mxu0
    %v9489 = vadd.f32 %v9160, %v9488
    %9490 = vmatmul.bf16.gmra.mxu0 %v3299
    %v9491 = vpop.f32.mrf.mxu0
    %v9492 = vadd.f32 %v9163, %v9491
    %v9493 = vpop.f32.mrf.mxu0
    %v9494 = vadd.f32 %v9165, %v9493
    %9495 = vmatmul.bf16.gmra.mxu0 %v3307
    %v9496 = vpop.f32.mrf.mxu0
    %v9497 = vadd.f32 %v9168, %v9496
    %v9498 = vpop.f32.mrf.mxu0
    %v9499 = vadd.f32 %v9170, %v9498
    %9500 = vmatmul.bf16.gmra.mxu0 %v3315
    %v9501 = vpop.f32.mrf.mxu0
    %v9502 = vadd.f32 %v9173, %v9501
    %v9503 = vpop.f32.mrf.mxu0
    %v9504 = vadd.f32 %v9175, %v9503
    %9505 = vmatmul.bf16.gmra.mxu0 %v3323
    %v9506 = vpop.f32.mrf.mxu0
    %v9507 = vadd.f32 %v9178, %v9506
    %v9508 = vpop.f32.mrf.mxu0
    %v9509 = vadd.f32 %v9180, %v9508
    %9510 = vmatmul.bf16.gmra.mxu0 %v3331
    %v9511 = vpop.f32.mrf.mxu0
    %v9512 = vadd.f32 %v9183, %v9511
    %v9513 = vpop.f32.mrf.mxu0
    %v9514 = vadd.f32 %v9185, %v9513
    %9515 = vmatmul.bf16.gmra.mxu0 %v3339
    %v9516 = vpop.f32.mrf.mxu0
    %v9517 = vadd.f32 %v9188, %v9516
    %v9518 = vpop.f32.mrf.mxu0
    %v9519 = vadd.f32 %v9190, %v9518
    %9520 = vmatmul.bf16.gmra.mxu0 %v3347
    %v9521 = vpop.f32.mrf.mxu0
    %v9522 = vadd.f32 %v9193, %v9521
    %v9523 = vpop.f32.mrf.mxu0
    %v9524 = vadd.f32 %v9195, %v9523
    %9525 = vmatmul.bf16.gmra.mxu0 %v3355
    %v9526 = vpop.f32.mrf.mxu0
    %v9527 = vadd.f32 %v9198, %v9526
    %v9528 = vpop.f32.mrf.mxu0
    %v9529 = vadd.f32 %v9200, %v9528
    %9530 = vmatmul.bf16.gmra.mxu0 %v3363
    %v9531 = vpop.f32.mrf.mxu0
    %v9532 = vadd.f32 %v9203, %v9531
    %v9533 = vpop.f32.mrf.mxu0
    %v9534 = vadd.f32 %v9205, %v9533
    %9535 = vmatmul.bf16.gmra.mxu0 %v3371
    %v9536 = vpop.f32.mrf.mxu0
    %v9537 = vadd.f32 %v9208, %v9536
    %v9538 = vpop.f32.mrf.mxu0
    %v9539 = vadd.f32 %v9210, %v9538
    %9540 = vmatmul.bf16.gmra.mxu0 %v3379
    %v9541 = vpop.f32.mrf.mxu0
    %v9542 = vadd.f32 %v9213, %v9541
    %v9543 = vpop.f32.mrf.mxu0
    %v9544 = vadd.f32 %v9215, %v9543
    %9545 = vmatmul.bf16.gmra.mxu0 %v3387
    %v9546 = vpop.f32.mrf.mxu0
    %v9547 = vadd.f32 %v9218, %v9546
    %v9548 = vpop.f32.mrf.mxu0
    %v9549 = vadd.f32 %v9220, %v9548
    %9550 = vmatmul.bf16.gmra.mxu0 %v3395
    %v9551 = vpop.f32.mrf.mxu0
    %v9552 = vadd.f32 %v9223, %v9551
    %v9553 = vpop.f32.mrf.mxu0
    %v9554 = vadd.f32 %v9225, %v9553
    %9555 = vmatmul.bf16.gmra.mxu0 %v3403
    %v9556 = vpop.f32.mrf.mxu0
    %v9557 = vadd.f32 %v9228, %v9556
    %v9558 = vpop.f32.mrf.mxu0
    %v9559 = vadd.f32 %v9230, %v9558
    %9560 = vmatmul.bf16.gmra.mxu0 %v3411
    %v9561 = vpop.f32.mrf.mxu0
    %v9562 = vadd.f32 %v9233, %v9561
    %v9563 = vpop.f32.mrf.mxu0
    %v9564 = vadd.f32 %v9235, %v9563
    %9565 = vmatmul.bf16.gmra.mxu0 %v3419
    %v9566 = vpop.f32.mrf.mxu0
    %v9567 = vadd.f32 %v9238, %v9566
    %v9568 = vpop.f32.mrf.mxu0
    %v9569 = vadd.f32 %v9240, %v9568
    %9570 = vmatmul.bf16.gmra.mxu0 %v3427
    %v9571 = vpop.f32.mrf.mxu0
    %v9572 = vadd.f32 %v9243, %v9571
    %v9573 = vpop.f32.mrf.mxu0
    %v9574 = vadd.f32 %v9245, %v9573
    %9575 = vmatmul.bf16.gmra.mxu0 %v3435
    %v9576 = vpop.f32.mrf.mxu0
    %v9577 = vadd.f32 %v9248, %v9576
    %v9578 = vpop.f32.mrf.mxu0
    %v9579 = vadd.f32 %v9250, %v9578
    %9580 = vmatmul.bf16.gmra.mxu0 %v3443
    %v9581 = vpop.f32.mrf.mxu0
    %v9582 = vadd.f32 %v9253, %v9581
    %v9583 = vpop.f32.mrf.mxu0
    %v9584 = vadd.f32 %v9255, %v9583
    %9585 = vmatmul.bf16.gmra.mxu0 %v3451
    %v9586 = vpop.f32.mrf.mxu0
    %v9587 = vadd.f32 %v9258, %v9586
    %v9588 = vpop.f32.mrf.mxu0
    %v9589 = vadd.f32 %v9260, %v9588
    %9590 = vmatmul.bf16.gmra.mxu0 %v3459
    %v9591 = vpop.f32.mrf.mxu0
    %v9592 = vadd.f32 %v9263, %v9591
    %v9593 = vpop.f32.mrf.mxu0
    %v9594 = vadd.f32 %v9265, %v9593
    %9595 = vmatmul.bf16.gmra.mxu0 %v3467
    %v9596 = vpop.f32.mrf.mxu0
    %v9597 = vadd.f32 %v9268, %v9596
    %v9598 = vpop.f32.mrf.mxu0
    %v9599 = vadd.f32 %v9270, %v9598
    %9600 = vmatmul.bf16.gmra.mxu0 %v3475
    %v9601 = vpop.f32.mrf.mxu0
    %v9602 = vadd.f32 %v9273, %v9601
    %v9603 = vpop.f32.mrf.mxu0
    %v9604 = vadd.f32 %v9275, %v9603
    %9605 = vmatmul.bf16.gmra.mxu0 %v3483
    %v9606 = vpop.f32.mrf.mxu0
    %v9607 = vadd.f32 %v9278, %v9606
    %v9608 = vpop.f32.mrf.mxu0
    %v9609 = vadd.f32 %v9280, %v9608
    %9610 = vmatmul.bf16.gmra.mxu0 %v3491
    %v9611 = vpop.f32.mrf.mxu0
    %v9612 = vadd.f32 %v9283, %v9611
    %v9613 = vpop.f32.mrf.mxu0
    %v9614 = vadd.f32 %v9285, %v9613
    %9615 = vmatmul.bf16.gmra.mxu0 %v3499
    %v9616 = vpop.f32.mrf.mxu0
    %v9617 = vadd.f32 %v9288, %v9616
    %v9618 = vpop.f32.mrf.mxu0
    %v9619 = vadd.f32 %v9290, %v9618
    %9620 = vmatmul.bf16.gmra.mxu0 %v3507
    %v9621 = vpop.f32.mrf.mxu0
    %v9622 = vadd.f32 %v9293, %v9621
    %v9623 = vpop.f32.mrf.mxu0
    %v9624 = vadd.f32 %v9295, %v9623
    %9625 = vmatmul.bf16.gmra.mxu0 %v3515
    %v9626 = vpop.f32.mrf.mxu0
    %v9627 = vadd.f32 %v9298, %v9626
    %v9628 = vpop.f32.mrf.mxu0
    %v9629 = vadd.f32 %v9300, %v9628
    %9630 = vmatmul.bf16.gmra.mxu0 %v3523
    %v9631 = vpop.f32.mrf.mxu0
    %v9632 = vadd.f32 %v9303, %v9631
    %v9633 = vpop.f32.mrf.mxu0
    %v9634 = vadd.f32 %v9305, %v9633
    %9635 = vmatmul.bf16.gmra.mxu0 %v3531
    %v9636 = vpop.f32.mrf.mxu0
    %v9637 = vadd.f32 %v9308, %v9636
    %v9638 = vpop.f32.mrf.mxu0
    %v9639 = vadd.f32 %v9310, %v9638
    %9640 = vmatmul.bf16.gmra.mxu0 %v3539
    %v9641 = vpop.f32.mrf.mxu0
    %v9642 = vadd.f32 %v9313, %v9641
    %v9643 = vpop.f32.mrf.mxu0
    %v9644 = vadd.f32 %v9315, %v9643
    %9645 = vmatmul.bf16.gmra.mxu0 %v3547
    %v9646 = vpop.f32.mrf.mxu0
    %v9647 = vadd.f32 %v9318, %v9646
    %v9648 = vpop.f32.mrf.mxu0
    %v9649 = vadd.f32 %v9320, %v9648
    %9650 = vmatmul.bf16.gmra.mxu0 %v3555
    %v9651 = vpop.f32.mrf.mxu0
    %v9652 = vadd.f32 %v9323, %v9651
    %v9653 = vpop.f32.mrf.mxu0
    %v9654 = vadd.f32 %v9325, %v9653
    %9655 = vmatmul.bf16.gmra.mxu0 %v3563
    %v9656 = vpop.f32.mrf.mxu0
    %v9657 = vadd.f32 %v9328, %v9656
    %v9658 = vpop.f32.mrf.mxu0
    %v9659 = vadd.f32 %v9330, %v9658
    %9660 = vdwg.mxu0
    %9661 = vmatpush.bf16.msra.mxu0 %v7357
    %9662 = vmatpush.bf16.msra.mxu0 %v7356
    %9663 = vmatpush.bf16.msra.mxu0 %v7355
    %9664 = vmatpush.bf16.msra.mxu0 %v7354
    %9665 = vmatpush.bf16.msra.mxu0 %v7353
    %9666 = vmatpush.bf16.msra.mxu0 %v7352
    %9667 = vmatpush.bf16.msra.mxu0 %v7351
    %9668 = vmatpush.bf16.msra.mxu0 %v7350
    %9669 = vmatmul.bf16.gmra.mxu0 %v3060
    %v9670 = vpop.f32.mrf.mxu0
    %v9671 = vadd.f32 %v9342, %v9670
    %v9672 = vpop.f32.mrf.mxu0
    %v9673 = vadd.f32 %v9344, %v9672
    %9674 = vmatmul.bf16.gmra.mxu0 %v3068
    %v9675 = vpop.f32.mrf.mxu0
    %v9676 = vadd.f32 %v9347, %v9675
    %v9677 = vpop.f32.mrf.mxu0
    %v9678 = vadd.f32 %v9349, %v9677
    %9679 = vmatmul.bf16.gmra.mxu0 %v3076
    %v9680 = vpop.f32.mrf.mxu0
    %v9681 = vadd.f32 %v9352, %v9680
    %v9682 = vpop.f32.mrf.mxu0
    %v9683 = vadd.f32 %v9354, %v9682
    %9684 = vmatmul.bf16.gmra.mxu0 %v3084
    %v9685 = vpop.f32.mrf.mxu0
    %v9686 = vadd.f32 %v9357, %v9685
    %v9687 = vpop.f32.mrf.mxu0
    %v9688 = vadd.f32 %v9359, %v9687
    %9689 = vmatmul.bf16.gmra.mxu0 %v3092
    %v9690 = vpop.f32.mrf.mxu0
    %v9691 = vadd.f32 %v9362, %v9690
    %v9692 = vpop.f32.mrf.mxu0
    %v9693 = vadd.f32 %v9364, %v9692
    %9694 = vmatmul.bf16.gmra.mxu0 %v3100
    %v9695 = vpop.f32.mrf.mxu0
    %v9696 = vadd.f32 %v9367, %v9695
    %v9697 = vpop.f32.mrf.mxu0
    %v9698 = vadd.f32 %v9369, %v9697
    %9699 = vmatmul.bf16.gmra.mxu0 %v3108
    %v9700 = vpop.f32.mrf.mxu0
    %v9701 = vadd.f32 %v9372, %v9700
    %v9702 = vpop.f32.mrf.mxu0
    %v9703 = vadd.f32 %v9374, %v9702
    %9704 = vmatmul.bf16.gmra.mxu0 %v3116
    %v9705 = vpop.f32.mrf.mxu0
    %v9706 = vadd.f32 %v9377, %v9705
    %v9707 = vpop.f32.mrf.mxu0
    %v9708 = vadd.f32 %v9379, %v9707
    %9709 = vmatmul.bf16.gmra.mxu0 %v3124
    %v9710 = vpop.f32.mrf.mxu0
    %v9711 = vadd.f32 %v9382, %v9710
    %v9712 = vpop.f32.mrf.mxu0
    %v9713 = vadd.f32 %v9384, %v9712
    %9714 = vmatmul.bf16.gmra.mxu0 %v3132
    %v9715 = vpop.f32.mrf.mxu0
    %v9716 = vadd.f32 %v9387, %v9715
    %v9717 = vpop.f32.mrf.mxu0
    %v9718 = vadd.f32 %v9389, %v9717
    %9719 = vmatmul.bf16.gmra.mxu0 %v3140
    %v9720 = vpop.f32.mrf.mxu0
    %v9721 = vadd.f32 %v9392, %v9720
    %v9722 = vpop.f32.mrf.mxu0
    %v9723 = vadd.f32 %v9394, %v9722
    %9724 = vmatmul.bf16.gmra.mxu0 %v3148
    %v9725 = vpop.f32.mrf.mxu0
    %v9726 = vadd.f32 %v9397, %v9725
    %v9727 = vpop.f32.mrf.mxu0
    %v9728 = vadd.f32 %v9399, %v9727
    %9729 = vmatmul.bf16.gmra.mxu0 %v3156
    %v9730 = vpop.f32.mrf.mxu0
    %v9731 = vadd.f32 %v9402, %v9730
    %v9732 = vpop.f32.mrf.mxu0
    %v9733 = vadd.f32 %v9404, %v9732
    %9734 = vmatmul.bf16.gmra.mxu0 %v3164
    %v9735 = vpop.f32.mrf.mxu0
    %v9736 = vadd.f32 %v9407, %v9735
    %v9737 = vpop.f32.mrf.mxu0
    %v9738 = vadd.f32 %v9409, %v9737
    %9739 = vmatmul.bf16.gmra.mxu0 %v3172
    %v9740 = vpop.f32.mrf.mxu0
    %v9741 = vadd.f32 %v9412, %v9740
    %v9742 = vpop.f32.mrf.mxu0
    %v9743 = vadd.f32 %v9414, %v9742
    %9744 = vmatmul.bf16.gmra.mxu0 %v3180
    %v9745 = vpop.f32.mrf.mxu0
    %v9746 = vadd.f32 %v9417, %v9745
    %v9747 = vpop.f32.mrf.mxu0
    %v9748 = vadd.f32 %v9419, %v9747
    %9749 = vmatmul.bf16.gmra.mxu0 %v3188
    %v9750 = vpop.f32.mrf.mxu0
    %v9751 = vadd.f32 %v9422, %v9750
    %v9752 = vpop.f32.mrf.mxu0
    %v9753 = vadd.f32 %v9424, %v9752
    %9754 = vmatmul.bf16.gmra.mxu0 %v3196
    %v9755 = vpop.f32.mrf.mxu0
    %v9756 = vadd.f32 %v9427, %v9755
    %v9757 = vpop.f32.mrf.mxu0
    %v9758 = vadd.f32 %v9429, %v9757
    %9759 = vmatmul.bf16.gmra.mxu0 %v3204
    %v9760 = vpop.f32.mrf.mxu0
    %v9761 = vadd.f32 %v9432, %v9760
    %v9762 = vpop.f32.mrf.mxu0
    %v9763 = vadd.f32 %v9434, %v9762
    %9764 = vmatmul.bf16.gmra.mxu0 %v3212
    %v9765 = vpop.f32.mrf.mxu0
    %v9766 = vadd.f32 %v9437, %v9765
    %v9767 = vpop.f32.mrf.mxu0
    %v9768 = vadd.f32 %v9439, %v9767
    %9769 = vmatmul.bf16.gmra.mxu0 %v3220
    %v9770 = vpop.f32.mrf.mxu0
    %v9771 = vadd.f32 %v9442, %v9770
    %v9772 = vpop.f32.mrf.mxu0
    %v9773 = vadd.f32 %v9444, %v9772
    %9774 = vmatmul.bf16.gmra.mxu0 %v3228
    %v9775 = vpop.f32.mrf.mxu0
    %v9776 = vadd.f32 %v9447, %v9775
    %v9777 = vpop.f32.mrf.mxu0
    %v9778 = vadd.f32 %v9449, %v9777
    %9779 = vmatmul.bf16.gmra.mxu0 %v3236
    %v9780 = vpop.f32.mrf.mxu0
    %v9781 = vadd.f32 %v9452, %v9780
    %v9782 = vpop.f32.mrf.mxu0
    %v9783 = vadd.f32 %v9454, %v9782
    %9784 = vmatmul.bf16.gmra.mxu0 %v3244
    %v9785 = vpop.f32.mrf.mxu0
    %v9786 = vadd.f32 %v9457, %v9785
    %v9787 = vpop.f32.mrf.mxu0
    %v9788 = vadd.f32 %v9459, %v9787
    %9789 = vmatmul.bf16.gmra.mxu0 %v3252
    %v9790 = vpop.f32.mrf.mxu0
    %v9791 = vadd.f32 %v9462, %v9790
    %v9792 = vpop.f32.mrf.mxu0
    %v9793 = vadd.f32 %v9464, %v9792
    %9794 = vmatmul.bf16.gmra.mxu0 %v3260
    %v9795 = vpop.f32.mrf.mxu0
    %v9796 = vadd.f32 %v9467, %v9795
    %v9797 = vpop.f32.mrf.mxu0
    %v9798 = vadd.f32 %v9469, %v9797
    %9799 = vmatmul.bf16.gmra.mxu0 %v3268
    %v9800 = vpop.f32.mrf.mxu0
    %v9801 = vadd.f32 %v9472, %v9800
    %v9802 = vpop.f32.mrf.mxu0
    %v9803 = vadd.f32 %v9474, %v9802
    %9804 = vmatmul.bf16.gmra.mxu0 %v3276
    %v9805 = vpop.f32.mrf.mxu0
    %v9806 = vadd.f32 %v9477, %v9805
    %v9807 = vpop.f32.mrf.mxu0
    %v9808 = vadd.f32 %v9479, %v9807
    %9809 = vmatmul.bf16.gmra.mxu0 %v3284
    %v9810 = vpop.f32.mrf.mxu0
    %v9811 = vadd.f32 %v9482, %v9810
    %v9812 = vpop.f32.mrf.mxu0
    %v9813 = vadd.f32 %v9484, %v9812
    %9814 = vmatmul.bf16.gmra.mxu0 %v3292
    %v9815 = vpop.f32.mrf.mxu0
    %v9816 = vadd.f32 %v9487, %v9815
    %v9817 = vpop.f32.mrf.mxu0
    %v9818 = vadd.f32 %v9489, %v9817
    %9819 = vmatmul.bf16.gmra.mxu0 %v3300
    %v9820 = vpop.f32.mrf.mxu0
    %v9821 = vadd.f32 %v9492, %v9820
    %v9822 = vpop.f32.mrf.mxu0
    %v9823 = vadd.f32 %v9494, %v9822
    %9824 = vmatmul.bf16.gmra.mxu0 %v3308
    %v9825 = vpop.f32.mrf.mxu0
    %v9826 = vadd.f32 %v9497, %v9825
    %v9827 = vpop.f32.mrf.mxu0
    %v9828 = vadd.f32 %v9499, %v9827
    %9829 = vmatmul.bf16.gmra.mxu0 %v3316
    %v9830 = vpop.f32.mrf.mxu0
    %v9831 = vadd.f32 %v9502, %v9830
    %v9832 = vpop.f32.mrf.mxu0
    %v9833 = vadd.f32 %v9504, %v9832
    %9834 = vmatmul.bf16.gmra.mxu0 %v3324
    %v9835 = vpop.f32.mrf.mxu0
    %v9836 = vadd.f32 %v9507, %v9835
    %v9837 = vpop.f32.mrf.mxu0
    %v9838 = vadd.f32 %v9509, %v9837
    %9839 = vmatmul.bf16.gmra.mxu0 %v3332
    %v9840 = vpop.f32.mrf.mxu0
    %v9841 = vadd.f32 %v9512, %v9840
    %v9842 = vpop.f32.mrf.mxu0
    %v9843 = vadd.f32 %v9514, %v9842
    %9844 = vmatmul.bf16.gmra.mxu0 %v3340
    %v9845 = vpop.f32.mrf.mxu0
    %v9846 = vadd.f32 %v9517, %v9845
    %v9847 = vpop.f32.mrf.mxu0
    %v9848 = vadd.f32 %v9519, %v9847
    %9849 = vmatmul.bf16.gmra.mxu0 %v3348
    %v9850 = vpop.f32.mrf.mxu0
    %v9851 = vadd.f32 %v9522, %v9850
    %v9852 = vpop.f32.mrf.mxu0
    %v9853 = vadd.f32 %v9524, %v9852
    %9854 = vmatmul.bf16.gmra.mxu0 %v3356
    %v9855 = vpop.f32.mrf.mxu0
    %v9856 = vadd.f32 %v9527, %v9855
    %v9857 = vpop.f32.mrf.mxu0
    %v9858 = vadd.f32 %v9529, %v9857
    %9859 = vmatmul.bf16.gmra.mxu0 %v3364
    %v9860 = vpop.f32.mrf.mxu0
    %v9861 = vadd.f32 %v9532, %v9860
    %v9862 = vpop.f32.mrf.mxu0
    %v9863 = vadd.f32 %v9534, %v9862
    %9864 = vmatmul.bf16.gmra.mxu0 %v3372
    %v9865 = vpop.f32.mrf.mxu0
    %v9866 = vadd.f32 %v9537, %v9865
    %v9867 = vpop.f32.mrf.mxu0
    %v9868 = vadd.f32 %v9539, %v9867
    %9869 = vmatmul.bf16.gmra.mxu0 %v3380
    %v9870 = vpop.f32.mrf.mxu0
    %v9871 = vadd.f32 %v9542, %v9870
    %v9872 = vpop.f32.mrf.mxu0
    %v9873 = vadd.f32 %v9544, %v9872
    %9874 = vmatmul.bf16.gmra.mxu0 %v3388
    %v9875 = vpop.f32.mrf.mxu0
    %v9876 = vadd.f32 %v9547, %v9875
    %v9877 = vpop.f32.mrf.mxu0
    %v9878 = vadd.f32 %v9549, %v9877
    %9879 = vmatmul.bf16.gmra.mxu0 %v3396
    %v9880 = vpop.f32.mrf.mxu0
    %v9881 = vadd.f32 %v9552, %v9880
    %v9882 = vpop.f32.mrf.mxu0
    %v9883 = vadd.f32 %v9554, %v9882
    %9884 = vmatmul.bf16.gmra.mxu0 %v3404
    %v9885 = vpop.f32.mrf.mxu0
    %v9886 = vadd.f32 %v9557, %v9885
    %v9887 = vpop.f32.mrf.mxu0
    %v9888 = vadd.f32 %v9559, %v9887
    %9889 = vmatmul.bf16.gmra.mxu0 %v3412
    %v9890 = vpop.f32.mrf.mxu0
    %v9891 = vadd.f32 %v9562, %v9890
    %v9892 = vpop.f32.mrf.mxu0
    %v9893 = vadd.f32 %v9564, %v9892
    %9894 = vmatmul.bf16.gmra.mxu0 %v3420
    %v9895 = vpop.f32.mrf.mxu0
    %v9896 = vadd.f32 %v9567, %v9895
    %v9897 = vpop.f32.mrf.mxu0
    %v9898 = vadd.f32 %v9569, %v9897
    %9899 = vmatmul.bf16.gmra.mxu0 %v3428
    %v9900 = vpop.f32.mrf.mxu0
    %v9901 = vadd.f32 %v9572, %v9900
    %v9902 = vpop.f32.mrf.mxu0
    %v9903 = vadd.f32 %v9574, %v9902
    %9904 = vmatmul.bf16.gmra.mxu0 %v3436
    %v9905 = vpop.f32.mrf.mxu0
    %v9906 = vadd.f32 %v9577, %v9905
    %v9907 = vpop.f32.mrf.mxu0
    %v9908 = vadd.f32 %v9579, %v9907
    %9909 = vmatmul.bf16.gmra.mxu0 %v3444
    %v9910 = vpop.f32.mrf.mxu0
    %v9911 = vadd.f32 %v9582, %v9910
    %v9912 = vpop.f32.mrf.mxu0
    %v9913 = vadd.f32 %v9584, %v9912
    %9914 = vmatmul.bf16.gmra.mxu0 %v3452
    %v9915 = vpop.f32.mrf.mxu0
    %v9916 = vadd.f32 %v9587, %v9915
    %v9917 = vpop.f32.mrf.mxu0
    %v9918 = vadd.f32 %v9589, %v9917
    %9919 = vmatmul.bf16.gmra.mxu0 %v3460
    %v9920 = vpop.f32.mrf.mxu0
    %v9921 = vadd.f32 %v9592, %v9920
    %v9922 = vpop.f32.mrf.mxu0
    %v9923 = vadd.f32 %v9594, %v9922
    %9924 = vmatmul.bf16.gmra.mxu0 %v3468
    %v9925 = vpop.f32.mrf.mxu0
    %v9926 = vadd.f32 %v9597, %v9925
    %v9927 = vpop.f32.mrf.mxu0
    %v9928 = vadd.f32 %v9599, %v9927
    %9929 = vmatmul.bf16.gmra.mxu0 %v3476
    %v9930 = vpop.f32.mrf.mxu0
    %v9931 = vadd.f32 %v9602, %v9930
    %v9932 = vpop.f32.mrf.mxu0
    %v9933 = vadd.f32 %v9604, %v9932
    %9934 = vmatmul.bf16.gmra.mxu0 %v3484
    %v9935 = vpop.f32.mrf.mxu0
    %v9936 = vadd.f32 %v9607, %v9935
    %v9937 = vpop.f32.mrf.mxu0
    %v9938 = vadd.f32 %v9609, %v9937
    %9939 = vmatmul.bf16.gmra.mxu0 %v3492
    %v9940 = vpop.f32.mrf.mxu0
    %v9941 = vadd.f32 %v9612, %v9940
    %v9942 = vpop.f32.mrf.mxu0
    %v9943 = vadd.f32 %v9614, %v9942
    %9944 = vmatmul.bf16.gmra.mxu0 %v3500
    %v9945 = vpop.f32.mrf.mxu0
    %v9946 = vadd.f32 %v9617, %v9945
    %v9947 = vpop.f32.mrf.mxu0
    %v9948 = vadd.f32 %v9619, %v9947
    %9949 = vmatmul.bf16.gmra.mxu0 %v3508
    %v9950 = vpop.f32.mrf.mxu0
    %v9951 = vadd.f32 %v9622, %v9950
    %v9952 = vpop.f32.mrf.mxu0
    %v9953 = vadd.f32 %v9624, %v9952
    %9954 = vmatmul.bf16.gmra.mxu0 %v3516
    %v9955 = vpop.f32.mrf.mxu0
    %v9956 = vadd.f32 %v9627, %v9955
    %v9957 = vpop.f32.mrf.mxu0
    %v9958 = vadd.f32 %v9629, %v9957
    %9959 = vmatmul.bf16.gmra.mxu0 %v3524
    %v9960 = vpop.f32.mrf.mxu0
    %v9961 = vadd.f32 %v9632, %v9960
    %v9962 = vpop.f32.mrf.mxu0
    %v9963 = vadd.f32 %v9634, %v9962
    %9964 = vmatmul.bf16.gmra.mxu0 %v3532
    %v9965 = vpop.f32.mrf.mxu0
    %v9966 = vadd.f32 %v9637, %v9965
    %v9967 = vpop.f32.mrf.mxu0
    %v9968 = vadd.f32 %v9639, %v9967
    %9969 = vmatmul.bf16.gmra.mxu0 %v3540
    %v9970 = vpop.f32.mrf.mxu0
    %v9971 = vadd.f32 %v9642, %v9970
    %v9972 = vpop.f32.mrf.mxu0
    %v9973 = vadd.f32 %v9644, %v9972
    %9974 = vmatmul.bf16.gmra.mxu0 %v3548
    %v9975 = vpop.f32.mrf.mxu0
    %v9976 = vadd.f32 %v9647, %v9975
    %v9977 = vpop.f32.mrf.mxu0
    %v9978 = vadd.f32 %v9649, %v9977
    %9979 = vmatmul.bf16.gmra.mxu0 %v3556
    %v9980 = vpop.f32.mrf.mxu0
    %v9981 = vadd.f32 %v9652, %v9980
    %v9982 = vpop.f32.mrf.mxu0
    %v9983 = vadd.f32 %v9654, %v9982
    %9984 = vmatmul.bf16.gmra.mxu0 %v3564
    %v9985 = vpop.f32.mrf.mxu0
    %v9986 = vadd.f32 %v9657, %v9985
    %v9987 = vpop.f32.mrf.mxu0
    %v9988 = vadd.f32 %v9659, %v9987
    %9989 = vdwg.mxu0
    %v9990 = vmax.f32 %v9671, 0.0
    %v9991 = vmax.f32 %v9673, 0.0
    %v9992 = vmax.f32 %v9676, 0.0
    %v9993 = vmax.f32 %v9678, 0.0
    %v9994 = vmax.f32 %v9681, 0.0
    %v9995 = vmax.f32 %v9683, 0.0
    %v9996 = vmax.f32 %v9686, 0.0
    %v9997 = vmax.f32 %v9688, 0.0
    %v9998 = vmax.f32 %v9691, 0.0
    %v9999 = vmax.f32 %v9693, 0.0
    %v10000 = vmax.f32 %v9696, 0.0
    %v10001 = vmax.f32 %v9698, 0.0
    %v10002 = vmax.f32 %v9701, 0.0
    %v10003 = vmax.f32 %v9703, 0.0
    %v10004 = vmax.f32 %v9706, 0.0
    %v10005 = vmax.f32 %v9708, 0.0
    %v10006 = vmax.f32 %v9711, 0.0
    %v10007 = vmax.f32 %v9713, 0.0
    %v10008 = vmax.f32 %v9716, 0.0
    %v10009 = vmax.f32 %v9718, 0.0
    %v10010 = vmax.f32 %v9721, 0.0
    %v10011 = vmax.f32 %v9723, 0.0
    %v10012 = vmax.f32 %v9726, 0.0
    %v10013 = vmax.f32 %v9728, 0.0
    %v10014 = vmax.f32 %v9731, 0.0
    %v10015 = vmax.f32 %v9733, 0.0
    %v10016 = vmax.f32 %v9736, 0.0
    %v10017 = vmax.f32 %v9738, 0.0
    %v10018 = vmax.f32 %v9741, 0.0
    %v10019 = vmax.f32 %v9743, 0.0
    %v10020 = vmax.f32 %v9746, 0.0
    %v10021 = vmax.f32 %v9748, 0.0
    %v10022 = vmax.f32 %v9751, 0.0
    %v10023 = vmax.f32 %v9753, 0.0
    %v10024 = vmax.f32 %v9756, 0.0
    %v10025 = vmax.f32 %v9758, 0.0
    %v10026 = vmax.f32 %v9761, 0.0
    %v10027 = vmax.f32 %v9763, 0.0
    %v10028 = vmax.f32 %v9766, 0.0
    %v10029 = vmax.f32 %v9768, 0.0
    %v10030 = vmax.f32 %v9771, 0.0
    %v10031 = vmax.f32 %v9773, 0.0
    %v10032 = vmax.f32 %v9776, 0.0
    %v10033 = vmax.f32 %v9778, 0.0
    %v10034 = vmax.f32 %v9781, 0.0
    %v10035 = vmax.f32 %v9783, 0.0
    %v10036 = vmax.f32 %v9786, 0.0
    %v10037 = vmax.f32 %v9788, 0.0
    %v10038 = vmax.f32 %v9791, 0.0
    %v10039 = vmax.f32 %v9793, 0.0
    %v10040 = vmax.f32 %v9796, 0.0
    %v10041 = vmax.f32 %v9798, 0.0
    %v10042 = vmax.f32 %v9801, 0.0
    %v10043 = vmax.f32 %v9803, 0.0
    %v10044 = vmax.f32 %v9806, 0.0
    %v10045 = vmax.f32 %v9808, 0.0
    %v10046 = vmax.f32 %v9811, 0.0
    %v10047 = vmax.f32 %v9813, 0.0
    %v10048 = vmax.f32 %v9816, 0.0
    %v10049 = vmax.f32 %v9818, 0.0
    %v10050 = vmax.f32 %v9821, 0.0
    %v10051 = vmax.f32 %v9823, 0.0
    %v10052 = vmax.f32 %v9826, 0.0
    %v10053 = vmax.f32 %v9828, 0.0
    %v10054 = vmax.f32 %v9831, 0.0
    %v10055 = vmax.f32 %v9833, 0.0
    %v10056 = vmax.f32 %v9836, 0.0
    %v10057 = vmax.f32 %v9838, 0.0
    %v10058 = vmax.f32 %v9841, 0.0
    %v10059 = vmax.f32 %v9843, 0.0
    %v10060 = vmax.f32 %v9846, 0.0
    %v10061 = vmax.f32 %v9848, 0.0
    %v10062 = vmax.f32 %v9851, 0.0
    %v10063 = vmax.f32 %v9853, 0.0
    %v10064 = vmax.f32 %v9856, 0.0
    %v10065 = vmax.f32 %v9858, 0.0
    %v10066 = vmax.f32 %v9861, 0.0
    %v10067 = vmax.f32 %v9863, 0.0
    %v10068 = vmax.f32 %v9866, 0.0
    %v10069 = vmax.f32 %v9868, 0.0
    %v10070 = vmax.f32 %v9871, 0.0
    %v10071 = vmax.f32 %v9873, 0.0
    %v10072 = vmax.f32 %v9876, 0.0
    %v10073 = vmax.f32 %v9878, 0.0
    %v10074 = vmax.f32 %v9881, 0.0
    %v10075 = vmax.f32 %v9883, 0.0
    %v10076 = vmax.f32 %v9886, 0.0
    %v10077 = vmax.f32 %v9888, 0.0
    %v10078 = vmax.f32 %v9891, 0.0
    %v10079 = vmax.f32 %v9893, 0.0
    %v10080 = vmax.f32 %v9896, 0.0
    %v10081 = vmax.f32 %v9898, 0.0
    %v10082 = vmax.f32 %v9901, 0.0
    %v10083 = vmax.f32 %v9903, 0.0
    %v10084 = vmax.f32 %v9906, 0.0
    %v10085 = vmax.f32 %v9908, 0.0
    %v10086 = vmax.f32 %v9911, 0.0
    %v10087 = vmax.f32 %v9913, 0.0
    %v10088 = vmax.f32 %v9916, 0.0
    %v10089 = vmax.f32 %v9918, 0.0
    %v10090 = vmax.f32 %v9921, 0.0
    %v10091 = vmax.f32 %v9923, 0.0
    %v10092 = vmax.f32 %v9926, 0.0
    %v10093 = vmax.f32 %v9928, 0.0
    %v10094 = vmax.f32 %v9931, 0.0
    %v10095 = vmax.f32 %v9933, 0.0
    %v10096 = vmax.f32 %v9936, 0.0
    %v10097 = vmax.f32 %v9938, 0.0
    %v10098 = vmax.f32 %v9941, 0.0
    %v10099 = vmax.f32 %v9943, 0.0
    %v10100 = vmax.f32 %v9946, 0.0
    %v10101 = vmax.f32 %v9948, 0.0
    %v10102 = vmax.f32 %v9951, 0.0
    %v10103 = vmax.f32 %v9953, 0.0
    %v10104 = vmax.f32 %v9956, 0.0
    %v10105 = vmax.f32 %v9958, 0.0
    %v10106 = vmax.f32 %v9961, 0.0
    %v10107 = vmax.f32 %v9963, 0.0
    %v10108 = vmax.f32 %v9966, 0.0
    %v10109 = vmax.f32 %v9968, 0.0
    %v10110 = vmax.f32 %v9971, 0.0
    %v10111 = vmax.f32 %v9973, 0.0
    %v10112 = vmax.f32 %v9976, 0.0
    %v10113 = vmax.f32 %v9978, 0.0
    %v10114 = vmax.f32 %v9981, 0.0
    %v10115 = vmax.f32 %v9983, 0.0
    %v10116 = vmax.f32 %v9986, 0.0
    %v10117 = vmax.f32 %v9988, 0.0
    %v10118 = vpack.c.bf16 %v9991, %v9990
    %v10119 = vpack.c.bf16 %v9993, %v9992
    %v10120 = vpack.c.bf16 %v9995, %v9994
    %v10121 = vpack.c.bf16 %v9997, %v9996
    %v10122 = vpack.c.bf16 %v9999, %v9998
    %v10123 = vpack.c.bf16 %v10001, %v10000
    %v10124 = vpack.c.bf16 %v10003, %v10002
    %v10125 = vpack.c.bf16 %v10005, %v10004
    %v10126 = vpack.c.bf16 %v10007, %v10006
    %v10127 = vpack.c.bf16 %v10009, %v10008
    %v10128 = vpack.c.bf16 %v10011, %v10010
    %v10129 = vpack.c.bf16 %v10013, %v10012
    %v10130 = vpack.c.bf16 %v10015, %v10014
    %v10131 = vpack.c.bf16 %v10017, %v10016
    %v10132 = vpack.c.bf16 %v10019, %v10018
    %v10133 = vpack.c.bf16 %v10021, %v10020
    %v10134 = vpack.c.bf16 %v10023, %v10022
    %v10135 = vpack.c.bf16 %v10025, %v10024
    %v10136 = vpack.c.bf16 %v10027, %v10026
    %v10137 = vpack.c.bf16 %v10029, %v10028
    %v10138 = vpack.c.bf16 %v10031, %v10030
    %v10139 = vpack.c.bf16 %v10033, %v10032
    %v10140 = vpack.c.bf16 %v10035, %v10034
    %v10141 = vpack.c.bf16 %v10037, %v10036
    %v10142 = vpack.c.bf16 %v10039, %v10038
    %v10143 = vpack.c.bf16 %v10041, %v10040
    %v10144 = vpack.c.bf16 %v10043, %v10042
    %v10145 = vpack.c.bf16 %v10045, %v10044
    %v10146 = vpack.c.bf16 %v10047, %v10046
    %v10147 = vpack.c.bf16 %v10049, %v10048
    %v10148 = vpack.c.bf16 %v10051, %v10050
    %v10149 = vpack.c.bf16 %v10053, %v10052
    %v10150 = vpack.c.bf16 %v10055, %v10054
    %v10151 = vpack.c.bf16 %v10057, %v10056
    %v10152 = vpack.c.bf16 %v10059, %v10058
    %v10153 = vpack.c.bf16 %v10061, %v10060
    %v10154 = vpack.c.bf16 %v10063, %v10062
    %v10155 = vpack.c.bf16 %v10065, %v10064
    %v10156 = vpack.c.bf16 %v10067, %v10066
    %v10157 = vpack.c.bf16 %v10069, %v10068
    %v10158 = vpack.c.bf16 %v10071, %v10070
    %v10159 = vpack.c.bf16 %v10073, %v10072
    %v10160 = vpack.c.bf16 %v10075, %v10074
    %v10161 = vpack.c.bf16 %v10077, %v10076
    %v10162 = vpack.c.bf16 %v10079, %v10078
    %v10163 = vpack.c.bf16 %v10081, %v10080
    %v10164 = vpack.c.bf16 %v10083, %v10082
    %v10165 = vpack.c.bf16 %v10085, %v10084
    %v10166 = vpack.c.bf16 %v10087, %v10086
    %v10167 = vpack.c.bf16 %v10089, %v10088
    %v10168 = vpack.c.bf16 %v10091, %v10090
    %v10169 = vpack.c.bf16 %v10093, %v10092
    %v10170 = vpack.c.bf16 %v10095, %v10094
    %v10171 = vpack.c.bf16 %v10097, %v10096
    %v10172 = vpack.c.bf16 %v10099, %v10098
    %v10173 = vpack.c.bf16 %v10101, %v10100
    %v10174 = vpack.c.bf16 %v10103, %v10102
    %v10175 = vpack.c.bf16 %v10105, %v10104
    %v10176 = vpack.c.bf16 %v10107, %v10106
    %v10177 = vpack.c.bf16 %v10109, %v10108
    %v10178 = vpack.c.bf16 %v10111, %v10110
    %v10179 = vpack.c.bf16 %v10113, %v10112
    %v10180 = vpack.c.bf16 %v10115, %v10114
    %v10181 = vpack.c.bf16 %v10117, %v10116
    %v10182 = vld [vmem:[%s4] sm:$0xf]
    %v10183 = vld [vmem:[%s4 + $0x4] sm:$0xf]
    %v10184 = vld [vmem:[%s4 + $0x8] sm:$0xf]
    %v10185 = vld [vmem:[%s4 + $0xc] sm:$0xf]
    %v10186 = vld [vmem:[%s4 + $0x10] sm:$0xf]
    %v10187 = vld [vmem:[%s4 + $0x14] sm:$0xf]
    %v10188 = vld [vmem:[%s4 + $0x18] sm:$0xf]
    %v10189 = vld [vmem:[%s4 + $0x1c] sm:$0xf]
    %v10190 = vld [vmem:[%s4 + $0x20] sm:$0xf]
    %v10191 = vld [vmem:[%s4 + $0x24] sm:$0xf]
    %v10192 = vld [vmem:[%s4 + $0x28] sm:$0xf]
    %v10193 = vld [vmem:[%s4 + $0x2c] sm:$0xf]
    %v10194 = vld [vmem:[%s4 + $0x30] sm:$0xf]
    %v10195 = vld [vmem:[%s4 + $0x34] sm:$0xf]
    %v10196 = vld [vmem:[%s4 + $0x38] sm:$0xf]
    %v10197 = vld [vmem:[%s4 + $0x3c] sm:$0xf]
    %v10214 = vunpack.c.l.b16 %v10182
    %v10215 = vunpack.c.l.b16 %v10183
    %v10216 = vunpack.c.l.b16 %v10184
    %v10217 = vunpack.c.l.b16 %v10185
    %v10218 = vunpack.c.l.b16 %v10186
    %v10219 = vunpack.c.l.b16 %v10187
    %v10220 = vunpack.c.l.b16 %v10188
    %v10221 = vunpack.c.l.b16 %v10189
    %v10222 = vunpack.c.l.b16 %v10190
    %v10223 = vunpack.c.l.b16 %v10191
    %v10224 = vunpack.c.l.b16 %v10192
    %v10225 = vunpack.c.l.b16 %v10193
    %v10226 = vunpack.c.l.b16 %v10194
    %v10227 = vunpack.c.l.b16 %v10195
    %v10228 = vunpack.c.l.b16 %v10196
    %v10229 = vunpack.c.l.b16 %v10197
    %v10230 = vpack.c.b16 %v10215, %v10214
    %v10231 = vpack.c.b16 %v10217, %v10216
    %v10232 = vpack.c.b16 %v10219, %v10218
    %v10233 = vpack.c.b16 %v10221, %v10220
    %v10234 = vpack.c.b16 %v10223, %v10222
    %v10235 = vpack.c.b16 %v10225, %v10224
    %v10236 = vpack.c.b16 %v10227, %v10226
    %v10237 = vpack.c.b16 %v10229, %v10228
    %10246 = vmatpush.bf16.msra.mxu0 %v10237
    %10247 = vmatpush.bf16.msra.mxu0 %v10236
    %10248 = vmatpush.bf16.msra.mxu0 %v10235
    %10249 = vmatpush.bf16.msra.mxu0 %v10234
    %10250 = vmatpush.bf16.msra.mxu0 %v10233
    %10251 = vmatpush.bf16.msra.mxu0 %v10232
    %10252 = vmatpush.bf16.msra.mxu0 %v10231
    %10253 = vmatpush.bf16.msra.mxu0 %v10230
    %10254 = vmatmul.bf16.gmra.mxu0 %v10118
    %v10255 = vpop.f32.mrf.mxu0
    %v10256 = vadd.f32 0.0, %v10255
    %v10257 = vpop.f32.mrf.mxu0
    %v10258 = vadd.f32 0.0, %v10257
    %10259 = vmatmul.bf16.gmra.mxu0 %v10119
    %v10260 = vpop.f32.mrf.mxu0
    %v10261 = vadd.f32 0.0, %v10260
    %v10262 = vpop.f32.mrf.mxu0
    %v10263 = vadd.f32 0.0, %v10262
    %10264 = vmatmul.bf16.gmra.mxu0 %v10120
    %v10265 = vpop.f32.mrf.mxu0
    %v10266 = vadd.f32 0.0, %v10265
    %v10267 = vpop.f32.mrf.mxu0
    %v10268 = vadd.f32 0.0, %v10267
    %10269 = vmatmul.bf16.gmra.mxu0 %v10121
    %v10270 = vpop.f32.mrf.mxu0
    %v10271 = vadd.f32 0.0, %v10270
    %v10272 = vpop.f32.mrf.mxu0
    %v10273 = vadd.f32 0.0, %v10272
    %10274 = vmatmul.bf16.gmra.mxu0 %v10122
    %v10275 = vpop.f32.mrf.mxu0
    %v10276 = vadd.f32 0.0, %v10275
    %v10277 = vpop.f32.mrf.mxu0
    %v10278 = vadd.f32 0.0, %v10277
    %10279 = vmatmul.bf16.gmra.mxu0 %v10123
    %v10280 = vpop.f32.mrf.mxu0
    %v10281 = vadd.f32 0.0, %v10280
    %v10282 = vpop.f32.mrf.mxu0
    %v10283 = vadd.f32 0.0, %v10282
    %10284 = vmatmul.bf16.gmra.mxu0 %v10124
    %v10285 = vpop.f32.mrf.mxu0
    %v10286 = vadd.f32 0.0, %v10285
    %v10287 = vpop.f32.mrf.mxu0
    %v10288 = vadd.f32 0.0, %v10287
    %10289 = vmatmul.bf16.gmra.mxu0 %v10125
    %v10290 = vpop.f32.mrf.mxu0
    %v10291 = vadd.f32 0.0, %v10290
    %v10292 = vpop.f32.mrf.mxu0
    %v10293 = vadd.f32 0.0, %v10292
    %10294 = vmatmul.bf16.gmra.mxu0 %v10126
    %v10295 = vpop.f32.mrf.mxu0
    %v10296 = vadd.f32 0.0, %v10295
    %v10297 = vpop.f32.mrf.mxu0
    %v10298 = vadd.f32 0.0, %v10297
    %10299 = vmatmul.bf16.gmra.mxu0 %v10127
    %v10300 = vpop.f32.mrf.mxu0
    %v10301 = vadd.f32 0.0, %v10300
    %v10302 = vpop.f32.mrf.mxu0
    %v10303 = vadd.f32 0.0, %v10302
    %10304 = vmatmul.bf16.gmra.mxu0 %v10128
    %v10305 = vpop.f32.mrf.mxu0
    %v10306 = vadd.f32 0.0, %v10305
    %v10307 = vpop.f32.mrf.mxu0
    %v10308 = vadd.f32 0.0, %v10307
    %10309 = vmatmul.bf16.gmra.mxu0 %v10129
    %v10310 = vpop.f32.mrf.mxu0
    %v10311 = vadd.f32 0.0, %v10310
    %v10312 = vpop.f32.mrf.mxu0
    %v10313 = vadd.f32 0.0, %v10312
    %10314 = vmatmul.bf16.gmra.mxu0 %v10130
    %v10315 = vpop.f32.mrf.mxu0
    %v10316 = vadd.f32 0.0, %v10315
    %v10317 = vpop.f32.mrf.mxu0
    %v10318 = vadd.f32 0.0, %v10317
    %10319 = vmatmul.bf16.gmra.mxu0 %v10131
    %v10320 = vpop.f32.mrf.mxu0
    %v10321 = vadd.f32 0.0, %v10320
    %v10322 = vpop.f32.mrf.mxu0
    %v10323 = vadd.f32 0.0, %v10322
    %10324 = vmatmul.bf16.gmra.mxu0 %v10132
    %v10325 = vpop.f32.mrf.mxu0
    %v10326 = vadd.f32 0.0, %v10325
    %v10327 = vpop.f32.mrf.mxu0
    %v10328 = vadd.f32 0.0, %v10327
    %10329 = vmatmul.bf16.gmra.mxu0 %v10133
    %v10330 = vpop.f32.mrf.mxu0
    %v10331 = vadd.f32 0.0, %v10330
    %v10332 = vpop.f32.mrf.mxu0
    %v10333 = vadd.f32 0.0, %v10332
    %10334 = vmatmul.bf16.gmra.mxu0 %v10134
    %v10335 = vpop.f32.mrf.mxu0
    %v10336 = vadd.f32 0.0, %v10335
    %v10337 = vpop.f32.mrf.mxu0
    %v10338 = vadd.f32 0.0, %v10337
    %10339 = vmatmul.bf16.gmra.mxu0 %v10135
    %v10340 = vpop.f32.mrf.mxu0
    %v10341 = vadd.f32 0.0, %v10340
    %v10342 = vpop.f32.mrf.mxu0
    %v10343 = vadd.f32 0.0, %v10342
    %10344 = vmatmul.bf16.gmra.mxu0 %v10136
    %v10345 = vpop.f32.mrf.mxu0
    %v10346 = vadd.f32 0.0, %v10345
    %v10347 = vpop.f32.mrf.mxu0
    %v10348 = vadd.f32 0.0, %v10347
    %10349 = vmatmul.bf16.gmra.mxu0 %v10137
    %v10350 = vpop.f32.mrf.mxu0
    %v10351 = vadd.f32 0.0, %v10350
    %v10352 = vpop.f32.mrf.mxu0
    %v10353 = vadd.f32 0.0, %v10352
    %10354 = vmatmul.bf16.gmra.mxu0 %v10138
    %v10355 = vpop.f32.mrf.mxu0
    %v10356 = vadd.f32 0.0, %v10355
    %v10357 = vpop.f32.mrf.mxu0
    %v10358 = vadd.f32 0.0, %v10357
    %10359 = vmatmul.bf16.gmra.mxu0 %v10139
    %v10360 = vpop.f32.mrf.mxu0
    %v10361 = vadd.f32 0.0, %v10360
    %v10362 = vpop.f32.mrf.mxu0
    %v10363 = vadd.f32 0.0, %v10362
    %10364 = vmatmul.bf16.gmra.mxu0 %v10140
    %v10365 = vpop.f32.mrf.mxu0
    %v10366 = vadd.f32 0.0, %v10365
    %v10367 = vpop.f32.mrf.mxu0
    %v10368 = vadd.f32 0.0, %v10367
    %10369 = vmatmul.bf16.gmra.mxu0 %v10141
    %v10370 = vpop.f32.mrf.mxu0
    %v10371 = vadd.f32 0.0, %v10370
    %v10372 = vpop.f32.mrf.mxu0
    %v10373 = vadd.f32 0.0, %v10372
    %10374 = vmatmul.bf16.gmra.mxu0 %v10142
    %v10375 = vpop.f32.mrf.mxu0
    %v10376 = vadd.f32 0.0, %v10375
    %v10377 = vpop.f32.mrf.mxu0
    %v10378 = vadd.f32 0.0, %v10377
    %10379 = vmatmul.bf16.gmra.mxu0 %v10143
    %v10380 = vpop.f32.mrf.mxu0
    %v10381 = vadd.f32 0.0, %v10380
    %v10382 = vpop.f32.mrf.mxu0
    %v10383 = vadd.f32 0.0, %v10382
    %10384 = vmatmul.bf16.gmra.mxu0 %v10144
    %v10385 = vpop.f32.mrf.mxu0
    %v10386 = vadd.f32 0.0, %v10385
    %v10387 = vpop.f32.mrf.mxu0
    %v10388 = vadd.f32 0.0, %v10387
    %10389 = vmatmul.bf16.gmra.mxu0 %v10145
    %v10390 = vpop.f32.mrf.mxu0
    %v10391 = vadd.f32 0.0, %v10390
    %v10392 = vpop.f32.mrf.mxu0
    %v10393 = vadd.f32 0.0, %v10392
    %10394 = vmatmul.bf16.gmra.mxu0 %v10146
    %v10395 = vpop.f32.mrf.mxu0
    %v10396 = vadd.f32 0.0, %v10395
    %v10397 = vpop.f32.mrf.mxu0
    %v10398 = vadd.f32 0.0, %v10397
    %10399 = vmatmul.bf16.gmra.mxu0 %v10147
    %v10400 = vpop.f32.mrf.mxu0
    %v10401 = vadd.f32 0.0, %v10400
    %v10402 = vpop.f32.mrf.mxu0
    %v10403 = vadd.f32 0.0, %v10402
    %10404 = vmatmul.bf16.gmra.mxu0 %v10148
    %v10405 = vpop.f32.mrf.mxu0
    %v10406 = vadd.f32 0.0, %v10405
    %v10407 = vpop.f32.mrf.mxu0
    %v10408 = vadd.f32 0.0, %v10407
    %10409 = vmatmul.bf16.gmra.mxu0 %v10149
    %v10410 = vpop.f32.mrf.mxu0
    %v10411 = vadd.f32 0.0, %v10410
    %v10412 = vpop.f32.mrf.mxu0
    %v10413 = vadd.f32 0.0, %v10412
    %10414 = vmatmul.bf16.gmra.mxu0 %v10150
    %v10415 = vpop.f32.mrf.mxu0
    %v10416 = vadd.f32 0.0, %v10415
    %v10417 = vpop.f32.mrf.mxu0
    %v10418 = vadd.f32 0.0, %v10417
    %10419 = vmatmul.bf16.gmra.mxu0 %v10151
    %v10420 = vpop.f32.mrf.mxu0
    %v10421 = vadd.f32 0.0, %v10420
    %v10422 = vpop.f32.mrf.mxu0
    %v10423 = vadd.f32 0.0, %v10422
    %10424 = vmatmul.bf16.gmra.mxu0 %v10152
    %v10425 = vpop.f32.mrf.mxu0
    %v10426 = vadd.f32 0.0, %v10425
    %v10427 = vpop.f32.mrf.mxu0
    %v10428 = vadd.f32 0.0, %v10427
    %10429 = vmatmul.bf16.gmra.mxu0 %v10153
    %v10430 = vpop.f32.mrf.mxu0
    %v10431 = vadd.f32 0.0, %v10430
    %v10432 = vpop.f32.mrf.mxu0
    %v10433 = vadd.f32 0.0, %v10432
    %10434 = vmatmul.bf16.gmra.mxu0 %v10154
    %v10435 = vpop.f32.mrf.mxu0
    %v10436 = vadd.f32 0.0, %v10435
    %v10437 = vpop.f32.mrf.mxu0
    %v10438 = vadd.f32 0.0, %v10437
    %10439 = vmatmul.bf16.gmra.mxu0 %v10155
    %v10440 = vpop.f32.mrf.mxu0
    %v10441 = vadd.f32 0.0, %v10440
    %v10442 = vpop.f32.mrf.mxu0
    %v10443 = vadd.f32 0.0, %v10442
    %10444 = vmatmul.bf16.gmra.mxu0 %v10156
    %v10445 = vpop.f32.mrf.mxu0
    %v10446 = vadd.f32 0.0, %v10445
    %v10447 = vpop.f32.mrf.mxu0
    %v10448 = vadd.f32 0.0, %v10447
    %10449 = vmatmul.bf16.gmra.mxu0 %v10157
    %v10450 = vpop.f32.mrf.mxu0
    %v10451 = vadd.f32 0.0, %v10450
    %v10452 = vpop.f32.mrf.mxu0
    %v10453 = vadd.f32 0.0, %v10452
    %10454 = vmatmul.bf16.gmra.mxu0 %v10158
    %v10455 = vpop.f32.mrf.mxu0
    %v10456 = vadd.f32 0.0, %v10455
    %v10457 = vpop.f32.mrf.mxu0
    %v10458 = vadd.f32 0.0, %v10457
    %10459 = vmatmul.bf16.gmra.mxu0 %v10159
    %v10460 = vpop.f32.mrf.mxu0
    %v10461 = vadd.f32 0.0, %v10460
    %v10462 = vpop.f32.mrf.mxu0
    %v10463 = vadd.f32 0.0, %v10462
    %10464 = vmatmul.bf16.gmra.mxu0 %v10160
    %v10465 = vpop.f32.mrf.mxu0
    %v10466 = vadd.f32 0.0, %v10465
    %v10467 = vpop.f32.mrf.mxu0
    %v10468 = vadd.f32 0.0, %v10467
    %10469 = vmatmul.bf16.gmra.mxu0 %v10161
    %v10470 = vpop.f32.mrf.mxu0
    %v10471 = vadd.f32 0.0, %v10470
    %v10472 = vpop.f32.mrf.mxu0
    %v10473 = vadd.f32 0.0, %v10472
    %10474 = vmatmul.bf16.gmra.mxu0 %v10162
    %v10475 = vpop.f32.mrf.mxu0
    %v10476 = vadd.f32 0.0, %v10475
    %v10477 = vpop.f32.mrf.mxu0
    %v10478 = vadd.f32 0.0, %v10477
    %10479 = vmatmul.bf16.gmra.mxu0 %v10163
    %v10480 = vpop.f32.mrf.mxu0
    %v10481 = vadd.f32 0.0, %v10480
    %v10482 = vpop.f32.mrf.mxu0
    %v10483 = vadd.f32 0.0, %v10482
    %10484 = vmatmul.bf16.gmra.mxu0 %v10164
    %v10485 = vpop.f32.mrf.mxu0
    %v10486 = vadd.f32 0.0, %v10485
    %v10487 = vpop.f32.mrf.mxu0
    %v10488 = vadd.f32 0.0, %v10487
    %10489 = vmatmul.bf16.gmra.mxu0 %v10165
    %v10490 = vpop.f32.mrf.mxu0
    %v10491 = vadd.f32 0.0, %v10490
    %v10492 = vpop.f32.mrf.mxu0
    %v10493 = vadd.f32 0.0, %v10492
    %10494 = vmatmul.bf16.gmra.mxu0 %v10166
    %v10495 = vpop.f32.mrf.mxu0
    %v10496 = vadd.f32 0.0, %v10495
    %v10497 = vpop.f32.mrf.mxu0
    %v10498 = vadd.f32 0.0, %v10497
    %10499 = vmatmul.bf16.gmra.mxu0 %v10167
    %v10500 = vpop.f32.mrf.mxu0
    %v10501 = vadd.f32 0.0, %v10500
    %v10502 = vpop.f32.mrf.mxu0
    %v10503 = vadd.f32 0.0, %v10502
    %10504 = vmatmul.bf16.gmra.mxu0 %v10168
    %v10505 = vpop.f32.mrf.mxu0
    %v10506 = vadd.f32 0.0, %v10505
    %v10507 = vpop.f32.mrf.mxu0
    %v10508 = vadd.f32 0.0, %v10507
    %10509 = vmatmul.bf16.gmra.mxu0 %v10169
    %v10510 = vpop.f32.mrf.mxu0
    %v10511 = vadd.f32 0.0, %v10510
    %v10512 = vpop.f32.mrf.mxu0
    %v10513 = vadd.f32 0.0, %v10512
    %10514 = vmatmul.bf16.gmra.mxu0 %v10170
    %v10515 = vpop.f32.mrf.mxu0
    %v10516 = vadd.f32 0.0, %v10515
    %v10517 = vpop.f32.mrf.mxu0
    %v10518 = vadd.f32 0.0, %v10517
    %10519 = vmatmul.bf16.gmra.mxu0 %v10171
    %v10520 = vpop.f32.mrf.mxu0
    %v10521 = vadd.f32 0.0, %v10520
    %v10522 = vpop.f32.mrf.mxu0
    %v10523 = vadd.f32 0.0, %v10522
    %10524 = vmatmul.bf16.gmra.mxu0 %v10172
    %v10525 = vpop.f32.mrf.mxu0
    %v10526 = vadd.f32 0.0, %v10525
    %v10527 = vpop.f32.mrf.mxu0
    %v10528 = vadd.f32 0.0, %v10527
    %10529 = vmatmul.bf16.gmra.mxu0 %v10173
    %v10530 = vpop.f32.mrf.mxu0
    %v10531 = vadd.f32 0.0, %v10530
    %v10532 = vpop.f32.mrf.mxu0
    %v10533 = vadd.f32 0.0, %v10532
    %10534 = vmatmul.bf16.gmra.mxu0 %v10174
    %v10535 = vpop.f32.mrf.mxu0
    %v10536 = vadd.f32 0.0, %v10535
    %v10537 = vpop.f32.mrf.mxu0
    %v10538 = vadd.f32 0.0, %v10537
    %10539 = vmatmul.bf16.gmra.mxu0 %v10175
    %v10540 = vpop.f32.mrf.mxu0
    %v10541 = vadd.f32 0.0, %v10540
    %v10542 = vpop.f32.mrf.mxu0
    %v10543 = vadd.f32 0.0, %v10542
    %10544 = vmatmul.bf16.gmra.mxu0 %v10176
    %v10545 = vpop.f32.mrf.mxu0
    %v10546 = vadd.f32 0.0, %v10545
    %v10547 = vpop.f32.mrf.mxu0
    %v10548 = vadd.f32 0.0, %v10547
    %10549 = vmatmul.bf16.gmra.mxu0 %v10177
    %v10550 = vpop.f32.mrf.mxu0
    %v10551 = vadd.f32 0.0, %v10550
    %v10552 = vpop.f32.mrf.mxu0
    %v10553 = vadd.f32 0.0, %v10552
    %10554 = vmatmul.bf16.gmra.mxu0 %v10178
    %v10555 = vpop.f32.mrf.mxu0
    %v10556 = vadd.f32 0.0, %v10555
    %v10557 = vpop.f32.mrf.mxu0
    %v10558 = vadd.f32 0.0, %v10557
    %10559 = vmatmul.bf16.gmra.mxu0 %v10179
    %v10560 = vpop.f32.mrf.mxu0
    %v10561 = vadd.f32 0.0, %v10560
    %v10562 = vpop.f32.mrf.mxu0
    %v10563 = vadd.f32 0.0, %v10562
    %10564 = vmatmul.bf16.gmra.mxu0 %v10180
    %v10565 = vpop.f32.mrf.mxu0
    %v10566 = vadd.f32 0.0, %v10565
    %v10567 = vpop.f32.mrf.mxu0
    %v10568 = vadd.f32 0.0, %v10567
    %10569 = vmatmul.bf16.gmra.mxu0 %v10181
    %v10570 = vpop.f32.mrf.mxu0
    %v10571 = vadd.f32 0.0, %v10570
    %v10572 = vpop.f32.mrf.mxu0
    %v10573 = vadd.f32 0.0, %v10572
    %10574 = vdwg.mxu0
    %v10575 = vpack.c.bf16 %v10258, %v10256
    %v10576 = vpack.c.bf16 %v10263, %v10261
    %v10577 = vpack.c.bf16 %v10268, %v10266
    %v10578 = vpack.c.bf16 %v10273, %v10271
    %v10579 = vpack.c.bf16 %v10278, %v10276
    %v10580 = vpack.c.bf16 %v10283, %v10281
    %v10581 = vpack.c.bf16 %v10288, %v10286
    %v10582 = vpack.c.bf16 %v10293, %v10291
    %v10583 = vpack.c.bf16 %v10298, %v10296
    %v10584 = vpack.c.bf16 %v10303, %v10301
    %v10585 = vpack.c.bf16 %v10308, %v10306
    %v10586 = vpack.c.bf16 %v10313, %v10311
    %v10587 = vpack.c.bf16 %v10318, %v10316
    %v10588 = vpack.c.bf16 %v10323, %v10321
    %v10589 = vpack.c.bf16 %v10328, %v10326
    %v10590 = vpack.c.bf16 %v10333, %v10331
    %v10591 = vpack.c.bf16 %v10338, %v10336
    %v10592 = vpack.c.bf16 %v10343, %v10341
    %v10593 = vpack.c.bf16 %v10348, %v10346
    %v10594 = vpack.c.bf16 %v10353, %v10351
    %v10595 = vpack.c.bf16 %v10358, %v10356
    %v10596 = vpack.c.bf16 %v10363, %v10361
    %v10597 = vpack.c.bf16 %v10368, %v10366
    %v10598 = vpack.c.bf16 %v10373, %v10371
    %v10599 = vpack.c.bf16 %v10378, %v10376
    %v10600 = vpack.c.bf16 %v10383, %v10381
    %v10601 = vpack.c.bf16 %v10388, %v10386
    %v10602 = vpack.c.bf16 %v10393, %v10391
    %v10603 = vpack.c.bf16 %v10398, %v10396
    %v10604 = vpack.c.bf16 %v10403, %v10401
    %v10605 = vpack.c.bf16 %v10408, %v10406
    %v10606 = vpack.c.bf16 %v10413, %v10411
    %v10607 = vpack.c.bf16 %v10418, %v10416
    %v10608 = vpack.c.bf16 %v10423, %v10421
    %v10609 = vpack.c.bf16 %v10428, %v10426
    %v10610 = vpack.c.bf16 %v10433, %v10431
    %v10611 = vpack.c.bf16 %v10438, %v10436
    %v10612 = vpack.c.bf16 %v10443, %v10441
    %v10613 = vpack.c.bf16 %v10448, %v10446
    %v10614 = vpack.c.bf16 %v10453, %v10451
    %v10615 = vpack.c.bf16 %v10458, %v10456
    %v10616 = vpack.c.bf16 %v10463, %v10461
    %v10617 = vpack.c.bf16 %v10468, %v10466
    %v10618 = vpack.c.bf16 %v10473, %v10471
    %v10619 = vpack.c.bf16 %v10478, %v10476
    %v10620 = vpack.c.bf16 %v10483, %v10481
    %v10621 = vpack.c.bf16 %v10488, %v10486
    %v10622 = vpack.c.bf16 %v10493, %v10491
    %v10623 = vpack.c.bf16 %v10498, %v10496
    %v10624 = vpack.c.bf16 %v10503, %v10501
    %v10625 = vpack.c.bf16 %v10508, %v10506
    %v10626 = vpack.c.bf16 %v10513, %v10511
    %v10627 = vpack.c.bf16 %v10518, %v10516
    %v10628 = vpack.c.bf16 %v10523, %v10521
    %v10629 = vpack.c.bf16 %v10528, %v10526
    %v10630 = vpack.c.bf16 %v10533, %v10531
    %v10631 = vpack.c.bf16 %v10538, %v10536
    %v10632 = vpack.c.bf16 %v10543, %v10541
    %v10633 = vpack.c.bf16 %v10548, %v10546
    %v10634 = vpack.c.bf16 %v10553, %v10551
    %v10635 = vpack.c.bf16 %v10558, %v10556
    %v10636 = vpack.c.bf16 %v10563, %v10561
    %v10637 = vpack.c.bf16 %v10568, %v10566
    %v10638 = vpack.c.bf16 %v10573, %v10571
    %10639 = vmatpush.bf16.msra.mxu0 %v10582
    %10640 = vmatpush.bf16.msra.mxu0 %v10581
    %10641 = vmatpush.bf16.msra.mxu0 %v10580
    %10642 = vmatpush.bf16.msra.mxu0 %v10579
    %10643 = vmatpush.bf16.msra.mxu0 %v10578
    %10644 = vmatpush.bf16.msra.mxu0 %v10577
    %10645 = vmatpush.bf16.msra.mxu0 %v10576
    %10646 = vmatpush.bf16.msra.mxu0 %v10575
    %10647 = vmatmul.bf16.gmra.mxu0 %v3053
    %v10648 = vpop.f32.mrf.mxu0
    %v10649 = vadd.f32 0.0, %v10648
    %v10650 = vpop.f32.mrf.mxu0
    %v10651 = vadd.f32 0.0, %v10650
    %10652 = vmatmul.bf16.gmra.mxu0 %v3061
    %v10653 = vpop.f32.mrf.mxu0
    %v10654 = vadd.f32 0.0, %v10653
    %v10655 = vpop.f32.mrf.mxu0
    %v10656 = vadd.f32 0.0, %v10655
    %10657 = vmatmul.bf16.gmra.mxu0 %v3069
    %v10658 = vpop.f32.mrf.mxu0
    %v10659 = vadd.f32 0.0, %v10658
    %v10660 = vpop.f32.mrf.mxu0
    %v10661 = vadd.f32 0.0, %v10660
    %10662 = vmatmul.bf16.gmra.mxu0 %v3077
    %v10663 = vpop.f32.mrf.mxu0
    %v10664 = vadd.f32 0.0, %v10663
    %v10665 = vpop.f32.mrf.mxu0
    %v10666 = vadd.f32 0.0, %v10665
    %10667 = vmatmul.bf16.gmra.mxu0 %v3085
    %v10668 = vpop.f32.mrf.mxu0
    %v10669 = vadd.f32 0.0, %v10668
    %v10670 = vpop.f32.mrf.mxu0
    %v10671 = vadd.f32 0.0, %v10670
    %10672 = vmatmul.bf16.gmra.mxu0 %v3093
    %v10673 = vpop.f32.mrf.mxu0
    %v10674 = vadd.f32 0.0, %v10673
    %v10675 = vpop.f32.mrf.mxu0
    %v10676 = vadd.f32 0.0, %v10675
    %10677 = vmatmul.bf16.gmra.mxu0 %v3101
    %v10678 = vpop.f32.mrf.mxu0
    %v10679 = vadd.f32 0.0, %v10678
    %v10680 = vpop.f32.mrf.mxu0
    %v10681 = vadd.f32 0.0, %v10680
    %10682 = vmatmul.bf16.gmra.mxu0 %v3109
    %v10683 = vpop.f32.mrf.mxu0
    %v10684 = vadd.f32 0.0, %v10683
    %v10685 = vpop.f32.mrf.mxu0
    %v10686 = vadd.f32 0.0, %v10685
    %10687 = vmatmul.bf16.gmra.mxu0 %v3117
    %v10688 = vpop.f32.mrf.mxu0
    %v10689 = vadd.f32 0.0, %v10688
    %v10690 = vpop.f32.mrf.mxu0
    %v10691 = vadd.f32 0.0, %v10690
    %10692 = vmatmul.bf16.gmra.mxu0 %v3125
    %v10693 = vpop.f32.mrf.mxu0
    %v10694 = vadd.f32 0.0, %v10693
    %v10695 = vpop.f32.mrf.mxu0
    %v10696 = vadd.f32 0.0, %v10695
    %10697 = vmatmul.bf16.gmra.mxu0 %v3133
    %v10698 = vpop.f32.mrf.mxu0
    %v10699 = vadd.f32 0.0, %v10698
    %v10700 = vpop.f32.mrf.mxu0
    %v10701 = vadd.f32 0.0, %v10700
    %10702 = vmatmul.bf16.gmra.mxu0 %v3141
    %v10703 = vpop.f32.mrf.mxu0
    %v10704 = vadd.f32 0.0, %v10703
    %v10705 = vpop.f32.mrf.mxu0
    %v10706 = vadd.f32 0.0, %v10705
    %10707 = vmatmul.bf16.gmra.mxu0 %v3149
    %v10708 = vpop.f32.mrf.mxu0
    %v10709 = vadd.f32 0.0, %v10708
    %v10710 = vpop.f32.mrf.mxu0
    %v10711 = vadd.f32 0.0, %v10710
    %10712 = vmatmul.bf16.gmra.mxu0 %v3157
    %v10713 = vpop.f32.mrf.mxu0
    %v10714 = vadd.f32 0.0, %v10713
    %v10715 = vpop.f32.mrf.mxu0
    %v10716 = vadd.f32 0.0, %v10715
    %10717 = vmatmul.bf16.gmra.mxu0 %v3165
    %v10718 = vpop.f32.mrf.mxu0
    %v10719 = vadd.f32 0.0, %v10718
    %v10720 = vpop.f32.mrf.mxu0
    %v10721 = vadd.f32 0.0, %v10720
    %10722 = vmatmul.bf16.gmra.mxu0 %v3173
    %v10723 = vpop.f32.mrf.mxu0
    %v10724 = vadd.f32 0.0, %v10723
    %v10725 = vpop.f32.mrf.mxu0
    %v10726 = vadd.f32 0.0, %v10725
    %10727 = vmatmul.bf16.gmra.mxu0 %v3181
    %v10728 = vpop.f32.mrf.mxu0
    %v10729 = vadd.f32 0.0, %v10728
    %v10730 = vpop.f32.mrf.mxu0
    %v10731 = vadd.f32 0.0, %v10730
    %10732 = vmatmul.bf16.gmra.mxu0 %v3189
    %v10733 = vpop.f32.mrf.mxu0
    %v10734 = vadd.f32 0.0, %v10733
    %v10735 = vpop.f32.mrf.mxu0
    %v10736 = vadd.f32 0.0, %v10735
    %10737 = vmatmul.bf16.gmra.mxu0 %v3197
    %v10738 = vpop.f32.mrf.mxu0
    %v10739 = vadd.f32 0.0, %v10738
    %v10740 = vpop.f32.mrf.mxu0
    %v10741 = vadd.f32 0.0, %v10740
    %10742 = vmatmul.bf16.gmra.mxu0 %v3205
    %v10743 = vpop.f32.mrf.mxu0
    %v10744 = vadd.f32 0.0, %v10743
    %v10745 = vpop.f32.mrf.mxu0
    %v10746 = vadd.f32 0.0, %v10745
    %10747 = vmatmul.bf16.gmra.mxu0 %v3213
    %v10748 = vpop.f32.mrf.mxu0
    %v10749 = vadd.f32 0.0, %v10748
    %v10750 = vpop.f32.mrf.mxu0
    %v10751 = vadd.f32 0.0, %v10750
    %10752 = vmatmul.bf16.gmra.mxu0 %v3221
    %v10753 = vpop.f32.mrf.mxu0
    %v10754 = vadd.f32 0.0, %v10753
    %v10755 = vpop.f32.mrf.mxu0
    %v10756 = vadd.f32 0.0, %v10755
    %10757 = vmatmul.bf16.gmra.mxu0 %v3229
    %v10758 = vpop.f32.mrf.mxu0
    %v10759 = vadd.f32 0.0, %v10758
    %v10760 = vpop.f32.mrf.mxu0
    %v10761 = vadd.f32 0.0, %v10760
    %10762 = vmatmul.bf16.gmra.mxu0 %v3237
    %v10763 = vpop.f32.mrf.mxu0
    %v10764 = vadd.f32 0.0, %v10763
    %v10765 = vpop.f32.mrf.mxu0
    %v10766 = vadd.f32 0.0, %v10765
    %10767 = vmatmul.bf16.gmra.mxu0 %v3245
    %v10768 = vpop.f32.mrf.mxu0
    %v10769 = vadd.f32 0.0, %v10768
    %v10770 = vpop.f32.mrf.mxu0
    %v10771 = vadd.f32 0.0, %v10770
    %10772 = vmatmul.bf16.gmra.mxu0 %v3253
    %v10773 = vpop.f32.mrf.mxu0
    %v10774 = vadd.f32 0.0, %v10773
    %v10775 = vpop.f32.mrf.mxu0
    %v10776 = vadd.f32 0.0, %v10775
    %10777 = vmatmul.bf16.gmra.mxu0 %v3261
    %v10778 = vpop.f32.mrf.mxu0
    %v10779 = vadd.f32 0.0, %v10778
    %v10780 = vpop.f32.mrf.mxu0
    %v10781 = vadd.f32 0.0, %v10780
    %10782 = vmatmul.bf16.gmra.mxu0 %v3269
    %v10783 = vpop.f32.mrf.mxu0
    %v10784 = vadd.f32 0.0, %v10783
    %v10785 = vpop.f32.mrf.mxu0
    %v10786 = vadd.f32 0.0, %v10785
    %10787 = vmatmul.bf16.gmra.mxu0 %v3277
    %v10788 = vpop.f32.mrf.mxu0
    %v10789 = vadd.f32 0.0, %v10788
    %v10790 = vpop.f32.mrf.mxu0
    %v10791 = vadd.f32 0.0, %v10790
    %10792 = vmatmul.bf16.gmra.mxu0 %v3285
    %v10793 = vpop.f32.mrf.mxu0
    %v10794 = vadd.f32 0.0, %v10793
    %v10795 = vpop.f32.mrf.mxu0
    %v10796 = vadd.f32 0.0, %v10795
    %10797 = vmatmul.bf16.gmra.mxu0 %v3293
    %v10798 = vpop.f32.mrf.mxu0
    %v10799 = vadd.f32 0.0, %v10798
    %v10800 = vpop.f32.mrf.mxu0
    %v10801 = vadd.f32 0.0, %v10800
    %10802 = vmatmul.bf16.gmra.mxu0 %v3301
    %v10803 = vpop.f32.mrf.mxu0
    %v10804 = vadd.f32 0.0, %v10803
    %v10805 = vpop.f32.mrf.mxu0
    %v10806 = vadd.f32 0.0, %v10805
    %10807 = vmatmul.bf16.gmra.mxu0 %v3309
    %v10808 = vpop.f32.mrf.mxu0
    %v10809 = vadd.f32 0.0, %v10808
    %v10810 = vpop.f32.mrf.mxu0
    %v10811 = vadd.f32 0.0, %v10810
    %10812 = vmatmul.bf16.gmra.mxu0 %v3317
    %v10813 = vpop.f32.mrf.mxu0
    %v10814 = vadd.f32 0.0, %v10813
    %v10815 = vpop.f32.mrf.mxu0
    %v10816 = vadd.f32 0.0, %v10815
    %10817 = vmatmul.bf16.gmra.mxu0 %v3325
    %v10818 = vpop.f32.mrf.mxu0
    %v10819 = vadd.f32 0.0, %v10818
    %v10820 = vpop.f32.mrf.mxu0
    %v10821 = vadd.f32 0.0, %v10820
    %10822 = vmatmul.bf16.gmra.mxu0 %v3333
    %v10823 = vpop.f32.mrf.mxu0
    %v10824 = vadd.f32 0.0, %v10823
    %v10825 = vpop.f32.mrf.mxu0
    %v10826 = vadd.f32 0.0, %v10825
    %10827 = vmatmul.bf16.gmra.mxu0 %v3341
    %v10828 = vpop.f32.mrf.mxu0
    %v10829 = vadd.f32 0.0, %v10828
    %v10830 = vpop.f32.mrf.mxu0
    %v10831 = vadd.f32 0.0, %v10830
    %10832 = vmatmul.bf16.gmra.mxu0 %v3349
    %v10833 = vpop.f32.mrf.mxu0
    %v10834 = vadd.f32 0.0, %v10833
    %v10835 = vpop.f32.mrf.mxu0
    %v10836 = vadd.f32 0.0, %v10835
    %10837 = vmatmul.bf16.gmra.mxu0 %v3357
    %v10838 = vpop.f32.mrf.mxu0
    %v10839 = vadd.f32 0.0, %v10838
    %v10840 = vpop.f32.mrf.mxu0
    %v10841 = vadd.f32 0.0, %v10840
    %10842 = vmatmul.bf16.gmra.mxu0 %v3365
    %v10843 = vpop.f32.mrf.mxu0
    %v10844 = vadd.f32 0.0, %v10843
    %v10845 = vpop.f32.mrf.mxu0
    %v10846 = vadd.f32 0.0, %v10845
    %10847 = vmatmul.bf16.gmra.mxu0 %v3373
    %v10848 = vpop.f32.mrf.mxu0
    %v10849 = vadd.f32 0.0, %v10848
    %v10850 = vpop.f32.mrf.mxu0
    %v10851 = vadd.f32 0.0, %v10850
    %10852 = vmatmul.bf16.gmra.mxu0 %v3381
    %v10853 = vpop.f32.mrf.mxu0
    %v10854 = vadd.f32 0.0, %v10853
    %v10855 = vpop.f32.mrf.mxu0
    %v10856 = vadd.f32 0.0, %v10855
    %10857 = vmatmul.bf16.gmra.mxu0 %v3389
    %v10858 = vpop.f32.mrf.mxu0
    %v10859 = vadd.f32 0.0, %v10858
    %v10860 = vpop.f32.mrf.mxu0
    %v10861 = vadd.f32 0.0, %v10860
    %10862 = vmatmul.bf16.gmra.mxu0 %v3397
    %v10863 = vpop.f32.mrf.mxu0
    %v10864 = vadd.f32 0.0, %v10863
    %v10865 = vpop.f32.mrf.mxu0
    %v10866 = vadd.f32 0.0, %v10865
    %10867 = vmatmul.bf16.gmra.mxu0 %v3405
    %v10868 = vpop.f32.mrf.mxu0
    %v10869 = vadd.f32 0.0, %v10868
    %v10870 = vpop.f32.mrf.mxu0
    %v10871 = vadd.f32 0.0, %v10870
    %10872 = vmatmul.bf16.gmra.mxu0 %v3413
    %v10873 = vpop.f32.mrf.mxu0
    %v10874 = vadd.f32 0.0, %v10873
    %v10875 = vpop.f32.mrf.mxu0
    %v10876 = vadd.f32 0.0, %v10875
    %10877 = vmatmul.bf16.gmra.mxu0 %v3421
    %v10878 = vpop.f32.mrf.mxu0
    %v10879 = vadd.f32 0.0, %v10878
    %v10880 = vpop.f32.mrf.mxu0
    %v10881 = vadd.f32 0.0, %v10880
    %10882 = vmatmul.bf16.gmra.mxu0 %v3429
    %v10883 = vpop.f32.mrf.mxu0
    %v10884 = vadd.f32 0.0, %v10883
    %v10885 = vpop.f32.mrf.mxu0
    %v10886 = vadd.f32 0.0, %v10885
    %10887 = vmatmul.bf16.gmra.mxu0 %v3437
    %v10888 = vpop.f32.mrf.mxu0
    %v10889 = vadd.f32 0.0, %v10888
    %v10890 = vpop.f32.mrf.mxu0
    %v10891 = vadd.f32 0.0, %v10890
    %10892 = vmatmul.bf16.gmra.mxu0 %v3445
    %v10893 = vpop.f32.mrf.mxu0
    %v10894 = vadd.f32 0.0, %v10893
    %v10895 = vpop.f32.mrf.mxu0
    %v10896 = vadd.f32 0.0, %v10895
    %10897 = vmatmul.bf16.gmra.mxu0 %v3453
    %v10898 = vpop.f32.mrf.mxu0
    %v10899 = vadd.f32 0.0, %v10898
    %v10900 = vpop.f32.mrf.mxu0
    %v10901 = vadd.f32 0.0, %v10900
    %10902 = vmatmul.bf16.gmra.mxu0 %v3461
    %v10903 = vpop.f32.mrf.mxu0
    %v10904 = vadd.f32 0.0, %v10903
    %v10905 = vpop.f32.mrf.mxu0
    %v10906 = vadd.f32 0.0, %v10905
    %10907 = vmatmul.bf16.gmra.mxu0 %v3469
    %v10908 = vpop.f32.mrf.mxu0
    %v10909 = vadd.f32 0.0, %v10908
    %v10910 = vpop.f32.mrf.mxu0
    %v10911 = vadd.f32 0.0, %v10910
    %10912 = vmatmul.bf16.gmra.mxu0 %v3477
    %v10913 = vpop.f32.mrf.mxu0
    %v10914 = vadd.f32 0.0, %v10913
    %v10915 = vpop.f32.mrf.mxu0
    %v10916 = vadd.f32 0.0, %v10915
    %10917 = vmatmul.bf16.gmra.mxu0 %v3485
    %v10918 = vpop.f32.mrf.mxu0
    %v10919 = vadd.f32 0.0, %v10918
    %v10920 = vpop.f32.mrf.mxu0
    %v10921 = vadd.f32 0.0, %v10920
    %10922 = vmatmul.bf16.gmra.mxu0 %v3493
    %v10923 = vpop.f32.mrf.mxu0
    %v10924 = vadd.f32 0.0, %v10923
    %v10925 = vpop.f32.mrf.mxu0
    %v10926 = vadd.f32 0.0, %v10925
    %10927 = vmatmul.bf16.gmra.mxu0 %v3501
    %v10928 = vpop.f32.mrf.mxu0
    %v10929 = vadd.f32 0.0, %v10928
    %v10930 = vpop.f32.mrf.mxu0
    %v10931 = vadd.f32 0.0, %v10930
    %10932 = vmatmul.bf16.gmra.mxu0 %v3509
    %v10933 = vpop.f32.mrf.mxu0
    %v10934 = vadd.f32 0.0, %v10933
    %v10935 = vpop.f32.mrf.mxu0
    %v10936 = vadd.f32 0.0, %v10935
    %10937 = vmatmul.bf16.gmra.mxu0 %v3517
    %v10938 = vpop.f32.mrf.mxu0
    %v10939 = vadd.f32 0.0, %v10938
    %v10940 = vpop.f32.mrf.mxu0
    %v10941 = vadd.f32 0.0, %v10940
    %10942 = vmatmul.bf16.gmra.mxu0 %v3525
    %v10943 = vpop.f32.mrf.mxu0
    %v10944 = vadd.f32 0.0, %v10943
    %v10945 = vpop.f32.mrf.mxu0
    %v10946 = vadd.f32 0.0, %v10945
    %10947 = vmatmul.bf16.gmra.mxu0 %v3533
    %v10948 = vpop.f32.mrf.mxu0
    %v10949 = vadd.f32 0.0, %v10948
    %v10950 = vpop.f32.mrf.mxu0
    %v10951 = vadd.f32 0.0, %v10950
    %10952 = vmatmul.bf16.gmra.mxu0 %v3541
    %v10953 = vpop.f32.mrf.mxu0
    %v10954 = vadd.f32 0.0, %v10953
    %v10955 = vpop.f32.mrf.mxu0
    %v10956 = vadd.f32 0.0, %v10955
    %10957 = vmatmul.bf16.gmra.mxu0 %v3549
    %v10958 = vpop.f32.mrf.mxu0
    %v10959 = vadd.f32 0.0, %v10958
    %v10960 = vpop.f32.mrf.mxu0
    %v10961 = vadd.f32 0.0, %v10960
    %10962 = vmatmul.bf16.gmra.mxu0 %v3557
    %v10963 = vpop.f32.mrf.mxu0
    %v10964 = vadd.f32 0.0, %v10963
    %v10965 = vpop.f32.mrf.mxu0
    %v10966 = vadd.f32 0.0, %v10965
    %10967 = vdwg.mxu0
    %10968 = vmatpush.bf16.msra.mxu0 %v10590
    %10969 = vmatpush.bf16.msra.mxu0 %v10589
    %10970 = vmatpush.bf16.msra.mxu0 %v10588
    %10971 = vmatpush.bf16.msra.mxu0 %v10587
    %10972 = vmatpush.bf16.msra.mxu0 %v10586
    %10973 = vmatpush.bf16.msra.mxu0 %v10585
    %10974 = vmatpush.bf16.msra.mxu0 %v10584
    %10975 = vmatpush.bf16.msra.mxu0 %v10583
    %10976 = vmatmul.bf16.gmra.mxu0 %v3054
    %v10977 = vpop.f32.mrf.mxu0
    %v10978 = vadd.f32 %v10649, %v10977
    %v10979 = vpop.f32.mrf.mxu0
    %v10980 = vadd.f32 %v10651, %v10979
    %10981 = vmatmul.bf16.gmra.mxu0 %v3062
    %v10982 = vpop.f32.mrf.mxu0
    %v10983 = vadd.f32 %v10654, %v10982
    %v10984 = vpop.f32.mrf.mxu0
    %v10985 = vadd.f32 %v10656, %v10984
    %10986 = vmatmul.bf16.gmra.mxu0 %v3070
    %v10987 = vpop.f32.mrf.mxu0
    %v10988 = vadd.f32 %v10659, %v10987
    %v10989 = vpop.f32.mrf.mxu0
    %v10990 = vadd.f32 %v10661, %v10989
    %10991 = vmatmul.bf16.gmra.mxu0 %v3078
    %v10992 = vpop.f32.mrf.mxu0
    %v10993 = vadd.f32 %v10664, %v10992
    %v10994 = vpop.f32.mrf.mxu0
    %v10995 = vadd.f32 %v10666, %v10994
    %10996 = vmatmul.bf16.gmra.mxu0 %v3086
    %v10997 = vpop.f32.mrf.mxu0
    %v10998 = vadd.f32 %v10669, %v10997
    %v10999 = vpop.f32.mrf.mxu0
    %v11000 = vadd.f32 %v10671, %v10999
    %11001 = vmatmul.bf16.gmra.mxu0 %v3094
    %v11002 = vpop.f32.mrf.mxu0
    %v11003 = vadd.f32 %v10674, %v11002
    %v11004 = vpop.f32.mrf.mxu0
    %v11005 = vadd.f32 %v10676, %v11004
    %11006 = vmatmul.bf16.gmra.mxu0 %v3102
    %v11007 = vpop.f32.mrf.mxu0
    %v11008 = vadd.f32 %v10679, %v11007
    %v11009 = vpop.f32.mrf.mxu0
    %v11010 = vadd.f32 %v10681, %v11009
    %11011 = vmatmul.bf16.gmra.mxu0 %v3110
    %v11012 = vpop.f32.mrf.mxu0
    %v11013 = vadd.f32 %v10684, %v11012
    %v11014 = vpop.f32.mrf.mxu0
    %v11015 = vadd.f32 %v10686, %v11014
    %11016 = vmatmul.bf16.gmra.mxu0 %v3118
    %v11017 = vpop.f32.mrf.mxu0
    %v11018 = vadd.f32 %v10689, %v11017
    %v11019 = vpop.f32.mrf.mxu0
    %v11020 = vadd.f32 %v10691, %v11019
    %11021 = vmatmul.bf16.gmra.mxu0 %v3126
    %v11022 = vpop.f32.mrf.mxu0
    %v11023 = vadd.f32 %v10694, %v11022
    %v11024 = vpop.f32.mrf.mxu0
    %v11025 = vadd.f32 %v10696, %v11024
    %11026 = vmatmul.bf16.gmra.mxu0 %v3134
    %v11027 = vpop.f32.mrf.mxu0
    %v11028 = vadd.f32 %v10699, %v11027
    %v11029 = vpop.f32.mrf.mxu0
    %v11030 = vadd.f32 %v10701, %v11029
    %11031 = vmatmul.bf16.gmra.mxu0 %v3142
    %v11032 = vpop.f32.mrf.mxu0
    %v11033 = vadd.f32 %v10704, %v11032
    %v11034 = vpop.f32.mrf.mxu0
    %v11035 = vadd.f32 %v10706, %v11034
    %11036 = vmatmul.bf16.gmra.mxu0 %v3150
    %v11037 = vpop.f32.mrf.mxu0
    %v11038 = vadd.f32 %v10709, %v11037
    %v11039 = vpop.f32.mrf.mxu0
    %v11040 = vadd.f32 %v10711, %v11039
    %11041 = vmatmul.bf16.gmra.mxu0 %v3158
    %v11042 = vpop.f32.mrf.mxu0
    %v11043 = vadd.f32 %v10714, %v11042
    %v11044 = vpop.f32.mrf.mxu0
    %v11045 = vadd.f32 %v10716, %v11044
    %11046 = vmatmul.bf16.gmra.mxu0 %v3166
    %v11047 = vpop.f32.mrf.mxu0
    %v11048 = vadd.f32 %v10719, %v11047
    %v11049 = vpop.f32.mrf.mxu0
    %v11050 = vadd.f32 %v10721, %v11049
    %11051 = vmatmul.bf16.gmra.mxu0 %v3174
    %v11052 = vpop.f32.mrf.mxu0
    %v11053 = vadd.f32 %v10724, %v11052
    %v11054 = vpop.f32.mrf.mxu0
    %v11055 = vadd.f32 %v10726, %v11054
    %11056 = vmatmul.bf16.gmra.mxu0 %v3182
    %v11057 = vpop.f32.mrf.mxu0
    %v11058 = vadd.f32 %v10729, %v11057
    %v11059 = vpop.f32.mrf.mxu0
    %v11060 = vadd.f32 %v10731, %v11059
    %11061 = vmatmul.bf16.gmra.mxu0 %v3190
    %v11062 = vpop.f32.mrf.mxu0
    %v11063 = vadd.f32 %v10734, %v11062
    %v11064 = vpop.f32.mrf.mxu0
    %v11065 = vadd.f32 %v10736, %v11064
    %11066 = vmatmul.bf16.gmra.mxu0 %v3198
    %v11067 = vpop.f32.mrf.mxu0
    %v11068 = vadd.f32 %v10739, %v11067
    %v11069 = vpop.f32.mrf.mxu0
    %v11070 = vadd.f32 %v10741, %v11069
    %11071 = vmatmul.bf16.gmra.mxu0 %v3206
    %v11072 = vpop.f32.mrf.mxu0
    %v11073 = vadd.f32 %v10744, %v11072
    %v11074 = vpop.f32.mrf.mxu0
    %v11075 = vadd.f32 %v10746, %v11074
    %11076 = vmatmul.bf16.gmra.mxu0 %v3214
    %v11077 = vpop.f32.mrf.mxu0
    %v11078 = vadd.f32 %v10749, %v11077
    %v11079 = vpop.f32.mrf.mxu0
    %v11080 = vadd.f32 %v10751, %v11079
    %11081 = vmatmul.bf16.gmra.mxu0 %v3222
    %v11082 = vpop.f32.mrf.mxu0
    %v11083 = vadd.f32 %v10754, %v11082
    %v11084 = vpop.f32.mrf.mxu0
    %v11085 = vadd.f32 %v10756, %v11084
    %11086 = vmatmul.bf16.gmra.mxu0 %v3230
    %v11087 = vpop.f32.mrf.mxu0
    %v11088 = vadd.f32 %v10759, %v11087
    %v11089 = vpop.f32.mrf.mxu0
    %v11090 = vadd.f32 %v10761, %v11089
    %11091 = vmatmul.bf16.gmra.mxu0 %v3238
    %v11092 = vpop.f32.mrf.mxu0
    %v11093 = vadd.f32 %v10764, %v11092
    %v11094 = vpop.f32.mrf.mxu0
    %v11095 = vadd.f32 %v10766, %v11094
    %11096 = vmatmul.bf16.gmra.mxu0 %v3246
    %v11097 = vpop.f32.mrf.mxu0
    %v11098 = vadd.f32 %v10769, %v11097
    %v11099 = vpop.f32.mrf.mxu0
    %v11100 = vadd.f32 %v10771, %v11099
    %11101 = vmatmul.bf16.gmra.mxu0 %v3254
    %v11102 = vpop.f32.mrf.mxu0
    %v11103 = vadd.f32 %v10774, %v11102
    %v11104 = vpop.f32.mrf.mxu0
    %v11105 = vadd.f32 %v10776, %v11104
    %11106 = vmatmul.bf16.gmra.mxu0 %v3262
    %v11107 = vpop.f32.mrf.mxu0
    %v11108 = vadd.f32 %v10779, %v11107
    %v11109 = vpop.f32.mrf.mxu0
    %v11110 = vadd.f32 %v10781, %v11109
    %11111 = vmatmul.bf16.gmra.mxu0 %v3270
    %v11112 = vpop.f32.mrf.mxu0
    %v11113 = vadd.f32 %v10784, %v11112
    %v11114 = vpop.f32.mrf.mxu0
    %v11115 = vadd.f32 %v10786, %v11114
    %11116 = vmatmul.bf16.gmra.mxu0 %v3278
    %v11117 = vpop.f32.mrf.mxu0
    %v11118 = vadd.f32 %v10789, %v11117
    %v11119 = vpop.f32.mrf.mxu0
    %v11120 = vadd.f32 %v10791, %v11119
    %11121 = vmatmul.bf16.gmra.mxu0 %v3286
    %v11122 = vpop.f32.mrf.mxu0
    %v11123 = vadd.f32 %v10794, %v11122
    %v11124 = vpop.f32.mrf.mxu0
    %v11125 = vadd.f32 %v10796, %v11124
    %11126 = vmatmul.bf16.gmra.mxu0 %v3294
    %v11127 = vpop.f32.mrf.mxu0
    %v11128 = vadd.f32 %v10799, %v11127
    %v11129 = vpop.f32.mrf.mxu0
    %v11130 = vadd.f32 %v10801, %v11129
    %11131 = vmatmul.bf16.gmra.mxu0 %v3302
    %v11132 = vpop.f32.mrf.mxu0
    %v11133 = vadd.f32 %v10804, %v11132
    %v11134 = vpop.f32.mrf.mxu0
    %v11135 = vadd.f32 %v10806, %v11134
    %11136 = vmatmul.bf16.gmra.mxu0 %v3310
    %v11137 = vpop.f32.mrf.mxu0
    %v11138 = vadd.f32 %v10809, %v11137
    %v11139 = vpop.f32.mrf.mxu0
    %v11140 = vadd.f32 %v10811, %v11139
    %11141 = vmatmul.bf16.gmra.mxu0 %v3318
    %v11142 = vpop.f32.mrf.mxu0
    %v11143 = vadd.f32 %v10814, %v11142
    %v11144 = vpop.f32.mrf.mxu0
    %v11145 = vadd.f32 %v10816, %v11144
    %11146 = vmatmul.bf16.gmra.mxu0 %v3326
    %v11147 = vpop.f32.mrf.mxu0
    %v11148 = vadd.f32 %v10819, %v11147
    %v11149 = vpop.f32.mrf.mxu0
    %v11150 = vadd.f32 %v10821, %v11149
    %11151 = vmatmul.bf16.gmra.mxu0 %v3334
    %v11152 = vpop.f32.mrf.mxu0
    %v11153 = vadd.f32 %v10824, %v11152
    %v11154 = vpop.f32.mrf.mxu0
    %v11155 = vadd.f32 %v10826, %v11154
    %11156 = vmatmul.bf16.gmra.mxu0 %v3342
    %v11157 = vpop.f32.mrf.mxu0
    %v11158 = vadd.f32 %v10829, %v11157
    %v11159 = vpop.f32.mrf.mxu0
    %v11160 = vadd.f32 %v10831, %v11159
    %11161 = vmatmul.bf16.gmra.mxu0 %v3350
    %v11162 = vpop.f32.mrf.mxu0
    %v11163 = vadd.f32 %v10834, %v11162
    %v11164 = vpop.f32.mrf.mxu0
    %v11165 = vadd.f32 %v10836, %v11164
    %11166 = vmatmul.bf16.gmra.mxu0 %v3358
    %v11167 = vpop.f32.mrf.mxu0
    %v11168 = vadd.f32 %v10839, %v11167
    %v11169 = vpop.f32.mrf.mxu0
    %v11170 = vadd.f32 %v10841, %v11169
    %11171 = vmatmul.bf16.gmra.mxu0 %v3366
    %v11172 = vpop.f32.mrf.mxu0
    %v11173 = vadd.f32 %v10844, %v11172
    %v11174 = vpop.f32.mrf.mxu0
    %v11175 = vadd.f32 %v10846, %v11174
    %11176 = vmatmul.bf16.gmra.mxu0 %v3374
    %v11177 = vpop.f32.mrf.mxu0
    %v11178 = vadd.f32 %v10849, %v11177
    %v11179 = vpop.f32.mrf.mxu0
    %v11180 = vadd.f32 %v10851, %v11179
    %11181 = vmatmul.bf16.gmra.mxu0 %v3382
    %v11182 = vpop.f32.mrf.mxu0
    %v11183 = vadd.f32 %v10854, %v11182
    %v11184 = vpop.f32.mrf.mxu0
    %v11185 = vadd.f32 %v10856, %v11184
    %11186 = vmatmul.bf16.gmra.mxu0 %v3390
    %v11187 = vpop.f32.mrf.mxu0
    %v11188 = vadd.f32 %v10859, %v11187
    %v11189 = vpop.f32.mrf.mxu0
    %v11190 = vadd.f32 %v10861, %v11189
    %11191 = vmatmul.bf16.gmra.mxu0 %v3398
    %v11192 = vpop.f32.mrf.mxu0
    %v11193 = vadd.f32 %v10864, %v11192
    %v11194 = vpop.f32.mrf.mxu0
    %v11195 = vadd.f32 %v10866, %v11194
    %11196 = vmatmul.bf16.gmra.mxu0 %v3406
    %v11197 = vpop.f32.mrf.mxu0
    %v11198 = vadd.f32 %v10869, %v11197
    %v11199 = vpop.f32.mrf.mxu0
    %v11200 = vadd.f32 %v10871, %v11199
    %11201 = vmatmul.bf16.gmra.mxu0 %v3414
    %v11202 = vpop.f32.mrf.mxu0
    %v11203 = vadd.f32 %v10874, %v11202
    %v11204 = vpop.f32.mrf.mxu0
    %v11205 = vadd.f32 %v10876, %v11204
    %11206 = vmatmul.bf16.gmra.mxu0 %v3422
    %v11207 = vpop.f32.mrf.mxu0
    %v11208 = vadd.f32 %v10879, %v11207
    %v11209 = vpop.f32.mrf.mxu0
    %v11210 = vadd.f32 %v10881, %v11209
    %11211 = vmatmul.bf16.gmra.mxu0 %v3430
    %v11212 = vpop.f32.mrf.mxu0
    %v11213 = vadd.f32 %v10884, %v11212
    %v11214 = vpop.f32.mrf.mxu0
    %v11215 = vadd.f32 %v10886, %v11214
    %11216 = vmatmul.bf16.gmra.mxu0 %v3438
    %v11217 = vpop.f32.mrf.mxu0
    %v11218 = vadd.f32 %v10889, %v11217
    %v11219 = vpop.f32.mrf.mxu0
    %v11220 = vadd.f32 %v10891, %v11219
    %11221 = vmatmul.bf16.gmra.mxu0 %v3446
    %v11222 = vpop.f32.mrf.mxu0
    %v11223 = vadd.f32 %v10894, %v11222
    %v11224 = vpop.f32.mrf.mxu0
    %v11225 = vadd.f32 %v10896, %v11224
    %11226 = vmatmul.bf16.gmra.mxu0 %v3454
    %v11227 = vpop.f32.mrf.mxu0
    %v11228 = vadd.f32 %v10899, %v11227
    %v11229 = vpop.f32.mrf.mxu0
    %v11230 = vadd.f32 %v10901, %v11229
    %11231 = vmatmul.bf16.gmra.mxu0 %v3462
    %v11232 = vpop.f32.mrf.mxu0
    %v11233 = vadd.f32 %v10904, %v11232
    %v11234 = vpop.f32.mrf.mxu0
    %v11235 = vadd.f32 %v10906, %v11234
    %11236 = vmatmul.bf16.gmra.mxu0 %v3470
    %v11237 = vpop.f32.mrf.mxu0
    %v11238 = vadd.f32 %v10909, %v11237
    %v11239 = vpop.f32.mrf.mxu0
    %v11240 = vadd.f32 %v10911, %v11239
    %11241 = vmatmul.bf16.gmra.mxu0 %v3478
    %v11242 = vpop.f32.mrf.mxu0
    %v11243 = vadd.f32 %v10914, %v11242
    %v11244 = vpop.f32.mrf.mxu0
    %v11245 = vadd.f32 %v10916, %v11244
    %11246 = vmatmul.bf16.gmra.mxu0 %v3486
    %v11247 = vpop.f32.mrf.mxu0
    %v11248 = vadd.f32 %v10919, %v11247
    %v11249 = vpop.f32.mrf.mxu0
    %v11250 = vadd.f32 %v10921, %v11249
    %11251 = vmatmul.bf16.gmra.mxu0 %v3494
    %v11252 = vpop.f32.mrf.mxu0
    %v11253 = vadd.f32 %v10924, %v11252
    %v11254 = vpop.f32.mrf.mxu0
    %v11255 = vadd.f32 %v10926, %v11254
    %11256 = vmatmul.bf16.gmra.mxu0 %v3502
    %v11257 = vpop.f32.mrf.mxu0
    %v11258 = vadd.f32 %v10929, %v11257
    %v11259 = vpop.f32.mrf.mxu0
    %v11260 = vadd.f32 %v10931, %v11259
    %11261 = vmatmul.bf16.gmra.mxu0 %v3510
    %v11262 = vpop.f32.mrf.mxu0
    %v11263 = vadd.f32 %v10934, %v11262
    %v11264 = vpop.f32.mrf.mxu0
    %v11265 = vadd.f32 %v10936, %v11264
    %11266 = vmatmul.bf16.gmra.mxu0 %v3518
    %v11267 = vpop.f32.mrf.mxu0
    %v11268 = vadd.f32 %v10939, %v11267
    %v11269 = vpop.f32.mrf.mxu0
    %v11270 = vadd.f32 %v10941, %v11269
    %11271 = vmatmul.bf16.gmra.mxu0 %v3526
    %v11272 = vpop.f32.mrf.mxu0
    %v11273 = vadd.f32 %v10944, %v11272
    %v11274 = vpop.f32.mrf.mxu0
    %v11275 = vadd.f32 %v10946, %v11274
    %11276 = vmatmul.bf16.gmra.mxu0 %v3534
    %v11277 = vpop.f32.mrf.mxu0
    %v11278 = vadd.f32 %v10949, %v11277
    %v11279 = vpop.f32.mrf.mxu0
    %v11280 = vadd.f32 %v10951, %v11279
    %11281 = vmatmul.bf16.gmra.mxu0 %v3542
    %v11282 = vpop.f32.mrf.mxu0
    %v11283 = vadd.f32 %v10954, %v11282
    %v11284 = vpop.f32.mrf.mxu0
    %v11285 = vadd.f32 %v10956, %v11284
    %11286 = vmatmul.bf16.gmra.mxu0 %v3550
    %v11287 = vpop.f32.mrf.mxu0
    %v11288 = vadd.f32 %v10959, %v11287
    %v11289 = vpop.f32.mrf.mxu0
    %v11290 = vadd.f32 %v10961, %v11289
    %11291 = vmatmul.bf16.gmra.mxu0 %v3558
    %v11292 = vpop.f32.mrf.mxu0
    %v11293 = vadd.f32 %v10964, %v11292
    %v11294 = vpop.f32.mrf.mxu0
    %v11295 = vadd.f32 %v10966, %v11294
    %11296 = vdwg.mxu0
    %11297 = vmatpush.bf16.msra.mxu0 %v10598
    %11298 = vmatpush.bf16.msra.mxu0 %v10597
    %11299 = vmatpush.bf16.msra.mxu0 %v10596
    %11300 = vmatpush.bf16.msra.mxu0 %v10595
    %11301 = vmatpush.bf16.msra.mxu0 %v10594
    %11302 = vmatpush.bf16.msra.mxu0 %v10593
    %11303 = vmatpush.bf16.msra.mxu0 %v10592
    %11304 = vmatpush.bf16.msra.mxu0 %v10591
    %11305 = vmatmul.bf16.gmra.mxu0 %v3055
    %v11306 = vpop.f32.mrf.mxu0
    %v11307 = vadd.f32 %v10978, %v11306
    %v11308 = vpop.f32.mrf.mxu0
    %v11309 = vadd.f32 %v10980, %v11308
    %11310 = vmatmul.bf16.gmra.mxu0 %v3063
    %v11311 = vpop.f32.mrf.mxu0
    %v11312 = vadd.f32 %v10983, %v11311
    %v11313 = vpop.f32.mrf.mxu0
    %v11314 = vadd.f32 %v10985, %v11313
    %11315 = vmatmul.bf16.gmra.mxu0 %v3071
    %v11316 = vpop.f32.mrf.mxu0
    %v11317 = vadd.f32 %v10988, %v11316
    %v11318 = vpop.f32.mrf.mxu0
    %v11319 = vadd.f32 %v10990, %v11318
    %11320 = vmatmul.bf16.gmra.mxu0 %v3079
    %v11321 = vpop.f32.mrf.mxu0
    %v11322 = vadd.f32 %v10993, %v11321
    %v11323 = vpop.f32.mrf.mxu0
    %v11324 = vadd.f32 %v10995, %v11323
    %11325 = vmatmul.bf16.gmra.mxu0 %v3087
    %v11326 = vpop.f32.mrf.mxu0
    %v11327 = vadd.f32 %v10998, %v11326
    %v11328 = vpop.f32.mrf.mxu0
    %v11329 = vadd.f32 %v11000, %v11328
    %11330 = vmatmul.bf16.gmra.mxu0 %v3095
    %v11331 = vpop.f32.mrf.mxu0
    %v11332 = vadd.f32 %v11003, %v11331
    %v11333 = vpop.f32.mrf.mxu0
    %v11334 = vadd.f32 %v11005, %v11333
    %11335 = vmatmul.bf16.gmra.mxu0 %v3103
    %v11336 = vpop.f32.mrf.mxu0
    %v11337 = vadd.f32 %v11008, %v11336
    %v11338 = vpop.f32.mrf.mxu0
    %v11339 = vadd.f32 %v11010, %v11338
    %11340 = vmatmul.bf16.gmra.mxu0 %v3111
    %v11341 = vpop.f32.mrf.mxu0
    %v11342 = vadd.f32 %v11013, %v11341
    %v11343 = vpop.f32.mrf.mxu0
    %v11344 = vadd.f32 %v11015, %v11343
    %11345 = vmatmul.bf16.gmra.mxu0 %v3119
    %v11346 = vpop.f32.mrf.mxu0
    %v11347 = vadd.f32 %v11018, %v11346
    %v11348 = vpop.f32.mrf.mxu0
    %v11349 = vadd.f32 %v11020, %v11348
    %11350 = vmatmul.bf16.gmra.mxu0 %v3127
    %v11351 = vpop.f32.mrf.mxu0
    %v11352 = vadd.f32 %v11023, %v11351
    %v11353 = vpop.f32.mrf.mxu0
    %v11354 = vadd.f32 %v11025, %v11353
    %11355 = vmatmul.bf16.gmra.mxu0 %v3135
    %v11356 = vpop.f32.mrf.mxu0
    %v11357 = vadd.f32 %v11028, %v11356
    %v11358 = vpop.f32.mrf.mxu0
    %v11359 = vadd.f32 %v11030, %v11358
    %11360 = vmatmul.bf16.gmra.mxu0 %v3143
    %v11361 = vpop.f32.mrf.mxu0
    %v11362 = vadd.f32 %v11033, %v11361
    %v11363 = vpop.f32.mrf.mxu0
    %v11364 = vadd.f32 %v11035, %v11363
    %11365 = vmatmul.bf16.gmra.mxu0 %v3151
    %v11366 = vpop.f32.mrf.mxu0
    %v11367 = vadd.f32 %v11038, %v11366
    %v11368 = vpop.f32.mrf.mxu0
    %v11369 = vadd.f32 %v11040, %v11368
    %11370 = vmatmul.bf16.gmra.mxu0 %v3159
    %v11371 = vpop.f32.mrf.mxu0
    %v11372 = vadd.f32 %v11043, %v11371
    %v11373 = vpop.f32.mrf.mxu0
    %v11374 = vadd.f32 %v11045, %v11373
    %11375 = vmatmul.bf16.gmra.mxu0 %v3167
    %v11376 = vpop.f32.mrf.mxu0
    %v11377 = vadd.f32 %v11048, %v11376
    %v11378 = vpop.f32.mrf.mxu0
    %v11379 = vadd.f32 %v11050, %v11378
    %11380 = vmatmul.bf16.gmra.mxu0 %v3175
    %v11381 = vpop.f32.mrf.mxu0
    %v11382 = vadd.f32 %v11053, %v11381
    %v11383 = vpop.f32.mrf.mxu0
    %v11384 = vadd.f32 %v11055, %v11383
    %11385 = vmatmul.bf16.gmra.mxu0 %v3183
    %v11386 = vpop.f32.mrf.mxu0
    %v11387 = vadd.f32 %v11058, %v11386
    %v11388 = vpop.f32.mrf.mxu0
    %v11389 = vadd.f32 %v11060, %v11388
    %11390 = vmatmul.bf16.gmra.mxu0 %v3191
    %v11391 = vpop.f32.mrf.mxu0
    %v11392 = vadd.f32 %v11063, %v11391
    %v11393 = vpop.f32.mrf.mxu0
    %v11394 = vadd.f32 %v11065, %v11393
    %11395 = vmatmul.bf16.gmra.mxu0 %v3199
    %v11396 = vpop.f32.mrf.mxu0
    %v11397 = vadd.f32 %v11068, %v11396
    %v11398 = vpop.f32.mrf.mxu0
    %v11399 = vadd.f32 %v11070, %v11398
    %11400 = vmatmul.bf16.gmra.mxu0 %v3207
    %v11401 = vpop.f32.mrf.mxu0
    %v11402 = vadd.f32 %v11073, %v11401
    %v11403 = vpop.f32.mrf.mxu0
    %v11404 = vadd.f32 %v11075, %v11403
    %11405 = vmatmul.bf16.gmra.mxu0 %v3215
    %v11406 = vpop.f32.mrf.mxu0
    %v11407 = vadd.f32 %v11078, %v11406
    %v11408 = vpop.f32.mrf.mxu0
    %v11409 = vadd.f32 %v11080, %v11408
    %11410 = vmatmul.bf16.gmra.mxu0 %v3223
    %v11411 = vpop.f32.mrf.mxu0
    %v11412 = vadd.f32 %v11083, %v11411
    %v11413 = vpop.f32.mrf.mxu0
    %v11414 = vadd.f32 %v11085, %v11413
    %11415 = vmatmul.bf16.gmra.mxu0 %v3231
    %v11416 = vpop.f32.mrf.mxu0
    %v11417 = vadd.f32 %v11088, %v11416
    %v11418 = vpop.f32.mrf.mxu0
    %v11419 = vadd.f32 %v11090, %v11418
    %11420 = vmatmul.bf16.gmra.mxu0 %v3239
    %v11421 = vpop.f32.mrf.mxu0
    %v11422 = vadd.f32 %v11093, %v11421
    %v11423 = vpop.f32.mrf.mxu0
    %v11424 = vadd.f32 %v11095, %v11423
    %11425 = vmatmul.bf16.gmra.mxu0 %v3247
    %v11426 = vpop.f32.mrf.mxu0
    %v11427 = vadd.f32 %v11098, %v11426
    %v11428 = vpop.f32.mrf.mxu0
    %v11429 = vadd.f32 %v11100, %v11428
    %11430 = vmatmul.bf16.gmra.mxu0 %v3255
    %v11431 = vpop.f32.mrf.mxu0
    %v11432 = vadd.f32 %v11103, %v11431
    %v11433 = vpop.f32.mrf.mxu0
    %v11434 = vadd.f32 %v11105, %v11433
    %11435 = vmatmul.bf16.gmra.mxu0 %v3263
    %v11436 = vpop.f32.mrf.mxu0
    %v11437 = vadd.f32 %v11108, %v11436
    %v11438 = vpop.f32.mrf.mxu0
    %v11439 = vadd.f32 %v11110, %v11438
    %11440 = vmatmul.bf16.gmra.mxu0 %v3271
    %v11441 = vpop.f32.mrf.mxu0
    %v11442 = vadd.f32 %v11113, %v11441
    %v11443 = vpop.f32.mrf.mxu0
    %v11444 = vadd.f32 %v11115, %v11443
    %11445 = vmatmul.bf16.gmra.mxu0 %v3279
    %v11446 = vpop.f32.mrf.mxu0
    %v11447 = vadd.f32 %v11118, %v11446
    %v11448 = vpop.f32.mrf.mxu0
    %v11449 = vadd.f32 %v11120, %v11448
    %11450 = vmatmul.bf16.gmra.mxu0 %v3287
    %v11451 = vpop.f32.mrf.mxu0
    %v11452 = vadd.f32 %v11123, %v11451
    %v11453 = vpop.f32.mrf.mxu0
    %v11454 = vadd.f32 %v11125, %v11453
    %11455 = vmatmul.bf16.gmra.mxu0 %v3295
    %v11456 = vpop.f32.mrf.mxu0
    %v11457 = vadd.f32 %v11128, %v11456
    %v11458 = vpop.f32.mrf.mxu0
    %v11459 = vadd.f32 %v11130, %v11458
    %11460 = vmatmul.bf16.gmra.mxu0 %v3303
    %v11461 = vpop.f32.mrf.mxu0
    %v11462 = vadd.f32 %v11133, %v11461
    %v11463 = vpop.f32.mrf.mxu0
    %v11464 = vadd.f32 %v11135, %v11463
    %11465 = vmatmul.bf16.gmra.mxu0 %v3311
    %v11466 = vpop.f32.mrf.mxu0
    %v11467 = vadd.f32 %v11138, %v11466
    %v11468 = vpop.f32.mrf.mxu0
    %v11469 = vadd.f32 %v11140, %v11468
    %11470 = vmatmul.bf16.gmra.mxu0 %v3319
    %v11471 = vpop.f32.mrf.mxu0
    %v11472 = vadd.f32 %v11143, %v11471
    %v11473 = vpop.f32.mrf.mxu0
    %v11474 = vadd.f32 %v11145, %v11473
    %11475 = vmatmul.bf16.gmra.mxu0 %v3327
    %v11476 = vpop.f32.mrf.mxu0
    %v11477 = vadd.f32 %v11148, %v11476
    %v11478 = vpop.f32.mrf.mxu0
    %v11479 = vadd.f32 %v11150, %v11478
    %11480 = vmatmul.bf16.gmra.mxu0 %v3335
    %v11481 = vpop.f32.mrf.mxu0
    %v11482 = vadd.f32 %v11153, %v11481
    %v11483 = vpop.f32.mrf.mxu0
    %v11484 = vadd.f32 %v11155, %v11483
    %11485 = vmatmul.bf16.gmra.mxu0 %v3343
    %v11486 = vpop.f32.mrf.mxu0
    %v11487 = vadd.f32 %v11158, %v11486
    %v11488 = vpop.f32.mrf.mxu0
    %v11489 = vadd.f32 %v11160, %v11488
    %11490 = vmatmul.bf16.gmra.mxu0 %v3351
    %v11491 = vpop.f32.mrf.mxu0
    %v11492 = vadd.f32 %v11163, %v11491
    %v11493 = vpop.f32.mrf.mxu0
    %v11494 = vadd.f32 %v11165, %v11493
    %11495 = vmatmul.bf16.gmra.mxu0 %v3359
    %v11496 = vpop.f32.mrf.mxu0
    %v11497 = vadd.f32 %v11168, %v11496
    %v11498 = vpop.f32.mrf.mxu0
    %v11499 = vadd.f32 %v11170, %v11498
    %11500 = vmatmul.bf16.gmra.mxu0 %v3367
    %v11501 = vpop.f32.mrf.mxu0
    %v11502 = vadd.f32 %v11173, %v11501
    %v11503 = vpop.f32.mrf.mxu0
    %v11504 = vadd.f32 %v11175, %v11503
    %11505 = vmatmul.bf16.gmra.mxu0 %v3375
    %v11506 = vpop.f32.mrf.mxu0
    %v11507 = vadd.f32 %v11178, %v11506
    %v11508 = vpop.f32.mrf.mxu0
    %v11509 = vadd.f32 %v11180, %v11508
    %11510 = vmatmul.bf16.gmra.mxu0 %v3383
    %v11511 = vpop.f32.mrf.mxu0
    %v11512 = vadd.f32 %v11183, %v11511
    %v11513 = vpop.f32.mrf.mxu0
    %v11514 = vadd.f32 %v11185, %v11513
    %11515 = vmatmul.bf16.gmra.mxu0 %v3391
    %v11516 = vpop.f32.mrf.mxu0
    %v11517 = vadd.f32 %v11188, %v11516
    %v11518 = vpop.f32.mrf.mxu0
    %v11519 = vadd.f32 %v11190, %v11518
    %11520 = vmatmul.bf16.gmra.mxu0 %v3399
    %v11521 = vpop.f32.mrf.mxu0
    %v11522 = vadd.f32 %v11193, %v11521
    %v11523 = vpop.f32.mrf.mxu0
    %v11524 = vadd.f32 %v11195, %v11523
    %11525 = vmatmul.bf16.gmra.mxu0 %v3407
    %v11526 = vpop.f32.mrf.mxu0
    %v11527 = vadd.f32 %v11198, %v11526
    %v11528 = vpop.f32.mrf.mxu0
    %v11529 = vadd.f32 %v11200, %v11528
    %11530 = vmatmul.bf16.gmra.mxu0 %v3415
    %v11531 = vpop.f32.mrf.mxu0
    %v11532 = vadd.f32 %v11203, %v11531
    %v11533 = vpop.f32.mrf.mxu0
    %v11534 = vadd.f32 %v11205, %v11533
    %11535 = vmatmul.bf16.gmra.mxu0 %v3423
    %v11536 = vpop.f32.mrf.mxu0
    %v11537 = vadd.f32 %v11208, %v11536
    %v11538 = vpop.f32.mrf.mxu0
    %v11539 = vadd.f32 %v11210, %v11538
    %11540 = vmatmul.bf16.gmra.mxu0 %v3431
    %v11541 = vpop.f32.mrf.mxu0
    %v11542 = vadd.f32 %v11213, %v11541
    %v11543 = vpop.f32.mrf.mxu0
    %v11544 = vadd.f32 %v11215, %v11543
    %11545 = vmatmul.bf16.gmra.mxu0 %v3439
    %v11546 = vpop.f32.mrf.mxu0
    %v11547 = vadd.f32 %v11218, %v11546
    %v11548 = vpop.f32.mrf.mxu0
    %v11549 = vadd.f32 %v11220, %v11548
    %11550 = vmatmul.bf16.gmra.mxu0 %v3447
    %v11551 = vpop.f32.mrf.mxu0
    %v11552 = vadd.f32 %v11223, %v11551
    %v11553 = vpop.f32.mrf.mxu0
    %v11554 = vadd.f32 %v11225, %v11553
    %11555 = vmatmul.bf16.gmra.mxu0 %v3455
    %v11556 = vpop.f32.mrf.mxu0
    %v11557 = vadd.f32 %v11228, %v11556
    %v11558 = vpop.f32.mrf.mxu0
    %v11559 = vadd.f32 %v11230, %v11558
    %11560 = vmatmul.bf16.gmra.mxu0 %v3463
    %v11561 = vpop.f32.mrf.mxu0
    %v11562 = vadd.f32 %v11233, %v11561
    %v11563 = vpop.f32.mrf.mxu0
    %v11564 = vadd.f32 %v11235, %v11563
    %11565 = vmatmul.bf16.gmra.mxu0 %v3471
    %v11566 = vpop.f32.mrf.mxu0
    %v11567 = vadd.f32 %v11238, %v11566
    %v11568 = vpop.f32.mrf.mxu0
    %v11569 = vadd.f32 %v11240, %v11568
    %11570 = vmatmul.bf16.gmra.mxu0 %v3479
    %v11571 = vpop.f32.mrf.mxu0
    %v11572 = vadd.f32 %v11243, %v11571
    %v11573 = vpop.f32.mrf.mxu0
    %v11574 = vadd.f32 %v11245, %v11573
    %11575 = vmatmul.bf16.gmra.mxu0 %v3487
    %v11576 = vpop.f32.mrf.mxu0
    %v11577 = vadd.f32 %v11248, %v11576
    %v11578 = vpop.f32.mrf.mxu0
    %v11579 = vadd.f32 %v11250, %v11578
    %11580 = vmatmul.bf16.gmra.mxu0 %v3495
    %v11581 = vpop.f32.mrf.mxu0
    %v11582 = vadd.f32 %v11253, %v11581
    %v11583 = vpop.f32.mrf.mxu0
    %v11584 = vadd.f32 %v11255, %v11583
    %11585 = vmatmul.bf16.gmra.mxu0 %v3503
    %v11586 = vpop.f32.mrf.mxu0
    %v11587 = vadd.f32 %v11258, %v11586
    %v11588 = vpop.f32.mrf.mxu0
    %v11589 = vadd.f32 %v11260, %v11588
    %11590 = vmatmul.bf16.gmra.mxu0 %v3511
    %v11591 = vpop.f32.mrf.mxu0
    %v11592 = vadd.f32 %v11263, %v11591
    %v11593 = vpop.f32.mrf.mxu0
    %v11594 = vadd.f32 %v11265, %v11593
    %11595 = vmatmul.bf16.gmra.mxu0 %v3519
    %v11596 = vpop.f32.mrf.mxu0
    %v11597 = vadd.f32 %v11268, %v11596
    %v11598 = vpop.f32.mrf.mxu0
    %v11599 = vadd.f32 %v11270, %v11598
    %11600 = vmatmul.bf16.gmra.mxu0 %v3527
    %v11601 = vpop.f32.mrf.mxu0
    %v11602 = vadd.f32 %v11273, %v11601
    %v11603 = vpop.f32.mrf.mxu0
    %v11604 = vadd.f32 %v11275, %v11603
    %11605 = vmatmul.bf16.gmra.mxu0 %v3535
    %v11606 = vpop.f32.mrf.mxu0
    %v11607 = vadd.f32 %v11278, %v11606
    %v11608 = vpop.f32.mrf.mxu0
    %v11609 = vadd.f32 %v11280, %v11608
    %11610 = vmatmul.bf16.gmra.mxu0 %v3543
    %v11611 = vpop.f32.mrf.mxu0
    %v11612 = vadd.f32 %v11283, %v11611
    %v11613 = vpop.f32.mrf.mxu0
    %v11614 = vadd.f32 %v11285, %v11613
    %11615 = vmatmul.bf16.gmra.mxu0 %v3551
    %v11616 = vpop.f32.mrf.mxu0
    %v11617 = vadd.f32 %v11288, %v11616
    %v11618 = vpop.f32.mrf.mxu0
    %v11619 = vadd.f32 %v11290, %v11618
    %11620 = vmatmul.bf16.gmra.mxu0 %v3559
    %v11621 = vpop.f32.mrf.mxu0
    %v11622 = vadd.f32 %v11293, %v11621
    %v11623 = vpop.f32.mrf.mxu0
    %v11624 = vadd.f32 %v11295, %v11623
    %11625 = vdwg.mxu0
    %11626 = vmatpush.bf16.msra.mxu0 %v10606
    %11627 = vmatpush.bf16.msra.mxu0 %v10605
    %11628 = vmatpush.bf16.msra.mxu0 %v10604
    %11629 = vmatpush.bf16.msra.mxu0 %v10603
    %11630 = vmatpush.bf16.msra.mxu0 %v10602
    %11631 = vmatpush.bf16.msra.mxu0 %v10601
    %11632 = vmatpush.bf16.msra.mxu0 %v10600
    %11633 = vmatpush.bf16.msra.mxu0 %v10599
    %11634 = vmatmul.bf16.gmra.mxu0 %v3056
    %v11635 = vpop.f32.mrf.mxu0
    %v11636 = vadd.f32 %v11307, %v11635
    %v11637 = vpop.f32.mrf.mxu0
    %v11638 = vadd.f32 %v11309, %v11637
    %11639 = vmatmul.bf16.gmra.mxu0 %v3064
    %v11640 = vpop.f32.mrf.mxu0
    %v11641 = vadd.f32 %v11312, %v11640
    %v11642 = vpop.f32.mrf.mxu0
    %v11643 = vadd.f32 %v11314, %v11642
    %11644 = vmatmul.bf16.gmra.mxu0 %v3072
    %v11645 = vpop.f32.mrf.mxu0
    %v11646 = vadd.f32 %v11317, %v11645
    %v11647 = vpop.f32.mrf.mxu0
    %v11648 = vadd.f32 %v11319, %v11647
    %11649 = vmatmul.bf16.gmra.mxu0 %v3080
    %v11650 = vpop.f32.mrf.mxu0
    %v11651 = vadd.f32 %v11322, %v11650
    %v11652 = vpop.f32.mrf.mxu0
    %v11653 = vadd.f32 %v11324, %v11652
    %11654 = vmatmul.bf16.gmra.mxu0 %v3088
    %v11655 = vpop.f32.mrf.mxu0
    %v11656 = vadd.f32 %v11327, %v11655
    %v11657 = vpop.f32.mrf.mxu0
    %v11658 = vadd.f32 %v11329, %v11657
    %11659 = vmatmul.bf16.gmra.mxu0 %v3096
    %v11660 = vpop.f32.mrf.mxu0
    %v11661 = vadd.f32 %v11332, %v11660
    %v11662 = vpop.f32.mrf.mxu0
    %v11663 = vadd.f32 %v11334, %v11662
    %11664 = vmatmul.bf16.gmra.mxu0 %v3104
    %v11665 = vpop.f32.mrf.mxu0
    %v11666 = vadd.f32 %v11337, %v11665
    %v11667 = vpop.f32.mrf.mxu0
    %v11668 = vadd.f32 %v11339, %v11667
    %11669 = vmatmul.bf16.gmra.mxu0 %v3112
    %v11670 = vpop.f32.mrf.mxu0
    %v11671 = vadd.f32 %v11342, %v11670
    %v11672 = vpop.f32.mrf.mxu0
    %v11673 = vadd.f32 %v11344, %v11672
    %11674 = vmatmul.bf16.gmra.mxu0 %v3120
    %v11675 = vpop.f32.mrf.mxu0
    %v11676 = vadd.f32 %v11347, %v11675
    %v11677 = vpop.f32.mrf.mxu0
    %v11678 = vadd.f32 %v11349, %v11677
    %11679 = vmatmul.bf16.gmra.mxu0 %v3128
    %v11680 = vpop.f32.mrf.mxu0
    %v11681 = vadd.f32 %v11352, %v11680
    %v11682 = vpop.f32.mrf.mxu0
    %v11683 = vadd.f32 %v11354, %v11682
    %11684 = vmatmul.bf16.gmra.mxu0 %v3136
    %v11685 = vpop.f32.mrf.mxu0
    %v11686 = vadd.f32 %v11357, %v11685
    %v11687 = vpop.f32.mrf.mxu0
    %v11688 = vadd.f32 %v11359, %v11687
    %11689 = vmatmul.bf16.gmra.mxu0 %v3144
    %v11690 = vpop.f32.mrf.mxu0
    %v11691 = vadd.f32 %v11362, %v11690
    %v11692 = vpop.f32.mrf.mxu0
    %v11693 = vadd.f32 %v11364, %v11692
    %11694 = vmatmul.bf16.gmra.mxu0 %v3152
    %v11695 = vpop.f32.mrf.mxu0
    %v11696 = vadd.f32 %v11367, %v11695
    %v11697 = vpop.f32.mrf.mxu0
    %v11698 = vadd.f32 %v11369, %v11697
    %11699 = vmatmul.bf16.gmra.mxu0 %v3160
    %v11700 = vpop.f32.mrf.mxu0
    %v11701 = vadd.f32 %v11372, %v11700
    %v11702 = vpop.f32.mrf.mxu0
    %v11703 = vadd.f32 %v11374, %v11702
    %11704 = vmatmul.bf16.gmra.mxu0 %v3168
    %v11705 = vpop.f32.mrf.mxu0
    %v11706 = vadd.f32 %v11377, %v11705
    %v11707 = vpop.f32.mrf.mxu0
    %v11708 = vadd.f32 %v11379, %v11707
    %11709 = vmatmul.bf16.gmra.mxu0 %v3176
    %v11710 = vpop.f32.mrf.mxu0
    %v11711 = vadd.f32 %v11382, %v11710
    %v11712 = vpop.f32.mrf.mxu0
    %v11713 = vadd.f32 %v11384, %v11712
    %11714 = vmatmul.bf16.gmra.mxu0 %v3184
    %v11715 = vpop.f32.mrf.mxu0
    %v11716 = vadd.f32 %v11387, %v11715
    %v11717 = vpop.f32.mrf.mxu0
    %v11718 = vadd.f32 %v11389, %v11717
    %11719 = vmatmul.bf16.gmra.mxu0 %v3192
    %v11720 = vpop.f32.mrf.mxu0
    %v11721 = vadd.f32 %v11392, %v11720
    %v11722 = vpop.f32.mrf.mxu0
    %v11723 = vadd.f32 %v11394, %v11722
    %11724 = vmatmul.bf16.gmra.mxu0 %v3200
    %v11725 = vpop.f32.mrf.mxu0
    %v11726 = vadd.f32 %v11397, %v11725
    %v11727 = vpop.f32.mrf.mxu0
    %v11728 = vadd.f32 %v11399, %v11727
    %11729 = vmatmul.bf16.gmra.mxu0 %v3208
    %v11730 = vpop.f32.mrf.mxu0
    %v11731 = vadd.f32 %v11402, %v11730
    %v11732 = vpop.f32.mrf.mxu0
    %v11733 = vadd.f32 %v11404, %v11732
    %11734 = vmatmul.bf16.gmra.mxu0 %v3216
    %v11735 = vpop.f32.mrf.mxu0
    %v11736 = vadd.f32 %v11407, %v11735
    %v11737 = vpop.f32.mrf.mxu0
    %v11738 = vadd.f32 %v11409, %v11737
    %11739 = vmatmul.bf16.gmra.mxu0 %v3224
    %v11740 = vpop.f32.mrf.mxu0
    %v11741 = vadd.f32 %v11412, %v11740
    %v11742 = vpop.f32.mrf.mxu0
    %v11743 = vadd.f32 %v11414, %v11742
    %11744 = vmatmul.bf16.gmra.mxu0 %v3232
    %v11745 = vpop.f32.mrf.mxu0
    %v11746 = vadd.f32 %v11417, %v11745
    %v11747 = vpop.f32.mrf.mxu0
    %v11748 = vadd.f32 %v11419, %v11747
    %11749 = vmatmul.bf16.gmra.mxu0 %v3240
    %v11750 = vpop.f32.mrf.mxu0
    %v11751 = vadd.f32 %v11422, %v11750
    %v11752 = vpop.f32.mrf.mxu0
    %v11753 = vadd.f32 %v11424, %v11752
    %11754 = vmatmul.bf16.gmra.mxu0 %v3248
    %v11755 = vpop.f32.mrf.mxu0
    %v11756 = vadd.f32 %v11427, %v11755
    %v11757 = vpop.f32.mrf.mxu0
    %v11758 = vadd.f32 %v11429, %v11757
    %11759 = vmatmul.bf16.gmra.mxu0 %v3256
    %v11760 = vpop.f32.mrf.mxu0
    %v11761 = vadd.f32 %v11432, %v11760
    %v11762 = vpop.f32.mrf.mxu0
    %v11763 = vadd.f32 %v11434, %v11762
    %11764 = vmatmul.bf16.gmra.mxu0 %v3264
    %v11765 = vpop.f32.mrf.mxu0
    %v11766 = vadd.f32 %v11437, %v11765
    %v11767 = vpop.f32.mrf.mxu0
    %v11768 = vadd.f32 %v11439, %v11767
    %11769 = vmatmul.bf16.gmra.mxu0 %v3272
    %v11770 = vpop.f32.mrf.mxu0
    %v11771 = vadd.f32 %v11442, %v11770
    %v11772 = vpop.f32.mrf.mxu0
    %v11773 = vadd.f32 %v11444, %v11772
    %11774 = vmatmul.bf16.gmra.mxu0 %v3280
    %v11775 = vpop.f32.mrf.mxu0
    %v11776 = vadd.f32 %v11447, %v11775
    %v11777 = vpop.f32.mrf.mxu0
    %v11778 = vadd.f32 %v11449, %v11777
    %11779 = vmatmul.bf16.gmra.mxu0 %v3288
    %v11780 = vpop.f32.mrf.mxu0
    %v11781 = vadd.f32 %v11452, %v11780
    %v11782 = vpop.f32.mrf.mxu0
    %v11783 = vadd.f32 %v11454, %v11782
    %11784 = vmatmul.bf16.gmra.mxu0 %v3296
    %v11785 = vpop.f32.mrf.mxu0
    %v11786 = vadd.f32 %v11457, %v11785
    %v11787 = vpop.f32.mrf.mxu0
    %v11788 = vadd.f32 %v11459, %v11787
    %11789 = vmatmul.bf16.gmra.mxu0 %v3304
    %v11790 = vpop.f32.mrf.mxu0
    %v11791 = vadd.f32 %v11462, %v11790
    %v11792 = vpop.f32.mrf.mxu0
    %v11793 = vadd.f32 %v11464, %v11792
    %11794 = vmatmul.bf16.gmra.mxu0 %v3312
    %v11795 = vpop.f32.mrf.mxu0
    %v11796 = vadd.f32 %v11467, %v11795
    %v11797 = vpop.f32.mrf.mxu0
    %v11798 = vadd.f32 %v11469, %v11797
    %11799 = vmatmul.bf16.gmra.mxu0 %v3320
    %v11800 = vpop.f32.mrf.mxu0
    %v11801 = vadd.f32 %v11472, %v11800
    %v11802 = vpop.f32.mrf.mxu0
    %v11803 = vadd.f32 %v11474, %v11802
    %11804 = vmatmul.bf16.gmra.mxu0 %v3328
    %v11805 = vpop.f32.mrf.mxu0
    %v11806 = vadd.f32 %v11477, %v11805
    %v11807 = vpop.f32.mrf.mxu0
    %v11808 = vadd.f32 %v11479, %v11807
    %11809 = vmatmul.bf16.gmra.mxu0 %v3336
    %v11810 = vpop.f32.mrf.mxu0
    %v11811 = vadd.f32 %v11482, %v11810
    %v11812 = vpop.f32.mrf.mxu0
    %v11813 = vadd.f32 %v11484, %v11812
    %11814 = vmatmul.bf16.gmra.mxu0 %v3344
    %v11815 = vpop.f32.mrf.mxu0
    %v11816 = vadd.f32 %v11487, %v11815
    %v11817 = vpop.f32.mrf.mxu0
    %v11818 = vadd.f32 %v11489, %v11817
    %11819 = vmatmul.bf16.gmra.mxu0 %v3352
    %v11820 = vpop.f32.mrf.mxu0
    %v11821 = vadd.f32 %v11492, %v11820
    %v11822 = vpop.f32.mrf.mxu0
    %v11823 = vadd.f32 %v11494, %v11822
    %11824 = vmatmul.bf16.gmra.mxu0 %v3360
    %v11825 = vpop.f32.mrf.mxu0
    %v11826 = vadd.f32 %v11497, %v11825
    %v11827 = vpop.f32.mrf.mxu0
    %v11828 = vadd.f32 %v11499, %v11827
    %11829 = vmatmul.bf16.gmra.mxu0 %v3368
    %v11830 = vpop.f32.mrf.mxu0
    %v11831 = vadd.f32 %v11502, %v11830
    %v11832 = vpop.f32.mrf.mxu0
    %v11833 = vadd.f32 %v11504, %v11832
    %11834 = vmatmul.bf16.gmra.mxu0 %v3376
    %v11835 = vpop.f32.mrf.mxu0
    %v11836 = vadd.f32 %v11507, %v11835
    %v11837 = vpop.f32.mrf.mxu0
    %v11838 = vadd.f32 %v11509, %v11837
    %11839 = vmatmul.bf16.gmra.mxu0 %v3384
    %v11840 = vpop.f32.mrf.mxu0
    %v11841 = vadd.f32 %v11512, %v11840
    %v11842 = vpop.f32.mrf.mxu0
    %v11843 = vadd.f32 %v11514, %v11842
    %11844 = vmatmul.bf16.gmra.mxu0 %v3392
    %v11845 = vpop.f32.mrf.mxu0
    %v11846 = vadd.f32 %v11517, %v11845
    %v11847 = vpop.f32.mrf.mxu0
    %v11848 = vadd.f32 %v11519, %v11847
    %11849 = vmatmul.bf16.gmra.mxu0 %v3400
    %v11850 = vpop.f32.mrf.mxu0
    %v11851 = vadd.f32 %v11522, %v11850
    %v11852 = vpop.f32.mrf.mxu0
    %v11853 = vadd.f32 %v11524, %v11852
    %11854 = vmatmul.bf16.gmra.mxu0 %v3408
    %v11855 = vpop.f32.mrf.mxu0
    %v11856 = vadd.f32 %v11527, %v11855
    %v11857 = vpop.f32.mrf.mxu0
    %v11858 = vadd.f32 %v11529, %v11857
    %11859 = vmatmul.bf16.gmra.mxu0 %v3416
    %v11860 = vpop.f32.mrf.mxu0
    %v11861 = vadd.f32 %v11532, %v11860
    %v11862 = vpop.f32.mrf.mxu0
    %v11863 = vadd.f32 %v11534, %v11862
    %11864 = vmatmul.bf16.gmra.mxu0 %v3424
    %v11865 = vpop.f32.mrf.mxu0
    %v11866 = vadd.f32 %v11537, %v11865
    %v11867 = vpop.f32.mrf.mxu0
    %v11868 = vadd.f32 %v11539, %v11867
    %11869 = vmatmul.bf16.gmra.mxu0 %v3432
    %v11870 = vpop.f32.mrf.mxu0
    %v11871 = vadd.f32 %v11542, %v11870
    %v11872 = vpop.f32.mrf.mxu0
    %v11873 = vadd.f32 %v11544, %v11872
    %11874 = vmatmul.bf16.gmra.mxu0 %v3440
    %v11875 = vpop.f32.mrf.mxu0
    %v11876 = vadd.f32 %v11547, %v11875
    %v11877 = vpop.f32.mrf.mxu0
    %v11878 = vadd.f32 %v11549, %v11877
    %11879 = vmatmul.bf16.gmra.mxu0 %v3448
    %v11880 = vpop.f32.mrf.mxu0
    %v11881 = vadd.f32 %v11552, %v11880
    %v11882 = vpop.f32.mrf.mxu0
    %v11883 = vadd.f32 %v11554, %v11882
    %11884 = vmatmul.bf16.gmra.mxu0 %v3456
    %v11885 = vpop.f32.mrf.mxu0
    %v11886 = vadd.f32 %v11557, %v11885
    %v11887 = vpop.f32.mrf.mxu0
    %v11888 = vadd.f32 %v11559, %v11887
    %11889 = vmatmul.bf16.gmra.mxu0 %v3464
    %v11890 = vpop.f32.mrf.mxu0
    %v11891 = vadd.f32 %v11562, %v11890
    %v11892 = vpop.f32.mrf.mxu0
    %v11893 = vadd.f32 %v11564, %v11892
    %11894 = vmatmul.bf16.gmra.mxu0 %v3472
    %v11895 = vpop.f32.mrf.mxu0
    %v11896 = vadd.f32 %v11567, %v11895
    %v11897 = vpop.f32.mrf.mxu0
    %v11898 = vadd.f32 %v11569, %v11897
    %11899 = vmatmul.bf16.gmra.mxu0 %v3480
    %v11900 = vpop.f32.mrf.mxu0
    %v11901 = vadd.f32 %v11572, %v11900
    %v11902 = vpop.f32.mrf.mxu0
    %v11903 = vadd.f32 %v11574, %v11902
    %11904 = vmatmul.bf16.gmra.mxu0 %v3488
    %v11905 = vpop.f32.mrf.mxu0
    %v11906 = vadd.f32 %v11577, %v11905
    %v11907 = vpop.f32.mrf.mxu0
    %v11908 = vadd.f32 %v11579, %v11907
    %11909 = vmatmul.bf16.gmra.mxu0 %v3496
    %v11910 = vpop.f32.mrf.mxu0
    %v11911 = vadd.f32 %v11582, %v11910
    %v11912 = vpop.f32.mrf.mxu0
    %v11913 = vadd.f32 %v11584, %v11912
    %11914 = vmatmul.bf16.gmra.mxu0 %v3504
    %v11915 = vpop.f32.mrf.mxu0
    %v11916 = vadd.f32 %v11587, %v11915
    %v11917 = vpop.f32.mrf.mxu0
    %v11918 = vadd.f32 %v11589, %v11917
    %11919 = vmatmul.bf16.gmra.mxu0 %v3512
    %v11920 = vpop.f32.mrf.mxu0
    %v11921 = vadd.f32 %v11592, %v11920
    %v11922 = vpop.f32.mrf.mxu0
    %v11923 = vadd.f32 %v11594, %v11922
    %11924 = vmatmul.bf16.gmra.mxu0 %v3520
    %v11925 = vpop.f32.mrf.mxu0
    %v11926 = vadd.f32 %v11597, %v11925
    %v11927 = vpop.f32.mrf.mxu0
    %v11928 = vadd.f32 %v11599, %v11927
    %11929 = vmatmul.bf16.gmra.mxu0 %v3528
    %v11930 = vpop.f32.mrf.mxu0
    %v11931 = vadd.f32 %v11602, %v11930
    %v11932 = vpop.f32.mrf.mxu0
    %v11933 = vadd.f32 %v11604, %v11932
    %11934 = vmatmul.bf16.gmra.mxu0 %v3536
    %v11935 = vpop.f32.mrf.mxu0
    %v11936 = vadd.f32 %v11607, %v11935
    %v11937 = vpop.f32.mrf.mxu0
    %v11938 = vadd.f32 %v11609, %v11937
    %11939 = vmatmul.bf16.gmra.mxu0 %v3544
    %v11940 = vpop.f32.mrf.mxu0
    %v11941 = vadd.f32 %v11612, %v11940
    %v11942 = vpop.f32.mrf.mxu0
    %v11943 = vadd.f32 %v11614, %v11942
    %11944 = vmatmul.bf16.gmra.mxu0 %v3552
    %v11945 = vpop.f32.mrf.mxu0
    %v11946 = vadd.f32 %v11617, %v11945
    %v11947 = vpop.f32.mrf.mxu0
    %v11948 = vadd.f32 %v11619, %v11947
    %11949 = vmatmul.bf16.gmra.mxu0 %v3560
    %v11950 = vpop.f32.mrf.mxu0
    %v11951 = vadd.f32 %v11622, %v11950
    %v11952 = vpop.f32.mrf.mxu0
    %v11953 = vadd.f32 %v11624, %v11952
    %11954 = vdwg.mxu0
    %11955 = vmatpush.bf16.msra.mxu0 %v10614
    %11956 = vmatpush.bf16.msra.mxu0 %v10613
    %11957 = vmatpush.bf16.msra.mxu0 %v10612
    %11958 = vmatpush.bf16.msra.mxu0 %v10611
    %11959 = vmatpush.bf16.msra.mxu0 %v10610
    %11960 = vmatpush.bf16.msra.mxu0 %v10609
    %11961 = vmatpush.bf16.msra.mxu0 %v10608
    %11962 = vmatpush.bf16.msra.mxu0 %v10607
    %11963 = vmatmul.bf16.gmra.mxu0 %v3057
    %v11964 = vpop.f32.mrf.mxu0
    %v11965 = vadd.f32 %v11636, %v11964
    %v11966 = vpop.f32.mrf.mxu0
    %v11967 = vadd.f32 %v11638, %v11966
    %11968 = vmatmul.bf16.gmra.mxu0 %v3065
    %v11969 = vpop.f32.mrf.mxu0
    %v11970 = vadd.f32 %v11641, %v11969
    %v11971 = vpop.f32.mrf.mxu0
    %v11972 = vadd.f32 %v11643, %v11971
    %11973 = vmatmul.bf16.gmra.mxu0 %v3073
    %v11974 = vpop.f32.mrf.mxu0
    %v11975 = vadd.f32 %v11646, %v11974
    %v11976 = vpop.f32.mrf.mxu0
    %v11977 = vadd.f32 %v11648, %v11976
    %11978 = vmatmul.bf16.gmra.mxu0 %v3081
    %v11979 = vpop.f32.mrf.mxu0
    %v11980 = vadd.f32 %v11651, %v11979
    %v11981 = vpop.f32.mrf.mxu0
    %v11982 = vadd.f32 %v11653, %v11981
    %11983 = vmatmul.bf16.gmra.mxu0 %v3089
    %v11984 = vpop.f32.mrf.mxu0
    %v11985 = vadd.f32 %v11656, %v11984
    %v11986 = vpop.f32.mrf.mxu0
    %v11987 = vadd.f32 %v11658, %v11986
    %11988 = vmatmul.bf16.gmra.mxu0 %v3097
    %v11989 = vpop.f32.mrf.mxu0
    %v11990 = vadd.f32 %v11661, %v11989
    %v11991 = vpop.f32.mrf.mxu0
    %v11992 = vadd.f32 %v11663, %v11991
    %11993 = vmatmul.bf16.gmra.mxu0 %v3105
    %v11994 = vpop.f32.mrf.mxu0
    %v11995 = vadd.f32 %v11666, %v11994
    %v11996 = vpop.f32.mrf.mxu0
    %v11997 = vadd.f32 %v11668, %v11996
    %11998 = vmatmul.bf16.gmra.mxu0 %v3113
    %v11999 = vpop.f32.mrf.mxu0
    %v12000 = vadd.f32 %v11671, %v11999
    %v12001 = vpop.f32.mrf.mxu0
    %v12002 = vadd.f32 %v11673, %v12001
    %12003 = vmatmul.bf16.gmra.mxu0 %v3121
    %v12004 = vpop.f32.mrf.mxu0
    %v12005 = vadd.f32 %v11676, %v12004
    %v12006 = vpop.f32.mrf.mxu0
    %v12007 = vadd.f32 %v11678, %v12006
    %12008 = vmatmul.bf16.gmra.mxu0 %v3129
    %v12009 = vpop.f32.mrf.mxu0
    %v12010 = vadd.f32 %v11681, %v12009
    %v12011 = vpop.f32.mrf.mxu0
    %v12012 = vadd.f32 %v11683, %v12011
    %12013 = vmatmul.bf16.gmra.mxu0 %v3137
    %v12014 = vpop.f32.mrf.mxu0
    %v12015 = vadd.f32 %v11686, %v12014
    %v12016 = vpop.f32.mrf.mxu0
    %v12017 = vadd.f32 %v11688, %v12016
    %12018 = vmatmul.bf16.gmra.mxu0 %v3145
    %v12019 = vpop.f32.mrf.mxu0
    %v12020 = vadd.f32 %v11691, %v12019
    %v12021 = vpop.f32.mrf.mxu0
    %v12022 = vadd.f32 %v11693, %v12021
    %12023 = vmatmul.bf16.gmra.mxu0 %v3153
    %v12024 = vpop.f32.mrf.mxu0
    %v12025 = vadd.f32 %v11696, %v12024
    %v12026 = vpop.f32.mrf.mxu0
    %v12027 = vadd.f32 %v11698, %v12026
    %12028 = vmatmul.bf16.gmra.mxu0 %v3161
    %v12029 = vpop.f32.mrf.mxu0
    %v12030 = vadd.f32 %v11701, %v12029
    %v12031 = vpop.f32.mrf.mxu0
    %v12032 = vadd.f32 %v11703, %v12031
    %12033 = vmatmul.bf16.gmra.mxu0 %v3169
    %v12034 = vpop.f32.mrf.mxu0
    %v12035 = vadd.f32 %v11706, %v12034
    %v12036 = vpop.f32.mrf.mxu0
    %v12037 = vadd.f32 %v11708, %v12036
    %12038 = vmatmul.bf16.gmra.mxu0 %v3177
    %v12039 = vpop.f32.mrf.mxu0
    %v12040 = vadd.f32 %v11711, %v12039
    %v12041 = vpop.f32.mrf.mxu0
    %v12042 = vadd.f32 %v11713, %v12041
    %12043 = vmatmul.bf16.gmra.mxu0 %v3185
    %v12044 = vpop.f32.mrf.mxu0
    %v12045 = vadd.f32 %v11716, %v12044
    %v12046 = vpop.f32.mrf.mxu0
    %v12047 = vadd.f32 %v11718, %v12046
    %12048 = vmatmul.bf16.gmra.mxu0 %v3193
    %v12049 = vpop.f32.mrf.mxu0
    %v12050 = vadd.f32 %v11721, %v12049
    %v12051 = vpop.f32.mrf.mxu0
    %v12052 = vadd.f32 %v11723, %v12051
    %12053 = vmatmul.bf16.gmra.mxu0 %v3201
    %v12054 = vpop.f32.mrf.mxu0
    %v12055 = vadd.f32 %v11726, %v12054
    %v12056 = vpop.f32.mrf.mxu0
    %v12057 = vadd.f32 %v11728, %v12056
    %12058 = vmatmul.bf16.gmra.mxu0 %v3209
    %v12059 = vpop.f32.mrf.mxu0
    %v12060 = vadd.f32 %v11731, %v12059
    %v12061 = vpop.f32.mrf.mxu0
    %v12062 = vadd.f32 %v11733, %v12061
    %12063 = vmatmul.bf16.gmra.mxu0 %v3217
    %v12064 = vpop.f32.mrf.mxu0
    %v12065 = vadd.f32 %v11736, %v12064
    %v12066 = vpop.f32.mrf.mxu0
    %v12067 = vadd.f32 %v11738, %v12066
    %12068 = vmatmul.bf16.gmra.mxu0 %v3225
    %v12069 = vpop.f32.mrf.mxu0
    %v12070 = vadd.f32 %v11741, %v12069
    %v12071 = vpop.f32.mrf.mxu0
    %v12072 = vadd.f32 %v11743, %v12071
    %12073 = vmatmul.bf16.gmra.mxu0 %v3233
    %v12074 = vpop.f32.mrf.mxu0
    %v12075 = vadd.f32 %v11746, %v12074
    %v12076 = vpop.f32.mrf.mxu0
    %v12077 = vadd.f32 %v11748, %v12076
    %12078 = vmatmul.bf16.gmra.mxu0 %v3241
    %v12079 = vpop.f32.mrf.mxu0
    %v12080 = vadd.f32 %v11751, %v12079
    %v12081 = vpop.f32.mrf.mxu0
    %v12082 = vadd.f32 %v11753, %v12081
    %12083 = vmatmul.bf16.gmra.mxu0 %v3249
    %v12084 = vpop.f32.mrf.mxu0
    %v12085 = vadd.f32 %v11756, %v12084
    %v12086 = vpop.f32.mrf.mxu0
    %v12087 = vadd.f32 %v11758, %v12086
    %12088 = vmatmul.bf16.gmra.mxu0 %v3257
    %v12089 = vpop.f32.mrf.mxu0
    %v12090 = vadd.f32 %v11761, %v12089
    %v12091 = vpop.f32.mrf.mxu0
    %v12092 = vadd.f32 %v11763, %v12091
    %12093 = vmatmul.bf16.gmra.mxu0 %v3265
    %v12094 = vpop.f32.mrf.mxu0
    %v12095 = vadd.f32 %v11766, %v12094
    %v12096 = vpop.f32.mrf.mxu0
    %v12097 = vadd.f32 %v11768, %v12096
    %12098 = vmatmul.bf16.gmra.mxu0 %v3273
    %v12099 = vpop.f32.mrf.mxu0
    %v12100 = vadd.f32 %v11771, %v12099
    %v12101 = vpop.f32.mrf.mxu0
    %v12102 = vadd.f32 %v11773, %v12101
    %12103 = vmatmul.bf16.gmra.mxu0 %v3281
    %v12104 = vpop.f32.mrf.mxu0
    %v12105 = vadd.f32 %v11776, %v12104
    %v12106 = vpop.f32.mrf.mxu0
    %v12107 = vadd.f32 %v11778, %v12106
    %12108 = vmatmul.bf16.gmra.mxu0 %v3289
    %v12109 = vpop.f32.mrf.mxu0
    %v12110 = vadd.f32 %v11781, %v12109
    %v12111 = vpop.f32.mrf.mxu0
    %v12112 = vadd.f32 %v11783, %v12111
    %12113 = vmatmul.bf16.gmra.mxu0 %v3297
    %v12114 = vpop.f32.mrf.mxu0
    %v12115 = vadd.f32 %v11786, %v12114
    %v12116 = vpop.f32.mrf.mxu0
    %v12117 = vadd.f32 %v11788, %v12116
    %12118 = vmatmul.bf16.gmra.mxu0 %v3305
    %v12119 = vpop.f32.mrf.mxu0
    %v12120 = vadd.f32 %v11791, %v12119
    %v12121 = vpop.f32.mrf.mxu0
    %v12122 = vadd.f32 %v11793, %v12121
    %12123 = vmatmul.bf16.gmra.mxu0 %v3313
    %v12124 = vpop.f32.mrf.mxu0
    %v12125 = vadd.f32 %v11796, %v12124
    %v12126 = vpop.f32.mrf.mxu0
    %v12127 = vadd.f32 %v11798, %v12126
    %12128 = vmatmul.bf16.gmra.mxu0 %v3321
    %v12129 = vpop.f32.mrf.mxu0
    %v12130 = vadd.f32 %v11801, %v12129
    %v12131 = vpop.f32.mrf.mxu0
    %v12132 = vadd.f32 %v11803, %v12131
    %12133 = vmatmul.bf16.gmra.mxu0 %v3329
    %v12134 = vpop.f32.mrf.mxu0
    %v12135 = vadd.f32 %v11806, %v12134
    %v12136 = vpop.f32.mrf.mxu0
    %v12137 = vadd.f32 %v11808, %v12136
    %12138 = vmatmul.bf16.gmra.mxu0 %v3337
    %v12139 = vpop.f32.mrf.mxu0
    %v12140 = vadd.f32 %v11811, %v12139
    %v12141 = vpop.f32.mrf.mxu0
    %v12142 = vadd.f32 %v11813, %v12141
    %12143 = vmatmul.bf16.gmra.mxu0 %v3345
    %v12144 = vpop.f32.mrf.mxu0
    %v12145 = vadd.f32 %v11816, %v12144
    %v12146 = vpop.f32.mrf.mxu0
    %v12147 = vadd.f32 %v11818, %v12146
    %12148 = vmatmul.bf16.gmra.mxu0 %v3353
    %v12149 = vpop.f32.mrf.mxu0
    %v12150 = vadd.f32 %v11821, %v12149
    %v12151 = vpop.f32.mrf.mxu0
    %v12152 = vadd.f32 %v11823, %v12151
    %12153 = vmatmul.bf16.gmra.mxu0 %v3361
    %v12154 = vpop.f32.mrf.mxu0
    %v12155 = vadd.f32 %v11826, %v12154
    %v12156 = vpop.f32.mrf.mxu0
    %v12157 = vadd.f32 %v11828, %v12156
    %12158 = vmatmul.bf16.gmra.mxu0 %v3369
    %v12159 = vpop.f32.mrf.mxu0
    %v12160 = vadd.f32 %v11831, %v12159
    %v12161 = vpop.f32.mrf.mxu0
    %v12162 = vadd.f32 %v11833, %v12161
    %12163 = vmatmul.bf16.gmra.mxu0 %v3377
    %v12164 = vpop.f32.mrf.mxu0
    %v12165 = vadd.f32 %v11836, %v12164
    %v12166 = vpop.f32.mrf.mxu0
    %v12167 = vadd.f32 %v11838, %v12166
    %12168 = vmatmul.bf16.gmra.mxu0 %v3385
    %v12169 = vpop.f32.mrf.mxu0
    %v12170 = vadd.f32 %v11841, %v12169
    %v12171 = vpop.f32.mrf.mxu0
    %v12172 = vadd.f32 %v11843, %v12171
    %12173 = vmatmul.bf16.gmra.mxu0 %v3393
    %v12174 = vpop.f32.mrf.mxu0
    %v12175 = vadd.f32 %v11846, %v12174
    %v12176 = vpop.f32.mrf.mxu0
    %v12177 = vadd.f32 %v11848, %v12176
    %12178 = vmatmul.bf16.gmra.mxu0 %v3401
    %v12179 = vpop.f32.mrf.mxu0
    %v12180 = vadd.f32 %v11851, %v12179
    %v12181 = vpop.f32.mrf.mxu0
    %v12182 = vadd.f32 %v11853, %v12181
    %12183 = vmatmul.bf16.gmra.mxu0 %v3409
    %v12184 = vpop.f32.mrf.mxu0
    %v12185 = vadd.f32 %v11856, %v12184
    %v12186 = vpop.f32.mrf.mxu0
    %v12187 = vadd.f32 %v11858, %v12186
    %12188 = vmatmul.bf16.gmra.mxu0 %v3417
    %v12189 = vpop.f32.mrf.mxu0
    %v12190 = vadd.f32 %v11861, %v12189
    %v12191 = vpop.f32.mrf.mxu0
    %v12192 = vadd.f32 %v11863, %v12191
    %12193 = vmatmul.bf16.gmra.mxu0 %v3425
    %v12194 = vpop.f32.mrf.mxu0
    %v12195 = vadd.f32 %v11866, %v12194
    %v12196 = vpop.f32.mrf.mxu0
    %v12197 = vadd.f32 %v11868, %v12196
    %12198 = vmatmul.bf16.gmra.mxu0 %v3433
    %v12199 = vpop.f32.mrf.mxu0
    %v12200 = vadd.f32 %v11871, %v12199
    %v12201 = vpop.f32.mrf.mxu0
    %v12202 = vadd.f32 %v11873, %v12201
    %12203 = vmatmul.bf16.gmra.mxu0 %v3441
    %v12204 = vpop.f32.mrf.mxu0
    %v12205 = vadd.f32 %v11876, %v12204
    %v12206 = vpop.f32.mrf.mxu0
    %v12207 = vadd.f32 %v11878, %v12206
    %12208 = vmatmul.bf16.gmra.mxu0 %v3449
    %v12209 = vpop.f32.mrf.mxu0
    %v12210 = vadd.f32 %v11881, %v12209
    %v12211 = vpop.f32.mrf.mxu0
    %v12212 = vadd.f32 %v11883, %v12211
    %12213 = vmatmul.bf16.gmra.mxu0 %v3457
    %v12214 = vpop.f32.mrf.mxu0
    %v12215 = vadd.f32 %v11886, %v12214
    %v12216 = vpop.f32.mrf.mxu0
    %v12217 = vadd.f32 %v11888, %v12216
    %12218 = vmatmul.bf16.gmra.mxu0 %v3465
    %v12219 = vpop.f32.mrf.mxu0
    %v12220 = vadd.f32 %v11891, %v12219
    %v12221 = vpop.f32.mrf.mxu0
    %v12222 = vadd.f32 %v11893, %v12221
    %12223 = vmatmul.bf16.gmra.mxu0 %v3473
    %v12224 = vpop.f32.mrf.mxu0
    %v12225 = vadd.f32 %v11896, %v12224
    %v12226 = vpop.f32.mrf.mxu0
    %v12227 = vadd.f32 %v11898, %v12226
    %12228 = vmatmul.bf16.gmra.mxu0 %v3481
    %v12229 = vpop.f32.mrf.mxu0
    %v12230 = vadd.f32 %v11901, %v12229
    %v12231 = vpop.f32.mrf.mxu0
    %v12232 = vadd.f32 %v11903, %v12231
    %12233 = vmatmul.bf16.gmra.mxu0 %v3489
    %v12234 = vpop.f32.mrf.mxu0
    %v12235 = vadd.f32 %v11906, %v12234
    %v12236 = vpop.f32.mrf.mxu0
    %v12237 = vadd.f32 %v11908, %v12236
    %12238 = vmatmul.bf16.gmra.mxu0 %v3497
    %v12239 = vpop.f32.mrf.mxu0
    %v12240 = vadd.f32 %v11911, %v12239
    %v12241 = vpop.f32.mrf.mxu0
    %v12242 = vadd.f32 %v11913, %v12241
    %12243 = vmatmul.bf16.gmra.mxu0 %v3505
    %v12244 = vpop.f32.mrf.mxu0
    %v12245 = vadd.f32 %v11916, %v12244
    %v12246 = vpop.f32.mrf.mxu0
    %v12247 = vadd.f32 %v11918, %v12246
    %12248 = vmatmul.bf16.gmra.mxu0 %v3513
    %v12249 = vpop.f32.mrf.mxu0
    %v12250 = vadd.f32 %v11921, %v12249
    %v12251 = vpop.f32.mrf.mxu0
    %v12252 = vadd.f32 %v11923, %v12251
    %12253 = vmatmul.bf16.gmra.mxu0 %v3521
    %v12254 = vpop.f32.mrf.mxu0
    %v12255 = vadd.f32 %v11926, %v12254
    %v12256 = vpop.f32.mrf.mxu0
    %v12257 = vadd.f32 %v11928, %v12256
    %12258 = vmatmul.bf16.gmra.mxu0 %v3529
    %v12259 = vpop.f32.mrf.mxu0
    %v12260 = vadd.f32 %v11931, %v12259
    %v12261 = vpop.f32.mrf.mxu0
    %v12262 = vadd.f32 %v11933, %v12261
    %12263 = vmatmul.bf16.gmra.mxu0 %v3537
    %v12264 = vpop.f32.mrf.mxu0
    %v12265 = vadd.f32 %v11936, %v12264
    %v12266 = vpop.f32.mrf.mxu0
    %v12267 = vadd.f32 %v11938, %v12266
    %12268 = vmatmul.bf16.gmra.mxu0 %v3545
    %v12269 = vpop.f32.mrf.mxu0
    %v12270 = vadd.f32 %v11941, %v12269
    %v12271 = vpop.f32.mrf.mxu0
    %v12272 = vadd.f32 %v11943, %v12271
    %12273 = vmatmul.bf16.gmra.mxu0 %v3553
    %v12274 = vpop.f32.mrf.mxu0
    %v12275 = vadd.f32 %v11946, %v12274
    %v12276 = vpop.f32.mrf.mxu0
    %v12277 = vadd.f32 %v11948, %v12276
    %12278 = vmatmul.bf16.gmra.mxu0 %v3561
    %v12279 = vpop.f32.mrf.mxu0
    %v12280 = vadd.f32 %v11951, %v12279
    %v12281 = vpop.f32.mrf.mxu0
    %v12282 = vadd.f32 %v11953, %v12281
    %12283 = vdwg.mxu0
    %12284 = vmatpush.bf16.msra.mxu0 %v10622
    %12285 = vmatpush.bf16.msra.mxu0 %v10621
    %12286 = vmatpush.bf16.msra.mxu0 %v10620
    %12287 = vmatpush.bf16.msra.mxu0 %v10619
    %12288 = vmatpush.bf16.msra.mxu0 %v10618
    %12289 = vmatpush.bf16.msra.mxu0 %v10617
    %12290 = vmatpush.bf16.msra.mxu0 %v10616
    %12291 = vmatpush.bf16.msra.mxu0 %v10615
    %12292 = vmatmul.bf16.gmra.mxu0 %v3058
    %v12293 = vpop.f32.mrf.mxu0
    %v12294 = vadd.f32 %v11965, %v12293
    %v12295 = vpop.f32.mrf.mxu0
    %v12296 = vadd.f32 %v11967, %v12295
    %12297 = vmatmul.bf16.gmra.mxu0 %v3066
    %v12298 = vpop.f32.mrf.mxu0
    %v12299 = vadd.f32 %v11970, %v12298
    %v12300 = vpop.f32.mrf.mxu0
    %v12301 = vadd.f32 %v11972, %v12300
    %12302 = vmatmul.bf16.gmra.mxu0 %v3074
    %v12303 = vpop.f32.mrf.mxu0
    %v12304 = vadd.f32 %v11975, %v12303
    %v12305 = vpop.f32.mrf.mxu0
    %v12306 = vadd.f32 %v11977, %v12305
    %12307 = vmatmul.bf16.gmra.mxu0 %v3082
    %v12308 = vpop.f32.mrf.mxu0
    %v12309 = vadd.f32 %v11980, %v12308
    %v12310 = vpop.f32.mrf.mxu0
    %v12311 = vadd.f32 %v11982, %v12310
    %12312 = vmatmul.bf16.gmra.mxu0 %v3090
    %v12313 = vpop.f32.mrf.mxu0
    %v12314 = vadd.f32 %v11985, %v12313
    %v12315 = vpop.f32.mrf.mxu0
    %v12316 = vadd.f32 %v11987, %v12315
    %12317 = vmatmul.bf16.gmra.mxu0 %v3098
    %v12318 = vpop.f32.mrf.mxu0
    %v12319 = vadd.f32 %v11990, %v12318
    %v12320 = vpop.f32.mrf.mxu0
    %v12321 = vadd.f32 %v11992, %v12320
    %12322 = vmatmul.bf16.gmra.mxu0 %v3106
    %v12323 = vpop.f32.mrf.mxu0
    %v12324 = vadd.f32 %v11995, %v12323
    %v12325 = vpop.f32.mrf.mxu0
    %v12326 = vadd.f32 %v11997, %v12325
    %12327 = vmatmul.bf16.gmra.mxu0 %v3114
    %v12328 = vpop.f32.mrf.mxu0
    %v12329 = vadd.f32 %v12000, %v12328
    %v12330 = vpop.f32.mrf.mxu0
    %v12331 = vadd.f32 %v12002, %v12330
    %12332 = vmatmul.bf16.gmra.mxu0 %v3122
    %v12333 = vpop.f32.mrf.mxu0
    %v12334 = vadd.f32 %v12005, %v12333
    %v12335 = vpop.f32.mrf.mxu0
    %v12336 = vadd.f32 %v12007, %v12335
    %12337 = vmatmul.bf16.gmra.mxu0 %v3130
    %v12338 = vpop.f32.mrf.mxu0
    %v12339 = vadd.f32 %v12010, %v12338
    %v12340 = vpop.f32.mrf.mxu0
    %v12341 = vadd.f32 %v12012, %v12340
    %12342 = vmatmul.bf16.gmra.mxu0 %v3138
    %v12343 = vpop.f32.mrf.mxu0
    %v12344 = vadd.f32 %v12015, %v12343
    %v12345 = vpop.f32.mrf.mxu0
    %v12346 = vadd.f32 %v12017, %v12345
    %12347 = vmatmul.bf16.gmra.mxu0 %v3146
    %v12348 = vpop.f32.mrf.mxu0
    %v12349 = vadd.f32 %v12020, %v12348
    %v12350 = vpop.f32.mrf.mxu0
    %v12351 = vadd.f32 %v12022, %v12350
    %12352 = vmatmul.bf16.gmra.mxu0 %v3154
    %v12353 = vpop.f32.mrf.mxu0
    %v12354 = vadd.f32 %v12025, %v12353
    %v12355 = vpop.f32.mrf.mxu0
    %v12356 = vadd.f32 %v12027, %v12355
    %12357 = vmatmul.bf16.gmra.mxu0 %v3162
    %v12358 = vpop.f32.mrf.mxu0
    %v12359 = vadd.f32 %v12030, %v12358
    %v12360 = vpop.f32.mrf.mxu0
    %v12361 = vadd.f32 %v12032, %v12360
    %12362 = vmatmul.bf16.gmra.mxu0 %v3170
    %v12363 = vpop.f32.mrf.mxu0
    %v12364 = vadd.f32 %v12035, %v12363
    %v12365 = vpop.f32.mrf.mxu0
    %v12366 = vadd.f32 %v12037, %v12365
    %12367 = vmatmul.bf16.gmra.mxu0 %v3178
    %v12368 = vpop.f32.mrf.mxu0
    %v12369 = vadd.f32 %v12040, %v12368
    %v12370 = vpop.f32.mrf.mxu0
    %v12371 = vadd.f32 %v12042, %v12370
    %12372 = vmatmul.bf16.gmra.mxu0 %v3186
    %v12373 = vpop.f32.mrf.mxu0
    %v12374 = vadd.f32 %v12045, %v12373
    %v12375 = vpop.f32.mrf.mxu0
    %v12376 = vadd.f32 %v12047, %v12375
    %12377 = vmatmul.bf16.gmra.mxu0 %v3194
    %v12378 = vpop.f32.mrf.mxu0
    %v12379 = vadd.f32 %v12050, %v12378
    %v12380 = vpop.f32.mrf.mxu0
    %v12381 = vadd.f32 %v12052, %v12380
    %12382 = vmatmul.bf16.gmra.mxu0 %v3202
    %v12383 = vpop.f32.mrf.mxu0
    %v12384 = vadd.f32 %v12055, %v12383
    %v12385 = vpop.f32.mrf.mxu0
    %v12386 = vadd.f32 %v12057, %v12385
    %12387 = vmatmul.bf16.gmra.mxu0 %v3210
    %v12388 = vpop.f32.mrf.mxu0
    %v12389 = vadd.f32 %v12060, %v12388
    %v12390 = vpop.f32.mrf.mxu0
    %v12391 = vadd.f32 %v12062, %v12390
    %12392 = vmatmul.bf16.gmra.mxu0 %v3218
    %v12393 = vpop.f32.mrf.mxu0
    %v12394 = vadd.f32 %v12065, %v12393
    %v12395 = vpop.f32.mrf.mxu0
    %v12396 = vadd.f32 %v12067, %v12395
    %12397 = vmatmul.bf16.gmra.mxu0 %v3226
    %v12398 = vpop.f32.mrf.mxu0
    %v12399 = vadd.f32 %v12070, %v12398
    %v12400 = vpop.f32.mrf.mxu0
    %v12401 = vadd.f32 %v12072, %v12400
    %12402 = vmatmul.bf16.gmra.mxu0 %v3234
    %v12403 = vpop.f32.mrf.mxu0
    %v12404 = vadd.f32 %v12075, %v12403
    %v12405 = vpop.f32.mrf.mxu0
    %v12406 = vadd.f32 %v12077, %v12405
    %12407 = vmatmul.bf16.gmra.mxu0 %v3242
    %v12408 = vpop.f32.mrf.mxu0
    %v12409 = vadd.f32 %v12080, %v12408
    %v12410 = vpop.f32.mrf.mxu0
    %v12411 = vadd.f32 %v12082, %v12410
    %12412 = vmatmul.bf16.gmra.mxu0 %v3250
    %v12413 = vpop.f32.mrf.mxu0
    %v12414 = vadd.f32 %v12085, %v12413
    %v12415 = vpop.f32.mrf.mxu0
    %v12416 = vadd.f32 %v12087, %v12415
    %12417 = vmatmul.bf16.gmra.mxu0 %v3258
    %v12418 = vpop.f32.mrf.mxu0
    %v12419 = vadd.f32 %v12090, %v12418
    %v12420 = vpop.f32.mrf.mxu0
    %v12421 = vadd.f32 %v12092, %v12420
    %12422 = vmatmul.bf16.gmra.mxu0 %v3266
    %v12423 = vpop.f32.mrf.mxu0
    %v12424 = vadd.f32 %v12095, %v12423
    %v12425 = vpop.f32.mrf.mxu0
    %v12426 = vadd.f32 %v12097, %v12425
    %12427 = vmatmul.bf16.gmra.mxu0 %v3274
    %v12428 = vpop.f32.mrf.mxu0
    %v12429 = vadd.f32 %v12100, %v12428
    %v12430 = vpop.f32.mrf.mxu0
    %v12431 = vadd.f32 %v12102, %v12430
    %12432 = vmatmul.bf16.gmra.mxu0 %v3282
    %v12433 = vpop.f32.mrf.mxu0
    %v12434 = vadd.f32 %v12105, %v12433
    %v12435 = vpop.f32.mrf.mxu0
    %v12436 = vadd.f32 %v12107, %v12435
    %12437 = vmatmul.bf16.gmra.mxu0 %v3290
    %v12438 = vpop.f32.mrf.mxu0
    %v12439 = vadd.f32 %v12110, %v12438
    %v12440 = vpop.f32.mrf.mxu0
    %v12441 = vadd.f32 %v12112, %v12440
    %12442 = vmatmul.bf16.gmra.mxu0 %v3298
    %v12443 = vpop.f32.mrf.mxu0
    %v12444 = vadd.f32 %v12115, %v12443
    %v12445 = vpop.f32.mrf.mxu0
    %v12446 = vadd.f32 %v12117, %v12445
    %12447 = vmatmul.bf16.gmra.mxu0 %v3306
    %v12448 = vpop.f32.mrf.mxu0
    %v12449 = vadd.f32 %v12120, %v12448
    %v12450 = vpop.f32.mrf.mxu0
    %v12451 = vadd.f32 %v12122, %v12450
    %12452 = vmatmul.bf16.gmra.mxu0 %v3314
    %v12453 = vpop.f32.mrf.mxu0
    %v12454 = vadd.f32 %v12125, %v12453
    %v12455 = vpop.f32.mrf.mxu0
    %v12456 = vadd.f32 %v12127, %v12455
    %12457 = vmatmul.bf16.gmra.mxu0 %v3322
    %v12458 = vpop.f32.mrf.mxu0
    %v12459 = vadd.f32 %v12130, %v12458
    %v12460 = vpop.f32.mrf.mxu0
    %v12461 = vadd.f32 %v12132, %v12460
    %12462 = vmatmul.bf16.gmra.mxu0 %v3330
    %v12463 = vpop.f32.mrf.mxu0
    %v12464 = vadd.f32 %v12135, %v12463
    %v12465 = vpop.f32.mrf.mxu0
    %v12466 = vadd.f32 %v12137, %v12465
    %12467 = vmatmul.bf16.gmra.mxu0 %v3338
    %v12468 = vpop.f32.mrf.mxu0
    %v12469 = vadd.f32 %v12140, %v12468
    %v12470 = vpop.f32.mrf.mxu0
    %v12471 = vadd.f32 %v12142, %v12470
    %12472 = vmatmul.bf16.gmra.mxu0 %v3346
    %v12473 = vpop.f32.mrf.mxu0
    %v12474 = vadd.f32 %v12145, %v12473
    %v12475 = vpop.f32.mrf.mxu0
    %v12476 = vadd.f32 %v12147, %v12475
    %12477 = vmatmul.bf16.gmra.mxu0 %v3354
    %v12478 = vpop.f32.mrf.mxu0
    %v12479 = vadd.f32 %v12150, %v12478
    %v12480 = vpop.f32.mrf.mxu0
    %v12481 = vadd.f32 %v12152, %v12480
    %12482 = vmatmul.bf16.gmra.mxu0 %v3362
    %v12483 = vpop.f32.mrf.mxu0
    %v12484 = vadd.f32 %v12155, %v12483
    %v12485 = vpop.f32.mrf.mxu0
    %v12486 = vadd.f32 %v12157, %v12485
    %12487 = vmatmul.bf16.gmra.mxu0 %v3370
    %v12488 = vpop.f32.mrf.mxu0
    %v12489 = vadd.f32 %v12160, %v12488
    %v12490 = vpop.f32.mrf.mxu0
    %v12491 = vadd.f32 %v12162, %v12490
    %12492 = vmatmul.bf16.gmra.mxu0 %v3378
    %v12493 = vpop.f32.mrf.mxu0
    %v12494 = vadd.f32 %v12165, %v12493
    %v12495 = vpop.f32.mrf.mxu0
    %v12496 = vadd.f32 %v12167, %v12495
    %12497 = vmatmul.bf16.gmra.mxu0 %v3386
    %v12498 = vpop.f32.mrf.mxu0
    %v12499 = vadd.f32 %v12170, %v12498
    %v12500 = vpop.f32.mrf.mxu0
    %v12501 = vadd.f32 %v12172, %v12500
    %12502 = vmatmul.bf16.gmra.mxu0 %v3394
    %v12503 = vpop.f32.mrf.mxu0
    %v12504 = vadd.f32 %v12175, %v12503
    %v12505 = vpop.f32.mrf.mxu0
    %v12506 = vadd.f32 %v12177, %v12505
    %12507 = vmatmul.bf16.gmra.mxu0 %v3402
    %v12508 = vpop.f32.mrf.mxu0
    %v12509 = vadd.f32 %v12180, %v12508
    %v12510 = vpop.f32.mrf.mxu0
    %v12511 = vadd.f32 %v12182, %v12510
    %12512 = vmatmul.bf16.gmra.mxu0 %v3410
    %v12513 = vpop.f32.mrf.mxu0
    %v12514 = vadd.f32 %v12185, %v12513
    %v12515 = vpop.f32.mrf.mxu0
    %v12516 = vadd.f32 %v12187, %v12515
    %12517 = vmatmul.bf16.gmra.mxu0 %v3418
    %v12518 = vpop.f32.mrf.mxu0
    %v12519 = vadd.f32 %v12190, %v12518
    %v12520 = vpop.f32.mrf.mxu0
    %v12521 = vadd.f32 %v12192, %v12520
    %12522 = vmatmul.bf16.gmra.mxu0 %v3426
    %v12523 = vpop.f32.mrf.mxu0
    %v12524 = vadd.f32 %v12195, %v12523
    %v12525 = vpop.f32.mrf.mxu0
    %v12526 = vadd.f32 %v12197, %v12525
    %12527 = vmatmul.bf16.gmra.mxu0 %v3434
    %v12528 = vpop.f32.mrf.mxu0
    %v12529 = vadd.f32 %v12200, %v12528
    %v12530 = vpop.f32.mrf.mxu0
    %v12531 = vadd.f32 %v12202, %v12530
    %12532 = vmatmul.bf16.gmra.mxu0 %v3442
    %v12533 = vpop.f32.mrf.mxu0
    %v12534 = vadd.f32 %v12205, %v12533
    %v12535 = vpop.f32.mrf.mxu0
    %v12536 = vadd.f32 %v12207, %v12535
    %12537 = vmatmul.bf16.gmra.mxu0 %v3450
    %v12538 = vpop.f32.mrf.mxu0
    %v12539 = vadd.f32 %v12210, %v12538
    %v12540 = vpop.f32.mrf.mxu0
    %v12541 = vadd.f32 %v12212, %v12540
    %12542 = vmatmul.bf16.gmra.mxu0 %v3458
    %v12543 = vpop.f32.mrf.mxu0
    %v12544 = vadd.f32 %v12215, %v12543
    %v12545 = vpop.f32.mrf.mxu0
    %v12546 = vadd.f32 %v12217, %v12545
    %12547 = vmatmul.bf16.gmra.mxu0 %v3466
    %v12548 = vpop.f32.mrf.mxu0
    %v12549 = vadd.f32 %v12220, %v12548
    %v12550 = vpop.f32.mrf.mxu0
    %v12551 = vadd.f32 %v12222, %v12550
    %12552 = vmatmul.bf16.gmra.mxu0 %v3474
    %v12553 = vpop.f32.mrf.mxu0
    %v12554 = vadd.f32 %v12225, %v12553
    %v12555 = vpop.f32.mrf.mxu0
    %v12556 = vadd.f32 %v12227, %v12555
    %12557 = vmatmul.bf16.gmra.mxu0 %v3482
    %v12558 = vpop.f32.mrf.mxu0
    %v12559 = vadd.f32 %v12230, %v12558
    %v12560 = vpop.f32.mrf.mxu0
    %v12561 = vadd.f32 %v12232, %v12560
    %12562 = vmatmul.bf16.gmra.mxu0 %v3490
    %v12563 = vpop.f32.mrf.mxu0
    %v12564 = vadd.f32 %v12235, %v12563
    %v12565 = vpop.f32.mrf.mxu0
    %v12566 = vadd.f32 %v12237, %v12565
    %12567 = vmatmul.bf16.gmra.mxu0 %v3498
    %v12568 = vpop.f32.mrf.mxu0
    %v12569 = vadd.f32 %v12240, %v12568
    %v12570 = vpop.f32.mrf.mxu0
    %v12571 = vadd.f32 %v12242, %v12570
    %12572 = vmatmul.bf16.gmra.mxu0 %v3506
    %v12573 = vpop.f32.mrf.mxu0
    %v12574 = vadd.f32 %v12245, %v12573
    %v12575 = vpop.f32.mrf.mxu0
    %v12576 = vadd.f32 %v12247, %v12575
    %12577 = vmatmul.bf16.gmra.mxu0 %v3514
    %v12578 = vpop.f32.mrf.mxu0
    %v12579 = vadd.f32 %v12250, %v12578
    %v12580 = vpop.f32.mrf.mxu0
    %v12581 = vadd.f32 %v12252, %v12580
    %12582 = vmatmul.bf16.gmra.mxu0 %v3522
    %v12583 = vpop.f32.mrf.mxu0
    %v12584 = vadd.f32 %v12255, %v12583
    %v12585 = vpop.f32.mrf.mxu0
    %v12586 = vadd.f32 %v12257, %v12585
    %12587 = vmatmul.bf16.gmra.mxu0 %v3530
    %v12588 = vpop.f32.mrf.mxu0
    %v12589 = vadd.f32 %v12260, %v12588
    %v12590 = vpop.f32.mrf.mxu0
    %v12591 = vadd.f32 %v12262, %v12590
    %12592 = vmatmul.bf16.gmra.mxu0 %v3538
    %v12593 = vpop.f32.mrf.mxu0
    %v12594 = vadd.f32 %v12265, %v12593
    %v12595 = vpop.f32.mrf.mxu0
    %v12596 = vadd.f32 %v12267, %v12595
    %12597 = vmatmul.bf16.gmra.mxu0 %v3546
    %v12598 = vpop.f32.mrf.mxu0
    %v12599 = vadd.f32 %v12270, %v12598
    %v12600 = vpop.f32.mrf.mxu0
    %v12601 = vadd.f32 %v12272, %v12600
    %12602 = vmatmul.bf16.gmra.mxu0 %v3554
    %v12603 = vpop.f32.mrf.mxu0
    %v12604 = vadd.f32 %v12275, %v12603
    %v12605 = vpop.f32.mrf.mxu0
    %v12606 = vadd.f32 %v12277, %v12605
    %12607 = vmatmul.bf16.gmra.mxu0 %v3562
    %v12608 = vpop.f32.mrf.mxu0
    %v12609 = vadd.f32 %v12280, %v12608
    %v12610 = vpop.f32.mrf.mxu0
    %v12611 = vadd.f32 %v12282, %v12610
    %12612 = vdwg.mxu0
    %12613 = vmatpush.bf16.msra.mxu0 %v10630
    %12614 = vmatpush.bf16.msra.mxu0 %v10629
    %12615 = vmatpush.bf16.msra.mxu0 %v10628
    %12616 = vmatpush.bf16.msra.mxu0 %v10627
    %12617 = vmatpush.bf16.msra.mxu0 %v10626
    %12618 = vmatpush.bf16.msra.mxu0 %v10625
    %12619 = vmatpush.bf16.msra.mxu0 %v10624
    %12620 = vmatpush.bf16.msra.mxu0 %v10623
    %12621 = vmatmul.bf16.gmra.mxu0 %v3059
    %v12622 = vpop.f32.mrf.mxu0
    %v12623 = vadd.f32 %v12294, %v12622
    %v12624 = vpop.f32.mrf.mxu0
    %v12625 = vadd.f32 %v12296, %v12624
    %12626 = vmatmul.bf16.gmra.mxu0 %v3067
    %v12627 = vpop.f32.mrf.mxu0
    %v12628 = vadd.f32 %v12299, %v12627
    %v12629 = vpop.f32.mrf.mxu0
    %v12630 = vadd.f32 %v12301, %v12629
    %12631 = vmatmul.bf16.gmra.mxu0 %v3075
    %v12632 = vpop.f32.mrf.mxu0
    %v12633 = vadd.f32 %v12304, %v12632
    %v12634 = vpop.f32.mrf.mxu0
    %v12635 = vadd.f32 %v12306, %v12634
    %12636 = vmatmul.bf16.gmra.mxu0 %v3083
    %v12637 = vpop.f32.mrf.mxu0
    %v12638 = vadd.f32 %v12309, %v12637
    %v12639 = vpop.f32.mrf.mxu0
    %v12640 = vadd.f32 %v12311, %v12639
    %12641 = vmatmul.bf16.gmra.mxu0 %v3091
    %v12642 = vpop.f32.mrf.mxu0
    %v12643 = vadd.f32 %v12314, %v12642
    %v12644 = vpop.f32.mrf.mxu0
    %v12645 = vadd.f32 %v12316, %v12644
    %12646 = vmatmul.bf16.gmra.mxu0 %v3099
    %v12647 = vpop.f32.mrf.mxu0
    %v12648 = vadd.f32 %v12319, %v12647
    %v12649 = vpop.f32.mrf.mxu0
    %v12650 = vadd.f32 %v12321, %v12649
    %12651 = vmatmul.bf16.gmra.mxu0 %v3107
    %v12652 = vpop.f32.mrf.mxu0
    %v12653 = vadd.f32 %v12324, %v12652
    %v12654 = vpop.f32.mrf.mxu0
    %v12655 = vadd.f32 %v12326, %v12654
    %12656 = vmatmul.bf16.gmra.mxu0 %v3115
    %v12657 = vpop.f32.mrf.mxu0
    %v12658 = vadd.f32 %v12329, %v12657
    %v12659 = vpop.f32.mrf.mxu0
    %v12660 = vadd.f32 %v12331, %v12659
    %12661 = vmatmul.bf16.gmra.mxu0 %v3123
    %v12662 = vpop.f32.mrf.mxu0
    %v12663 = vadd.f32 %v12334, %v12662
    %v12664 = vpop.f32.mrf.mxu0
    %v12665 = vadd.f32 %v12336, %v12664
    %12666 = vmatmul.bf16.gmra.mxu0 %v3131
    %v12667 = vpop.f32.mrf.mxu0
    %v12668 = vadd.f32 %v12339, %v12667
    %v12669 = vpop.f32.mrf.mxu0
    %v12670 = vadd.f32 %v12341, %v12669
    %12671 = vmatmul.bf16.gmra.mxu0 %v3139
    %v12672 = vpop.f32.mrf.mxu0
    %v12673 = vadd.f32 %v12344, %v12672
    %v12674 = vpop.f32.mrf.mxu0
    %v12675 = vadd.f32 %v12346, %v12674
    %12676 = vmatmul.bf16.gmra.mxu0 %v3147
    %v12677 = vpop.f32.mrf.mxu0
    %v12678 = vadd.f32 %v12349, %v12677
    %v12679 = vpop.f32.mrf.mxu0
    %v12680 = vadd.f32 %v12351, %v12679
    %12681 = vmatmul.bf16.gmra.mxu0 %v3155
    %v12682 = vpop.f32.mrf.mxu0
    %v12683 = vadd.f32 %v12354, %v12682
    %v12684 = vpop.f32.mrf.mxu0
    %v12685 = vadd.f32 %v12356, %v12684
    %12686 = vmatmul.bf16.gmra.mxu0 %v3163
    %v12687 = vpop.f32.mrf.mxu0
    %v12688 = vadd.f32 %v12359, %v12687
    %v12689 = vpop.f32.mrf.mxu0
    %v12690 = vadd.f32 %v12361, %v12689
    %12691 = vmatmul.bf16.gmra.mxu0 %v3171
    %v12692 = vpop.f32.mrf.mxu0
    %v12693 = vadd.f32 %v12364, %v12692
    %v12694 = vpop.f32.mrf.mxu0
    %v12695 = vadd.f32 %v12366, %v12694
    %12696 = vmatmul.bf16.gmra.mxu0 %v3179
    %v12697 = vpop.f32.mrf.mxu0
    %v12698 = vadd.f32 %v12369, %v12697
    %v12699 = vpop.f32.mrf.mxu0
    %v12700 = vadd.f32 %v12371, %v12699
    %12701 = vmatmul.bf16.gmra.mxu0 %v3187
    %v12702 = vpop.f32.mrf.mxu0
    %v12703 = vadd.f32 %v12374, %v12702
    %v12704 = vpop.f32.mrf.mxu0
    %v12705 = vadd.f32 %v12376, %v12704
    %12706 = vmatmul.bf16.gmra.mxu0 %v3195
    %v12707 = vpop.f32.mrf.mxu0
    %v12708 = vadd.f32 %v12379, %v12707
    %v12709 = vpop.f32.mrf.mxu0
    %v12710 = vadd.f32 %v12381, %v12709
    %12711 = vmatmul.bf16.gmra.mxu0 %v3203
    %v12712 = vpop.f32.mrf.mxu0
    %v12713 = vadd.f32 %v12384, %v12712
    %v12714 = vpop.f32.mrf.mxu0
    %v12715 = vadd.f32 %v12386, %v12714
    %12716 = vmatmul.bf16.gmra.mxu0 %v3211
    %v12717 = vpop.f32.mrf.mxu0
    %v12718 = vadd.f32 %v12389, %v12717
    %v12719 = vpop.f32.mrf.mxu0
    %v12720 = vadd.f32 %v12391, %v12719
    %12721 = vmatmul.bf16.gmra.mxu0 %v3219
    %v12722 = vpop.f32.mrf.mxu0
    %v12723 = vadd.f32 %v12394, %v12722
    %v12724 = vpop.f32.mrf.mxu0
    %v12725 = vadd.f32 %v12396, %v12724
    %12726 = vmatmul.bf16.gmra.mxu0 %v3227
    %v12727 = vpop.f32.mrf.mxu0
    %v12728 = vadd.f32 %v12399, %v12727
    %v12729 = vpop.f32.mrf.mxu0
    %v12730 = vadd.f32 %v12401, %v12729
    %12731 = vmatmul.bf16.gmra.mxu0 %v3235
    %v12732 = vpop.f32.mrf.mxu0
    %v12733 = vadd.f32 %v12404, %v12732
    %v12734 = vpop.f32.mrf.mxu0
    %v12735 = vadd.f32 %v12406, %v12734
    %12736 = vmatmul.bf16.gmra.mxu0 %v3243
    %v12737 = vpop.f32.mrf.mxu0
    %v12738 = vadd.f32 %v12409, %v12737
    %v12739 = vpop.f32.mrf.mxu0
    %v12740 = vadd.f32 %v12411, %v12739
    %12741 = vmatmul.bf16.gmra.mxu0 %v3251
    %v12742 = vpop.f32.mrf.mxu0
    %v12743 = vadd.f32 %v12414, %v12742
    %v12744 = vpop.f32.mrf.mxu0
    %v12745 = vadd.f32 %v12416, %v12744
    %12746 = vmatmul.bf16.gmra.mxu0 %v3259
    %v12747 = vpop.f32.mrf.mxu0
    %v12748 = vadd.f32 %v12419, %v12747
    %v12749 = vpop.f32.mrf.mxu0
    %v12750 = vadd.f32 %v12421, %v12749
    %12751 = vmatmul.bf16.gmra.mxu0 %v3267
    %v12752 = vpop.f32.mrf.mxu0
    %v12753 = vadd.f32 %v12424, %v12752
    %v12754 = vpop.f32.mrf.mxu0
    %v12755 = vadd.f32 %v12426, %v12754
    %12756 = vmatmul.bf16.gmra.mxu0 %v3275
    %v12757 = vpop.f32.mrf.mxu0
    %v12758 = vadd.f32 %v12429, %v12757
    %v12759 = vpop.f32.mrf.mxu0
    %v12760 = vadd.f32 %v12431, %v12759
    %12761 = vmatmul.bf16.gmra.mxu0 %v3283
    %v12762 = vpop.f32.mrf.mxu0
    %v12763 = vadd.f32 %v12434, %v12762
    %v12764 = vpop.f32.mrf.mxu0
    %v12765 = vadd.f32 %v12436, %v12764
    %12766 = vmatmul.bf16.gmra.mxu0 %v3291
    %v12767 = vpop.f32.mrf.mxu0
    %v12768 = vadd.f32 %v12439, %v12767
    %v12769 = vpop.f32.mrf.mxu0
    %v12770 = vadd.f32 %v12441, %v12769
    %12771 = vmatmul.bf16.gmra.mxu0 %v3299
    %v12772 = vpop.f32.mrf.mxu0
    %v12773 = vadd.f32 %v12444, %v12772
    %v12774 = vpop.f32.mrf.mxu0
    %v12775 = vadd.f32 %v12446, %v12774
    %12776 = vmatmul.bf16.gmra.mxu0 %v3307
    %v12777 = vpop.f32.mrf.mxu0
    %v12778 = vadd.f32 %v12449, %v12777
    %v12779 = vpop.f32.mrf.mxu0
    %v12780 = vadd.f32 %v12451, %v12779
    %12781 = vmatmul.bf16.gmra.mxu0 %v3315
    %v12782 = vpop.f32.mrf.mxu0
    %v12783 = vadd.f32 %v12454, %v12782
    %v12784 = vpop.f32.mrf.mxu0
    %v12785 = vadd.f32 %v12456, %v12784
    %12786 = vmatmul.bf16.gmra.mxu0 %v3323
    %v12787 = vpop.f32.mrf.mxu0
    %v12788 = vadd.f32 %v12459, %v12787
    %v12789 = vpop.f32.mrf.mxu0
    %v12790 = vadd.f32 %v12461, %v12789
    %12791 = vmatmul.bf16.gmra.mxu0 %v3331
    %v12792 = vpop.f32.mrf.mxu0
    %v12793 = vadd.f32 %v12464, %v12792
    %v12794 = vpop.f32.mrf.mxu0
    %v12795 = vadd.f32 %v12466, %v12794
    %12796 = vmatmul.bf16.gmra.mxu0 %v3339
    %v12797 = vpop.f32.mrf.mxu0
    %v12798 = vadd.f32 %v12469, %v12797
    %v12799 = vpop.f32.mrf.mxu0
    %v12800 = vadd.f32 %v12471, %v12799
    %12801 = vmatmul.bf16.gmra.mxu0 %v3347
    %v12802 = vpop.f32.mrf.mxu0
    %v12803 = vadd.f32 %v12474, %v12802
    %v12804 = vpop.f32.mrf.mxu0
    %v12805 = vadd.f32 %v12476, %v12804
    %12806 = vmatmul.bf16.gmra.mxu0 %v3355
    %v12807 = vpop.f32.mrf.mxu0
    %v12808 = vadd.f32 %v12479, %v12807
    %v12809 = vpop.f32.mrf.mxu0
    %v12810 = vadd.f32 %v12481, %v12809
    %12811 = vmatmul.bf16.gmra.mxu0 %v3363
    %v12812 = vpop.f32.mrf.mxu0
    %v12813 = vadd.f32 %v12484, %v12812
    %v12814 = vpop.f32.mrf.mxu0
    %v12815 = vadd.f32 %v12486, %v12814
    %12816 = vmatmul.bf16.gmra.mxu0 %v3371
    %v12817 = vpop.f32.mrf.mxu0
    %v12818 = vadd.f32 %v12489, %v12817
    %v12819 = vpop.f32.mrf.mxu0
    %v12820 = vadd.f32 %v12491, %v12819
    %12821 = vmatmul.bf16.gmra.mxu0 %v3379
    %v12822 = vpop.f32.mrf.mxu0
    %v12823 = vadd.f32 %v12494, %v12822
    %v12824 = vpop.f32.mrf.mxu0
    %v12825 = vadd.f32 %v12496, %v12824
    %12826 = vmatmul.bf16.gmra.mxu0 %v3387
    %v12827 = vpop.f32.mrf.mxu0
    %v12828 = vadd.f32 %v12499, %v12827
    %v12829 = vpop.f32.mrf.mxu0
    %v12830 = vadd.f32 %v12501, %v12829
    %12831 = vmatmul.bf16.gmra.mxu0 %v3395
    %v12832 = vpop.f32.mrf.mxu0
    %v12833 = vadd.f32 %v12504, %v12832
    %v12834 = vpop.f32.mrf.mxu0
    %v12835 = vadd.f32 %v12506, %v12834
    %12836 = vmatmul.bf16.gmra.mxu0 %v3403
    %v12837 = vpop.f32.mrf.mxu0
    %v12838 = vadd.f32 %v12509, %v12837
    %v12839 = vpop.f32.mrf.mxu0
    %v12840 = vadd.f32 %v12511, %v12839
    %12841 = vmatmul.bf16.gmra.mxu0 %v3411
    %v12842 = vpop.f32.mrf.mxu0
    %v12843 = vadd.f32 %v12514, %v12842
    %v12844 = vpop.f32.mrf.mxu0
    %v12845 = vadd.f32 %v12516, %v12844
    %12846 = vmatmul.bf16.gmra.mxu0 %v3419
    %v12847 = vpop.f32.mrf.mxu0
    %v12848 = vadd.f32 %v12519, %v12847
    %v12849 = vpop.f32.mrf.mxu0
    %v12850 = vadd.f32 %v12521, %v12849
    %12851 = vmatmul.bf16.gmra.mxu0 %v3427
    %v12852 = vpop.f32.mrf.mxu0
    %v12853 = vadd.f32 %v12524, %v12852
    %v12854 = vpop.f32.mrf.mxu0
    %v12855 = vadd.f32 %v12526, %v12854
    %12856 = vmatmul.bf16.gmra.mxu0 %v3435
    %v12857 = vpop.f32.mrf.mxu0
    %v12858 = vadd.f32 %v12529, %v12857
    %v12859 = vpop.f32.mrf.mxu0
    %v12860 = vadd.f32 %v12531, %v12859
    %12861 = vmatmul.bf16.gmra.mxu0 %v3443
    %v12862 = vpop.f32.mrf.mxu0
    %v12863 = vadd.f32 %v12534, %v12862
    %v12864 = vpop.f32.mrf.mxu0
    %v12865 = vadd.f32 %v12536, %v12864
    %12866 = vmatmul.bf16.gmra.mxu0 %v3451
    %v12867 = vpop.f32.mrf.mxu0
    %v12868 = vadd.f32 %v12539, %v12867
    %v12869 = vpop.f32.mrf.mxu0
    %v12870 = vadd.f32 %v12541, %v12869
    %12871 = vmatmul.bf16.gmra.mxu0 %v3459
    %v12872 = vpop.f32.mrf.mxu0
    %v12873 = vadd.f32 %v12544, %v12872
    %v12874 = vpop.f32.mrf.mxu0
    %v12875 = vadd.f32 %v12546, %v12874
    %12876 = vmatmul.bf16.gmra.mxu0 %v3467
    %v12877 = vpop.f32.mrf.mxu0
    %v12878 = vadd.f32 %v12549, %v12877
    %v12879 = vpop.f32.mrf.mxu0
    %v12880 = vadd.f32 %v12551, %v12879
    %12881 = vmatmul.bf16.gmra.mxu0 %v3475
    %v12882 = vpop.f32.mrf.mxu0
    %v12883 = vadd.f32 %v12554, %v12882
    %v12884 = vpop.f32.mrf.mxu0
    %v12885 = vadd.f32 %v12556, %v12884
    %12886 = vmatmul.bf16.gmra.mxu0 %v3483
    %v12887 = vpop.f32.mrf.mxu0
    %v12888 = vadd.f32 %v12559, %v12887
    %v12889 = vpop.f32.mrf.mxu0
    %v12890 = vadd.f32 %v12561, %v12889
    %12891 = vmatmul.bf16.gmra.mxu0 %v3491
    %v12892 = vpop.f32.mrf.mxu0
    %v12893 = vadd.f32 %v12564, %v12892
    %v12894 = vpop.f32.mrf.mxu0
    %v12895 = vadd.f32 %v12566, %v12894
    %12896 = vmatmul.bf16.gmra.mxu0 %v3499
    %v12897 = vpop.f32.mrf.mxu0
    %v12898 = vadd.f32 %v12569, %v12897
    %v12899 = vpop.f32.mrf.mxu0
    %v12900 = vadd.f32 %v12571, %v12899
    %12901 = vmatmul.bf16.gmra.mxu0 %v3507
    %v12902 = vpop.f32.mrf.mxu0
    %v12903 = vadd.f32 %v12574, %v12902
    %v12904 = vpop.f32.mrf.mxu0
    %v12905 = vadd.f32 %v12576, %v12904
    %12906 = vmatmul.bf16.gmra.mxu0 %v3515
    %v12907 = vpop.f32.mrf.mxu0
    %v12908 = vadd.f32 %v12579, %v12907
    %v12909 = vpop.f32.mrf.mxu0
    %v12910 = vadd.f32 %v12581, %v12909
    %12911 = vmatmul.bf16.gmra.mxu0 %v3523
    %v12912 = vpop.f32.mrf.mxu0
    %v12913 = vadd.f32 %v12584, %v12912
    %v12914 = vpop.f32.mrf.mxu0
    %v12915 = vadd.f32 %v12586, %v12914
    %12916 = vmatmul.bf16.gmra.mxu0 %v3531
    %v12917 = vpop.f32.mrf.mxu0
    %v12918 = vadd.f32 %v12589, %v12917
    %v12919 = vpop.f32.mrf.mxu0
    %v12920 = vadd.f32 %v12591, %v12919
    %12921 = vmatmul.bf16.gmra.mxu0 %v3539
    %v12922 = vpop.f32.mrf.mxu0
    %v12923 = vadd.f32 %v12594, %v12922
    %v12924 = vpop.f32.mrf.mxu0
    %v12925 = vadd.f32 %v12596, %v12924
    %12926 = vmatmul.bf16.gmra.mxu0 %v3547
    %v12927 = vpop.f32.mrf.mxu0
    %v12928 = vadd.f32 %v12599, %v12927
    %v12929 = vpop.f32.mrf.mxu0
    %v12930 = vadd.f32 %v12601, %v12929
    %12931 = vmatmul.bf16.gmra.mxu0 %v3555
    %v12932 = vpop.f32.mrf.mxu0
    %v12933 = vadd.f32 %v12604, %v12932
    %v12934 = vpop.f32.mrf.mxu0
    %v12935 = vadd.f32 %v12606, %v12934
    %12936 = vmatmul.bf16.gmra.mxu0 %v3563
    %v12937 = vpop.f32.mrf.mxu0
    %v12938 = vadd.f32 %v12609, %v12937
    %v12939 = vpop.f32.mrf.mxu0
    %v12940 = vadd.f32 %v12611, %v12939
    %12941 = vdwg.mxu0
    %12942 = vmatpush.bf16.msra.mxu0 %v10638
    %12943 = vmatpush.bf16.msra.mxu0 %v10637
    %12944 = vmatpush.bf16.msra.mxu0 %v10636
    %12945 = vmatpush.bf16.msra.mxu0 %v10635
    %12946 = vmatpush.bf16.msra.mxu0 %v10634
    %12947 = vmatpush.bf16.msra.mxu0 %v10633
    %12948 = vmatpush.bf16.msra.mxu0 %v10632
    %12949 = vmatpush.bf16.msra.mxu0 %v10631
    %12950 = vmatmul.bf16.gmra.mxu0 %v3060
    %v12951 = vpop.f32.mrf.mxu0
    %v12952 = vadd.f32 %v12623, %v12951
    %v12953 = vpop.f32.mrf.mxu0
    %v12954 = vadd.f32 %v12625, %v12953
    %12955 = vmatmul.bf16.gmra.mxu0 %v3068
    %v12956 = vpop.f32.mrf.mxu0
    %v12957 = vadd.f32 %v12628, %v12956
    %v12958 = vpop.f32.mrf.mxu0
    %v12959 = vadd.f32 %v12630, %v12958
    %12960 = vmatmul.bf16.gmra.mxu0 %v3076
    %v12961 = vpop.f32.mrf.mxu0
    %v12962 = vadd.f32 %v12633, %v12961
    %v12963 = vpop.f32.mrf.mxu0
    %v12964 = vadd.f32 %v12635, %v12963
    %12965 = vmatmul.bf16.gmra.mxu0 %v3084
    %v12966 = vpop.f32.mrf.mxu0
    %v12967 = vadd.f32 %v12638, %v12966
    %v12968 = vpop.f32.mrf.mxu0
    %v12969 = vadd.f32 %v12640, %v12968
    %12970 = vmatmul.bf16.gmra.mxu0 %v3092
    %v12971 = vpop.f32.mrf.mxu0
    %v12972 = vadd.f32 %v12643, %v12971
    %v12973 = vpop.f32.mrf.mxu0
    %v12974 = vadd.f32 %v12645, %v12973
    %12975 = vmatmul.bf16.gmra.mxu0 %v3100
    %v12976 = vpop.f32.mrf.mxu0
    %v12977 = vadd.f32 %v12648, %v12976
    %v12978 = vpop.f32.mrf.mxu0
    %v12979 = vadd.f32 %v12650, %v12978
    %12980 = vmatmul.bf16.gmra.mxu0 %v3108
    %v12981 = vpop.f32.mrf.mxu0
    %v12982 = vadd.f32 %v12653, %v12981
    %v12983 = vpop.f32.mrf.mxu0
    %v12984 = vadd.f32 %v12655, %v12983
    %12985 = vmatmul.bf16.gmra.mxu0 %v3116
    %v12986 = vpop.f32.mrf.mxu0
    %v12987 = vadd.f32 %v12658, %v12986
    %v12988 = vpop.f32.mrf.mxu0
    %v12989 = vadd.f32 %v12660, %v12988
    %12990 = vmatmul.bf16.gmra.mxu0 %v3124
    %v12991 = vpop.f32.mrf.mxu0
    %v12992 = vadd.f32 %v12663, %v12991
    %v12993 = vpop.f32.mrf.mxu0
    %v12994 = vadd.f32 %v12665, %v12993
    %12995 = vmatmul.bf16.gmra.mxu0 %v3132
    %v12996 = vpop.f32.mrf.mxu0
    %v12997 = vadd.f32 %v12668, %v12996
    %v12998 = vpop.f32.mrf.mxu0
    %v12999 = vadd.f32 %v12670, %v12998
    %13000 = vmatmul.bf16.gmra.mxu0 %v3140
    %v13001 = vpop.f32.mrf.mxu0
    %v13002 = vadd.f32 %v12673, %v13001
    %v13003 = vpop.f32.mrf.mxu0
    %v13004 = vadd.f32 %v12675, %v13003
    %13005 = vmatmul.bf16.gmra.mxu0 %v3148
    %v13006 = vpop.f32.mrf.mxu0
    %v13007 = vadd.f32 %v12678, %v13006
    %v13008 = vpop.f32.mrf.mxu0
    %v13009 = vadd.f32 %v12680, %v13008
    %13010 = vmatmul.bf16.gmra.mxu0 %v3156
    %v13011 = vpop.f32.mrf.mxu0
    %v13012 = vadd.f32 %v12683, %v13011
    %v13013 = vpop.f32.mrf.mxu0
    %v13014 = vadd.f32 %v12685, %v13013
    %13015 = vmatmul.bf16.gmra.mxu0 %v3164
    %v13016 = vpop.f32.mrf.mxu0
    %v13017 = vadd.f32 %v12688, %v13016
    %v13018 = vpop.f32.mrf.mxu0
    %v13019 = vadd.f32 %v12690, %v13018
    %13020 = vmatmul.bf16.gmra.mxu0 %v3172
    %v13021 = vpop.f32.mrf.mxu0
    %v13022 = vadd.f32 %v12693, %v13021
    %v13023 = vpop.f32.mrf.mxu0
    %v13024 = vadd.f32 %v12695, %v13023
    %13025 = vmatmul.bf16.gmra.mxu0 %v3180
    %v13026 = vpop.f32.mrf.mxu0
    %v13027 = vadd.f32 %v12698, %v13026
    %v13028 = vpop.f32.mrf.mxu0
    %v13029 = vadd.f32 %v12700, %v13028
    %13030 = vmatmul.bf16.gmra.mxu0 %v3188
    %v13031 = vpop.f32.mrf.mxu0
    %v13032 = vadd.f32 %v12703, %v13031
    %v13033 = vpop.f32.mrf.mxu0
    %v13034 = vadd.f32 %v12705, %v13033
    %13035 = vmatmul.bf16.gmra.mxu0 %v3196
    %v13036 = vpop.f32.mrf.mxu0
    %v13037 = vadd.f32 %v12708, %v13036
    %v13038 = vpop.f32.mrf.mxu0
    %v13039 = vadd.f32 %v12710, %v13038
    %13040 = vmatmul.bf16.gmra.mxu0 %v3204
    %v13041 = vpop.f32.mrf.mxu0
    %v13042 = vadd.f32 %v12713, %v13041
    %v13043 = vpop.f32.mrf.mxu0
    %v13044 = vadd.f32 %v12715, %v13043
    %13045 = vmatmul.bf16.gmra.mxu0 %v3212
    %v13046 = vpop.f32.mrf.mxu0
    %v13047 = vadd.f32 %v12718, %v13046
    %v13048 = vpop.f32.mrf.mxu0
    %v13049 = vadd.f32 %v12720, %v13048
    %13050 = vmatmul.bf16.gmra.mxu0 %v3220
    %v13051 = vpop.f32.mrf.mxu0
    %v13052 = vadd.f32 %v12723, %v13051
    %v13053 = vpop.f32.mrf.mxu0
    %v13054 = vadd.f32 %v12725, %v13053
    %13055 = vmatmul.bf16.gmra.mxu0 %v3228
    %v13056 = vpop.f32.mrf.mxu0
    %v13057 = vadd.f32 %v12728, %v13056
    %v13058 = vpop.f32.mrf.mxu0
    %v13059 = vadd.f32 %v12730, %v13058
    %13060 = vmatmul.bf16.gmra.mxu0 %v3236
    %v13061 = vpop.f32.mrf.mxu0
    %v13062 = vadd.f32 %v12733, %v13061
    %v13063 = vpop.f32.mrf.mxu0
    %v13064 = vadd.f32 %v12735, %v13063
    %13065 = vmatmul.bf16.gmra.mxu0 %v3244
    %v13066 = vpop.f32.mrf.mxu0
    %v13067 = vadd.f32 %v12738, %v13066
    %v13068 = vpop.f32.mrf.mxu0
    %v13069 = vadd.f32 %v12740, %v13068
    %13070 = vmatmul.bf16.gmra.mxu0 %v3252
    %v13071 = vpop.f32.mrf.mxu0
    %v13072 = vadd.f32 %v12743, %v13071
    %v13073 = vpop.f32.mrf.mxu0
    %v13074 = vadd.f32 %v12745, %v13073
    %13075 = vmatmul.bf16.gmra.mxu0 %v3260
    %v13076 = vpop.f32.mrf.mxu0
    %v13077 = vadd.f32 %v12748, %v13076
    %v13078 = vpop.f32.mrf.mxu0
    %v13079 = vadd.f32 %v12750, %v13078
    %13080 = vmatmul.bf16.gmra.mxu0 %v3268
    %v13081 = vpop.f32.mrf.mxu0
    %v13082 = vadd.f32 %v12753, %v13081
    %v13083 = vpop.f32.mrf.mxu0
    %v13084 = vadd.f32 %v12755, %v13083
    %13085 = vmatmul.bf16.gmra.mxu0 %v3276
    %v13086 = vpop.f32.mrf.mxu0
    %v13087 = vadd.f32 %v12758, %v13086
    %v13088 = vpop.f32.mrf.mxu0
    %v13089 = vadd.f32 %v12760, %v13088
    %13090 = vmatmul.bf16.gmra.mxu0 %v3284
    %v13091 = vpop.f32.mrf.mxu0
    %v13092 = vadd.f32 %v12763, %v13091
    %v13093 = vpop.f32.mrf.mxu0
    %v13094 = vadd.f32 %v12765, %v13093
    %13095 = vmatmul.bf16.gmra.mxu0 %v3292
    %v13096 = vpop.f32.mrf.mxu0
    %v13097 = vadd.f32 %v12768, %v13096
    %v13098 = vpop.f32.mrf.mxu0
    %v13099 = vadd.f32 %v12770, %v13098
    %13100 = vmatmul.bf16.gmra.mxu0 %v3300
    %v13101 = vpop.f32.mrf.mxu0
    %v13102 = vadd.f32 %v12773, %v13101
    %v13103 = vpop.f32.mrf.mxu0
    %v13104 = vadd.f32 %v12775, %v13103
    %13105 = vmatmul.bf16.gmra.mxu0 %v3308
    %v13106 = vpop.f32.mrf.mxu0
    %v13107 = vadd.f32 %v12778, %v13106
    %v13108 = vpop.f32.mrf.mxu0
    %v13109 = vadd.f32 %v12780, %v13108
    %13110 = vmatmul.bf16.gmra.mxu0 %v3316
    %v13111 = vpop.f32.mrf.mxu0
    %v13112 = vadd.f32 %v12783, %v13111
    %v13113 = vpop.f32.mrf.mxu0
    %v13114 = vadd.f32 %v12785, %v13113
    %13115 = vmatmul.bf16.gmra.mxu0 %v3324
    %v13116 = vpop.f32.mrf.mxu0
    %v13117 = vadd.f32 %v12788, %v13116
    %v13118 = vpop.f32.mrf.mxu0
    %v13119 = vadd.f32 %v12790, %v13118
    %13120 = vmatmul.bf16.gmra.mxu0 %v3332
    %v13121 = vpop.f32.mrf.mxu0
    %v13122 = vadd.f32 %v12793, %v13121
    %v13123 = vpop.f32.mrf.mxu0
    %v13124 = vadd.f32 %v12795, %v13123
    %13125 = vmatmul.bf16.gmra.mxu0 %v3340
    %v13126 = vpop.f32.mrf.mxu0
    %v13127 = vadd.f32 %v12798, %v13126
    %v13128 = vpop.f32.mrf.mxu0
    %v13129 = vadd.f32 %v12800, %v13128
    %13130 = vmatmul.bf16.gmra.mxu0 %v3348
    %v13131 = vpop.f32.mrf.mxu0
    %v13132 = vadd.f32 %v12803, %v13131
    %v13133 = vpop.f32.mrf.mxu0
    %v13134 = vadd.f32 %v12805, %v13133
    %13135 = vmatmul.bf16.gmra.mxu0 %v3356
    %v13136 = vpop.f32.mrf.mxu0
    %v13137 = vadd.f32 %v12808, %v13136
    %v13138 = vpop.f32.mrf.mxu0
    %v13139 = vadd.f32 %v12810, %v13138
    %13140 = vmatmul.bf16.gmra.mxu0 %v3364
    %v13141 = vpop.f32.mrf.mxu0
    %v13142 = vadd.f32 %v12813, %v13141
    %v13143 = vpop.f32.mrf.mxu0
    %v13144 = vadd.f32 %v12815, %v13143
    %13145 = vmatmul.bf16.gmra.mxu0 %v3372
    %v13146 = vpop.f32.mrf.mxu0
    %v13147 = vadd.f32 %v12818, %v13146
    %v13148 = vpop.f32.mrf.mxu0
    %v13149 = vadd.f32 %v12820, %v13148
    %13150 = vmatmul.bf16.gmra.mxu0 %v3380
    %v13151 = vpop.f32.mrf.mxu0
    %v13152 = vadd.f32 %v12823, %v13151
    %v13153 = vpop.f32.mrf.mxu0
    %v13154 = vadd.f32 %v12825, %v13153
    %13155 = vmatmul.bf16.gmra.mxu0 %v3388
    %v13156 = vpop.f32.mrf.mxu0
    %v13157 = vadd.f32 %v12828, %v13156
    %v13158 = vpop.f32.mrf.mxu0
    %v13159 = vadd.f32 %v12830, %v13158
    %13160 = vmatmul.bf16.gmra.mxu0 %v3396
    %v13161 = vpop.f32.mrf.mxu0
    %v13162 = vadd.f32 %v12833, %v13161
    %v13163 = vpop.f32.mrf.mxu0
    %v13164 = vadd.f32 %v12835, %v13163
    %13165 = vmatmul.bf16.gmra.mxu0 %v3404
    %v13166 = vpop.f32.mrf.mxu0
    %v13167 = vadd.f32 %v12838, %v13166
    %v13168 = vpop.f32.mrf.mxu0
    %v13169 = vadd.f32 %v12840, %v13168
    %13170 = vmatmul.bf16.gmra.mxu0 %v3412
    %v13171 = vpop.f32.mrf.mxu0
    %v13172 = vadd.f32 %v12843, %v13171
    %v13173 = vpop.f32.mrf.mxu0
    %v13174 = vadd.f32 %v12845, %v13173
    %13175 = vmatmul.bf16.gmra.mxu0 %v3420
    %v13176 = vpop.f32.mrf.mxu0
    %v13177 = vadd.f32 %v12848, %v13176
    %v13178 = vpop.f32.mrf.mxu0
    %v13179 = vadd.f32 %v12850, %v13178
    %13180 = vmatmul.bf16.gmra.mxu0 %v3428
    %v13181 = vpop.f32.mrf.mxu0
    %v13182 = vadd.f32 %v12853, %v13181
    %v13183 = vpop.f32.mrf.mxu0
    %v13184 = vadd.f32 %v12855, %v13183
    %13185 = vmatmul.bf16.gmra.mxu0 %v3436
    %v13186 = vpop.f32.mrf.mxu0
    %v13187 = vadd.f32 %v12858, %v13186
    %v13188 = vpop.f32.mrf.mxu0
    %v13189 = vadd.f32 %v12860, %v13188
    %13190 = vmatmul.bf16.gmra.mxu0 %v3444
    %v13191 = vpop.f32.mrf.mxu0
    %v13192 = vadd.f32 %v12863, %v13191
    %v13193 = vpop.f32.mrf.mxu0
    %v13194 = vadd.f32 %v12865, %v13193
    %13195 = vmatmul.bf16.gmra.mxu0 %v3452
    %v13196 = vpop.f32.mrf.mxu0
    %v13197 = vadd.f32 %v12868, %v13196
    %v13198 = vpop.f32.mrf.mxu0
    %v13199 = vadd.f32 %v12870, %v13198
    %13200 = vmatmul.bf16.gmra.mxu0 %v3460
    %v13201 = vpop.f32.mrf.mxu0
    %v13202 = vadd.f32 %v12873, %v13201
    %v13203 = vpop.f32.mrf.mxu0
    %v13204 = vadd.f32 %v12875, %v13203
    %13205 = vmatmul.bf16.gmra.mxu0 %v3468
    %v13206 = vpop.f32.mrf.mxu0
    %v13207 = vadd.f32 %v12878, %v13206
    %v13208 = vpop.f32.mrf.mxu0
    %v13209 = vadd.f32 %v12880, %v13208
    %13210 = vmatmul.bf16.gmra.mxu0 %v3476
    %v13211 = vpop.f32.mrf.mxu0
    %v13212 = vadd.f32 %v12883, %v13211
    %v13213 = vpop.f32.mrf.mxu0
    %v13214 = vadd.f32 %v12885, %v13213
    %13215 = vmatmul.bf16.gmra.mxu0 %v3484
    %v13216 = vpop.f32.mrf.mxu0
    %v13217 = vadd.f32 %v12888, %v13216
    %v13218 = vpop.f32.mrf.mxu0
    %v13219 = vadd.f32 %v12890, %v13218
    %13220 = vmatmul.bf16.gmra.mxu0 %v3492
    %v13221 = vpop.f32.mrf.mxu0
    %v13222 = vadd.f32 %v12893, %v13221
    %v13223 = vpop.f32.mrf.mxu0
    %v13224 = vadd.f32 %v12895, %v13223
    %13225 = vmatmul.bf16.gmra.mxu0 %v3500
    %v13226 = vpop.f32.mrf.mxu0
    %v13227 = vadd.f32 %v12898, %v13226
    %v13228 = vpop.f32.mrf.mxu0
    %v13229 = vadd.f32 %v12900, %v13228
    %13230 = vmatmul.bf16.gmra.mxu0 %v3508
    %v13231 = vpop.f32.mrf.mxu0
    %v13232 = vadd.f32 %v12903, %v13231
    %v13233 = vpop.f32.mrf.mxu0
    %v13234 = vadd.f32 %v12905, %v13233
    %13235 = vmatmul.bf16.gmra.mxu0 %v3516
    %v13236 = vpop.f32.mrf.mxu0
    %v13237 = vadd.f32 %v12908, %v13236
    %v13238 = vpop.f32.mrf.mxu0
    %v13239 = vadd.f32 %v12910, %v13238
    %13240 = vmatmul.bf16.gmra.mxu0 %v3524
    %v13241 = vpop.f32.mrf.mxu0
    %v13242 = vadd.f32 %v12913, %v13241
    %v13243 = vpop.f32.mrf.mxu0
    %v13244 = vadd.f32 %v12915, %v13243
    %13245 = vmatmul.bf16.gmra.mxu0 %v3532
    %v13246 = vpop.f32.mrf.mxu0
    %v13247 = vadd.f32 %v12918, %v13246
    %v13248 = vpop.f32.mrf.mxu0
    %v13249 = vadd.f32 %v12920, %v13248
    %13250 = vmatmul.bf16.gmra.mxu0 %v3540
    %v13251 = vpop.f32.mrf.mxu0
    %v13252 = vadd.f32 %v12923, %v13251
    %v13253 = vpop.f32.mrf.mxu0
    %v13254 = vadd.f32 %v12925, %v13253
    %13255 = vmatmul.bf16.gmra.mxu0 %v3548
    %v13256 = vpop.f32.mrf.mxu0
    %v13257 = vadd.f32 %v12928, %v13256
    %v13258 = vpop.f32.mrf.mxu0
    %v13259 = vadd.f32 %v12930, %v13258
    %13260 = vmatmul.bf16.gmra.mxu0 %v3556
    %v13261 = vpop.f32.mrf.mxu0
    %v13262 = vadd.f32 %v12933, %v13261
    %v13263 = vpop.f32.mrf.mxu0
    %v13264 = vadd.f32 %v12935, %v13263
    %13265 = vmatmul.bf16.gmra.mxu0 %v3564
    %v13266 = vpop.f32.mrf.mxu0
    %v13267 = vadd.f32 %v12938, %v13266
    %v13268 = vpop.f32.mrf.mxu0
    %v13269 = vadd.f32 %v12940, %v13268
    %13270 = vdwg.mxu0
    %13271 = vst [vmem:[%s5] sm:$0xff] %v12952
    %13272 = vst [vmem:[%s5 + $0x8] sm:$0xff] %v12954
    %13273 = vst [vmem:[%s5 + $0x10] sm:$0xff] %v12957
    %13274 = vst [vmem:[%s5 + $0x18] sm:$0xff] %v12959
    %13275 = vst [vmem:[%s5 + $0x20] sm:$0xff] %v12962
    %13276 = vst [vmem:[%s5 + $0x28] sm:$0xff] %v12964
    %13277 = vst [vmem:[%s5 + $0x30] sm:$0xff] %v12967
    %13278 = vst [vmem:[%s5 + $0x38] sm:$0xff] %v12969
    %13279 = vst [vmem:[%s5 + $0x40] sm:$0xff] %v12972
    %13280 = vst [vmem:[%s5 + $0x48] sm:$0xff] %v12974
    %13281 = vst [vmem:[%s5 + $0x50] sm:$0xff] %v12977
    %13282 = vst [vmem:[%s5 + $0x58] sm:$0xff] %v12979
    %13283 = vst [vmem:[%s5 + $0x60] sm:$0xff] %v12982
    %13284 = vst [vmem:[%s5 + $0x68] sm:$0xff] %v12984
    %13285 = vst [vmem:[%s5 + $0x70] sm:$0xff] %v12987
    %13286 = vst [vmem:[%s5 + $0x78] sm:$0xff] %v12989
    %13287 = vst [vmem:[%s5 + $0x80] sm:$0xff] %v12992
    %13288 = vst [vmem:[%s5 + $0x88] sm:$0xff] %v12994
    %13289 = vst [vmem:[%s5 + $0x90] sm:$0xff] %v12997
    %13290 = vst [vmem:[%s5 + $0x98] sm:$0xff] %v12999
    %13291 = vst [vmem:[%s5 + $0xa0] sm:$0xff] %v13002
    %13292 = vst [vmem:[%s5 + $0xa8] sm:$0xff] %v13004
    %13293 = vst [vmem:[%s5 + $0xb0] sm:$0xff] %v13007
    %13294 = vst [vmem:[%s5 + $0xb8] sm:$0xff] %v13009
    %13295 = vst [vmem:[%s5 + $0xc0] sm:$0xff] %v13012
    %13296 = vst [vmem:[%s5 + $0xc8] sm:$0xff] %v13014
    %13297 = vst [vmem:[%s5 + $0xd0] sm:$0xff] %v13017
    %13298 = vst [vmem:[%s5 + $0xd8] sm:$0xff] %v13019
    %13299 = vst [vmem:[%s5 + $0xe0] sm:$0xff] %v13022
    %13300 = vst [vmem:[%s5 + $0xe8] sm:$0xff] %v13024
    %13301 = vst [vmem:[%s5 + $0xf0] sm:$0xff] %v13027
    %13302 = vst [vmem:[%s5 + $0xf8] sm:$0xff] %v13029
    %13303 = vst [vmem:[%s5 + $0x100] sm:$0xff] %v13032
    %13304 = vst [vmem:[%s5 + $0x108] sm:$0xff] %v13034
    %13305 = vst [vmem:[%s5 + $0x110] sm:$0xff] %v13037
    %13306 = vst [vmem:[%s5 + $0x118] sm:$0xff] %v13039
    %13307 = vst [vmem:[%s5 + $0x120] sm:$0xff] %v13042
    %13308 = vst [vmem:[%s5 + $0x128] sm:$0xff] %v13044
    %13309 = vst [vmem:[%s5 + $0x130] sm:$0xff] %v13047
    %13310 = vst [vmem:[%s5 + $0x138] sm:$0xff] %v13049
    %13311 = vst [vmem:[%s5 + $0x140] sm:$0xff] %v13052
    %13312 = vst [vmem:[%s5 + $0x148] sm:$0xff] %v13054
    %13313 = vst [vmem:[%s5 + $0x150] sm:$0xff] %v13057
    %13314 = vst [vmem:[%s5 + $0x158] sm:$0xff] %v13059
    %13315 = vst [vmem:[%s5 + $0x160] sm:$0xff] %v13062
    %13316 = vst [vmem:[%s5 + $0x168] sm:$0xff] %v13064
    %13317 = vst [vmem:[%s5 + $0x170] sm:$0xff] %v13067
    %13318 = vst [vmem:[%s5 + $0x178] sm:$0xff] %v13069
    %13319 = vst [vmem:[%s5 + $0x180] sm:$0xff] %v13072
    %13320 = vst [vmem:[%s5 + $0x188] sm:$0xff] %v13074
    %13321 = vst [vmem:[%s5 + $0x190] sm:$0xff] %v13077
    %13322 = vst [vmem:[%s5 + $0x198] sm:$0xff] %v13079
    %13323 = vst [vmem:[%s5 + $0x1a0] sm:$0xff] %v13082
    %13324 = vst [vmem:[%s5 + $0x1a8] sm:$0xff] %v13084
    %13325 = vst [vmem:[%s5 + $0x1b0] sm:$0xff] %v13087
    %13326 = vst [vmem:[%s5 + $0x1b8] sm:$0xff] %v13089
    %13327 = vst [vmem:[%s5 + $0x1c0] sm:$0xff] %v13092
    %13328 = vst [vmem:[%s5 + $0x1c8] sm:$0xff] %v13094
    %13329 = vst [vmem:[%s5 + $0x1d0] sm:$0xff] %v13097
    %13330 = vst [vmem:[%s5 + $0x1d8] sm:$0xff] %v13099
    %13331 = vst [vmem:[%s5 + $0x1e0] sm:$0xff] %v13102
    %13332 = vst [vmem:[%s5 + $0x1e8] sm:$0xff] %v13104
    %13333 = vst [vmem:[%s5 + $0x1f0] sm:$0xff] %v13107
    %13334 = vst [vmem:[%s5 + $0x1f8] sm:$0xff] %v13109
    %13335 = vst [vmem:[%s5 + $0x200] sm:$0xff] %v13112
    %13336 = vst [vmem:[%s5 + $0x208] sm:$0xff] %v13114
    %13337 = vst [vmem:[%s5 + $0x210] sm:$0xff] %v13117
    %13338 = vst [vmem:[%s5 + $0x218] sm:$0xff] %v13119
    %13339 = vst [vmem:[%s5 + $0x220] sm:$0xff] %v13122
    %13340 = vst [vmem:[%s5 + $0x228] sm:$0xff] %v13124
    %13341 = vst [vmem:[%s5 + $0x230] sm:$0xff] %v13127
    %13342 = vst [vmem:[%s5 + $0x238] sm:$0xff] %v13129
    %13343 = vst [vmem:[%s5 + $0x240] sm:$0xff] %v13132
    %13344 = vst [vmem:[%s5 + $0x248] sm:$0xff] %v13134
    %13345 = vst [vmem:[%s5 + $0x250] sm:$0xff] %v13137
    %13346 = vst [vmem:[%s5 + $0x258] sm:$0xff] %v13139
    %13347 = vst [vmem:[%s5 + $0x260] sm:$0xff] %v13142
    %13348 = vst [vmem:[%s5 + $0x268] sm:$0xff] %v13144
    %13349 = vst [vmem:[%s5 + $0x270] sm:$0xff] %v13147
    %13350 = vst [vmem:[%s5 + $0x278] sm:$0xff] %v13149
    %13351 = vst [vmem:[%s5 + $0x280] sm:$0xff] %v13152
    %13352 = vst [vmem:[%s5 + $0x288] sm:$0xff] %v13154
    %13353 = vst [vmem:[%s5 + $0x290] sm:$0xff] %v13157
    %13354 = vst [vmem:[%s5 + $0x298] sm:$0xff] %v13159
    %13355 = vst [vmem:[%s5 + $0x2a0] sm:$0xff] %v13162
    %13356 = vst [vmem:[%s5 + $0x2a8] sm:$0xff] %v13164
    %13357 = vst [vmem:[%s5 + $0x2b0] sm:$0xff] %v13167
    %13358 = vst [vmem:[%s5 + $0x2b8] sm:$0xff] %v13169
    %13359 = vst [vmem:[%s5 + $0x2c0] sm:$0xff] %v13172
    %13360 = vst [vmem:[%s5 + $0x2c8] sm:$0xff] %v13174
    %13361 = vst [vmem:[%s5 + $0x2d0] sm:$0xff] %v13177
    %13362 = vst [vmem:[%s5 + $0x2d8] sm:$0xff] %v13179
    %13363 = vst [vmem:[%s5 + $0x2e0] sm:$0xff] %v13182
    %13364 = vst [vmem:[%s5 + $0x2e8] sm:$0xff] %v13184
    %13365 = vst [vmem:[%s5 + $0x2f0] sm:$0xff] %v13187
    %13366 = vst [vmem:[%s5 + $0x2f8] sm:$0xff] %v13189
    %13367 = vst [vmem:[%s5 + $0x300] sm:$0xff] %v13192
    %13368 = vst [vmem:[%s5 + $0x308] sm:$0xff] %v13194
    %13369 = vst [vmem:[%s5 + $0x310] sm:$0xff] %v13197
    %13370 = vst [vmem:[%s5 + $0x318] sm:$0xff] %v13199
    %13371 = vst [vmem:[%s5 + $0x320] sm:$0xff] %v13202
    %13372 = vst [vmem:[%s5 + $0x328] sm:$0xff] %v13204
    %13373 = vst [vmem:[%s5 + $0x330] sm:$0xff] %v13207
    %13374 = vst [vmem:[%s5 + $0x338] sm:$0xff] %v13209
    %13375 = vst [vmem:[%s5 + $0x340] sm:$0xff] %v13212
    %13376 = vst [vmem:[%s5 + $0x348] sm:$0xff] %v13214
    %13377 = vst [vmem:[%s5 + $0x350] sm:$0xff] %v13217
    %13378 = vst [vmem:[%s5 + $0x358] sm:$0xff] %v13219
    %13379 = vst [vmem:[%s5 + $0x360] sm:$0xff] %v13222
    %13380 = vst [vmem:[%s5 + $0x368] sm:$0xff] %v13224
    %13381 = vst [vmem:[%s5 + $0x370] sm:$0xff] %v13227
    %13382 = vst [vmem:[%s5 + $0x378] sm:$0xff] %v13229
    %13383 = vst [vmem:[%s5 + $0x380] sm:$0xff] %v13232
    %13384 = vst [vmem:[%s5 + $0x388] sm:$0xff] %v13234
    %13385 = vst [vmem:[%s5 + $0x390] sm:$0xff] %v13237
    %13386 = vst [vmem:[%s5 + $0x398] sm:$0xff] %v13239
    %13387 = vst [vmem:[%s5 + $0x3a0] sm:$0xff] %v13242
    %13388 = vst [vmem:[%s5 + $0x3a8] sm:$0xff] %v13244
    %13389 = vst [vmem:[%s5 + $0x3b0] sm:$0xff] %v13247
    %13390 = vst [vmem:[%s5 + $0x3b8] sm:$0xff] %v13249
    %13391 = vst [vmem:[%s5 + $0x3c0] sm:$0xff] %v13252
    %13392 = vst [vmem:[%s5 + $0x3c8] sm:$0xff] %v13254
    %13393 = vst [vmem:[%s5 + $0x3d0] sm:$0xff] %v13257
    %13394 = vst [vmem:[%s5 + $0x3d8] sm:$0xff] %v13259
    %13395 = vst [vmem:[%s5 + $0x3e0] sm:$0xff] %v13262
    %13396 = vst [vmem:[%s5 + $0x3e8] sm:$0xff] %v13264
    %13397 = vst [vmem:[%s5 + $0x3f0] sm:$0xff] %v13267
    %13398 = vst [vmem:[%s5 + $0x3f8] sm:$0xff] %v13269
    // Predicated region
    $region26: #{gcn_forward.1} parent=1 // pred_check
      _
    $region27: #{gcn_forward.1} parent=1 // pred_check_branch
      %13400 = sbr.rel (0) target = $region29
    $region28: #{gcn_forward.1} parent=1 // pred_region
      _
    $region29: #{gcn_forward.1} parent=1 // pred_fallthru
      _
    // Predicated region
    $region30: #{gcn_forward.1} parent=1 // pred_check
      _
    $region31: #{gcn_forward.1} parent=1 // pred_check_branch
      %13402 = sbr.rel (0) target = $region33
    $region32: #{gcn_forward.1} parent=1 // pred_region
      _
    $region33: #{gcn_forward.1} parent=1 // pred_fallthru
      _
    %13403 = vsyncpa [#allocation3], 1

</llo_original>
